<compile_context>
chip_gen: v7x
topology: tpu7x:2x2x1
jax: 0.10.0
libtpu: 0.0.40
codegen_flags: <defaults>
</compile_context>

<pallas_src>
import functools
import math

import jax
import jax.numpy as jnp
from jax.experimental import pallas as pl
from jax.experimental.pallas import tpu as pltpu

# --- module hyper-parameters (from tapegpt.py globals / Block) ---
N_EMBED = 384
N_HEAD = 6
HEAD_SIZE = N_EMBED // N_HEAD   # 64 (Block: head_size = n_embed // n_head)
N_LAYER = 6
BLOCK_SIZE = 256                # max seq len (positional table / tril buffer)
LN_EPS = 1e-5
NEG_INF = -1e30


# -----------------------------------------------------------------------------
# shared math helpers (pure jnp; used both in-kernel and in the reference)
# -----------------------------------------------------------------------------
def _layernorm(x, gamma, beta):
    m = jnp.mean(x, axis=-1, keepdims=True)
    xc = x - m
    var = jnp.mean(xc * xc, axis=-1, keepdims=True)
    return xc * jax.lax.rsqrt(var + LN_EPS) * gamma + beta


def _new_gelu(x):
    c = math.sqrt(2.0 / math.pi)
    return 0.5 * x * (1.0 + jnp.tanh(c * (x + 0.044715 * x * x * x)))


# -----------------------------------------------------------------------------
# Kernel: one grid step = (batch tile bi, transformer layer l).
# The (bb*T, C) activation is carried across the layer axis in a VMEM scratch.
# NOTE: the layer axis MUST stay the innermost (fastest-varying) grid axis — the
# output block is written only on the last layer step and relies on the unchanged
# output index not being written back between layer steps.
# -----------------------------------------------------------------------------
def _gpt_stack_kernel(x_ref,
                      ln1g_ref, ln1b_ref, wqkv_ref, wo_ref, bo_ref,
                      ln2g_ref, ln2b_ref, wfc_ref, bfc_ref, wpr_ref, bpr_ref,
                      lnfg_ref, lnfb_ref, wlm_ref, blm_ref,
                      out_ref, act_ref, att_ref,
                      *, n_embed, n_head, seq_len, batch_tile):
    l = pl.program_id(1)
    C = n_embed
    hs = C // n_head
    T = seq_len
    bb = batch_tile
    f32 = jnp.float32
    bf16 = jnp.bfloat16

    @pl.when(l == 0)
    def _():
        act_ref[...] = x_ref[...].astype(f32).reshape(bb * T, C)

    x = act_ref[...]                                   # (bb*T, C) f32 running activation

    # causal additive bias built on-chip (cheap VPU filler; no HBM stream / VMEM buffer)
    rows = jax.lax.broadcasted_iota(jnp.int32, (T, T), 0)
    cols = jax.lax.broadcasted_iota(jnp.int32, (T, T), 1)
    mask = jnp.where(cols <= rows, 0.0, NEG_INF).astype(f32)

    # ---- attention: LN1 -> fused QKV matmul -> per-head softmax(QK^T)V -> proj ----
    xn = _layernorm(x, ln1g_ref[...], ln1b_ref[...])
    qkv = jnp.dot(xn.astype(bf16), wqkv_ref[...],
                  preferred_element_type=f32)          # (bb*T, 3C), bf16 MXU, f32 acc
    q = qkv[:, 0:C]                                    # C**-0.5 already folded into Wq
    k = qkv[:, C:2 * C]
    v = qkv[:, 2 * C:3 * C]

    for b in range(bb):
        rs = slice(b * T, (b + 1) * T)
        for h in range(n_head):
            cs = slice(h * hs, (h + 1) * hs)
            s = jnp.einsum("qd,kd->qk",
                           q[rs, cs].astype(bf16), k[rs, cs].astype(bf16),
                           preferred_element_type=f32) + mask
            s = s - jnp.max(s, axis=-1, keepdims=True)
            p = jnp.exp(s)
            p = p * pl.reciprocal(jnp.sum(p, axis=-1, keepdims=True), approx=True)
            ho = jnp.dot(p.astype(bf16), v[rs, cs].astype(bf16),
                         preferred_element_type=f32)
            att_ref[rs, cs] = ho.astype(bf16)          # head concat via lane-slice store

    x = x + jnp.dot(att_ref[...], wo_ref[...],
                    preferred_element_type=f32) + bo_ref[...]

    # ---- MLP: LN2 -> c_fc -> new_gelu -> c_proj ----
    xn2 = _layernorm(x, ln2g_ref[...], ln2b_ref[...])
    h1 = jnp.dot(xn2.astype(bf16), wfc_ref[...],
                 preferred_element_type=f32) + bfc_ref[...]
    h1 = _new_gelu(h1)
    x = x + jnp.dot(h1.astype(bf16), wpr_ref[...],
                    preferred_element_type=f32) + bpr_ref[...]

    act_ref[...] = x

    # ---- after the last layer: final LayerNorm + lm_head (vocab padded to 128) ----
    @pl.when(l == pl.num_programs(1) - 1)
    def _():
        xf = _layernorm(x, lnfg_ref[...], lnfb_ref[...])
        logits = (jnp.dot(xf.astype(bf16), wlm_ref[...],
                          preferred_element_type=f32) + blm_ref[...])
        out_ref[...] = logits.reshape(bb, T, -1).astype(out_ref.dtype)


# -----------------------------------------------------------------------------
# Parameter packing: stack per-layer weights with a leading layer axis (pipelined
# prefetch of layer l+1's weights) and store the big matmul weights as bf16.
# The C**-0.5 attention-score scale is folded into the Q weight columns here.
# -----------------------------------------------------------------------------
def _pack_layer_params(layers):
    C = N_EMBED
    scale = C ** -0.5            # Head.forward uses C (= n_embed) ** -0.5

    def cat_heads(w):            # (H, C, hs) -> (C, C) with head h at cols [h*hs:(h+1)*hs]
        return jnp.transpose(w, (1, 0, 2)).reshape(C, C)

    wqkv = jnp.stack([
        jnp.concatenate([cat_heads(ly["wq"]) * scale,      # score scale folded into Q
                         cat_heads(ly["wk"]),
                         cat_heads(ly["wv"])], axis=-1)
        for ly in layers]).astype(jnp.bfloat16)

    def stack(name, dt=jnp.float32):
        return jnp.stack([ly[name] for ly in layers]).astype(dt)

    return (stack("ln1_g"), stack("ln1_b"), wqkv,
            stack("wo", jnp.bfloat16), stack("bo"),
            stack("ln2_g"), stack("ln2_b"),
            stack("wfc", jnp.bfloat16), stack("bfc"),
            stack("wpr", jnp.bfloat16), stack("bpr"))


def _vmem_limit_bytes():
    # ~3/4 of physical VMEM, capped at 64 MiB: 48 MiB on v7x (64 MiB/TC),
    # 64 MiB on v5e/v6e (128 MiB). Falls back to 48 MiB (safe everywhere).
    try:
        phys = pltpu.get_tpu_info().vmem_capacity_bytes
        return int(min(phys * 3 // 4, 64 * 1024 * 1024))
    except Exception:
        return 48 * 1024 * 1024


# -----------------------------------------------------------------------------
# Forward wrapper (eval-mode: dropout = identity)
# -----------------------------------------------------------------------------
def bigram_lm_forward(idx, params, targets=None):
    B, T = idx.shape
    C, H, L = N_EMBED, N_HEAD, N_LAYER
    V = params["wlm"].shape[1]
    Vp = ((V + 127) // 128) * 128
    assert T <= BLOCK_SIZE and C % H == 0

    # batch tile: fold batch elements into one block so per-layer weights are streamed
    # B//bb (not B) times; keep 2 grid steps along batch when B is even so both v7x
    # TensorCores get work (accepting 2x weight streams for the parallel axis).
    bb = B // 2 if (B % 2 == 0 and B >= 2) else B
    if T % 8 != 0:
        bb = 1                       # keep the (bb,T,C)->(bb*T,C) collapse tile-aligned
    while bb > 1 and (B % bb != 0 or bb * T > 1024):
        bb -= 1
    nb = B // bb
    assert nb * bb == B

    # TODO(synk): token/position embedding gather kept in plain JAX (data-dependent
    # gather; negligible cost and no beneficial Pallas mapping at this size).
    x = (jnp.take(params["tok_emb"], idx, axis=0)
         + params["pos_emb"][:T][None, :, :]).astype(jnp.float32)

    (ln1g, ln1b, wqkv, wo, bo, ln2g, ln2b, wfc, bfc, wpr, bpr) = \
        _pack_layer_params(params["layers"])

    # lm_head padded to a lane-dense 128-wide output (padding sliced off afterwards);
    # weight stored bf16, bias kept f32.
    wlm = (jnp.zeros((C, Vp), jnp.float32).at[:, :V].set(params["wlm"])
           .astype(jnp.bfloat16))
    blm = jnp.zeros((1, Vp), jnp.float32).at[:, :V].set(params["blm"])

    per_batch = lambda b, l: (b, 0, 0)
    per_layer = lambda b, l: (l, 0, 0)
    const2d = lambda b, l: (0, 0)

    grid_spec = pltpu.PrefetchScalarGridSpec(
        num_scalar_prefetch=0,
        grid=(nb, L),                                    # layer axis innermost (required)
        in_specs=[
            pl.BlockSpec((bb, T, C), per_batch),         # x (embeddings), f32
            pl.BlockSpec((None, 1, C), per_layer),       # ln1 gamma
            pl.BlockSpec((None, 1, C), per_layer),       # ln1 beta
            pl.BlockSpec((None, C, 3 * C), per_layer),   # fused Wqkv (384,1152) bf16
            pl.BlockSpec((None, C, C), per_layer),       # attention projection W bf16
            pl.BlockSpec((None, 1, C), per_layer),       # attention projection b
            pl.BlockSpec((None, 1, C), per_layer),       # ln2 gamma
            pl.BlockSpec((None, 1, C), per_layer),       # ln2 beta
            pl.BlockSpec((None, C, 4 * C), per_layer),   # MLP c_fc W bf16
            pl.BlockSpec((None, 1, 4 * C), per_layer),   # MLP c_fc b
            pl.BlockSpec((None, 4 * C, C), per_layer),   # MLP c_proj W bf16
            pl.BlockSpec((None, 1, C), per_layer),       # MLP c_proj b
            pl.BlockSpec((1, C), const2d),               # final LN gamma
            pl.BlockSpec((1, C), const2d),               # final LN beta
            pl.BlockSpec((C, Vp), const2d),              # lm_head W (padded, bf16)
            pl.BlockSpec((1, Vp), const2d),              # lm_head b (padded, f32)
        ],
        out_specs=pl.BlockSpec((bb, T, Vp), per_batch),
        scratch_shapes=[
            pltpu.VMEM((bb * T, C), jnp.float32),        # running activation (residual)
            pltpu.VMEM((bb * T, C), jnp.bfloat16),       # per-head output concat buffer
        ],
    )

    logits_padded = pl.pallas_call(
        functools.partial(_gpt_stack_kernel, n_embed=C, n_head=H,
                          seq_len=T, batch_tile=bb),
        out_shape=jax.ShapeDtypeStruct((B, T, Vp), jnp.float32),
        grid_spec=grid_spec,
        compiler_params=pltpu.CompilerParams(
            dimension_semantics=("parallel", "arbitrary"),
            vmem_limit_bytes=_vmem_limit_bytes()),
    )(x, ln1g, ln1b, wqkv, wo, bo, ln2g, ln2b, wfc, bfc, wpr, bpr,
      params["lnf_g"], params["lnf_b"], wlm, blm)

    logits = logits_padded[:, :, :V]

    loss = None
    if targets is not None:
        # TODO(synk): cross-entropy loss kept in plain JAX (scalar reduction).
        logp = jax.nn.log_softmax(logits.reshape(-1, V), axis=-1)
        loss = -jnp.mean(jnp.take_along_axis(logp, targets.reshape(-1, 1), axis=-1))
    return logits, loss


# -----------------------------------------------------------------------------
# Pure-JAX reference (mirrors the PyTorch module structure) for validation.
# Run it under jax.default_matmul_precision("highest") to get a true-f32 baseline.
# -----------------------------------------------------------------------------
def reference_forward(idx, params):
    C, H = N_EMBED, N_HEAD
    B, T = idx.shape
    x = jnp.take(params["tok_emb"], idx, axis=0) + params["pos_emb"][:T][None]
    tril = jnp.tril(jnp.ones((T, T), bool))
    for ly in params["layers"]:
        xn = _layernorm(x, ly["ln1_g"], ly["ln1_b"])
        heads = []
        for h in range(H):
            q = xn @ ly["wq"][h]
            k = xn @ ly["wk"][h]
            v = xn @ ly["wv"][h]
            wei = jnp.einsum("btd,bsd->bts", q, k) * (C ** -0.5)
            wei = jnp.where(tril[None], wei, -jnp.inf)
            wei = jax.nn.softmax(wei, axis=-1)
            heads.append(jnp.einsum("bts,bsd->btd", wei, v))
        att = jnp.concatenate(heads, axis=-1)
        x = x + att @ ly["wo"] + ly["bo"]
        xn2 = _layernorm(x, ly["ln2_g"], ly["ln2_b"])
        h1 = _new_gelu(xn2 @ ly["wfc"] + ly["bfc"])
        x = x + h1 @ ly["wpr"] + ly["bpr"]
    x = _layernorm(x, params["lnf_g"], params["lnf_b"])
    return x @ params["wlm"] + params["blm"]


# -----------------------------------------------------------------------------
# Deterministic parameter construction
# -----------------------------------------------------------------------------
def init_params(key, vocab_size):
    C, H, L = N_EMBED, N_HEAD, N_LAYER
    hs = C // H
    keys = iter(jax.random.split(key, 16 + 16 * L))

    def nrm(shape, scale=1.0):
        return jax.random.normal(next(keys), shape, jnp.float32) * scale

    params = dict(
        tok_emb=nrm((vocab_size, C), 0.5),
        pos_emb=nrm((BLOCK_SIZE, C), 0.5),
        lnf_g=1.0 + nrm((1, C), 0.1),
        lnf_b=nrm((1, C), 0.1),
        wlm=nrm((C, vocab_size), C ** -0.5),
        blm=nrm((1, vocab_size), 0.01),
        layers=[],
    )
    for _ in range(L):
        params["layers"].append(dict(
            ln1_g=1.0 + nrm((1, C), 0.1), ln1_b=nrm((1, C), 0.1),
            wq=nrm((H, C, hs), C ** -0.5),
            wk=nrm((H, C, hs), C ** -0.5),
            wv=nrm((H, C, hs), C ** -0.5),
            wo=nrm((C, C), C ** -0.5), bo=nrm((1, C), 0.01),
            ln2_g=1.0 + nrm((1, C), 0.1), ln2_b=nrm((1, C), 0.1),
            wfc=nrm((C, 4 * C), C ** -0.5), bfc=nrm((1, 4 * C), 0.01),
            wpr=nrm((4 * C, C), (4 * C) ** -0.5), bpr=nrm((1, C), 0.01),
        ))
    return params


if __name__ == "__main__":
    VOCAB = 65          # len(chars) for the character vocabulary
    B, T = 2, 8         # small batch / seq; T <= block_size (256)

    key = jax.random.PRNGKey(0)
    params = init_params(key, VOCAB)
    idx = jax.random.randint(jax.random.fold_in(key, 12345), (B, T), 0, VOCAB)

    logits, loss = bigram_lm_forward(idx, params)
    logits = jax.block_until_ready(logits)

    # true-f32 baseline (context manager: no global precision-state mutation)
    with jax.default_matmul_precision("highest"):
        ref = reference_forward(idx, params)

    assert logits.shape == (B, T, VOCAB)
    max_err = jnp.max(jnp.abs(logits - ref))
    # Kernel runs MXU operands in bf16 (f32 accumulation); expected deviation vs the
    # exact-f32 reference is ~1e-2 on O(1) logits — structural bugs show up as O(1).
    assert jnp.allclose(logits, ref, atol=1e-1, rtol=1e-1), (
        f"mismatch vs reference (max abs err {max_err})")

    print("KERNEL_OK")
</pallas_src>

<mosaic_0001>
module attributes {stable_mosaic.version = 11 : i64} {
  func.func @_gpt_stack_kernel(%arg0: i32, %arg1: i32, %arg2: memref<1x8x384xf32, #tpu.memory_space<vmem>>, %arg3: memref<1x1x384xf32, #tpu.memory_space<vmem>>, %arg4: memref<1x1x384xf32, #tpu.memory_space<vmem>>, %arg5: memref<1x384x1152xbf16, #tpu.memory_space<vmem>>, %arg6: memref<1x384x384xbf16, #tpu.memory_space<vmem>>, %arg7: memref<1x1x384xf32, #tpu.memory_space<vmem>>, %arg8: memref<1x1x384xf32, #tpu.memory_space<vmem>>, %arg9: memref<1x1x384xf32, #tpu.memory_space<vmem>>, %arg10: memref<1x384x1536xbf16, #tpu.memory_space<vmem>>, %arg11: memref<1x1x1536xf32, #tpu.memory_space<vmem>>, %arg12: memref<1x1536x384xbf16, #tpu.memory_space<vmem>>, %arg13: memref<1x1x384xf32, #tpu.memory_space<vmem>>, %arg14: memref<1x384xf32, #tpu.memory_space<vmem>>, %arg15: memref<1x384xf32, #tpu.memory_space<vmem>>, %arg16: memref<384x128xbf16, #tpu.memory_space<vmem>>, %arg17: memref<1x128xf32, #tpu.memory_space<vmem>>, %arg18: memref<1x8x128xf32, #tpu.memory_space<vmem>>, %arg19: memref<8x384xf32, #tpu.memory_space<vmem>>, %arg20: memref<8x384xbf16, #tpu.memory_space<vmem>>) attributes {dimension_semantics = [#tpu.dimension_semantics<parallel>, #tpu.dimension_semantics<arbitrary>], iteration_bounds = array<i64: 2, 6>, scalar_prefetch = 0 : i64, scratch_operands = 2 : i64, tpu.core_type = #tpu.core_type<tc>, window_params = [{transform_indices = @transform_0, window_bounds = array<i64: 1, 8, 384>}, {transform_indices = @transform_1, window_bounds = array<i64: 1, 1, 384>}, {transform_indices = @transform_2, window_bounds = array<i64: 1, 1, 384>}, {transform_indices = @transform_3, window_bounds = array<i64: 1, 384, 1152>}, {transform_indices = @transform_4, window_bounds = array<i64: 1, 384, 384>}, {transform_indices = @transform_5, window_bounds = array<i64: 1, 1, 384>}, {transform_indices = @transform_6, window_bounds = array<i64: 1, 1, 384>}, {transform_indices = @transform_7, window_bounds = array<i64: 1, 1, 384>}, {transform_indices = @transform_8, window_bounds = array<i64: 1, 384, 1536>}, {transform_indices = @transform_9, window_bounds = array<i64: 1, 1, 1536>}, {transform_indices = @transform_10, window_bounds = array<i64: 1, 1536, 384>}, {transform_indices = @transform_11, window_bounds = array<i64: 1, 1, 384>}, {pipeline_mode = #tpu.pipeline_mode<synchronous>, transform_indices = @transform_12, window_bounds = array<i64: 1, 384>}, {pipeline_mode = #tpu.pipeline_mode<synchronous>, transform_indices = @transform_13, window_bounds = array<i64: 1, 384>}, {pipeline_mode = #tpu.pipeline_mode<synchronous>, transform_indices = @transform_14, window_bounds = array<i64: 384, 128>}, {pipeline_mode = #tpu.pipeline_mode<synchronous>, transform_indices = @transform_15, window_bounds = array<i64: 1, 128>}, {transform_indices = @transform_16, window_bounds = array<i64: 1, 8, 128>}]} {
    %c0_i32 = arith.constant 0 : i32
    %0 = arith.cmpi eq, %arg1, %c0_i32 : i32
    %1 = arith.extui %0 : i1 to i32
    %c0_i32_0 = arith.constant 0 : i32
    %2 = arith.cmpi ne, %1, %c0_i32_0 : i32
    scf.if %2 {
      %c0_90 = arith.constant 0 : index
      %c0_91 = arith.constant 0 : index
      %c0_92 = arith.constant 0 : index
      %240 = vector.load %arg2[%c0_90, %c0_91, %c0_92] : memref<1x8x384xf32, #tpu.memory_space<vmem>>, vector<1x8x384xf32>
      %241 = vector.shape_cast %240 : vector<1x8x384xf32> to vector<8x384xf32>
      %c0_93 = arith.constant 0 : index
      %c0_94 = arith.constant 0 : index
      %242 = vector.load %arg19[%c0_93, %c0_94] : memref<8x384xf32, #tpu.memory_space<vmem>>, vector<8x384xf32>
      tpu.vector_store %arg19[%c0_93, %c0_94], %241 {strides = array<i32>} : memref<8x384xf32, #tpu.memory_space<vmem>>, vector<8x384xf32>,
    } else {
    }
    %c0 = arith.constant 0 : index
    %c0_1 = arith.constant 0 : index
    %3 = vector.load %arg19[%c0, %c0_1] : memref<8x384xf32, #tpu.memory_space<vmem>>, vector<8x384xf32>
    %4 = tpu.iota {dimensions = array<i32: 0>} : vector<8x8xi32>
    %5 = tpu.iota {dimensions = array<i32: 1>} : vector<8x8xi32>
    %6 = arith.cmpi sle, %5, %4 : vector<8x8xi32>
    %cst = arith.constant 0.000000e+00 : f32
    %cst_2 = arith.constant -1.000000e+30 : f32
    %7 = vector.broadcast %cst : f32 to vector<8x8xf32>
    %8 = vector.broadcast %cst_2 : f32 to vector<8x8xf32>
    %9 = arith.select %6, %7, %8 : vector<8x8xi1>, vector<8x8xf32>
    %c0_3 = arith.constant 0 : index
    %c0_4 = arith.constant 0 : index
    %c0_5 = arith.constant 0 : index
    %10 = vector.load %arg3[%c0_3, %c0_4, %c0_5] : memref<1x1x384xf32, #tpu.memory_space<vmem>>, vector<1x1x384xf32>
    %11 = vector.shape_cast %10 : vector<1x1x384xf32> to vector<1x384xf32>
    %c0_6 = arith.constant 0 : index
    %c0_7 = arith.constant 0 : index
    %c0_8 = arith.constant 0 : index
    %12 = vector.load %arg4[%c0_6, %c0_7, %c0_8] : memref<1x1x384xf32, #tpu.memory_space<vmem>>, vector<1x1x384xf32>
    %13 = vector.shape_cast %12 : vector<1x1x384xf32> to vector<1x384xf32>
    %cst_9 = arith.constant dense<0.000000e+00> : vector<8xf32>
    %14 = vector.multi_reduction <add>, %3, %cst_9 [1] : vector<8x384xf32> to vector<8xf32>
    %15 = vector.shape_cast %14 : vector<8xf32> to vector<8x1xf32>
    %cst_10 = arith.constant 3.840000e+02 : f32
    %16 = vector.broadcast %cst_10 : f32 to vector<8x1xf32>
    %17 = arith.divf %15, %16 : vector<8x1xf32>
    %18 = vector.broadcast %17 : vector<8x1xf32> to vector<8x384xf32>
    %19 = arith.subf %3, %18 : vector<8x384xf32>
    %20 = arith.mulf %19, %19 : vector<8x384xf32>
    %cst_11 = arith.constant dense<0.000000e+00> : vector<8xf32>
    %21 = vector.multi_reduction <add>, %20, %cst_11 [1] : vector<8x384xf32> to vector<8xf32>
    %22 = vector.shape_cast %21 : vector<8xf32> to vector<8x1xf32>
    %cst_12 = arith.constant 3.840000e+02 : f32
    %23 = vector.broadcast %cst_12 : f32 to vector<8x1xf32>
    %24 = arith.divf %22, %23 : vector<8x1xf32>
    %cst_13 = arith.constant 9.99999974E-6 : f32
    %25 = vector.broadcast %cst_13 : f32 to vector<8x1xf32>
    %26 = arith.addf %24, %25 : vector<8x1xf32>
    %27 = math.rsqrt %26 : vector<8x1xf32>
    %28 = vector.broadcast %27 : vector<8x1xf32> to vector<8x384xf32>
    %29 = arith.mulf %19, %28 : vector<8x384xf32>
    %30 = vector.broadcast %11 : vector<1x384xf32> to vector<8x384xf32>
    %31 = arith.mulf %29, %30 : vector<8x384xf32>
    %32 = vector.broadcast %13 : vector<1x384xf32> to vector<8x384xf32>
    %33 = arith.addf %31, %32 : vector<8x384xf32>
    %34 = arith.truncf %33 : vector<8x384xf32> to vector<8x384xbf16>
    %c0_14 = arith.constant 0 : index
    %c0_15 = arith.constant 0 : index
    %c0_16 = arith.constant 0 : index
    %35 = vector.load %arg5[%c0_14, %c0_15, %c0_16] : memref<1x384x1152xbf16, #tpu.memory_space<vmem>>, vector<1x384x1152xbf16>
    %36 = vector.shape_cast %35 : vector<1x384x1152xbf16> to vector<384x1152xbf16>
    %cst_17 = arith.constant dense<0.000000e+00> : vector<8x1152xf32>
    %37 = tpu.matmul %34, %36, %cst_17 {dimension_numbers = #tpu.dot_dimension_numbers<[1], [0], [0], [1], [0, 0, 1, 1], [], []>} : vector<8x384xbf16>, vector<384x1152xbf16>, vector<8x1152xf32> -> vector<8x1152xf32>
    %38 = vector.extract_strided_slice %37 {offsets = [0, 0], sizes = [8, 384], strides = [1, 1]} : vector<8x1152xf32> to vector<8x384xf32>
    %39 = vector.extract_strided_slice %37 {offsets = [0, 384], sizes = [8, 384], strides = [1, 1]} : vector<8x1152xf32> to vector<8x384xf32>
    %40 = vector.extract_strided_slice %37 {offsets = [0, 768], sizes = [8, 384], strides = [1, 1]} : vector<8x1152xf32> to vector<8x384xf32>
    %41 = vector.extract_strided_slice %38 {offsets = [0, 0], sizes = [8, 64], strides = [1, 1]} : vector<8x384xf32> to vector<8x64xf32>
    %42 = arith.truncf %41 : vector<8x64xf32> to vector<8x64xbf16>
    %43 = vector.extract_strided_slice %39 {offsets = [0, 0], sizes = [8, 64], strides = [1, 1]} : vector<8x384xf32> to vector<8x64xf32>
    %44 = arith.truncf %43 : vector<8x64xf32> to vector<8x64xbf16>
    "tpu.trace_start"() <{level = 10 : i32, message = "qd,kd->qk"}> : () -> ()
    %cst_18 = arith.constant dense<0.000000e+00> : vector<8x8xf32>
    %45 = tpu.matmul %42, %44, %cst_18 {dimension_numbers = #tpu.dot_dimension_numbers<[1], [1], [0], [0], [0, 0, 1, 0], [], []>} : vector<8x64xbf16>, vector<8x64xbf16>, vector<8x8xf32> -> vector<8x8xf32>
    "tpu.trace_stop"() : () -> ()
    %46 = arith.addf %45, %9 : vector<8x8xf32>
    %cst_19 = arith.constant dense<0xFF800000> : vector<8xf32>
    %47 = vector.multi_reduction <maximumf>, %46, %cst_19 [1] : vector<8x8xf32> to vector<8xf32>
    %48 = vector.shape_cast %47 : vector<8xf32> to vector<8x1xf32>
    %49 = vector.broadcast %48 : vector<8x1xf32> to vector<8x8xf32>
    %50 = arith.subf %46, %49 : vector<8x8xf32>
    %51 = math.exp %50 : vector<8x8xf32>
    %cst_20 = arith.constant dense<0.000000e+00> : vector<8xf32>
    %52 = vector.multi_reduction <add>, %51, %cst_20 [1] : vector<8x8xf32> to vector<8xf32>
    %53 = vector.shape_cast %52 : vector<8xf32> to vector<8x1xf32>
    %54 = tpu.reciprocal %53 {approx = true} : vector<8x1xf32> -> vector<8x1xf32>
    %55 = vector.broadcast %54 : vector<8x1xf32> to vector<8x8xf32>
    %56 = arith.mulf %51, %55 : vector<8x8xf32>
    %57 = arith.truncf %56 : vector<8x8xf32> to vector<8x8xbf16>
    %58 = vector.extract_strided_slice %40 {offsets = [0, 0], sizes = [8, 64], strides = [1, 1]} : vector<8x384xf32> to vector<8x64xf32>
    %59 = arith.truncf %58 : vector<8x64xf32> to vector<8x64xbf16>
    %cst_21 = arith.constant dense<0.000000e+00> : vector<8x64xf32>
    %60 = tpu.matmul %57, %59, %cst_21 {dimension_numbers = #tpu.dot_dimension_numbers<[1], [0], [0], [1], [0, 0, 1, 1], [], []>} : vector<8x8xbf16>, vector<8x64xbf16>, vector<8x64xf32> -> vector<8x64xf32>
    %61 = arith.truncf %60 : vector<8x64xf32> to vector<8x64xbf16>
    %c0_22 = arith.constant 0 : index
    %c0_23 = arith.constant 0 : index
    %62 = vector.load %arg20[%c0_22, %c0_23] : memref<8x384xbf16, #tpu.memory_space<vmem>>, vector<8x64xbf16>
    tpu.vector_store %arg20[%c0_22, %c0_23], %61 {strides = array<i32>} : memref<8x384xbf16, #tpu.memory_space<vmem>>, vector<8x64xbf16>,
    %63 = vector.extract_strided_slice %38 {offsets = [0, 64], sizes = [8, 64], strides = [1, 1]} : vector<8x384xf32> to vector<8x64xf32>
    %64 = arith.truncf %63 : vector<8x64xf32> to vector<8x64xbf16>
    %65 = vector.extract_strided_slice %39 {offsets = [0, 64], sizes = [8, 64], strides = [1, 1]} : vector<8x384xf32> to vector<8x64xf32>
    %66 = arith.truncf %65 : vector<8x64xf32> to vector<8x64xbf16>
    "tpu.trace_start"() <{level = 10 : i32, message = "qd,kd->qk"}> : () -> ()
    %cst_24 = arith.constant dense<0.000000e+00> : vector<8x8xf32>
    %67 = tpu.matmul %64, %66, %cst_24 {dimension_numbers = #tpu.dot_dimension_numbers<[1], [1], [0], [0], [0, 0, 1, 0], [], []>} : vector<8x64xbf16>, vector<8x64xbf16>, vector<8x8xf32> -> vector<8x8xf32>
    "tpu.trace_stop"() : () -> ()
    %68 = arith.addf %67, %9 : vector<8x8xf32>
    %cst_25 = arith.constant dense<0xFF800000> : vector<8xf32>
    %69 = vector.multi_reduction <maximumf>, %68, %cst_25 [1] : vector<8x8xf32> to vector<8xf32>
    %70 = vector.shape_cast %69 : vector<8xf32> to vector<8x1xf32>
    %71 = vector.broadcast %70 : vector<8x1xf32> to vector<8x8xf32>
    %72 = arith.subf %68, %71 : vector<8x8xf32>
    %73 = math.exp %72 : vector<8x8xf32>
    %cst_26 = arith.constant dense<0.000000e+00> : vector<8xf32>
    %74 = vector.multi_reduction <add>, %73, %cst_26 [1] : vector<8x8xf32> to vector<8xf32>
    %75 = vector.shape_cast %74 : vector<8xf32> to vector<8x1xf32>
    %76 = tpu.reciprocal %75 {approx = true} : vector<8x1xf32> -> vector<8x1xf32>
    %77 = vector.broadcast %76 : vector<8x1xf32> to vector<8x8xf32>
    %78 = arith.mulf %73, %77 : vector<8x8xf32>
    %79 = arith.truncf %78 : vector<8x8xf32> to vector<8x8xbf16>
    %80 = vector.extract_strided_slice %40 {offsets = [0, 64], sizes = [8, 64], strides = [1, 1]} : vector<8x384xf32> to vector<8x64xf32>
    %81 = arith.truncf %80 : vector<8x64xf32> to vector<8x64xbf16>
    %cst_27 = arith.constant dense<0.000000e+00> : vector<8x64xf32>
    %82 = tpu.matmul %79, %81, %cst_27 {dimension_numbers = #tpu.dot_dimension_numbers<[1], [0], [0], [1], [0, 0, 1, 1], [], []>} : vector<8x8xbf16>, vector<8x64xbf16>, vector<8x64xf32> -> vector<8x64xf32>
    %83 = arith.truncf %82 : vector<8x64xf32> to vector<8x64xbf16>
    %c0_28 = arith.constant 0 : index
    %c64 = arith.constant 64 : index
    %84 = vector.load %arg20[%c0_28, %c64] : memref<8x384xbf16, #tpu.memory_space<vmem>>, vector<8x64xbf16>
    tpu.vector_store %arg20[%c0_28, %c64], %83 {strides = array<i32>} : memref<8x384xbf16, #tpu.memory_space<vmem>>, vector<8x64xbf16>,
    %85 = vector.extract_strided_slice %38 {offsets = [0, 128], sizes = [8, 64], strides = [1, 1]} : vector<8x384xf32> to vector<8x64xf32>
    %86 = arith.truncf %85 : vector<8x64xf32> to vector<8x64xbf16>
    %87 = vector.extract_strided_slice %39 {offsets = [0, 128], sizes = [8, 64], strides = [1, 1]} : vector<8x384xf32> to vector<8x64xf32>
    %88 = arith.truncf %87 : vector<8x64xf32> to vector<8x64xbf16>
    "tpu.trace_start"() <{level = 10 : i32, message = "qd,kd->qk"}> : () -> ()
    %cst_29 = arith.constant dense<0.000000e+00> : vector<8x8xf32>
    %89 = tpu.matmul %86, %88, %cst_29 {dimension_numbers = #tpu.dot_dimension_numbers<[1], [1], [0], [0], [0, 0, 1, 0], [], []>} : vector<8x64xbf16>, vector<8x64xbf16>, vector<8x8xf32> -> vector<8x8xf32>
    "tpu.trace_stop"() : () -> ()
    %90 = arith.addf %89, %9 : vector<8x8xf32>
    %cst_30 = arith.constant dense<0xFF800000> : vector<8xf32>
    %91 = vector.multi_reduction <maximumf>, %90, %cst_30 [1] : vector<8x8xf32> to vector<8xf32>
    %92 = vector.shape_cast %91 : vector<8xf32> to vector<8x1xf32>
    %93 = vector.broadcast %92 : vector<8x1xf32> to vector<8x8xf32>
    %94 = arith.subf %90, %93 : vector<8x8xf32>
    %95 = math.exp %94 : vector<8x8xf32>
    %cst_31 = arith.constant dense<0.000000e+00> : vector<8xf32>
    %96 = vector.multi_reduction <add>, %95, %cst_31 [1] : vector<8x8xf32> to vector<8xf32>
    %97 = vector.shape_cast %96 : vector<8xf32> to vector<8x1xf32>
    %98 = tpu.reciprocal %97 {approx = true} : vector<8x1xf32> -> vector<8x1xf32>
    %99 = vector.broadcast %98 : vector<8x1xf32> to vector<8x8xf32>
    %100 = arith.mulf %95, %99 : vector<8x8xf32>
    %101 = arith.truncf %100 : vector<8x8xf32> to vector<8x8xbf16>
    %102 = vector.extract_strided_slice %40 {offsets = [0, 128], sizes = [8, 64], strides = [1, 1]} : vector<8x384xf32> to vector<8x64xf32>
    %103 = arith.truncf %102 : vector<8x64xf32> to vector<8x64xbf16>
    %cst_32 = arith.constant dense<0.000000e+00> : vector<8x64xf32>
    %104 = tpu.matmul %101, %103, %cst_32 {dimension_numbers = #tpu.dot_dimension_numbers<[1], [0], [0], [1], [0, 0, 1, 1], [], []>} : vector<8x8xbf16>, vector<8x64xbf16>, vector<8x64xf32> -> vector<8x64xf32>
    %105 = arith.truncf %104 : vector<8x64xf32> to vector<8x64xbf16>
    %c0_33 = arith.constant 0 : index
    %c128 = arith.constant 128 : index
    %106 = vector.load %arg20[%c0_33, %c128] : memref<8x384xbf16, #tpu.memory_space<vmem>>, vector<8x64xbf16>
    tpu.vector_store %arg20[%c0_33, %c128], %105 {strides = array<i32>} : memref<8x384xbf16, #tpu.memory_space<vmem>>, vector<8x64xbf16>,
    %107 = vector.extract_strided_slice %38 {offsets = [0, 192], sizes = [8, 64], strides = [1, 1]} : vector<8x384xf32> to vector<8x64xf32>
    %108 = arith.truncf %107 : vector<8x64xf32> to vector<8x64xbf16>
    %109 = vector.extract_strided_slice %39 {offsets = [0, 192], sizes = [8, 64], strides = [1, 1]} : vector<8x384xf32> to vector<8x64xf32>
    %110 = arith.truncf %109 : vector<8x64xf32> to vector<8x64xbf16>
    "tpu.trace_start"() <{level = 10 : i32, message = "qd,kd->qk"}> : () -> ()
    %cst_34 = arith.constant dense<0.000000e+00> : vector<8x8xf32>
    %111 = tpu.matmul %108, %110, %cst_34 {dimension_numbers = #tpu.dot_dimension_numbers<[1], [1], [0], [0], [0, 0, 1, 0], [], []>} : vector<8x64xbf16>, vector<8x64xbf16>, vector<8x8xf32> -> vector<8x8xf32>
    "tpu.trace_stop"() : () -> ()
    %112 = arith.addf %111, %9 : vector<8x8xf32>
    %cst_35 = arith.constant dense<0xFF800000> : vector<8xf32>
    %113 = vector.multi_reduction <maximumf>, %112, %cst_35 [1] : vector<8x8xf32> to vector<8xf32>
    %114 = vector.shape_cast %113 : vector<8xf32> to vector<8x1xf32>
    %115 = vector.broadcast %114 : vector<8x1xf32> to vector<8x8xf32>
    %116 = arith.subf %112, %115 : vector<8x8xf32>
    %117 = math.exp %116 : vector<8x8xf32>
    %cst_36 = arith.constant dense<0.000000e+00> : vector<8xf32>
    %118 = vector.multi_reduction <add>, %117, %cst_36 [1] : vector<8x8xf32> to vector<8xf32>
    %119 = vector.shape_cast %118 : vector<8xf32> to vector<8x1xf32>
    %120 = tpu.reciprocal %119 {approx = true} : vector<8x1xf32> -> vector<8x1xf32>
    %121 = vector.broadcast %120 : vector<8x1xf32> to vector<8x8xf32>
    %122 = arith.mulf %117, %121 : vector<8x8xf32>
    %123 = arith.truncf %122 : vector<8x8xf32> to vector<8x8xbf16>
    %124 = vector.extract_strided_slice %40 {offsets = [0, 192], sizes = [8, 64], strides = [1, 1]} : vector<8x384xf32> to vector<8x64xf32>
    %125 = arith.truncf %124 : vector<8x64xf32> to vector<8x64xbf16>
    %cst_37 = arith.constant dense<0.000000e+00> : vector<8x64xf32>
    %126 = tpu.matmul %123, %125, %cst_37 {dimension_numbers = #tpu.dot_dimension_numbers<[1], [0], [0], [1], [0, 0, 1, 1], [], []>} : vector<8x8xbf16>, vector<8x64xbf16>, vector<8x64xf32> -> vector<8x64xf32>
    %127 = arith.truncf %126 : vector<8x64xf32> to vector<8x64xbf16>
    %c0_38 = arith.constant 0 : index
    %c192 = arith.constant 192 : index
    %128 = vector.load %arg20[%c0_38, %c192] : memref<8x384xbf16, #tpu.memory_space<vmem>>, vector<8x64xbf16>
    tpu.vector_store %arg20[%c0_38, %c192], %127 {strides = array<i32>} : memref<8x384xbf16, #tpu.memory_space<vmem>>, vector<8x64xbf16>,
    %129 = vector.extract_strided_slice %38 {offsets = [0, 256], sizes = [8, 64], strides = [1, 1]} : vector<8x384xf32> to vector<8x64xf32>
    %130 = arith.truncf %129 : vector<8x64xf32> to vector<8x64xbf16>
    %131 = vector.extract_strided_slice %39 {offsets = [0, 256], sizes = [8, 64], strides = [1, 1]} : vector<8x384xf32> to vector<8x64xf32>
    %132 = arith.truncf %131 : vector<8x64xf32> to vector<8x64xbf16>
    "tpu.trace_start"() <{level = 10 : i32, message = "qd,kd->qk"}> : () -> ()
    %cst_39 = arith.constant dense<0.000000e+00> : vector<8x8xf32>
    %133 = tpu.matmul %130, %132, %cst_39 {dimension_numbers = #tpu.dot_dimension_numbers<[1], [1], [0], [0], [0, 0, 1, 0], [], []>} : vector<8x64xbf16>, vector<8x64xbf16>, vector<8x8xf32> -> vector<8x8xf32>
    "tpu.trace_stop"() : () -> ()
    %134 = arith.addf %133, %9 : vector<8x8xf32>
    %cst_40 = arith.constant dense<0xFF800000> : vector<8xf32>
    %135 = vector.multi_reduction <maximumf>, %134, %cst_40 [1] : vector<8x8xf32> to vector<8xf32>
    %136 = vector.shape_cast %135 : vector<8xf32> to vector<8x1xf32>
    %137 = vector.broadcast %136 : vector<8x1xf32> to vector<8x8xf32>
    %138 = arith.subf %134, %137 : vector<8x8xf32>
    %139 = math.exp %138 : vector<8x8xf32>
    %cst_41 = arith.constant dense<0.000000e+00> : vector<8xf32>
    %140 = vector.multi_reduction <add>, %139, %cst_41 [1] : vector<8x8xf32> to vector<8xf32>
    %141 = vector.shape_cast %140 : vector<8xf32> to vector<8x1xf32>
    %142 = tpu.reciprocal %141 {approx = true} : vector<8x1xf32> -> vector<8x1xf32>
    %143 = vector.broadcast %142 : vector<8x1xf32> to vector<8x8xf32>
    %144 = arith.mulf %139, %143 : vector<8x8xf32>
    %145 = arith.truncf %144 : vector<8x8xf32> to vector<8x8xbf16>
    %146 = vector.extract_strided_slice %40 {offsets = [0, 256], sizes = [8, 64], strides = [1, 1]} : vector<8x384xf32> to vector<8x64xf32>
    %147 = arith.truncf %146 : vector<8x64xf32> to vector<8x64xbf16>
    %cst_42 = arith.constant dense<0.000000e+00> : vector<8x64xf32>
    %148 = tpu.matmul %145, %147, %cst_42 {dimension_numbers = #tpu.dot_dimension_numbers<[1], [0], [0], [1], [0, 0, 1, 1], [], []>} : vector<8x8xbf16>, vector<8x64xbf16>, vector<8x64xf32> -> vector<8x64xf32>
    %149 = arith.truncf %148 : vector<8x64xf32> to vector<8x64xbf16>
    %c0_43 = arith.constant 0 : index
    %c256 = arith.constant 256 : index
    %150 = vector.load %arg20[%c0_43, %c256] : memref<8x384xbf16, #tpu.memory_space<vmem>>, vector<8x64xbf16>
    tpu.vector_store %arg20[%c0_43, %c256], %149 {strides = array<i32>} : memref<8x384xbf16, #tpu.memory_space<vmem>>, vector<8x64xbf16>,
    %151 = vector.extract_strided_slice %38 {offsets = [0, 320], sizes = [8, 64], strides = [1, 1]} : vector<8x384xf32> to vector<8x64xf32>
    %152 = arith.truncf %151 : vector<8x64xf32> to vector<8x64xbf16>
    %153 = vector.extract_strided_slice %39 {offsets = [0, 320], sizes = [8, 64], strides = [1, 1]} : vector<8x384xf32> to vector<8x64xf32>
    %154 = arith.truncf %153 : vector<8x64xf32> to vector<8x64xbf16>
    "tpu.trace_start"() <{level = 10 : i32, message = "qd,kd->qk"}> : () -> ()
    %cst_44 = arith.constant dense<0.000000e+00> : vector<8x8xf32>
    %155 = tpu.matmul %152, %154, %cst_44 {dimension_numbers = #tpu.dot_dimension_numbers<[1], [1], [0], [0], [0, 0, 1, 0], [], []>} : vector<8x64xbf16>, vector<8x64xbf16>, vector<8x8xf32> -> vector<8x8xf32>
    "tpu.trace_stop"() : () -> ()
    %156 = arith.addf %155, %9 : vector<8x8xf32>
    %cst_45 = arith.constant dense<0xFF800000> : vector<8xf32>
    %157 = vector.multi_reduction <maximumf>, %156, %cst_45 [1] : vector<8x8xf32> to vector<8xf32>
    %158 = vector.shape_cast %157 : vector<8xf32> to vector<8x1xf32>
    %159 = vector.broadcast %158 : vector<8x1xf32> to vector<8x8xf32>
    %160 = arith.subf %156, %159 : vector<8x8xf32>
    %161 = math.exp %160 : vector<8x8xf32>
    %cst_46 = arith.constant dense<0.000000e+00> : vector<8xf32>
    %162 = vector.multi_reduction <add>, %161, %cst_46 [1] : vector<8x8xf32> to vector<8xf32>
    %163 = vector.shape_cast %162 : vector<8xf32> to vector<8x1xf32>
    %164 = tpu.reciprocal %163 {approx = true} : vector<8x1xf32> -> vector<8x1xf32>
    %165 = vector.broadcast %164 : vector<8x1xf32> to vector<8x8xf32>
    %166 = arith.mulf %161, %165 : vector<8x8xf32>
    %167 = arith.truncf %166 : vector<8x8xf32> to vector<8x8xbf16>
    %168 = vector.extract_strided_slice %40 {offsets = [0, 320], sizes = [8, 64], strides = [1, 1]} : vector<8x384xf32> to vector<8x64xf32>
    %169 = arith.truncf %168 : vector<8x64xf32> to vector<8x64xbf16>
    %cst_47 = arith.constant dense<0.000000e+00> : vector<8x64xf32>
    %170 = tpu.matmul %167, %169, %cst_47 {dimension_numbers = #tpu.dot_dimension_numbers<[1], [0], [0], [1], [0, 0, 1, 1], [], []>} : vector<8x8xbf16>, vector<8x64xbf16>, vector<8x64xf32> -> vector<8x64xf32>
    %171 = arith.truncf %170 : vector<8x64xf32> to vector<8x64xbf16>
    %c0_48 = arith.constant 0 : index
    %c320 = arith.constant 320 : index
    %172 = vector.load %arg20[%c0_48, %c320] : memref<8x384xbf16, #tpu.memory_space<vmem>>, vector<8x64xbf16>
    tpu.vector_store %arg20[%c0_48, %c320], %171 {strides = array<i32>} : memref<8x384xbf16, #tpu.memory_space<vmem>>, vector<8x64xbf16>,
    %c0_49 = arith.constant 0 : index
    %c0_50 = arith.constant 0 : index
    %173 = vector.load %arg20[%c0_49, %c0_50] : memref<8x384xbf16, #tpu.memory_space<vmem>>, vector<8x384xbf16>
    %c0_51 = arith.constant 0 : index
    %c0_52 = arith.constant 0 : index
    %c0_53 = arith.constant 0 : index
    %174 = vector.load %arg6[%c0_51, %c0_52, %c0_53] : memref<1x384x384xbf16, #tpu.memory_space<vmem>>, vector<1x384x384xbf16>
    %175 = vector.shape_cast %174 : vector<1x384x384xbf16> to vector<384x384xbf16>
    %cst_54 = arith.constant dense<0.000000e+00> : vector<8x384xf32>
    %176 = tpu.matmul %173, %175, %cst_54 {dimension_numbers = #tpu.dot_dimension_numbers<[1], [0], [0], [1], [0, 0, 1, 1], [], []>} : vector<8x384xbf16>, vector<384x384xbf16>, vector<8x384xf32> -> vector<8x384xf32>
    %177 = arith.addf %3, %176 : vector<8x384xf32>
    %c0_55 = arith.constant 0 : index
    %c0_56 = arith.constant 0 : index
    %c0_57 = arith.constant 0 : index
    %178 = vector.load %arg7[%c0_55, %c0_56, %c0_57] : memref<1x1x384xf32, #tpu.memory_space<vmem>>, vector<1x1x384xf32>
    %179 = vector.shape_cast %178 : vector<1x1x384xf32> to vector<1x384xf32>
    %180 = vector.broadcast %179 : vector<1x384xf32> to vector<8x384xf32>
    %181 = arith.addf %177, %180 : vector<8x384xf32>
    %c0_58 = arith.constant 0 : index
    %c0_59 = arith.constant 0 : index
    %c0_60 = arith.constant 0 : index
    %182 = vector.load %arg8[%c0_58, %c0_59, %c0_60] : memref<1x1x384xf32, #tpu.memory_space<vmem>>, vector<1x1x384xf32>
    %183 = vector.shape_cast %182 : vector<1x1x384xf32> to vector<1x384xf32>
    %c0_61 = arith.constant 0 : index
    %c0_62 = arith.constant 0 : index
    %c0_63 = arith.constant 0 : index
    %184 = vector.load %arg9[%c0_61, %c0_62, %c0_63] : memref<1x1x384xf32, #tpu.memory_space<vmem>>, vector<1x1x384xf32>
    %185 = vector.shape_cast %184 : vector<1x1x384xf32> to vector<1x384xf32>
    %cst_64 = arith.constant dense<0.000000e+00> : vector<8xf32>
    %186 = vector.multi_reduction <add>, %181, %cst_64 [1] : vector<8x384xf32> to vector<8xf32>
    %187 = vector.shape_cast %186 : vector<8xf32> to vector<8x1xf32>
    %cst_65 = arith.constant 3.840000e+02 : f32
    %188 = vector.broadcast %cst_65 : f32 to vector<8x1xf32>
    %189 = arith.divf %187, %188 : vector<8x1xf32>
    %190 = vector.broadcast %189 : vector<8x1xf32> to vector<8x384xf32>
    %191 = arith.subf %181, %190 : vector<8x384xf32>
    %192 = arith.mulf %191, %191 : vector<8x384xf32>
    %cst_66 = arith.constant dense<0.000000e+00> : vector<8xf32>
    %193 = vector.multi_reduction <add>, %192, %cst_66 [1] : vector<8x384xf32> to vector<8xf32>
    %194 = vector.shape_cast %193 : vector<8xf32> to vector<8x1xf32>
    %cst_67 = arith.constant 3.840000e+02 : f32
    %195 = vector.broadcast %cst_67 : f32 to vector<8x1xf32>
    %196 = arith.divf %194, %195 : vector<8x1xf32>
    %cst_68 = arith.constant 9.99999974E-6 : f32
    %197 = vector.broadcast %cst_68 : f32 to vector<8x1xf32>
    %198 = arith.addf %196, %197 : vector<8x1xf32>
    %199 = math.rsqrt %198 : vector<8x1xf32>
    %200 = vector.broadcast %199 : vector<8x1xf32> to vector<8x384xf32>
    %201 = arith.mulf %191, %200 : vector<8x384xf32>
    %202 = vector.broadcast %183 : vector<1x384xf32> to vector<8x384xf32>
    %203 = arith.mulf %201, %202 : vector<8x384xf32>
    %204 = vector.broadcast %185 : vector<1x384xf32> to vector<8x384xf32>
    %205 = arith.addf %203, %204 : vector<8x384xf32>
    %206 = arith.truncf %205 : vector<8x384xf32> to vector<8x384xbf16>
    %c0_69 = arith.constant 0 : index
    %c0_70 = arith.constant 0 : index
    %c0_71 = arith.constant 0 : index
    %207 = vector.load %arg10[%c0_69, %c0_70, %c0_71] : memref<1x384x1536xbf16, #tpu.memory_space<vmem>>, vector<1x384x1536xbf16>
    %208 = vector.shape_cast %207 : vector<1x384x1536xbf16> to vector<384x1536xbf16>
    %cst_72 = arith.constant dense<0.000000e+00> : vector<8x1536xf32>
    %209 = tpu.matmul %206, %208, %cst_72 {dimension_numbers = #tpu.dot_dimension_numbers<[1], [0], [0], [1], [0, 0, 1, 1], [], []>} : vector<8x384xbf16>, vector<384x1536xbf16>, vector<8x1536xf32> -> vector<8x1536xf32>
    %c0_73 = arith.constant 0 : index
    %c0_74 = arith.constant 0 : index
    %c0_75 = arith.constant 0 : index
    %210 = vector.load %arg11[%c0_73, %c0_74, %c0_75] : memref<1x1x1536xf32, #tpu.memory_space<vmem>>, vector<1x1x1536xf32>
    %211 = vector.shape_cast %210 : vector<1x1x1536xf32> to vector<1x1536xf32>
    %212 = vector.broadcast %211 : vector<1x1536xf32> to vector<8x1536xf32>
    %213 = arith.addf %209, %212 : vector<8x1536xf32>
    %cst_76 = arith.constant 5.000000e-01 : f32
    %214 = vector.broadcast %cst_76 : f32 to vector<8x1536xf32>
    %215 = arith.mulf %214, %213 : vector<8x1536xf32>
    %cst_77 = arith.constant 4.471500e-02 : f32
    %216 = vector.broadcast %cst_77 : f32 to vector<8x1536xf32>
    %217 = arith.mulf %216, %213 : vector<8x1536xf32>
    %218 = arith.mulf %217, %213 : vector<8x1536xf32>
    %219 = arith.mulf %218, %213 : vector<8x1536xf32>
    %220 = arith.addf %213, %219 : vector<8x1536xf32>
    %cst_78 = arith.constant 0.797884583 : f32
    %221 = vector.broadcast %cst_78 : f32 to vector<8x1536xf32>
    %222 = arith.mulf %221, %220 : vector<8x1536xf32>
    %223 = math.tanh %222 : vector<8x1536xf32>
    %cst_79 = arith.constant 1.000000e+00 : f32
    %224 = vector.broadcast %cst_79 : f32 to vector<8x1536xf32>
    %225 = arith.addf %224, %223 : vector<8x1536xf32>
    %226 = arith.mulf %215, %225 : vector<8x1536xf32>
    %227 = arith.truncf %226 : vector<8x1536xf32> to vector<8x1536xbf16>
    %c0_80 = arith.constant 0 : index
    %c0_81 = arith.constant 0 : index
    %c0_82 = arith.constant 0 : index
    %228 = vector.load %arg12[%c0_80, %c0_81, %c0_82] : memref<1x1536x384xbf16, #tpu.memory_space<vmem>>, vector<1x1536x384xbf16>
    %229 = vector.shape_cast %228 : vector<1x1536x384xbf16> to vector<1536x384xbf16>
    %cst_83 = arith.constant dense<0.000000e+00> : vector<8x384xf32>
    %230 = tpu.matmul %227, %229, %cst_83 {dimension_numbers = #tpu.dot_dimension_numbers<[1], [0], [0], [1], [0, 0, 1, 1], [], []>} : vector<8x1536xbf16>, vector<1536x384xbf16>, vector<8x384xf32> -> vector<8x384xf32>
    %231 = arith.addf %181, %230 : vector<8x384xf32>
    %c0_84 = arith.constant 0 : index
    %c0_85 = arith.constant 0 : index
    %c0_86 = arith.constant 0 : index
    %232 = vector.load %arg13[%c0_84, %c0_85, %c0_86] : memref<1x1x384xf32, #tpu.memory_space<vmem>>, vector<1x1x384xf32>
    %233 = vector.shape_cast %232 : vector<1x1x384xf32> to vector<1x384xf32>
    %234 = vector.broadcast %233 : vector<1x384xf32> to vector<8x384xf32>
    %235 = arith.addf %231, %234 : vector<8x384xf32>
    %c0_87 = arith.constant 0 : index
    %c0_88 = arith.constant 0 : index
    %236 = vector.load %arg19[%c0_87, %c0_88] : memref<8x384xf32, #tpu.memory_space<vmem>>, vector<8x384xf32>
    tpu.vector_store %arg19[%c0_87, %c0_88], %235 {strides = array<i32>} : memref<8x384xf32, #tpu.memory_space<vmem>>, vector<8x384xf32>,
    %c5_i32 = arith.constant 5 : i32
    %237 = arith.cmpi eq, %arg1, %c5_i32 : i32
    %238 = arith.extui %237 : i1 to i32
    %c0_i32_89 = arith.constant 0 : i32
    %239 = arith.cmpi ne, %238, %c0_i32_89 : i32
    scf.if %239 {
      %c0_90 = arith.constant 0 : index
      %c0_91 = arith.constant 0 : index
      %240 = vector.load %arg14[%c0_90, %c0_91] : memref<1x384xf32, #tpu.memory_space<vmem>>, vector<1x384xf32>
      %c0_92 = arith.constant 0 : index
      %c0_93 = arith.constant 0 : index
      %241 = vector.load %arg15[%c0_92, %c0_93] : memref<1x384xf32, #tpu.memory_space<vmem>>, vector<1x384xf32>
      %cst_94 = arith.constant dense<0.000000e+00> : vector<8xf32>
      %242 = vector.multi_reduction <add>, %235, %cst_94 [1] : vector<8x384xf32> to vector<8xf32>
      %243 = vector.shape_cast %242 : vector<8xf32> to vector<8x1xf32>
      %cst_95 = arith.constant 3.840000e+02 : f32
      %244 = vector.broadcast %cst_95 : f32 to vector<8x1xf32>
      %245 = arith.divf %243, %244 : vector<8x1xf32>
      %246 = vector.broadcast %245 : vector<8x1xf32> to vector<8x384xf32>
      %247 = arith.subf %235, %246 : vector<8x384xf32>
      %248 = arith.mulf %247, %247 : vector<8x384xf32>
      %cst_96 = arith.constant dense<0.000000e+00> : vector<8xf32>
      %249 = vector.multi_reduction <add>, %248, %cst_96 [1] : vector<8x384xf32> to vector<8xf32>
      %250 = vector.shape_cast %249 : vector<8xf32> to vector<8x1xf32>
      %cst_97 = arith.constant 3.840000e+02 : f32
      %251 = vector.broadcast %cst_97 : f32 to vector<8x1xf32>
      %252 = arith.divf %250, %251 : vector<8x1xf32>
      %cst_98 = arith.constant 9.99999974E-6 : f32
      %253 = vector.broadcast %cst_98 : f32 to vector<8x1xf32>
      %254 = arith.addf %252, %253 : vector<8x1xf32>
      %255 = math.rsqrt %254 : vector<8x1xf32>
      %256 = vector.broadcast %255 : vector<8x1xf32> to vector<8x384xf32>
      %257 = arith.mulf %247, %256 : vector<8x384xf32>
      %258 = vector.broadcast %240 : vector<1x384xf32> to vector<8x384xf32>
      %259 = arith.mulf %257, %258 : vector<8x384xf32>
      %260 = vector.broadcast %241 : vector<1x384xf32> to vector<8x384xf32>
      %261 = arith.addf %259, %260 : vector<8x384xf32>
      %262 = arith.truncf %261 : vector<8x384xf32> to vector<8x384xbf16>
      %c0_99 = arith.constant 0 : index
      %c0_100 = arith.constant 0 : index
      %263 = vector.load %arg16[%c0_99, %c0_100] : memref<384x128xbf16, #tpu.memory_space<vmem>>, vector<384x128xbf16>
      %cst_101 = arith.constant dense<0.000000e+00> : vector<8x128xf32>
      %264 = tpu.matmul %262, %263, %cst_101 {dimension_numbers = #tpu.dot_dimension_numbers<[1], [0], [0], [1], [0, 0, 1, 1], [], []>} : vector<8x384xbf16>, vector<384x128xbf16>, vector<8x128xf32> -> vector<8x128xf32>
      %c0_102 = arith.constant 0 : index
      %c0_103 = arith.constant 0 : index
      %265 = vector.load %arg17[%c0_102, %c0_103] : memref<1x128xf32, #tpu.memory_space<vmem>>, vector<1x128xf32>
      %266 = vector.broadcast %265 : vector<1x128xf32> to vector<8x128xf32>
      %267 = arith.addf %264, %266 : vector<8x128xf32>
      %268 = vector.shape_cast %267 : vector<8x128xf32> to vector<1x8x128xf32>
      %c0_104 = arith.constant 0 : index
      %c0_105 = arith.constant 0 : index
      %c0_106 = arith.constant 0 : index
      %269 = vector.load %arg18[%c0_104, %c0_105, %c0_106] : memref<1x8x128xf32, #tpu.memory_space<vmem>>, vector<1x8x128xf32>
      tpu.vector_store %arg18[%c0_104, %c0_105, %c0_106], %268 {strides = array<i32>} : memref<1x8x128xf32, #tpu.memory_space<vmem>>, vector<1x8x128xf32>,
    } else {
    }
    return
  }
  func.func @transform_0(%arg0: i32, %arg1: i32) -> (i32, i32, i32) {
    %c0_i32 = arith.constant 0 : i32
    %c0_i32_0 = arith.constant 0 : i32
    %c0_i32_1 = arith.constant 0 : i32
    return %arg0, %c0_i32, %c0_i32_0 : i32, i32, i32
  }
  func.func @transform_1(%arg0: i32, %arg1: i32) -> (i32, i32, i32) {
    %c0_i32 = arith.constant 0 : i32
    %c0_i32_0 = arith.constant 0 : i32
    %c0_i32_1 = arith.constant 0 : i32
    return %arg1, %c0_i32, %c0_i32_0 : i32, i32, i32
  }
  func.func @transform_2(%arg0: i32, %arg1: i32) -> (i32, i32, i32) {
    %c0_i32 = arith.constant 0 : i32
    %c0_i32_0 = arith.constant 0 : i32
    %c0_i32_1 = arith.constant 0 : i32
    return %arg1, %c0_i32, %c0_i32_0 : i32, i32, i32
  }
  func.func @transform_3(%arg0: i32, %arg1: i32) -> (i32, i32, i32) {
    %c0_i32 = arith.constant 0 : i32
    %c0_i32_0 = arith.constant 0 : i32
    %c0_i32_1 = arith.constant 0 : i32
    return %arg1, %c0_i32, %c0_i32_0 : i32, i32, i32
  }
  func.func @transform_4(%arg0: i32, %arg1: i32) -> (i32, i32, i32) {
    %c0_i32 = arith.constant 0 : i32
    %c0_i32_0 = arith.constant 0 : i32
    %c0_i32_1 = arith.constant 0 : i32
    return %arg1, %c0_i32, %c0_i32_0 : i32, i32, i32
  }
  func.func @transform_5(%arg0: i32, %arg1: i32) -> (i32, i32, i32) {
    %c0_i32 = arith.constant 0 : i32
    %c0_i32_0 = arith.constant 0 : i32
    %c0_i32_1 = arith.constant 0 : i32
    return %arg1, %c0_i32, %c0_i32_0 : i32, i32, i32
  }
  func.func @transform_6(%arg0: i32, %arg1: i32) -> (i32, i32, i32) {
    %c0_i32 = arith.constant 0 : i32
    %c0_i32_0 = arith.constant 0 : i32
    %c0_i32_1 = arith.constant 0 : i32
    return %arg1, %c0_i32, %c0_i32_0 : i32, i32, i32
  }
  func.func @transform_7(%arg0: i32, %arg1: i32) -> (i32, i32, i32) {
    %c0_i32 = arith.constant 0 : i32
    %c0_i32_0 = arith.constant 0 : i32
    %c0_i32_1 = arith.constant 0 : i32
    return %arg1, %c0_i32, %c0_i32_0 : i32, i32, i32
  }
  func.func @transform_8(%arg0: i32, %arg1: i32) -> (i32, i32, i32) {
    %c0_i32 = arith.constant 0 : i32
    %c0_i32_0 = arith.constant 0 : i32
    %c0_i32_1 = arith.constant 0 : i32
    return %arg1, %c0_i32, %c0_i32_0 : i32, i32, i32
  }
  func.func @transform_9(%arg0: i32, %arg1: i32) -> (i32, i32, i32) {
    %c0_i32 = arith.constant 0 : i32
    %c0_i32_0 = arith.constant 0 : i32
    %c0_i32_1 = arith.constant 0 : i32
    return %arg1, %c0_i32, %c0_i32_0 : i32, i32, i32
  }
  func.func @transform_10(%arg0: i32, %arg1: i32) -> (i32, i32, i32) {
    %c0_i32 = arith.constant 0 : i32
    %c0_i32_0 = arith.constant 0 : i32
    %c0_i32_1 = arith.constant 0 : i32
    return %arg1, %c0_i32, %c0_i32_0 : i32, i32, i32
  }
  func.func @transform_11(%arg0: i32, %arg1: i32) -> (i32, i32, i32) {
    %c0_i32 = arith.constant 0 : i32
    %c0_i32_0 = arith.constant 0 : i32
    %c0_i32_1 = arith.constant 0 : i32
    return %arg1, %c0_i32, %c0_i32_0 : i32, i32, i32
  }
  func.func @transform_12(%arg0: i32, %arg1: i32) -> (i32, i32) {
    %c0_i32 = arith.constant 0 : i32
    %c0_i32_0 = arith.constant 0 : i32
    %c0_i32_1 = arith.constant 0 : i32
    return %c0_i32, %c0_i32_0 : i32, i32
  }
  func.func @transform_13(%arg0: i32, %arg1: i32) -> (i32, i32) {
    %c0_i32 = arith.constant 0 : i32
    %c0_i32_0 = arith.constant 0 : i32
    %c0_i32_1 = arith.constant 0 : i32
    return %c0_i32, %c0_i32_0 : i32, i32
  }
  func.func @transform_14(%arg0: i32, %arg1: i32) -> (i32, i32) {
    %c0_i32 = arith.constant 0 : i32
    %c0_i32_0 = arith.constant 0 : i32
    %c0_i32_1 = arith.constant 0 : i32
    return %c0_i32, %c0_i32_0 : i32, i32
  }
  func.func @transform_15(%arg0: i32, %arg1: i32) -> (i32, i32) {
    %c0_i32 = arith.constant 0 : i32
    %c0_i32_0 = arith.constant 0 : i32
    %c0_i32_1 = arith.constant 0 : i32
    return %c0_i32, %c0_i32_0 : i32, i32
  }
  func.func @transform_16(%arg0: i32, %arg1: i32) -> (i32, i32, i32) {
    %c0_i32 = arith.constant 0 : i32
    %c0_i32_0 = arith.constant 0 : i32
    %c0_i32_1 = arith.constant 0 : i32
    return %arg0, %c0_i32, %c0_i32_0 : i32, i32, i32
  }
}

</mosaic_0001>

<llo_original>
// kernel: tpu_custom_call.1
$region0: #{tpu_custom_call.1}
  #allocation0 [shape = 'u32[]', space=smem, size = 0x4, offset = 0x4, fixed_abs, tag = 'smem constant byte address 0x4 - core index']
  #allocation1 [shape = 'u32[144,128]{1,0:T(1,128)}', space=vmem, size = 0x12000, scoped, tag = 'internal scratch']
  #allocation2 [shape = 'f32[8,384]{1,0:T(8,128)}', space=vmem, size = 0x3000, scoped, tag = 'scratch operand']
  #allocation3 [shape = 'bf16[8,384]{1,0:T(8,128)(2,1)}', space=vmem, size = 0x1800, scoped, tag = 'scratch operand']
  %s0 = inlined_call_operand.hbm [shape: f32[2,8,384], index: 0, kind: input, shape index: {}]
  %s1 = inlined_call_operand.hbm [shape: f32[6,1,384], index: 1, kind: input, shape index: {}]
  %s2 = inlined_call_operand.hbm [shape: f32[6,1,384], index: 2, kind: input, shape index: {}]
  %s3 = inlined_call_operand.hbm [shape: bf16[6,384,1152], index: 3, kind: input, shape index: {}]
  %s4 = inlined_call_operand.hbm [shape: bf16[6,384,384], index: 4, kind: input, shape index: {}]
  %s5 = inlined_call_operand.hbm [shape: f32[6,1,384], index: 5, kind: input, shape index: {}]
  %s6 = inlined_call_operand.hbm [shape: f32[6,1,384], index: 6, kind: input, shape index: {}]
  %s7 = inlined_call_operand.hbm [shape: f32[6,1,384], index: 7, kind: input, shape index: {}]
  %s8 = inlined_call_operand.hbm [shape: bf16[6,384,1536], index: 8, kind: input, shape index: {}]
  %s9 = inlined_call_operand.hbm [shape: f32[6,1,1536], index: 9, kind: input, shape index: {}]
  %s10 = inlined_call_operand.hbm [shape: bf16[6,1536,384], index: 10, kind: input, shape index: {}]
  %s11 = inlined_call_operand.hbm [shape: f32[6,1,384], index: 11, kind: input, shape index: {}]
  %s12 = inlined_call_operand.hbm [shape: f32[1,384], index: 12, kind: input, shape index: {}]
  %s13 = inlined_call_operand.hbm [shape: f32[1,384], index: 13, kind: input, shape index: {}]
  %s14 = inlined_call_operand.hbm [shape: bf16[384,128], index: 14, kind: input, shape index: {}]
  %s15 = inlined_call_operand.hbm [shape: f32[1,128], index: 15, kind: input, shape index: {}]
  %s16 = inlined_call_operand.hbm [shape: f32[2,8,128], index: 16, kind: output, shape index: {}]
  %s17 = sld [smem:[#allocation0]]
  $region169: #{tpu_custom_call.1} parent=0
    _
  %s19 = ssub.s32 1, %s17
  %s20 = scalar_select 0, %s19, %s17
  $region1: #{tpu_custom_call.1} parent=0
    #allocation4 [shape = 'u8[24576]{0}', space=vmem, size = 0x6000, scoped, tag = 'input window, operand 0']
    #allocation5 [shape = 's32[2]{0}', space=sflag, size = 0x8, scoped, tag = 'scoped memory for tpu_custom_call.1']
    #allocation6 [shape = 's32[2]{0}', space=sflag, size = 0x8, scoped, tag = 'scoped memory for tpu_custom_call.1']
    #allocation7 [shape = 'u8[3072]{0}', space=vmem, size = 0xc00, scoped, tag = 'input window, operand 1']
    #allocation8 [shape = 's32[2]{0}', space=sflag, size = 0x8, scoped, tag = 'scoped memory for tpu_custom_call.1']
    #allocation9 [shape = 'u8[3072]{0}', space=vmem, size = 0xc00, scoped, tag = 'input window, operand 2']
    #allocation10 [shape = 'u8[1769472]{0}', space=vmem, size = 0x1b0000, scoped, tag = 'input window, operand 3']
    #allocation11 [shape = 's32[2]{0}', space=sflag, size = 0x8, scoped, tag = 'scoped memory for tpu_custom_call.1']
    #allocation12 [shape = 'u8[589824]{0}', space=vmem, size = 0x90000, scoped, tag = 'input window, operand 4']
    #allocation13 [shape = 'u8[3072]{0}', space=vmem, size = 0xc00, scoped, tag = 'input window, operand 5']
    #allocation14 [shape = 's32[2]{0}', space=sflag, size = 0x8, scoped, tag = 'scoped memory for tpu_custom_call.1']
    #allocation15 [shape = 'u8[3072]{0}', space=vmem, size = 0xc00, scoped, tag = 'input window, operand 6']
    #allocation16 [shape = 'u8[3072]{0}', space=vmem, size = 0xc00, scoped, tag = 'input window, operand 7']
    #allocation17 [shape = 's32[2]{0}', space=sflag, size = 0x8, scoped, tag = 'scoped memory for tpu_custom_call.1']
    #allocation18 [shape = 'u8[2359296]{0}', space=vmem, size = 0x240000, scoped, tag = 'input window, operand 8']
    #allocation19 [shape = 'u8[12288]{0}', space=vmem, size = 0x3000, scoped, tag = 'input window, operand 9']
    #allocation20 [shape = 's32[2]{0}', space=sflag, size = 0x8, scoped, tag = 'scoped memory for tpu_custom_call.1']
    #allocation21 [shape = 'u8[2359296]{0}', space=vmem, size = 0x240000, scoped, tag = 'input window, operand 10']
    #allocation22 [shape = 'u8[3072]{0}', space=vmem, size = 0xc00, scoped, tag = 'input window, operand 11']
    #allocation23 [shape = 's32[2]{0}', space=sflag, size = 0x8, scoped, tag = 'scoped memory for tpu_custom_call.1']
    #allocation24 [shape = 'u8[1536]{0}', space=vmem, size = 0x800, scoped, tag = 'input window, operand 12, single buffered']
    #allocation25 [shape = 'u8[1536]{0}', space=vmem, size = 0x800, scoped, tag = 'input window, operand 13, single buffered']
    #allocation26 [shape = 's32[1]{0}', space=sflag, size = 0x4, scoped, tag = 'scoped memory for tpu_custom_call.1']
    #allocation27 [shape = 'u8[98304]{0}', space=vmem, size = 0x18000, scoped, tag = 'input window, operand 14, single buffered']
    #allocation28 [shape = 'u8[512]{0}', space=vmem, size = 0x400, scoped, tag = 'input window, operand 15, single buffered']
    #allocation29 [shape = 's32[1]{0}', space=sflag, size = 0x4, scoped, tag = 'scoped memory for tpu_custom_call.1']
    #allocation30 [shape = 'u8[8192]{0}', space=vmem, size = 0x2000, scoped, tag = 'output window, operand 0']
    %21 = vsyncpa [#allocation5], 0
    %s22 = scalar_lea.sflag [#allocation5], 1
    %23 = vsyncpa %s22, 0
    %24 = vsyncpa [#allocation8], 0
    %s25 = scalar_lea.sflag [#allocation8], 1
    %26 = vsyncpa %s25, 0
    %27 = vsyncpa [#allocation11], 0
    %s28 = scalar_lea.sflag [#allocation11], 1
    %29 = vsyncpa %s28, 0
    %30 = vsyncpa [#allocation14], 0
    %s31 = scalar_lea.sflag [#allocation14], 1
    %32 = vsyncpa %s31, 0
    %33 = vsyncpa [#allocation17], 0
    %s34 = scalar_lea.sflag [#allocation17], 1
    %35 = vsyncpa %s34, 0
    %36 = vsyncpa [#allocation20], 0
    %s37 = scalar_lea.sflag [#allocation20], 1
    %38 = vsyncpa %s37, 0
    %39 = vsyncpa [#allocation23], 0
    %s40 = scalar_lea.sflag [#allocation23], 1
    %41 = vsyncpa %s40, 0
    %42 = vsyncpa [#allocation26], 0
    %43 = vsyncpa [#allocation29], 0
    %44 = vsyncpa [#allocation6], 0
    %s45 = scalar_lea.sflag [#allocation6], 1
    %46 = vsyncpa %s45, 0
    loop: start=0, step=1, limit=14
    $region2: #{tpu_custom_call.1} parent=1 // loop_pre_header
      _
    $region3: #{tpu_custom_call.1} parent=1 // loop_header
      %s48 = sphi 0, %s52
      %p49 = scmp.ge.s32.totalorder %s48, 14
      %s55 = sphi 0, %s67
      %s56 = sphi 0, %s63
      %s57 = sphi 0, %s55
      %s58 = sphi 0, %s56
      %s59 = sphi 0, %s57
      %s60 = sphi 0, %s58
      %s70 = sphi 0, %s72
      %s73 = sphi 0, %s70
      %s74 = sphi 0, %s73
      %s90 = sphi 0, %s74
      %s96 = sphi 0, %s98
      %s99 = sphi 0, %s96
      %s100 = sphi 0, %s99
      %s116 = sphi 0, %s100
      %s122 = sphi 0, %s124
      %s125 = sphi 0, %s122
      %s126 = sphi 0, %s125
      %s142 = sphi 0, %s126
      %s148 = sphi 0, %s150
      %s151 = sphi 0, %s148
      %s152 = sphi 0, %s151
      %s168 = sphi 0, %s152
      %s174 = sphi 0, %s176
      %s177 = sphi 0, %s174
      %s178 = sphi 0, %s177
      %s194 = sphi 0, %s178
      %s200 = sphi 0, %s202
      %s203 = sphi 0, %s200
      %s204 = sphi 0, %s203
      %s220 = sphi 0, %s204
      %s226 = sphi 0, %s228
      %s229 = sphi 0, %s226
      %s230 = sphi 0, %s229
      %s246 = sphi 0, %s230
      %s252 = sphi 0, %s254
      %s255 = sphi 0, %s252
      %s256 = sphi 0, %s255
      %s272 = sphi 0, %s256
      %s278 = sphi 0, %s280
      %s281 = sphi 0, %s278
      %s282 = sphi 0, %s281
      %s298 = sphi 0, %s282
      %s304 = sphi 0, %s306
      %s307 = sphi 0, %s304
      %s308 = sphi 0, %s307
      %s324 = sphi 0, %s308
      %s330 = sphi 0, %s332
      %s333 = sphi 0, %s330
      %s334 = sphi 0, %s333
      %s350 = sphi 0, %s334
      %s356 = sphi 0, %s358
      %s359 = sphi 0, %s356
      %s360 = sphi 0, %s359
      %s376 = sphi 0, %s360
      %s380 = sphi 0, %s380
      %s382 = sphi 0, %s380
      %s383 = sphi 0, %s382
      %s397 = sphi 0, %s383
      %s401 = sphi 0, %s401
      %s403 = sphi 0, %s401
      %s404 = sphi 0, %s403
      %s418 = sphi 0, %s404
      %s422 = sphi 0, %s422
      %s424 = sphi 0, %s422
      %s425 = sphi 0, %s424
      %s439 = sphi 0, %s425
      %s443 = sphi 0, %s443
      %s445 = sphi 0, %s443
      %s446 = sphi 0, %s445
      %s460 = sphi 0, %s446
      %s466 = sphi 0, %s468
      %s469 = sphi 0, %s466
      %s470 = sphi 0, %s469
      %s486 = sphi 0, %s470
    $region4: #{tpu_custom_call.1} parent=1 // loop_header_branch
      %51 = sbr.rel (%p49) target = $region8
    $region5: #{tpu_custom_call.1} parent=1 // loop_body
      %s53 = ssub.s32 %s48, 1
      %s54 = ssub.s32 %s48, 2
      %s61 = sadd.s32 1, %s56
      %p62 = scmp.ge.s32.totalorder %s61, 6
      %s63 = scalar_select %p62, 0, %s61
      %s64 = sadd.s32 1, %s55
      %s65 = scalar_select %p62, %s64, %s55
      %p66 = scmp.ge.s32.totalorder %s65, 2
      %s67 = scalar_select %p66, 0, %s65
      %s68 = ssub.s32 %s55, %s67
      %p69 = scmp.eq.s32.totalorder %s68, 0
      %s71 = sadd.s32 %s70, 1
      %s72 = scalar_select %p69, %s70, %s71
      %p75 = pneg %p69
      %p76 = scmp.eq.s32.totalorder %s48, 11
      %p77 = por %p75, %p76
      %p78 = scmp.ne.s32.totalorder %s70, %s73
      %p79 = scmp.eq.s32.totalorder %s48, 0
      %p80 = por %p78, %p79
      %p81 = scmp.ne.s32.totalorder %s70, %s73
      %p82 = scmp.eq.s32.totalorder %s53, 11
      %p83 = por %p81, %p82
      %p84 = scmp.ne.s32.totalorder %s73, %s74
      %p85 = scmp.eq.s32.totalorder %s53, 0
      %p86 = por %p84, %p85
      %p87 = scmp.ne.s32.totalorder %s73, %s74
      %p88 = scmp.eq.s32.totalorder %s54, 11
      %p89 = por %p87, %p88
      %p91 = scmp.ne.s32.totalorder %s74, %s90
      %p92 = scmp.eq.s32.totalorder %s54, 0
      %p93 = por %p91, %p92
      %s94 = ssub.s32 %s56, %s63
      %p95 = scmp.eq.s32.totalorder %s94, 0
      %s97 = sadd.s32 %s96, 1
      %s98 = scalar_select %p95, %s96, %s97
      %p101 = pneg %p95
      %p102 = scmp.eq.s32.totalorder %s48, 11
      %p103 = por %p101, %p102
      %p104 = scmp.ne.s32.totalorder %s96, %s99
      %p105 = scmp.eq.s32.totalorder %s48, 0
      %p106 = por %p104, %p105
      %p107 = scmp.ne.s32.totalorder %s96, %s99
      %p108 = scmp.eq.s32.totalorder %s53, 11
      %p109 = por %p107, %p108
      %p110 = scmp.ne.s32.totalorder %s99, %s100
      %p111 = scmp.eq.s32.totalorder %s53, 0
      %p112 = por %p110, %p111
      %p113 = scmp.ne.s32.totalorder %s99, %s100
      %p114 = scmp.eq.s32.totalorder %s54, 11
      %p115 = por %p113, %p114
      %p117 = scmp.ne.s32.totalorder %s100, %s116
      %p118 = scmp.eq.s32.totalorder %s54, 0
      %p119 = por %p117, %p118
      %s120 = ssub.s32 %s56, %s63
      %p121 = scmp.eq.s32.totalorder %s120, 0
      %s123 = sadd.s32 %s122, 1
      %s124 = scalar_select %p121, %s122, %s123
      %p127 = pneg %p121
      %p128 = scmp.eq.s32.totalorder %s48, 11
      %p129 = por %p127, %p128
      %p130 = scmp.ne.s32.totalorder %s122, %s125
      %p131 = scmp.eq.s32.totalorder %s48, 0
      %p132 = por %p130, %p131
      %p133 = scmp.ne.s32.totalorder %s122, %s125
      %p134 = scmp.eq.s32.totalorder %s53, 11
      %p135 = por %p133, %p134
      %p136 = scmp.ne.s32.totalorder %s125, %s126
      %p137 = scmp.eq.s32.totalorder %s53, 0
      %p138 = por %p136, %p137
      %p139 = scmp.ne.s32.totalorder %s125, %s126
      %p140 = scmp.eq.s32.totalorder %s54, 11
      %p141 = por %p139, %p140
      %p143 = scmp.ne.s32.totalorder %s126, %s142
      %p144 = scmp.eq.s32.totalorder %s54, 0
      %p145 = por %p143, %p144
      %s146 = ssub.s32 %s56, %s63
      %p147 = scmp.eq.s32.totalorder %s146, 0
      %s149 = sadd.s32 %s148, 1
      %s150 = scalar_select %p147, %s148, %s149
      %p153 = pneg %p147
      %p154 = scmp.eq.s32.totalorder %s48, 11
      %p155 = por %p153, %p154
      %p156 = scmp.ne.s32.totalorder %s148, %s151
      %p157 = scmp.eq.s32.totalorder %s48, 0
      %p158 = por %p156, %p157
      %p159 = scmp.ne.s32.totalorder %s148, %s151
      %p160 = scmp.eq.s32.totalorder %s53, 11
      %p161 = por %p159, %p160
      %p162 = scmp.ne.s32.totalorder %s151, %s152
      %p163 = scmp.eq.s32.totalorder %s53, 0
      %p164 = por %p162, %p163
      %p165 = scmp.ne.s32.totalorder %s151, %s152
      %p166 = scmp.eq.s32.totalorder %s54, 11
      %p167 = por %p165, %p166
      %p169 = scmp.ne.s32.totalorder %s152, %s168
      %p170 = scmp.eq.s32.totalorder %s54, 0
      %p171 = por %p169, %p170
      %s172 = ssub.s32 %s56, %s63
      %p173 = scmp.eq.s32.totalorder %s172, 0
      %s175 = sadd.s32 %s174, 1
      %s176 = scalar_select %p173, %s174, %s175
      %p179 = pneg %p173
      %p180 = scmp.eq.s32.totalorder %s48, 11
      %p181 = por %p179, %p180
      %p182 = scmp.ne.s32.totalorder %s174, %s177
      %p183 = scmp.eq.s32.totalorder %s48, 0
      %p184 = por %p182, %p183
      %p185 = scmp.ne.s32.totalorder %s174, %s177
      %p186 = scmp.eq.s32.totalorder %s53, 11
      %p187 = por %p185, %p186
      %p188 = scmp.ne.s32.totalorder %s177, %s178
      %p189 = scmp.eq.s32.totalorder %s53, 0
      %p190 = por %p188, %p189
      %p191 = scmp.ne.s32.totalorder %s177, %s178
      %p192 = scmp.eq.s32.totalorder %s54, 11
      %p193 = por %p191, %p192
      %p195 = scmp.ne.s32.totalorder %s178, %s194
      %p196 = scmp.eq.s32.totalorder %s54, 0
      %p197 = por %p195, %p196
      %s198 = ssub.s32 %s56, %s63
      %p199 = scmp.eq.s32.totalorder %s198, 0
      %s201 = sadd.s32 %s200, 1
      %s202 = scalar_select %p199, %s200, %s201
      %p205 = pneg %p199
      %p206 = scmp.eq.s32.totalorder %s48, 11
      %p207 = por %p205, %p206
      %p208 = scmp.ne.s32.totalorder %s200, %s203
      %p209 = scmp.eq.s32.totalorder %s48, 0
      %p210 = por %p208, %p209
      %p211 = scmp.ne.s32.totalorder %s200, %s203
      %p212 = scmp.eq.s32.totalorder %s53, 11
      %p213 = por %p211, %p212
      %p214 = scmp.ne.s32.totalorder %s203, %s204
      %p215 = scmp.eq.s32.totalorder %s53, 0
      %p216 = por %p214, %p215
      %p217 = scmp.ne.s32.totalorder %s203, %s204
      %p218 = scmp.eq.s32.totalorder %s54, 11
      %p219 = por %p217, %p218
      %p221 = scmp.ne.s32.totalorder %s204, %s220
      %p222 = scmp.eq.s32.totalorder %s54, 0
      %p223 = por %p221, %p222
      %s224 = ssub.s32 %s56, %s63
      %p225 = scmp.eq.s32.totalorder %s224, 0
      %s227 = sadd.s32 %s226, 1
      %s228 = scalar_select %p225, %s226, %s227
      %p231 = pneg %p225
      %p232 = scmp.eq.s32.totalorder %s48, 11
      %p233 = por %p231, %p232
      %p234 = scmp.ne.s32.totalorder %s226, %s229
      %p235 = scmp.eq.s32.totalorder %s48, 0
      %p236 = por %p234, %p235
      %p237 = scmp.ne.s32.totalorder %s226, %s229
      %p238 = scmp.eq.s32.totalorder %s53, 11
      %p239 = por %p237, %p238
      %p240 = scmp.ne.s32.totalorder %s229, %s230
      %p241 = scmp.eq.s32.totalorder %s53, 0
      %p242 = por %p240, %p241
      %p243 = scmp.ne.s32.totalorder %s229, %s230
      %p244 = scmp.eq.s32.totalorder %s54, 11
      %p245 = por %p243, %p244
      %p247 = scmp.ne.s32.totalorder %s230, %s246
      %p248 = scmp.eq.s32.totalorder %s54, 0
      %p249 = por %p247, %p248
      %s250 = ssub.s32 %s56, %s63
      %p251 = scmp.eq.s32.totalorder %s250, 0
      %s253 = sadd.s32 %s252, 1
      %s254 = scalar_select %p251, %s252, %s253
      %p257 = pneg %p251
      %p258 = scmp.eq.s32.totalorder %s48, 11
      %p259 = por %p257, %p258
      %p260 = scmp.ne.s32.totalorder %s252, %s255
      %p261 = scmp.eq.s32.totalorder %s48, 0
      %p262 = por %p260, %p261
      %p263 = scmp.ne.s32.totalorder %s252, %s255
      %p264 = scmp.eq.s32.totalorder %s53, 11
      %p265 = por %p263, %p264
      %p266 = scmp.ne.s32.totalorder %s255, %s256
      %p267 = scmp.eq.s32.totalorder %s53, 0
      %p268 = por %p266, %p267
      %p269 = scmp.ne.s32.totalorder %s255, %s256
      %p270 = scmp.eq.s32.totalorder %s54, 11
      %p271 = por %p269, %p270
      %p273 = scmp.ne.s32.totalorder %s256, %s272
      %p274 = scmp.eq.s32.totalorder %s54, 0
      %p275 = por %p273, %p274
      %s276 = ssub.s32 %s56, %s63
      %p277 = scmp.eq.s32.totalorder %s276, 0
      %s279 = sadd.s32 %s278, 1
      %s280 = scalar_select %p277, %s278, %s279
      %p283 = pneg %p277
      %p284 = scmp.eq.s32.totalorder %s48, 11
      %p285 = por %p283, %p284
      %p286 = scmp.ne.s32.totalorder %s278, %s281
      %p287 = scmp.eq.s32.totalorder %s48, 0
      %p288 = por %p286, %p287
      %p289 = scmp.ne.s32.totalorder %s278, %s281
      %p290 = scmp.eq.s32.totalorder %s53, 11
      %p291 = por %p289, %p290
      %p292 = scmp.ne.s32.totalorder %s281, %s282
      %p293 = scmp.eq.s32.totalorder %s53, 0
      %p294 = por %p292, %p293
      %p295 = scmp.ne.s32.totalorder %s281, %s282
      %p296 = scmp.eq.s32.totalorder %s54, 11
      %p297 = por %p295, %p296
      %p299 = scmp.ne.s32.totalorder %s282, %s298
      %p300 = scmp.eq.s32.totalorder %s54, 0
      %p301 = por %p299, %p300
      %s302 = ssub.s32 %s56, %s63
      %p303 = scmp.eq.s32.totalorder %s302, 0
      %s305 = sadd.s32 %s304, 1
      %s306 = scalar_select %p303, %s304, %s305
      %p309 = pneg %p303
      %p310 = scmp.eq.s32.totalorder %s48, 11
      %p311 = por %p309, %p310
      %p312 = scmp.ne.s32.totalorder %s304, %s307
      %p313 = scmp.eq.s32.totalorder %s48, 0
      %p314 = por %p312, %p313
      %p315 = scmp.ne.s32.totalorder %s304, %s307
      %p316 = scmp.eq.s32.totalorder %s53, 11
      %p317 = por %p315, %p316
      %p318 = scmp.ne.s32.totalorder %s307, %s308
      %p319 = scmp.eq.s32.totalorder %s53, 0
      %p320 = por %p318, %p319
      %p321 = scmp.ne.s32.totalorder %s307, %s308
      %p322 = scmp.eq.s32.totalorder %s54, 11
      %p323 = por %p321, %p322
      %p325 = scmp.ne.s32.totalorder %s308, %s324
      %p326 = scmp.eq.s32.totalorder %s54, 0
      %p327 = por %p325, %p326
      %s328 = ssub.s32 %s56, %s63
      %p329 = scmp.eq.s32.totalorder %s328, 0
      %s331 = sadd.s32 %s330, 1
      %s332 = scalar_select %p329, %s330, %s331
      %p335 = pneg %p329
      %p336 = scmp.eq.s32.totalorder %s48, 11
      %p337 = por %p335, %p336
      %p338 = scmp.ne.s32.totalorder %s330, %s333
      %p339 = scmp.eq.s32.totalorder %s48, 0
      %p340 = por %p338, %p339
      %p341 = scmp.ne.s32.totalorder %s330, %s333
      %p342 = scmp.eq.s32.totalorder %s53, 11
      %p343 = por %p341, %p342
      %p344 = scmp.ne.s32.totalorder %s333, %s334
      %p345 = scmp.eq.s32.totalorder %s53, 0
      %p346 = por %p344, %p345
      %p347 = scmp.ne.s32.totalorder %s333, %s334
      %p348 = scmp.eq.s32.totalorder %s54, 11
      %p349 = por %p347, %p348
      %p351 = scmp.ne.s32.totalorder %s334, %s350
      %p352 = scmp.eq.s32.totalorder %s54, 0
      %p353 = por %p351, %p352
      %s354 = ssub.s32 %s56, %s63
      %p355 = scmp.eq.s32.totalorder %s354, 0
      %s357 = sadd.s32 %s356, 1
      %s358 = scalar_select %p355, %s356, %s357
      %p361 = pneg %p355
      %p362 = scmp.eq.s32.totalorder %s48, 11
      %p363 = por %p361, %p362
      %p364 = scmp.ne.s32.totalorder %s356, %s359
      %p365 = scmp.eq.s32.totalorder %s48, 0
      %p366 = por %p364, %p365
      %p367 = scmp.ne.s32.totalorder %s356, %s359
      %p368 = scmp.eq.s32.totalorder %s53, 11
      %p369 = por %p367, %p368
      %p370 = scmp.ne.s32.totalorder %s359, %s360
      %p371 = scmp.eq.s32.totalorder %s53, 0
      %p372 = por %p370, %p371
      %p373 = scmp.ne.s32.totalorder %s359, %s360
      %p374 = scmp.eq.s32.totalorder %s54, 11
      %p375 = por %p373, %p374
      %p377 = scmp.ne.s32.totalorder %s360, %s376
      %p378 = scmp.eq.s32.totalorder %s54, 0
      %p379 = por %p377, %p378
      %s381 = sadd.s32 %s380, 1
      %p384 = scmp.eq.s32.totalorder %s48, 11
      %p385 = scmp.ne.s32.totalorder %s380, %s382
      %p386 = scmp.eq.s32.totalorder %s48, 0
      %p387 = por %p385, %p386
      %p388 = scmp.ne.s32.totalorder %s380, %s382
      %p389 = scmp.eq.s32.totalorder %s53, 11
      %p390 = por %p388, %p389
      %p391 = scmp.ne.s32.totalorder %s382, %s383
      %p392 = scmp.eq.s32.totalorder %s53, 0
      %p393 = por %p391, %p392
      %p394 = scmp.ne.s32.totalorder %s382, %s383
      %p395 = scmp.eq.s32.totalorder %s54, 11
      %p396 = por %p394, %p395
      %p398 = scmp.ne.s32.totalorder %s383, %s397
      %p399 = scmp.eq.s32.totalorder %s54, 0
      %p400 = por %p398, %p399
      %s402 = sadd.s32 %s401, 1
      %p405 = scmp.eq.s32.totalorder %s48, 11
      %p406 = scmp.ne.s32.totalorder %s401, %s403
      %p407 = scmp.eq.s32.totalorder %s48, 0
      %p408 = por %p406, %p407
      %p409 = scmp.ne.s32.totalorder %s401, %s403
      %p410 = scmp.eq.s32.totalorder %s53, 11
      %p411 = por %p409, %p410
      %p412 = scmp.ne.s32.totalorder %s403, %s404
      %p413 = scmp.eq.s32.totalorder %s53, 0
      %p414 = por %p412, %p413
      %p415 = scmp.ne.s32.totalorder %s403, %s404
      %p416 = scmp.eq.s32.totalorder %s54, 11
      %p417 = por %p415, %p416
      %p419 = scmp.ne.s32.totalorder %s404, %s418
      %p420 = scmp.eq.s32.totalorder %s54, 0
      %p421 = por %p419, %p420
      %s423 = sadd.s32 %s422, 1
      %p426 = scmp.eq.s32.totalorder %s48, 11
      %p427 = scmp.ne.s32.totalorder %s422, %s424
      %p428 = scmp.eq.s32.totalorder %s48, 0
      %p429 = por %p427, %p428
      %p430 = scmp.ne.s32.totalorder %s422, %s424
      %p431 = scmp.eq.s32.totalorder %s53, 11
      %p432 = por %p430, %p431
      %p433 = scmp.ne.s32.totalorder %s424, %s425
      %p434 = scmp.eq.s32.totalorder %s53, 0
      %p435 = por %p433, %p434
      %p436 = scmp.ne.s32.totalorder %s424, %s425
      %p437 = scmp.eq.s32.totalorder %s54, 11
      %p438 = por %p436, %p437
      %p440 = scmp.ne.s32.totalorder %s425, %s439
      %p441 = scmp.eq.s32.totalorder %s54, 0
      %p442 = por %p440, %p441
      %s444 = sadd.s32 %s443, 1
      %p447 = scmp.eq.s32.totalorder %s48, 11
      %p448 = scmp.ne.s32.totalorder %s443, %s445
      %p449 = scmp.eq.s32.totalorder %s48, 0
      %p450 = por %p448, %p449
      %p451 = scmp.ne.s32.totalorder %s443, %s445
      %p452 = scmp.eq.s32.totalorder %s53, 11
      %p453 = por %p451, %p452
      %p454 = scmp.ne.s32.totalorder %s445, %s446
      %p455 = scmp.eq.s32.totalorder %s53, 0
      %p456 = por %p454, %p455
      %p457 = scmp.ne.s32.totalorder %s445, %s446
      %p458 = scmp.eq.s32.totalorder %s54, 11
      %p459 = por %p457, %p458
      %p461 = scmp.ne.s32.totalorder %s446, %s460
      %p462 = scmp.eq.s32.totalorder %s54, 0
      %p463 = por %p461, %p462
      %s464 = ssub.s32 %s55, %s67
      %p465 = scmp.eq.s32.totalorder %s464, 0
      %s467 = sadd.s32 %s466, 1
      %s468 = scalar_select %p465, %s466, %s467
      %p471 = pneg %p465
      %p472 = scmp.eq.s32.totalorder %s48, 11
      %p473 = por %p471, %p472
      %p474 = scmp.ne.s32.totalorder %s466, %s469
      %p475 = scmp.eq.s32.totalorder %s48, 0
      %p476 = por %p474, %p475
      %p477 = scmp.ne.s32.totalorder %s466, %s469
      %p478 = scmp.eq.s32.totalorder %s53, 11
      %p479 = por %p477, %p478
      %p480 = scmp.ne.s32.totalorder %s469, %s470
      %p481 = scmp.eq.s32.totalorder %s53, 0
      %p482 = por %p480, %p481
      %p483 = scmp.ne.s32.totalorder %s469, %s470
      %p484 = scmp.eq.s32.totalorder %s54, 11
      %p485 = por %p483, %p484
      %p487 = scmp.ne.s32.totalorder %s470, %s486
      %p488 = scmp.eq.s32.totalorder %s54, 0
      %p489 = por %p487, %p488
      %p490 = scmp.le.s32.totalorder 1, %s48
      %p491 = scmp.lt.s32.totalorder %s48, 13
      %p492 = pnand %p490, %p491
      %p493 = pneg %p492
      // Predicated region
      $region9: #{tpu_custom_call.1} parent=5 // pred_check
        _
      $region10: #{tpu_custom_call.1} parent=5 // pred_check_branch
        %495 = sbr.rel (%p492) target = $region12
      $region11: #{tpu_custom_call.1} parent=5 // pred_region
        %s496 = ssub.s32 %s48, 1
        // Predicated region
        $region13: #{tpu_custom_call.1} parent=11 // pred_check
          %p497 = pneg %p393
        $region14: #{tpu_custom_call.1} parent=11 // pred_check_branch
          %499 = sbr.rel (%p497) target = $region16
        $region15: #{tpu_custom_call.1} parent=11 // pred_region
          %s501 = ssub.s32 48, 48
          %502 = vsyncadd [#allocation23], %s501
          %s504 = sshll.u32 [#allocation24], 4
          %s505 = int_to_ptr.vmem [resolvable:$true] %s504
          %507 = dma.hbm_to_vmem [thread:$0]  %s12, 48, %s505, [#allocation23]
        $region16: #{tpu_custom_call.1} parent=11 // pred_fallthru
          _
        // Predicated region
        $region17: #{tpu_custom_call.1} parent=11 // pred_check
          %p508 = pneg %p414
        $region18: #{tpu_custom_call.1} parent=11 // pred_check_branch
          %510 = sbr.rel (%p508) target = $region20
        $region19: #{tpu_custom_call.1} parent=11 // pred_region
          %s512 = ssub.s32 48, 48
          %513 = vsyncadd [#allocation26], %s512
          %s515 = sshll.u32 [#allocation25], 4
          %s516 = int_to_ptr.vmem [resolvable:$true] %s515
          %518 = dma.hbm_to_vmem [thread:$0]  %s13, 48, %s516, [#allocation26]
        $region20: #{tpu_custom_call.1} parent=11 // pred_fallthru
          _
        // Predicated region
        $region21: #{tpu_custom_call.1} parent=11 // pred_check
          %p519 = pneg %p435
        $region22: #{tpu_custom_call.1} parent=11 // pred_check_branch
          %521 = sbr.rel (%p519) target = $region24
        $region23: #{tpu_custom_call.1} parent=11 // pred_region
          %s523 = ssub.s32 3072, 3072
          %524 = vsyncadd [#allocation26], %s523
          %s525 = sshll.u32 [#allocation27], 4
          %s526 = int_to_ptr.vmem [resolvable:$true] %s525
          %531 = dma.hbm_to_vmem [thread:$0]  %s14, 3072, %s526, [#allocation26], 64, 64, 4
        $region24: #{tpu_custom_call.1} parent=11 // pred_fallthru
          _
        // Predicated region
        $region25: #{tpu_custom_call.1} parent=11 // pred_check
          %p532 = pneg %p456
        $region26: #{tpu_custom_call.1} parent=11 // pred_check_branch
          %534 = sbr.rel (%p532) target = $region28
        $region27: #{tpu_custom_call.1} parent=11 // pred_region
          %s536 = ssub.s32 16, 16
          %537 = vsyncadd [#allocation29], %s536
          %s539 = sshll.u32 [#allocation28], 4
          %s540 = int_to_ptr.vmem [resolvable:$true] %s539
          %542 = dma.hbm_to_vmem [thread:$0]  %s15, 16, %s540, [#allocation29]
        $region28: #{tpu_custom_call.1} parent=11 // pred_fallthru
          _
      $region12: #{tpu_custom_call.1} parent=5 // pred_fallthru
        _
      %p543 = scmp.lt.s32.totalorder %s48, 12
      // Predicated region
      $region29: #{tpu_custom_call.1} parent=5 // pred_check
        %p544 = pneg %p543
      $region30: #{tpu_custom_call.1} parent=5 // pred_check_branch
        %546 = sbr.rel (%p544) target = $region32
      $region31: #{tpu_custom_call.1} parent=5 // pred_region
        // Predicated region
        $region33: #{tpu_custom_call.1} parent=31 // pred_check
          %p547 = pneg %p80
        $region34: #{tpu_custom_call.1} parent=31 // pred_check_branch
          %549 = sbr.rel (%p547) target = $region36
        $region35: #{tpu_custom_call.1} parent=31 // pred_region
          %s550 = sand.u32 %s70, 1
          %s551 = scalar_lea.sflag [#allocation5], %s550
          %s552 = sand.u32 %s70, 1
          %s553 = smul.addr %s552, 24
          %s554 = scalar_lea.vmem [#allocation4], %s553
          %s556 = ssub.s32 384, 384
          %557 = vsyncadd %s551, %s556
          %s558 = smul.addr %s55, 3
          %s559 = smul.addr %s558, 128
          %s560 = scalar_lea.hbm %s0, %s559
          %s562 = sshll.u32 %s554, 4
          %s563 = int_to_ptr.vmem [resolvable:$true] %s562
          %565 = dma.hbm_to_vmem [thread:$0]  %s560, 384, %s563, %s551
        $region36: #{tpu_custom_call.1} parent=31 // pred_fallthru
          _
        // Predicated region
        $region37: #{tpu_custom_call.1} parent=31 // pred_check
          %p566 = pneg %p106
        $region38: #{tpu_custom_call.1} parent=31 // pred_check_branch
          %568 = sbr.rel (%p566) target = $region40
        $region39: #{tpu_custom_call.1} parent=31 // pred_region
          %s569 = sand.u32 %s48, 1
          %s570 = scalar_lea.sflag [#allocation8], %s569
          %s571 = sand.u32 %s96, 1
          %s572 = smul.addr %s571, 3
          %s573 = scalar_lea.vmem [#allocation7], %s572
          %s575 = ssub.s32 48, 48
          %576 = vsyncadd %s570, %s575
          %s577 = smul.addr %s56, 3
          %s578 = smul.addr %s577, 16
          %s579 = scalar_lea.hbm %s1, %s578
          %s581 = sshll.u32 %s573, 4
          %s582 = int_to_ptr.vmem [resolvable:$true] %s581
          %584 = dma.hbm_to_vmem [thread:$0]  %s579, 48, %s582, %s570
        $region40: #{tpu_custom_call.1} parent=31 // pred_fallthru
          _
        // Predicated region
        $region41: #{tpu_custom_call.1} parent=31 // pred_check
          %p585 = pneg %p132
        $region42: #{tpu_custom_call.1} parent=31 // pred_check_branch
          %587 = sbr.rel (%p585) target = $region44
        $region43: #{tpu_custom_call.1} parent=31 // pred_region
          %s588 = sand.u32 %s48, 1
          %s589 = scalar_lea.sflag [#allocation8], %s588
          %s590 = sand.u32 %s122, 1
          %s591 = smul.addr %s590, 3
          %s592 = scalar_lea.vmem [#allocation9], %s591
          %s594 = ssub.s32 48, 48
          %595 = vsyncadd %s589, %s594
          %s596 = smul.addr %s56, 3
          %s597 = smul.addr %s596, 16
          %s598 = scalar_lea.hbm %s2, %s597
          %s600 = sshll.u32 %s592, 4
          %s601 = int_to_ptr.vmem [resolvable:$true] %s600
          %603 = dma.hbm_to_vmem [thread:$0]  %s598, 48, %s601, %s589
        $region44: #{tpu_custom_call.1} parent=31 // pred_fallthru
          _
        // Predicated region
        $region45: #{tpu_custom_call.1} parent=31 // pred_check
          %p604 = pneg %p158
        $region46: #{tpu_custom_call.1} parent=31 // pred_check_branch
          %606 = sbr.rel (%p604) target = $region48
        $region47: #{tpu_custom_call.1} parent=31 // pred_region
          %s607 = sand.u32 %s48, 1
          %s608 = scalar_lea.sflag [#allocation11], %s607
          %s609 = sand.u32 %s148, 1
          %s610 = smul.addr %s609, 1728
          %s611 = scalar_lea.vmem [#allocation10], %s610
          %s613 = ssub.s32 27648, 27648
          %614 = vsyncadd %s608, %s613
          %s615 = smul.addr %s56, 432
          %s616 = smul.addr %s615, 64
          %s617 = scalar_lea.hbm %s3, %s616
          %s618 = sshll.u32 %s611, 4
          %s619 = int_to_ptr.vmem [resolvable:$true] %s618
          %624 = dma.hbm_to_vmem [thread:$0]  %s617, 27648, %s619, %s608, 576, 576, 36
        $region48: #{tpu_custom_call.1} parent=31 // pred_fallthru
          _
        // Predicated region
        $region49: #{tpu_custom_call.1} parent=31 // pred_check
          %p625 = pneg %p184
        $region50: #{tpu_custom_call.1} parent=31 // pred_check_branch
          %627 = sbr.rel (%p625) target = $region52
        $region51: #{tpu_custom_call.1} parent=31 // pred_region
          %s628 = sand.u32 %s48, 1
          %s629 = scalar_lea.sflag [#allocation11], %s628
          %s630 = sand.u32 %s174, 1
          %s631 = smul.addr %s630, 576
          %s632 = scalar_lea.vmem [#allocation12], %s631
          %s634 = ssub.s32 9216, 9216
          %635 = vsyncadd %s629, %s634
          %s636 = smul.addr %s56, 144
          %s637 = smul.addr %s636, 64
          %s638 = scalar_lea.hbm %s4, %s637
          %s639 = sshll.u32 %s632, 4
          %s640 = int_to_ptr.vmem [resolvable:$true] %s639
          %645 = dma.hbm_to_vmem [thread:$0]  %s638, 9216, %s640, %s629, 192, 192, 12
        $region52: #{tpu_custom_call.1} parent=31 // pred_fallthru
          _
        // Predicated region
        $region53: #{tpu_custom_call.1} parent=31 // pred_check
          %p646 = pneg %p210
        $region54: #{tpu_custom_call.1} parent=31 // pred_check_branch
          %648 = sbr.rel (%p646) target = $region56
        $region55: #{tpu_custom_call.1} parent=31 // pred_region
          %s649 = sand.u32 %s48, 1
          %s650 = scalar_lea.sflag [#allocation14], %s649
          %s651 = sand.u32 %s200, 1
          %s652 = smul.addr %s651, 3
          %s653 = scalar_lea.vmem [#allocation13], %s652
          %s655 = ssub.s32 48, 48
          %656 = vsyncadd %s650, %s655
          %s657 = smul.addr %s56, 3
          %s658 = smul.addr %s657, 16
          %s659 = scalar_lea.hbm %s5, %s658
          %s661 = sshll.u32 %s653, 4
          %s662 = int_to_ptr.vmem [resolvable:$true] %s661
          %664 = dma.hbm_to_vmem [thread:$0]  %s659, 48, %s662, %s650
        $region56: #{tpu_custom_call.1} parent=31 // pred_fallthru
          _
        // Predicated region
        $region57: #{tpu_custom_call.1} parent=31 // pred_check
          %p665 = pneg %p236
        $region58: #{tpu_custom_call.1} parent=31 // pred_check_branch
          %667 = sbr.rel (%p665) target = $region60
        $region59: #{tpu_custom_call.1} parent=31 // pred_region
          %s668 = sand.u32 %s48, 1
          %s669 = scalar_lea.sflag [#allocation14], %s668
          %s670 = sand.u32 %s226, 1
          %s671 = smul.addr %s670, 3
          %s672 = scalar_lea.vmem [#allocation15], %s671
          %s674 = ssub.s32 48, 48
          %675 = vsyncadd %s669, %s674
          %s676 = smul.addr %s56, 3
          %s677 = smul.addr %s676, 16
          %s678 = scalar_lea.hbm %s6, %s677
          %s680 = sshll.u32 %s672, 4
          %s681 = int_to_ptr.vmem [resolvable:$true] %s680
          %683 = dma.hbm_to_vmem [thread:$0]  %s678, 48, %s681, %s669
        $region60: #{tpu_custom_call.1} parent=31 // pred_fallthru
          _
        // Predicated region
        $region61: #{tpu_custom_call.1} parent=31 // pred_check
          %p684 = pneg %p262
        $region62: #{tpu_custom_call.1} parent=31 // pred_check_branch
          %686 = sbr.rel (%p684) target = $region64
        $region63: #{tpu_custom_call.1} parent=31 // pred_region
          %s687 = sand.u32 %s48, 1
          %s688 = scalar_lea.sflag [#allocation17], %s687
          %s689 = sand.u32 %s252, 1
          %s690 = smul.addr %s689, 3
          %s691 = scalar_lea.vmem [#allocation16], %s690
          %s693 = ssub.s32 48, 48
          %694 = vsyncadd %s688, %s693
          %s695 = smul.addr %s56, 3
          %s696 = smul.addr %s695, 16
          %s697 = scalar_lea.hbm %s7, %s696
          %s699 = sshll.u32 %s691, 4
          %s700 = int_to_ptr.vmem [resolvable:$true] %s699
          %702 = dma.hbm_to_vmem [thread:$0]  %s697, 48, %s700, %s688
        $region64: #{tpu_custom_call.1} parent=31 // pred_fallthru
          _
        // Predicated region
        $region65: #{tpu_custom_call.1} parent=31 // pred_check
          %p703 = pneg %p288
        $region66: #{tpu_custom_call.1} parent=31 // pred_check_branch
          %705 = sbr.rel (%p703) target = $region68
        $region67: #{tpu_custom_call.1} parent=31 // pred_region
          %s706 = sand.u32 %s48, 1
          %s707 = scalar_lea.sflag [#allocation17], %s706
          %s708 = sand.u32 %s278, 1
          %s709 = smul.addr %s708, 2304
          %s710 = scalar_lea.vmem [#allocation18], %s709
          %s712 = ssub.s32 36864, 36864
          %713 = vsyncadd %s707, %s712
          %s714 = smul.addr %s56, 576
          %s715 = smul.addr %s714, 64
          %s716 = scalar_lea.hbm %s8, %s715
          %s717 = sshll.u32 %s710, 4
          %s718 = int_to_ptr.vmem [resolvable:$true] %s717
          %723 = dma.hbm_to_vmem [thread:$0]  %s716, 36864, %s718, %s707, 768, 768, 48
        $region68: #{tpu_custom_call.1} parent=31 // pred_fallthru
          _
        // Predicated region
        $region69: #{tpu_custom_call.1} parent=31 // pred_check
          %p724 = pneg %p314
        $region70: #{tpu_custom_call.1} parent=31 // pred_check_branch
          %726 = sbr.rel (%p724) target = $region72
        $region71: #{tpu_custom_call.1} parent=31 // pred_region
          %s727 = sand.u32 %s48, 1
          %s728 = scalar_lea.sflag [#allocation20], %s727
          %s729 = sand.u32 %s304, 1
          %s730 = smul.addr %s729, 12
          %s731 = scalar_lea.vmem [#allocation19], %s730
          %s733 = ssub.s32 192, 192
          %734 = vsyncadd %s728, %s733
          %s735 = smul.addr %s56, 12
          %s736 = smul.addr %s735, 16
          %s737 = scalar_lea.hbm %s9, %s736
          %s739 = sshll.u32 %s731, 4
          %s740 = int_to_ptr.vmem [resolvable:$true] %s739
          %742 = dma.hbm_to_vmem [thread:$0]  %s737, 192, %s740, %s728
        $region72: #{tpu_custom_call.1} parent=31 // pred_fallthru
          _
        // Predicated region
        $region73: #{tpu_custom_call.1} parent=31 // pred_check
          %p743 = pneg %p340
        $region74: #{tpu_custom_call.1} parent=31 // pred_check_branch
          %745 = sbr.rel (%p743) target = $region76
        $region75: #{tpu_custom_call.1} parent=31 // pred_region
          %s746 = sand.u32 %s48, 1
          %s747 = scalar_lea.sflag [#allocation20], %s746
          %s748 = sand.u32 %s330, 1
          %s749 = smul.addr %s748, 2304
          %s750 = scalar_lea.vmem [#allocation21], %s749
          %s752 = ssub.s32 36864, 36864
          %753 = vsyncadd %s747, %s752
          %s754 = smul.addr %s56, 576
          %s755 = smul.addr %s754, 64
          %s756 = scalar_lea.hbm %s10, %s755
          %s757 = sshll.u32 %s750, 4
          %s758 = int_to_ptr.vmem [resolvable:$true] %s757
          %763 = dma.hbm_to_vmem [thread:$0]  %s756, 36864, %s758, %s747, 192, 192, 12
        $region76: #{tpu_custom_call.1} parent=31 // pred_fallthru
          _
        // Predicated region
        $region77: #{tpu_custom_call.1} parent=31 // pred_check
          %p764 = pneg %p366
        $region78: #{tpu_custom_call.1} parent=31 // pred_check_branch
          %766 = sbr.rel (%p764) target = $region80
        $region79: #{tpu_custom_call.1} parent=31 // pred_region
          %s767 = sand.u32 %s48, 1
          %s768 = scalar_lea.sflag [#allocation23], %s767
          %s769 = sand.u32 %s356, 1
          %s770 = smul.addr %s769, 3
          %s771 = scalar_lea.vmem [#allocation22], %s770
          %s773 = ssub.s32 48, 48
          %774 = vsyncadd %s768, %s773
          %s775 = smul.addr %s56, 3
          %s776 = smul.addr %s775, 16
          %s777 = scalar_lea.hbm %s11, %s776
          %s779 = sshll.u32 %s771, 4
          %s780 = int_to_ptr.vmem [resolvable:$true] %s779
          %782 = dma.hbm_to_vmem [thread:$0]  %s777, 48, %s780, %s768
        $region80: #{tpu_custom_call.1} parent=31 // pred_fallthru
          _
      $region32: #{tpu_custom_call.1} parent=5 // pred_fallthru
        _
      %p783 = scmp.le.s32.totalorder 1, %s48
      %p784 = scmp.lt.s32.totalorder %s48, 13
      %p785 = pnand %p783, %p784
      %p786 = pneg %p785
      // Predicated region
      $region81: #{tpu_custom_call.1} parent=5 // pred_check
        _
      $region82: #{tpu_custom_call.1} parent=5 // pred_check_branch
        %788 = sbr.rel (%p785) target = $region84
      $region83: #{tpu_custom_call.1} parent=5 // pred_region
        %s789 = ssub.s32 %s48, 1
        %s790 = sand.u32 %s73, 1
        %s791 = scalar_lea.sflag [#allocation5], %s790
        %s792 = sand.u32 %s73, 1
        %s793 = smul.addr %s792, 24
        %s794 = scalar_lea.vmem [#allocation4], %s793
        // Predicated region
        $region85: #{tpu_custom_call.1} parent=83 // pred_check
          %p795 = pneg %p86
        $region86: #{tpu_custom_call.1} parent=83 // pred_check_branch
          %797 = sbr.rel (%p795) target = $region88
        $region87: #{tpu_custom_call.1} parent=83 // pred_region
          %798 = dma.done %s791, 384
        $region88: #{tpu_custom_call.1} parent=83 // pred_fallthru
          _
        %s799 = sand.u32 %s53, 1
        %s800 = scalar_lea.sflag [#allocation8], %s799
        %s801 = sand.u32 %s99, 1
        %s802 = smul.addr %s801, 3
        %s803 = scalar_lea.vmem [#allocation7], %s802
        // Predicated region
        $region89: #{tpu_custom_call.1} parent=83 // pred_check
          %p804 = pneg %p112
        $region90: #{tpu_custom_call.1} parent=83 // pred_check_branch
          %806 = sbr.rel (%p804) target = $region92
        $region91: #{tpu_custom_call.1} parent=83 // pred_region
          %807 = dma.done %s800, 48
        $region92: #{tpu_custom_call.1} parent=83 // pred_fallthru
          _
        %s808 = sand.u32 %s53, 1
        %s809 = scalar_lea.sflag [#allocation8], %s808
        %s810 = sand.u32 %s125, 1
        %s811 = smul.addr %s810, 3
        %s812 = scalar_lea.vmem [#allocation9], %s811
        // Predicated region
        $region93: #{tpu_custom_call.1} parent=83 // pred_check
          %p813 = pneg %p138
        $region94: #{tpu_custom_call.1} parent=83 // pred_check_branch
          %815 = sbr.rel (%p813) target = $region96
        $region95: #{tpu_custom_call.1} parent=83 // pred_region
          %816 = dma.done %s809, 48
        $region96: #{tpu_custom_call.1} parent=83 // pred_fallthru
          _
        %s817 = sand.u32 %s53, 1
        %s818 = scalar_lea.sflag [#allocation11], %s817
        %s819 = sand.u32 %s151, 1
        %s820 = smul.addr %s819, 1728
        %s821 = scalar_lea.vmem [#allocation10], %s820
        // Predicated region
        $region97: #{tpu_custom_call.1} parent=83 // pred_check
          %p822 = pneg %p164
        $region98: #{tpu_custom_call.1} parent=83 // pred_check_branch
          %824 = sbr.rel (%p822) target = $region100
        $region99: #{tpu_custom_call.1} parent=83 // pred_region
          %825 = dma.done %s818, 27648
        $region100: #{tpu_custom_call.1} parent=83 // pred_fallthru
          _
        %s826 = sand.u32 %s53, 1
        %s827 = scalar_lea.sflag [#allocation11], %s826
        %s828 = sand.u32 %s177, 1
        %s829 = smul.addr %s828, 576
        %s830 = scalar_lea.vmem [#allocation12], %s829
        // Predicated region
        $region101: #{tpu_custom_call.1} parent=83 // pred_check
          %p831 = pneg %p190
        $region102: #{tpu_custom_call.1} parent=83 // pred_check_branch
          %833 = sbr.rel (%p831) target = $region104
        $region103: #{tpu_custom_call.1} parent=83 // pred_region
          %834 = dma.done %s827, 9216
        $region104: #{tpu_custom_call.1} parent=83 // pred_fallthru
          _
        %s835 = sand.u32 %s53, 1
        %s836 = scalar_lea.sflag [#allocation14], %s835
        %s837 = sand.u32 %s203, 1
        %s838 = smul.addr %s837, 3
        %s839 = scalar_lea.vmem [#allocation13], %s838
        // Predicated region
        $region105: #{tpu_custom_call.1} parent=83 // pred_check
          %p840 = pneg %p216
        $region106: #{tpu_custom_call.1} parent=83 // pred_check_branch
          %842 = sbr.rel (%p840) target = $region108
        $region107: #{tpu_custom_call.1} parent=83 // pred_region
          %843 = dma.done %s836, 48
        $region108: #{tpu_custom_call.1} parent=83 // pred_fallthru
          _
        %s844 = sand.u32 %s53, 1
        %s845 = scalar_lea.sflag [#allocation14], %s844
        %s846 = sand.u32 %s229, 1
        %s847 = smul.addr %s846, 3
        %s848 = scalar_lea.vmem [#allocation15], %s847
        // Predicated region
        $region109: #{tpu_custom_call.1} parent=83 // pred_check
          %p849 = pneg %p242
        $region110: #{tpu_custom_call.1} parent=83 // pred_check_branch
          %851 = sbr.rel (%p849) target = $region112
        $region111: #{tpu_custom_call.1} parent=83 // pred_region
          %852 = dma.done %s845, 48
        $region112: #{tpu_custom_call.1} parent=83 // pred_fallthru
          _
        %s853 = sand.u32 %s53, 1
        %s854 = scalar_lea.sflag [#allocation17], %s853
        %s855 = sand.u32 %s255, 1
        %s856 = smul.addr %s855, 3
        %s857 = scalar_lea.vmem [#allocation16], %s856
        // Predicated region
        $region113: #{tpu_custom_call.1} parent=83 // pred_check
          %p858 = pneg %p268
        $region114: #{tpu_custom_call.1} parent=83 // pred_check_branch
          %860 = sbr.rel (%p858) target = $region116
        $region115: #{tpu_custom_call.1} parent=83 // pred_region
          %861 = dma.done %s854, 48
        $region116: #{tpu_custom_call.1} parent=83 // pred_fallthru
          _
        %s862 = sand.u32 %s53, 1
        %s863 = scalar_lea.sflag [#allocation17], %s862
        %s864 = sand.u32 %s281, 1
        %s865 = smul.addr %s864, 2304
        %s866 = scalar_lea.vmem [#allocation18], %s865
        // Predicated region
        $region117: #{tpu_custom_call.1} parent=83 // pred_check
          %p867 = pneg %p294
        $region118: #{tpu_custom_call.1} parent=83 // pred_check_branch
          %869 = sbr.rel (%p867) target = $region120
        $region119: #{tpu_custom_call.1} parent=83 // pred_region
          %870 = dma.done %s863, 36864
        $region120: #{tpu_custom_call.1} parent=83 // pred_fallthru
          _
        %s871 = sand.u32 %s53, 1
        %s872 = scalar_lea.sflag [#allocation20], %s871
        %s873 = sand.u32 %s307, 1
        %s874 = smul.addr %s873, 12
        %s875 = scalar_lea.vmem [#allocation19], %s874
        // Predicated region
        $region121: #{tpu_custom_call.1} parent=83 // pred_check
          %p876 = pneg %p320
        $region122: #{tpu_custom_call.1} parent=83 // pred_check_branch
          %878 = sbr.rel (%p876) target = $region124
        $region123: #{tpu_custom_call.1} parent=83 // pred_region
          %879 = dma.done %s872, 192
        $region124: #{tpu_custom_call.1} parent=83 // pred_fallthru
          _
        %s880 = sand.u32 %s53, 1
        %s881 = scalar_lea.sflag [#allocation20], %s880
        %s882 = sand.u32 %s333, 1
        %s883 = smul.addr %s882, 2304
        %s884 = scalar_lea.vmem [#allocation21], %s883
        // Predicated region
        $region125: #{tpu_custom_call.1} parent=83 // pred_check
          %p885 = pneg %p346
        $region126: #{tpu_custom_call.1} parent=83 // pred_check_branch
          %887 = sbr.rel (%p885) target = $region128
        $region127: #{tpu_custom_call.1} parent=83 // pred_region
          %888 = dma.done %s881, 36864
        $region128: #{tpu_custom_call.1} parent=83 // pred_fallthru
          _
        %s889 = sand.u32 %s53, 1
        %s890 = scalar_lea.sflag [#allocation23], %s889
        %s891 = sand.u32 %s359, 1
        %s892 = smul.addr %s891, 3
        %s893 = scalar_lea.vmem [#allocation22], %s892
        // Predicated region
        $region129: #{tpu_custom_call.1} parent=83 // pred_check
          %p894 = pneg %p372
        $region130: #{tpu_custom_call.1} parent=83 // pred_check_branch
          %896 = sbr.rel (%p894) target = $region132
        $region131: #{tpu_custom_call.1} parent=83 // pred_region
          %897 = dma.done %s890, 48
        $region132: #{tpu_custom_call.1} parent=83 // pred_fallthru
          _
        // Predicated region
        $region133: #{tpu_custom_call.1} parent=83 // pred_check
          %p898 = pneg %p393
        $region134: #{tpu_custom_call.1} parent=83 // pred_check_branch
          %900 = sbr.rel (%p898) target = $region136
        $region135: #{tpu_custom_call.1} parent=83 // pred_region
          %901 = dma.done [#allocation23], 48
        $region136: #{tpu_custom_call.1} parent=83 // pred_fallthru
          _
        // Predicated region
        $region137: #{tpu_custom_call.1} parent=83 // pred_check
          %p902 = pneg %p414
        $region138: #{tpu_custom_call.1} parent=83 // pred_check_branch
          %904 = sbr.rel (%p902) target = $region140
        $region139: #{tpu_custom_call.1} parent=83 // pred_region
          %905 = dma.done [#allocation26], 48
        $region140: #{tpu_custom_call.1} parent=83 // pred_fallthru
          _
        // Predicated region
        $region141: #{tpu_custom_call.1} parent=83 // pred_check
          %p906 = pneg %p435
        $region142: #{tpu_custom_call.1} parent=83 // pred_check_branch
          %908 = sbr.rel (%p906) target = $region144
        $region143: #{tpu_custom_call.1} parent=83 // pred_region
          %909 = dma.done [#allocation26], 3072
        $region144: #{tpu_custom_call.1} parent=83 // pred_fallthru
          _
        // Predicated region
        $region145: #{tpu_custom_call.1} parent=83 // pred_check
          %p910 = pneg %p456
        $region146: #{tpu_custom_call.1} parent=83 // pred_check_branch
          %912 = sbr.rel (%p910) target = $region148
        $region147: #{tpu_custom_call.1} parent=83 // pred_region
          %913 = dma.done [#allocation29], 16
        $region148: #{tpu_custom_call.1} parent=83 // pred_fallthru
          _
        %s914 = sand.u32 %s73, 1
        %s915 = scalar_lea.sflag [#allocation5], %s914
        %s916 = sand.u32 %s73, 1
        %s917 = smul.addr %s916, 24
        %s918 = scalar_lea.vmem [#allocation4], %s917
        %p919 = pneg %p86
        %p920 = pneg %p83
        %s921 = sand.u32 %s53, 1
        %s922 = scalar_lea.sflag [#allocation8], %s921
        %s923 = sand.u32 %s99, 1
        %s924 = smul.addr %s923, 3
        %s925 = scalar_lea.vmem [#allocation7], %s924
        %p926 = pneg %p112
        %p927 = pneg %p109
        %s928 = sand.u32 %s53, 1
        %s929 = scalar_lea.sflag [#allocation8], %s928
        %s930 = sand.u32 %s125, 1
        %s931 = smul.addr %s930, 3
        %s932 = scalar_lea.vmem [#allocation9], %s931
        %p933 = pneg %p138
        %p934 = pneg %p135
        %s935 = sand.u32 %s53, 1
        %s936 = scalar_lea.sflag [#allocation11], %s935
        %s937 = sand.u32 %s151, 1
        %s938 = smul.addr %s937, 1728
        %s939 = scalar_lea.vmem [#allocation10], %s938
        %p940 = pneg %p164
        %p941 = pneg %p161
        %s942 = sand.u32 %s53, 1
        %s943 = scalar_lea.sflag [#allocation11], %s942
        %s944 = sand.u32 %s177, 1
        %s945 = smul.addr %s944, 576
        %s946 = scalar_lea.vmem [#allocation12], %s945
        %p947 = pneg %p190
        %p948 = pneg %p187
        %s949 = sand.u32 %s53, 1
        %s950 = scalar_lea.sflag [#allocation14], %s949
        %s951 = sand.u32 %s203, 1
        %s952 = smul.addr %s951, 3
        %s953 = scalar_lea.vmem [#allocation13], %s952
        %p954 = pneg %p216
        %p955 = pneg %p213
        %s956 = sand.u32 %s53, 1
        %s957 = scalar_lea.sflag [#allocation14], %s956
        %s958 = sand.u32 %s229, 1
        %s959 = smul.addr %s958, 3
        %s960 = scalar_lea.vmem [#allocation15], %s959
        %p961 = pneg %p242
        %p962 = pneg %p239
        %s963 = sand.u32 %s53, 1
        %s964 = scalar_lea.sflag [#allocation17], %s963
        %s965 = sand.u32 %s255, 1
        %s966 = smul.addr %s965, 3
        %s967 = scalar_lea.vmem [#allocation16], %s966
        %p968 = pneg %p268
        %p969 = pneg %p265
        %s970 = sand.u32 %s53, 1
        %s971 = scalar_lea.sflag [#allocation17], %s970
        %s972 = sand.u32 %s281, 1
        %s973 = smul.addr %s972, 2304
        %s974 = scalar_lea.vmem [#allocation18], %s973
        %p975 = pneg %p294
        %p976 = pneg %p291
        %s977 = sand.u32 %s53, 1
        %s978 = scalar_lea.sflag [#allocation20], %s977
        %s979 = sand.u32 %s307, 1
        %s980 = smul.addr %s979, 12
        %s981 = scalar_lea.vmem [#allocation19], %s980
        %p982 = pneg %p320
        %p983 = pneg %p317
        %s984 = sand.u32 %s53, 1
        %s985 = scalar_lea.sflag [#allocation20], %s984
        %s986 = sand.u32 %s333, 1
        %s987 = smul.addr %s986, 2304
        %s988 = scalar_lea.vmem [#allocation21], %s987
        %p989 = pneg %p346
        %p990 = pneg %p343
        %s991 = sand.u32 %s53, 1
        %s992 = scalar_lea.sflag [#allocation23], %s991
        %s993 = sand.u32 %s359, 1
        %s994 = smul.addr %s993, 3
        %s995 = scalar_lea.vmem [#allocation22], %s994
        %p996 = pneg %p372
        %p997 = pneg %p369
        %p998 = pneg %p393
        %p999 = pneg %p390
        %p1000 = pneg %p414
        %p1001 = pneg %p411
        %p1002 = pneg %p435
        %p1003 = pneg %p432
        %p1004 = pneg %p456
        %p1005 = pneg %p453
        %p1006 = pneg %p482
        %p1007 = pneg %p479
        %s1008 = sand.u32 %s469, 1
        %s1009 = scalar_lea.sflag [#allocation6], %s1008
        %s1010 = sand.u32 %s469, 1
        %s1011 = smul.addr %s1010, 8
        %s1012 = scalar_lea.vmem [#allocation30], %s1011
        %p1014 = scmp.eq.s32.totalorder %s58, 0
        // Predicated region
        $region149: #{tpu_custom_call.1} parent=83 // pred_check
          %p1015 = pneg %p1014
        $region150: #{tpu_custom_call.1} parent=83 // pred_check_branch
          %1017 = sbr.rel (%p1015) target = $region152
        $region151: #{tpu_custom_call.1} parent=83 // pred_region
          %v1018 = vld [vmem:[%s794] sm:$0xff]
          %v1019 = vld [vmem:[%s794 + $0x8] sm:$0xff]
          %v1020 = vld [vmem:[%s794 + $0x10] sm:$0xff]
          %1021 = vst [vmem:[#allocation2] sm:$0xff] %v1018
          %1022 = vst [vmem:[#allocation2 + $0x8] sm:$0xff] %v1019
          %1023 = vst [vmem:[#allocation2 + $0x10] sm:$0xff] %v1020
        $region152: #{tpu_custom_call.1} parent=83 // pred_fallthru
          _
        %v1024 = vld [vmem:[#allocation2] sm:$0xff]
        %v1025 = vld [vmem:[#allocation2 + $0x8] sm:$0xff]
        %v1026 = vld [vmem:[#allocation2 + $0x10] sm:$0xff]
        %v1027 = vlaneseq
        %v1028 = vshrl.u32 %v1027, 7
        %v1029 = vlaneseq
        %v1030 = vand.u32 %v1029, 127
        %vm1031 = vcmp.le.s32.totalorder %v1030, %v1028
        %v1032 = vsel %vm1031, 0.0, -1e+30
        %v1033 = vld [vmem:[%s803] sm:$0x7]
        %v1034 = vld [vmem:[%s812] sm:$0x7]
        %v1035 = vadd.f32 %v1024, %v1025
        %v1036 = vadd.f32 %v1035, %v1026
        %1037 = vadd.xlane.f32.xlu0 %v1036
        %v1038 = vpop.xlane.xlu0 %1037
        %v1039 = vrcp.pop 384.0
        %v1040 = vmul.f32 %v1038, %v1039
        %v1041 = vsub.f32 %v1024, %v1040
        %v1042 = vsub.f32 %v1025, %v1040
        %v1043 = vsub.f32 %v1026, %v1040
        %v1044 = vmul.f32 %v1041, %v1041
        %v1045 = vmul.f32 %v1042, %v1042
        %v1046 = vmul.f32 %v1043, %v1043
        %v1047 = vadd.f32 %v1044, %v1045
        %v1048 = vadd.f32 %v1047, %v1046
        %1049 = vadd.xlane.f32.xlu0 %v1048
        %v1050 = vpop.xlane.xlu0 %1049
        %v1051 = vmul.f32 %v1050, %v1039
        %v1052 = vadd.f32 %v1051, 1e-05
        %v1053 = vrsqrt.pop %v1052
        %v1054 = vmul.f32 %v1041, %v1053
        %v1055 = vmul.f32 %v1042, %v1053
        %v1056 = vmul.f32 %v1043, %v1053
        %v1058 = vlaneseq
        %v1059 = vshrl.u32 %v1058, 7
        %v1060 = vsub.s32 0, %v1059
        %v1061 = vrot.slane %v1033, %v1060
        %v1062 = vlaneseq
        %v1063 = vshrl.u32 %v1062, 7
        %v1064 = vsub.s32 1, %v1063
        %v1065 = vrot.slane %v1033, %v1064
        %v1066 = vlaneseq
        %v1067 = vshrl.u32 %v1066, 7
        %v1068 = vsub.s32 2, %v1067
        %v1069 = vrot.slane %v1033, %v1068
        %v1073 = vmul.f32 %v1054, %v1061
        %v1074 = vmul.f32 %v1055, %v1065
        %v1075 = vmul.f32 %v1056, %v1069
        %v1077 = vlaneseq
        %v1078 = vshrl.u32 %v1077, 7
        %v1079 = vsub.s32 0, %v1078
        %v1080 = vrot.slane %v1034, %v1079
        %v1081 = vlaneseq
        %v1082 = vshrl.u32 %v1081, 7
        %v1083 = vsub.s32 1, %v1082
        %v1084 = vrot.slane %v1034, %v1083
        %v1085 = vlaneseq
        %v1086 = vshrl.u32 %v1085, 7
        %v1087 = vsub.s32 2, %v1086
        %v1088 = vrot.slane %v1034, %v1087
        %v1092 = vadd.f32 %v1073, %v1080
        %v1093 = vadd.f32 %v1074, %v1084
        %v1094 = vadd.f32 %v1075, %v1088
        %v1095 = vpack.c.bf16 %v1092, %v1092
        %v1096 = vpack.c.bf16 %v1093, %v1093
        %v1097 = vpack.c.bf16 %v1094, %v1094
        %v1098 = vld [vmem:[%s821] sm:$0xff]
        %v1099 = vld [vmem:[%s821 + $0x8] sm:$0xff]
        %v1100 = vld [vmem:[%s821 + $0x10] sm:$0xff]
        %v1101 = vld [vmem:[%s821 + $0x18] sm:$0xff]
        %v1102 = vld [vmem:[%s821 + $0x20] sm:$0xf]
        %v1103 = vld [vmem:[%s821 + $0x24] sm:$0xff]
        %v1104 = vld [vmem:[%s821 + $0x2c] sm:$0xff]
        %v1105 = vld [vmem:[%s821 + $0x34] sm:$0xff]
        %v1106 = vld [vmem:[%s821 + $0x3c] sm:$0xff]
        %v1107 = vld [vmem:[%s821 + $0x44] sm:$0xf]
        %v1108 = vld [vmem:[%s821 + $0x48] sm:$0xff]
        %v1109 = vld [vmem:[%s821 + $0x50] sm:$0xff]
        %v1110 = vld [vmem:[%s821 + $0x58] sm:$0xff]
        %v1111 = vld [vmem:[%s821 + $0x60] sm:$0xff]
        %v1112 = vld [vmem:[%s821 + $0x68] sm:$0xf]
        %v1113 = vld [vmem:[%s821 + $0x6c] sm:$0xff]
        %v1114 = vld [vmem:[%s821 + $0x74] sm:$0xff]
        %v1115 = vld [vmem:[%s821 + $0x7c] sm:$0xff]
        %v1116 = vld [vmem:[%s821 + $0x84] sm:$0xff]
        %v1117 = vld [vmem:[%s821 + $0x8c] sm:$0xf]
        %v1118 = vld [vmem:[%s821 + $0x90] sm:$0xff]
        %v1119 = vld [vmem:[%s821 + $0x98] sm:$0xff]
        %v1120 = vld [vmem:[%s821 + $0xa0] sm:$0xff]
        %v1121 = vld [vmem:[%s821 + $0xa8] sm:$0xff]
        %v1122 = vld [vmem:[%s821 + $0xb0] sm:$0xf]
        %v1123 = vld [vmem:[%s821 + $0xb4] sm:$0xff]
        %v1124 = vld [vmem:[%s821 + $0xbc] sm:$0xff]
        %v1125 = vld [vmem:[%s821 + $0xc4] sm:$0xff]
        %v1126 = vld [vmem:[%s821 + $0xcc] sm:$0xff]
        %v1127 = vld [vmem:[%s821 + $0xd4] sm:$0xf]
        %v1128 = vld [vmem:[%s821 + $0xd8] sm:$0xff]
        %v1129 = vld [vmem:[%s821 + $0xe0] sm:$0xff]
        %v1130 = vld [vmem:[%s821 + $0xe8] sm:$0xff]
        %v1131 = vld [vmem:[%s821 + $0xf0] sm:$0xff]
        %v1132 = vld [vmem:[%s821 + $0xf8] sm:$0xf]
        %v1133 = vld [vmem:[%s821 + $0xfc] sm:$0xff]
        %v1134 = vld [vmem:[%s821 + $0x104] sm:$0xff]
        %v1135 = vld [vmem:[%s821 + $0x10c] sm:$0xff]
        %v1136 = vld [vmem:[%s821 + $0x114] sm:$0xff]
        %v1137 = vld [vmem:[%s821 + $0x11c] sm:$0xf]
        %v1138 = vld [vmem:[%s821 + $0x120] sm:$0xff]
        %v1139 = vld [vmem:[%s821 + $0x128] sm:$0xff]
        %v1140 = vld [vmem:[%s821 + $0x130] sm:$0xff]
        %v1141 = vld [vmem:[%s821 + $0x138] sm:$0xff]
        %v1142 = vld [vmem:[%s821 + $0x140] sm:$0xf]
        %v1143 = vld [vmem:[%s821 + $0x144] sm:$0xff]
        %v1144 = vld [vmem:[%s821 + $0x14c] sm:$0xff]
        %v1145 = vld [vmem:[%s821 + $0x154] sm:$0xff]
        %v1146 = vld [vmem:[%s821 + $0x15c] sm:$0xff]
        %v1147 = vld [vmem:[%s821 + $0x164] sm:$0xf]
        %v1148 = vld [vmem:[%s821 + $0x168] sm:$0xff]
        %v1149 = vld [vmem:[%s821 + $0x170] sm:$0xff]
        %v1150 = vld [vmem:[%s821 + $0x178] sm:$0xff]
        %v1151 = vld [vmem:[%s821 + $0x180] sm:$0xff]
        %v1152 = vld [vmem:[%s821 + $0x188] sm:$0xf]
        %v1153 = vld [vmem:[%s821 + $0x18c] sm:$0xff]
        %v1154 = vld [vmem:[%s821 + $0x194] sm:$0xff]
        %v1155 = vld [vmem:[%s821 + $0x19c] sm:$0xff]
        %v1156 = vld [vmem:[%s821 + $0x1a4] sm:$0xff]
        %v1157 = vld [vmem:[%s821 + $0x1ac] sm:$0xf]
        %v1158 = vld [vmem:[%s821 + $0x1b0] sm:$0xff]
        %v1159 = vld [vmem:[%s821 + $0x1b8] sm:$0xff]
        %v1160 = vld [vmem:[%s821 + $0x1c0] sm:$0xff]
        %v1161 = vld [vmem:[%s821 + $0x1c8] sm:$0xff]
        %v1162 = vld [vmem:[%s821 + $0x1d0] sm:$0xf]
        %v1163 = vld [vmem:[%s821 + $0x1d4] sm:$0xff]
        %v1164 = vld [vmem:[%s821 + $0x1dc] sm:$0xff]
        %v1165 = vld [vmem:[%s821 + $0x1e4] sm:$0xff]
        %v1166 = vld [vmem:[%s821 + $0x1ec] sm:$0xff]
        %v1167 = vld [vmem:[%s821 + $0x1f4] sm:$0xf]
        %v1168 = vld [vmem:[%s821 + $0x1f8] sm:$0xff]
        %v1169 = vld [vmem:[%s821 + $0x200] sm:$0xff]
        %v1170 = vld [vmem:[%s821 + $0x208] sm:$0xff]
        %v1171 = vld [vmem:[%s821 + $0x210] sm:$0xff]
        %v1172 = vld [vmem:[%s821 + $0x218] sm:$0xf]
        %v1173 = vld [vmem:[%s821 + $0x21c] sm:$0xff]
        %v1174 = vld [vmem:[%s821 + $0x224] sm:$0xff]
        %v1175 = vld [vmem:[%s821 + $0x22c] sm:$0xff]
        %v1176 = vld [vmem:[%s821 + $0x234] sm:$0xff]
        %v1177 = vld [vmem:[%s821 + $0x23c] sm:$0xf]
        %v1178 = vld [vmem:[%s821 + $0x240] sm:$0xff]
        %v1179 = vld [vmem:[%s821 + $0x248] sm:$0xff]
        %v1180 = vld [vmem:[%s821 + $0x250] sm:$0xff]
        %v1181 = vld [vmem:[%s821 + $0x258] sm:$0xff]
        %v1182 = vld [vmem:[%s821 + $0x260] sm:$0xf]
        %v1183 = vld [vmem:[%s821 + $0x264] sm:$0xff]
        %v1184 = vld [vmem:[%s821 + $0x26c] sm:$0xff]
        %v1185 = vld [vmem:[%s821 + $0x274] sm:$0xff]
        %v1186 = vld [vmem:[%s821 + $0x27c] sm:$0xff]
        %v1187 = vld [vmem:[%s821 + $0x284] sm:$0xf]
        %v1188 = vld [vmem:[%s821 + $0x288] sm:$0xff]
        %v1189 = vld [vmem:[%s821 + $0x290] sm:$0xff]
        %v1190 = vld [vmem:[%s821 + $0x298] sm:$0xff]
        %v1191 = vld [vmem:[%s821 + $0x2a0] sm:$0xff]
        %v1192 = vld [vmem:[%s821 + $0x2a8] sm:$0xf]
        %v1193 = vld [vmem:[%s821 + $0x2ac] sm:$0xff]
        %v1194 = vld [vmem:[%s821 + $0x2b4] sm:$0xff]
        %v1195 = vld [vmem:[%s821 + $0x2bc] sm:$0xff]
        %v1196 = vld [vmem:[%s821 + $0x2c4] sm:$0xff]
        %v1197 = vld [vmem:[%s821 + $0x2cc] sm:$0xf]
        %v1198 = vld [vmem:[%s821 + $0x2d0] sm:$0xff]
        %v1199 = vld [vmem:[%s821 + $0x2d8] sm:$0xff]
        %v1200 = vld [vmem:[%s821 + $0x2e0] sm:$0xff]
        %v1201 = vld [vmem:[%s821 + $0x2e8] sm:$0xff]
        %v1202 = vld [vmem:[%s821 + $0x2f0] sm:$0xf]
        %v1203 = vld [vmem:[%s821 + $0x2f4] sm:$0xff]
        %v1204 = vld [vmem:[%s821 + $0x2fc] sm:$0xff]
        %v1205 = vld [vmem:[%s821 + $0x304] sm:$0xff]
        %v1206 = vld [vmem:[%s821 + $0x30c] sm:$0xff]
        %v1207 = vld [vmem:[%s821 + $0x314] sm:$0xf]
        %v1208 = vld [vmem:[%s821 + $0x318] sm:$0xff]
        %v1209 = vld [vmem:[%s821 + $0x320] sm:$0xff]
        %v1210 = vld [vmem:[%s821 + $0x328] sm:$0xff]
        %v1211 = vld [vmem:[%s821 + $0x330] sm:$0xff]
        %v1212 = vld [vmem:[%s821 + $0x338] sm:$0xf]
        %v1213 = vld [vmem:[%s821 + $0x33c] sm:$0xff]
        %v1214 = vld [vmem:[%s821 + $0x344] sm:$0xff]
        %v1215 = vld [vmem:[%s821 + $0x34c] sm:$0xff]
        %v1216 = vld [vmem:[%s821 + $0x354] sm:$0xff]
        %v1217 = vld [vmem:[%s821 + $0x35c] sm:$0xf]
        %v1218 = vld [vmem:[%s821 + $0x360] sm:$0xff]
        %v1219 = vld [vmem:[%s821 + $0x368] sm:$0xff]
        %v1220 = vld [vmem:[%s821 + $0x370] sm:$0xff]
        %v1221 = vld [vmem:[%s821 + $0x378] sm:$0xff]
        %v1222 = vld [vmem:[%s821 + $0x380] sm:$0xf]
        %v1223 = vld [vmem:[%s821 + $0x384] sm:$0xff]
        %v1224 = vld [vmem:[%s821 + $0x38c] sm:$0xff]
        %v1225 = vld [vmem:[%s821 + $0x394] sm:$0xff]
        %v1226 = vld [vmem:[%s821 + $0x39c] sm:$0xff]
        %v1227 = vld [vmem:[%s821 + $0x3a4] sm:$0xf]
        %v1228 = vld [vmem:[%s821 + $0x3a8] sm:$0xff]
        %v1229 = vld [vmem:[%s821 + $0x3b0] sm:$0xff]
        %v1230 = vld [vmem:[%s821 + $0x3b8] sm:$0xff]
        %v1231 = vld [vmem:[%s821 + $0x3c0] sm:$0xff]
        %v1232 = vld [vmem:[%s821 + $0x3c8] sm:$0xf]
        %v1233 = vld [vmem:[%s821 + $0x3cc] sm:$0xff]
        %v1234 = vld [vmem:[%s821 + $0x3d4] sm:$0xff]
        %v1235 = vld [vmem:[%s821 + $0x3dc] sm:$0xff]
        %v1236 = vld [vmem:[%s821 + $0x3e4] sm:$0xff]
        %v1237 = vld [vmem:[%s821 + $0x3ec] sm:$0xf]
        %v1238 = vld [vmem:[%s821 + $0x3f0] sm:$0xff]
        %v1239 = vld [vmem:[%s821 + $0x3f8] sm:$0xff]
        %v1240 = vld [vmem:[%s821 + $0x400] sm:$0xff]
        %v1241 = vld [vmem:[%s821 + $0x408] sm:$0xff]
        %v1242 = vld [vmem:[%s821 + $0x410] sm:$0xf]
        %v1243 = vld [vmem:[%s821 + $0x414] sm:$0xff]
        %v1244 = vld [vmem:[%s821 + $0x41c] sm:$0xff]
        %v1245 = vld [vmem:[%s821 + $0x424] sm:$0xff]
        %v1246 = vld [vmem:[%s821 + $0x42c] sm:$0xff]
        %v1247 = vld [vmem:[%s821 + $0x434] sm:$0xf]
        %v1248 = vld [vmem:[%s821 + $0x438] sm:$0xff]
        %v1249 = vld [vmem:[%s821 + $0x440] sm:$0xff]
        %v1250 = vld [vmem:[%s821 + $0x448] sm:$0xff]
        %v1251 = vld [vmem:[%s821 + $0x450] sm:$0xff]
        %v1252 = vld [vmem:[%s821 + $0x458] sm:$0xf]
        %v1253 = vld [vmem:[%s821 + $0x45c] sm:$0xff]
        %v1254 = vld [vmem:[%s821 + $0x464] sm:$0xff]
        %v1255 = vld [vmem:[%s821 + $0x46c] sm:$0xff]
        %v1256 = vld [vmem:[%s821 + $0x474] sm:$0xff]
        %v1257 = vld [vmem:[%s821 + $0x47c] sm:$0xf]
        %v1258 = vld [vmem:[%s821 + $0x480] sm:$0xff]
        %v1259 = vld [vmem:[%s821 + $0x488] sm:$0xff]
        %v1260 = vld [vmem:[%s821 + $0x490] sm:$0xff]
        %v1261 = vld [vmem:[%s821 + $0x498] sm:$0xff]
        %v1262 = vld [vmem:[%s821 + $0x4a0] sm:$0xf]
        %v1263 = vld [vmem:[%s821 + $0x4a4] sm:$0xff]
        %v1264 = vld [vmem:[%s821 + $0x4ac] sm:$0xff]
        %v1265 = vld [vmem:[%s821 + $0x4b4] sm:$0xff]
        %v1266 = vld [vmem:[%s821 + $0x4bc] sm:$0xff]
        %v1267 = vld [vmem:[%s821 + $0x4c4] sm:$0xf]
        %v1268 = vld [vmem:[%s821 + $0x4c8] sm:$0xff]
        %v1269 = vld [vmem:[%s821 + $0x4d0] sm:$0xff]
        %v1270 = vld [vmem:[%s821 + $0x4d8] sm:$0xff]
        %v1271 = vld [vmem:[%s821 + $0x4e0] sm:$0xff]
        %v1272 = vld [vmem:[%s821 + $0x4e8] sm:$0xf]
        %v1273 = vld [vmem:[%s821 + $0x4ec] sm:$0xff]
        %v1274 = vld [vmem:[%s821 + $0x4f4] sm:$0xff]
        %v1275 = vld [vmem:[%s821 + $0x4fc] sm:$0xff]
        %v1276 = vld [vmem:[%s821 + $0x504] sm:$0xff]
        %v1277 = vld [vmem:[%s821 + $0x50c] sm:$0xf]
        %v1278 = vld [vmem:[%s821 + $0x510] sm:$0xff]
        %v1279 = vld [vmem:[%s821 + $0x518] sm:$0xff]
        %v1280 = vld [vmem:[%s821 + $0x520] sm:$0xff]
        %v1281 = vld [vmem:[%s821 + $0x528] sm:$0xff]
        %v1282 = vld [vmem:[%s821 + $0x530] sm:$0xf]
        %v1283 = vld [vmem:[%s821 + $0x534] sm:$0xff]
        %v1284 = vld [vmem:[%s821 + $0x53c] sm:$0xff]
        %v1285 = vld [vmem:[%s821 + $0x544] sm:$0xff]
        %v1286 = vld [vmem:[%s821 + $0x54c] sm:$0xff]
        %v1287 = vld [vmem:[%s821 + $0x554] sm:$0xf]
        %v1288 = vld [vmem:[%s821 + $0x558] sm:$0xff]
        %v1289 = vld [vmem:[%s821 + $0x560] sm:$0xff]
        %v1290 = vld [vmem:[%s821 + $0x568] sm:$0xff]
        %v1291 = vld [vmem:[%s821 + $0x570] sm:$0xff]
        %v1292 = vld [vmem:[%s821 + $0x578] sm:$0xf]
        %v1293 = vld [vmem:[%s821 + $0x57c] sm:$0xff]
        %v1294 = vld [vmem:[%s821 + $0x584] sm:$0xff]
        %v1295 = vld [vmem:[%s821 + $0x58c] sm:$0xff]
        %v1296 = vld [vmem:[%s821 + $0x594] sm:$0xff]
        %v1297 = vld [vmem:[%s821 + $0x59c] sm:$0xf]
        %v1298 = vld [vmem:[%s821 + $0x5a0] sm:$0xff]
        %v1299 = vld [vmem:[%s821 + $0x5a8] sm:$0xff]
        %v1300 = vld [vmem:[%s821 + $0x5b0] sm:$0xff]
        %v1301 = vld [vmem:[%s821 + $0x5b8] sm:$0xff]
        %v1302 = vld [vmem:[%s821 + $0x5c0] sm:$0xf]
        %v1303 = vld [vmem:[%s821 + $0x5c4] sm:$0xff]
        %v1304 = vld [vmem:[%s821 + $0x5cc] sm:$0xff]
        %v1305 = vld [vmem:[%s821 + $0x5d4] sm:$0xff]
        %v1306 = vld [vmem:[%s821 + $0x5dc] sm:$0xff]
        %v1307 = vld [vmem:[%s821 + $0x5e4] sm:$0xf]
        %v1308 = vld [vmem:[%s821 + $0x5e8] sm:$0xff]
        %v1309 = vld [vmem:[%s821 + $0x5f0] sm:$0xff]
        %v1310 = vld [vmem:[%s821 + $0x5f8] sm:$0xff]
        %v1311 = vld [vmem:[%s821 + $0x600] sm:$0xff]
        %v1312 = vld [vmem:[%s821 + $0x608] sm:$0xf]
        %v1313 = vld [vmem:[%s821 + $0x60c] sm:$0xff]
        %v1314 = vld [vmem:[%s821 + $0x614] sm:$0xff]
        %v1315 = vld [vmem:[%s821 + $0x61c] sm:$0xff]
        %v1316 = vld [vmem:[%s821 + $0x624] sm:$0xff]
        %v1317 = vld [vmem:[%s821 + $0x62c] sm:$0xf]
        %v1318 = vld [vmem:[%s821 + $0x630] sm:$0xff]
        %v1319 = vld [vmem:[%s821 + $0x638] sm:$0xff]
        %v1320 = vld [vmem:[%s821 + $0x640] sm:$0xff]
        %v1321 = vld [vmem:[%s821 + $0x648] sm:$0xff]
        %v1322 = vld [vmem:[%s821 + $0x650] sm:$0xf]
        %v1323 = vld [vmem:[%s821 + $0x654] sm:$0xff]
        %v1324 = vld [vmem:[%s821 + $0x65c] sm:$0xff]
        %v1325 = vld [vmem:[%s821 + $0x664] sm:$0xff]
        %v1326 = vld [vmem:[%s821 + $0x66c] sm:$0xff]
        %v1327 = vld [vmem:[%s821 + $0x674] sm:$0xf]
        %v1328 = vld [vmem:[%s821 + $0x678] sm:$0xff]
        %v1329 = vld [vmem:[%s821 + $0x680] sm:$0xff]
        %v1330 = vld [vmem:[%s821 + $0x688] sm:$0xff]
        %v1331 = vld [vmem:[%s821 + $0x690] sm:$0xff]
        %v1332 = vld [vmem:[%s821 + $0x698] sm:$0xf]
        %v1333 = vld [vmem:[%s821 + $0x69c] sm:$0xff]
        %v1334 = vld [vmem:[%s821 + $0x6a4] sm:$0xff]
        %v1335 = vld [vmem:[%s821 + $0x6ac] sm:$0xff]
        %v1336 = vld [vmem:[%s821 + $0x6b4] sm:$0xff]
        %v1337 = vld [vmem:[%s821 + $0x6bc] sm:$0xf]
        %v1578 = vunpack.c.l.b16 %v1098
        %v1579 = vunpack.c.h.b16 %v1098
        %v1580 = vunpack.c.l.b16 %v1099
        %v1581 = vunpack.c.h.b16 %v1099
        %v1582 = vunpack.c.l.b16 %v1100
        %v1583 = vunpack.c.h.b16 %v1100
        %v1584 = vunpack.c.l.b16 %v1101
        %v1585 = vunpack.c.h.b16 %v1101
        %v1586 = vunpack.c.l.b16 %v1102
        %v1587 = vunpack.c.l.b16 %v1103
        %v1588 = vunpack.c.h.b16 %v1103
        %v1589 = vunpack.c.l.b16 %v1104
        %v1590 = vunpack.c.h.b16 %v1104
        %v1591 = vunpack.c.l.b16 %v1105
        %v1592 = vunpack.c.h.b16 %v1105
        %v1593 = vunpack.c.l.b16 %v1106
        %v1594 = vunpack.c.h.b16 %v1106
        %v1595 = vunpack.c.l.b16 %v1107
        %v1596 = vunpack.c.l.b16 %v1108
        %v1597 = vunpack.c.h.b16 %v1108
        %v1598 = vunpack.c.l.b16 %v1109
        %v1599 = vunpack.c.h.b16 %v1109
        %v1600 = vunpack.c.l.b16 %v1110
        %v1601 = vunpack.c.h.b16 %v1110
        %v1602 = vunpack.c.l.b16 %v1111
        %v1603 = vunpack.c.h.b16 %v1111
        %v1604 = vunpack.c.l.b16 %v1112
        %v1605 = vunpack.c.l.b16 %v1113
        %v1606 = vunpack.c.h.b16 %v1113
        %v1607 = vunpack.c.l.b16 %v1114
        %v1608 = vunpack.c.h.b16 %v1114
        %v1609 = vunpack.c.l.b16 %v1115
        %v1610 = vunpack.c.h.b16 %v1115
        %v1611 = vunpack.c.l.b16 %v1116
        %v1612 = vunpack.c.h.b16 %v1116
        %v1613 = vunpack.c.l.b16 %v1117
        %v1614 = vunpack.c.l.b16 %v1118
        %v1615 = vunpack.c.h.b16 %v1118
        %v1616 = vunpack.c.l.b16 %v1119
        %v1617 = vunpack.c.h.b16 %v1119
        %v1618 = vunpack.c.l.b16 %v1120
        %v1619 = vunpack.c.h.b16 %v1120
        %v1620 = vunpack.c.l.b16 %v1121
        %v1621 = vunpack.c.h.b16 %v1121
        %v1622 = vunpack.c.l.b16 %v1122
        %v1623 = vunpack.c.l.b16 %v1123
        %v1624 = vunpack.c.h.b16 %v1123
        %v1625 = vunpack.c.l.b16 %v1124
        %v1626 = vunpack.c.h.b16 %v1124
        %v1627 = vunpack.c.l.b16 %v1125
        %v1628 = vunpack.c.h.b16 %v1125
        %v1629 = vunpack.c.l.b16 %v1126
        %v1630 = vunpack.c.h.b16 %v1126
        %v1631 = vunpack.c.l.b16 %v1127
        %v1632 = vunpack.c.l.b16 %v1128
        %v1633 = vunpack.c.h.b16 %v1128
        %v1634 = vunpack.c.l.b16 %v1129
        %v1635 = vunpack.c.h.b16 %v1129
        %v1636 = vunpack.c.l.b16 %v1130
        %v1637 = vunpack.c.h.b16 %v1130
        %v1638 = vunpack.c.l.b16 %v1131
        %v1639 = vunpack.c.h.b16 %v1131
        %v1640 = vunpack.c.l.b16 %v1132
        %v1641 = vunpack.c.l.b16 %v1133
        %v1642 = vunpack.c.h.b16 %v1133
        %v1643 = vunpack.c.l.b16 %v1134
        %v1644 = vunpack.c.h.b16 %v1134
        %v1645 = vunpack.c.l.b16 %v1135
        %v1646 = vunpack.c.h.b16 %v1135
        %v1647 = vunpack.c.l.b16 %v1136
        %v1648 = vunpack.c.h.b16 %v1136
        %v1649 = vunpack.c.l.b16 %v1137
        %v1650 = vunpack.c.l.b16 %v1138
        %v1651 = vunpack.c.h.b16 %v1138
        %v1652 = vunpack.c.l.b16 %v1139
        %v1653 = vunpack.c.h.b16 %v1139
        %v1654 = vunpack.c.l.b16 %v1140
        %v1655 = vunpack.c.h.b16 %v1140
        %v1656 = vunpack.c.l.b16 %v1141
        %v1657 = vunpack.c.h.b16 %v1141
        %v1658 = vunpack.c.l.b16 %v1142
        %v1659 = vunpack.c.l.b16 %v1143
        %v1660 = vunpack.c.h.b16 %v1143
        %v1661 = vunpack.c.l.b16 %v1144
        %v1662 = vunpack.c.h.b16 %v1144
        %v1663 = vunpack.c.l.b16 %v1145
        %v1664 = vunpack.c.h.b16 %v1145
        %v1665 = vunpack.c.l.b16 %v1146
        %v1666 = vunpack.c.h.b16 %v1146
        %v1667 = vunpack.c.l.b16 %v1147
        %v1668 = vunpack.c.l.b16 %v1148
        %v1669 = vunpack.c.h.b16 %v1148
        %v1670 = vunpack.c.l.b16 %v1149
        %v1671 = vunpack.c.h.b16 %v1149
        %v1672 = vunpack.c.l.b16 %v1150
        %v1673 = vunpack.c.h.b16 %v1150
        %v1674 = vunpack.c.l.b16 %v1151
        %v1675 = vunpack.c.h.b16 %v1151
        %v1676 = vunpack.c.l.b16 %v1152
        %v1677 = vunpack.c.l.b16 %v1153
        %v1678 = vunpack.c.h.b16 %v1153
        %v1679 = vunpack.c.l.b16 %v1154
        %v1680 = vunpack.c.h.b16 %v1154
        %v1681 = vunpack.c.l.b16 %v1155
        %v1682 = vunpack.c.h.b16 %v1155
        %v1683 = vunpack.c.l.b16 %v1156
        %v1684 = vunpack.c.h.b16 %v1156
        %v1685 = vunpack.c.l.b16 %v1157
        %v1686 = vunpack.c.l.b16 %v1158
        %v1687 = vunpack.c.h.b16 %v1158
        %v1688 = vunpack.c.l.b16 %v1159
        %v1689 = vunpack.c.h.b16 %v1159
        %v1690 = vunpack.c.l.b16 %v1160
        %v1691 = vunpack.c.h.b16 %v1160
        %v1692 = vunpack.c.l.b16 %v1161
        %v1693 = vunpack.c.h.b16 %v1161
        %v1694 = vunpack.c.l.b16 %v1162
        %v1695 = vunpack.c.l.b16 %v1163
        %v1696 = vunpack.c.h.b16 %v1163
        %v1697 = vunpack.c.l.b16 %v1164
        %v1698 = vunpack.c.h.b16 %v1164
        %v1699 = vunpack.c.l.b16 %v1165
        %v1700 = vunpack.c.h.b16 %v1165
        %v1701 = vunpack.c.l.b16 %v1166
        %v1702 = vunpack.c.h.b16 %v1166
        %v1703 = vunpack.c.l.b16 %v1167
        %v1704 = vunpack.c.l.b16 %v1168
        %v1705 = vunpack.c.h.b16 %v1168
        %v1706 = vunpack.c.l.b16 %v1169
        %v1707 = vunpack.c.h.b16 %v1169
        %v1708 = vunpack.c.l.b16 %v1170
        %v1709 = vunpack.c.h.b16 %v1170
        %v1710 = vunpack.c.l.b16 %v1171
        %v1711 = vunpack.c.h.b16 %v1171
        %v1712 = vunpack.c.l.b16 %v1172
        %v1713 = vunpack.c.l.b16 %v1173
        %v1714 = vunpack.c.h.b16 %v1173
        %v1715 = vunpack.c.l.b16 %v1174
        %v1716 = vunpack.c.h.b16 %v1174
        %v1717 = vunpack.c.l.b16 %v1175
        %v1718 = vunpack.c.h.b16 %v1175
        %v1719 = vunpack.c.l.b16 %v1176
        %v1720 = vunpack.c.h.b16 %v1176
        %v1721 = vunpack.c.l.b16 %v1177
        %v1722 = vunpack.c.l.b16 %v1178
        %v1723 = vunpack.c.h.b16 %v1178
        %v1724 = vunpack.c.l.b16 %v1179
        %v1725 = vunpack.c.h.b16 %v1179
        %v1726 = vunpack.c.l.b16 %v1180
        %v1727 = vunpack.c.h.b16 %v1180
        %v1728 = vunpack.c.l.b16 %v1181
        %v1729 = vunpack.c.h.b16 %v1181
        %v1730 = vunpack.c.l.b16 %v1182
        %v1731 = vunpack.c.l.b16 %v1183
        %v1732 = vunpack.c.h.b16 %v1183
        %v1733 = vunpack.c.l.b16 %v1184
        %v1734 = vunpack.c.h.b16 %v1184
        %v1735 = vunpack.c.l.b16 %v1185
        %v1736 = vunpack.c.h.b16 %v1185
        %v1737 = vunpack.c.l.b16 %v1186
        %v1738 = vunpack.c.h.b16 %v1186
        %v1739 = vunpack.c.l.b16 %v1187
        %v1740 = vunpack.c.l.b16 %v1188
        %v1741 = vunpack.c.h.b16 %v1188
        %v1742 = vunpack.c.l.b16 %v1189
        %v1743 = vunpack.c.h.b16 %v1189
        %v1744 = vunpack.c.l.b16 %v1190
        %v1745 = vunpack.c.h.b16 %v1190
        %v1746 = vunpack.c.l.b16 %v1191
        %v1747 = vunpack.c.h.b16 %v1191
        %v1748 = vunpack.c.l.b16 %v1192
        %v1749 = vunpack.c.l.b16 %v1193
        %v1750 = vunpack.c.h.b16 %v1193
        %v1751 = vunpack.c.l.b16 %v1194
        %v1752 = vunpack.c.h.b16 %v1194
        %v1753 = vunpack.c.l.b16 %v1195
        %v1754 = vunpack.c.h.b16 %v1195
        %v1755 = vunpack.c.l.b16 %v1196
        %v1756 = vunpack.c.h.b16 %v1196
        %v1757 = vunpack.c.l.b16 %v1197
        %v1758 = vunpack.c.l.b16 %v1198
        %v1759 = vunpack.c.h.b16 %v1198
        %v1760 = vunpack.c.l.b16 %v1199
        %v1761 = vunpack.c.h.b16 %v1199
        %v1762 = vunpack.c.l.b16 %v1200
        %v1763 = vunpack.c.h.b16 %v1200
        %v1764 = vunpack.c.l.b16 %v1201
        %v1765 = vunpack.c.h.b16 %v1201
        %v1766 = vunpack.c.l.b16 %v1202
        %v1767 = vunpack.c.l.b16 %v1203
        %v1768 = vunpack.c.h.b16 %v1203
        %v1769 = vunpack.c.l.b16 %v1204
        %v1770 = vunpack.c.h.b16 %v1204
        %v1771 = vunpack.c.l.b16 %v1205
        %v1772 = vunpack.c.h.b16 %v1205
        %v1773 = vunpack.c.l.b16 %v1206
        %v1774 = vunpack.c.h.b16 %v1206
        %v1775 = vunpack.c.l.b16 %v1207
        %v1776 = vunpack.c.l.b16 %v1208
        %v1777 = vunpack.c.h.b16 %v1208
        %v1778 = vunpack.c.l.b16 %v1209
        %v1779 = vunpack.c.h.b16 %v1209
        %v1780 = vunpack.c.l.b16 %v1210
        %v1781 = vunpack.c.h.b16 %v1210
        %v1782 = vunpack.c.l.b16 %v1211
        %v1783 = vunpack.c.h.b16 %v1211
        %v1784 = vunpack.c.l.b16 %v1212
        %v1785 = vunpack.c.l.b16 %v1213
        %v1786 = vunpack.c.h.b16 %v1213
        %v1787 = vunpack.c.l.b16 %v1214
        %v1788 = vunpack.c.h.b16 %v1214
        %v1789 = vunpack.c.l.b16 %v1215
        %v1790 = vunpack.c.h.b16 %v1215
        %v1791 = vunpack.c.l.b16 %v1216
        %v1792 = vunpack.c.h.b16 %v1216
        %v1793 = vunpack.c.l.b16 %v1217
        %v1794 = vunpack.c.l.b16 %v1218
        %v1795 = vunpack.c.h.b16 %v1218
        %v1796 = vunpack.c.l.b16 %v1219
        %v1797 = vunpack.c.h.b16 %v1219
        %v1798 = vunpack.c.l.b16 %v1220
        %v1799 = vunpack.c.h.b16 %v1220
        %v1800 = vunpack.c.l.b16 %v1221
        %v1801 = vunpack.c.h.b16 %v1221
        %v1802 = vunpack.c.l.b16 %v1222
        %v1803 = vunpack.c.l.b16 %v1223
        %v1804 = vunpack.c.h.b16 %v1223
        %v1805 = vunpack.c.l.b16 %v1224
        %v1806 = vunpack.c.h.b16 %v1224
        %v1807 = vunpack.c.l.b16 %v1225
        %v1808 = vunpack.c.h.b16 %v1225
        %v1809 = vunpack.c.l.b16 %v1226
        %v1810 = vunpack.c.h.b16 %v1226
        %v1811 = vunpack.c.l.b16 %v1227
        %v1812 = vunpack.c.l.b16 %v1228
        %v1813 = vunpack.c.h.b16 %v1228
        %v1814 = vunpack.c.l.b16 %v1229
        %v1815 = vunpack.c.h.b16 %v1229
        %v1816 = vunpack.c.l.b16 %v1230
        %v1817 = vunpack.c.h.b16 %v1230
        %v1818 = vunpack.c.l.b16 %v1231
        %v1819 = vunpack.c.h.b16 %v1231
        %v1820 = vunpack.c.l.b16 %v1232
        %v1821 = vunpack.c.l.b16 %v1233
        %v1822 = vunpack.c.h.b16 %v1233
        %v1823 = vunpack.c.l.b16 %v1234
        %v1824 = vunpack.c.h.b16 %v1234
        %v1825 = vunpack.c.l.b16 %v1235
        %v1826 = vunpack.c.h.b16 %v1235
        %v1827 = vunpack.c.l.b16 %v1236
        %v1828 = vunpack.c.h.b16 %v1236
        %v1829 = vunpack.c.l.b16 %v1237
        %v1830 = vunpack.c.l.b16 %v1238
        %v1831 = vunpack.c.h.b16 %v1238
        %v1832 = vunpack.c.l.b16 %v1239
        %v1833 = vunpack.c.h.b16 %v1239
        %v1834 = vunpack.c.l.b16 %v1240
        %v1835 = vunpack.c.h.b16 %v1240
        %v1836 = vunpack.c.l.b16 %v1241
        %v1837 = vunpack.c.h.b16 %v1241
        %v1838 = vunpack.c.l.b16 %v1242
        %v1839 = vunpack.c.l.b16 %v1243
        %v1840 = vunpack.c.h.b16 %v1243
        %v1841 = vunpack.c.l.b16 %v1244
        %v1842 = vunpack.c.h.b16 %v1244
        %v1843 = vunpack.c.l.b16 %v1245
        %v1844 = vunpack.c.h.b16 %v1245
        %v1845 = vunpack.c.l.b16 %v1246
        %v1846 = vunpack.c.h.b16 %v1246
        %v1847 = vunpack.c.l.b16 %v1247
        %v1848 = vunpack.c.l.b16 %v1248
        %v1849 = vunpack.c.h.b16 %v1248
        %v1850 = vunpack.c.l.b16 %v1249
        %v1851 = vunpack.c.h.b16 %v1249
        %v1852 = vunpack.c.l.b16 %v1250
        %v1853 = vunpack.c.h.b16 %v1250
        %v1854 = vunpack.c.l.b16 %v1251
        %v1855 = vunpack.c.h.b16 %v1251
        %v1856 = vunpack.c.l.b16 %v1252
        %v1857 = vunpack.c.l.b16 %v1253
        %v1858 = vunpack.c.h.b16 %v1253
        %v1859 = vunpack.c.l.b16 %v1254
        %v1860 = vunpack.c.h.b16 %v1254
        %v1861 = vunpack.c.l.b16 %v1255
        %v1862 = vunpack.c.h.b16 %v1255
        %v1863 = vunpack.c.l.b16 %v1256
        %v1864 = vunpack.c.h.b16 %v1256
        %v1865 = vunpack.c.l.b16 %v1257
        %v1866 = vunpack.c.l.b16 %v1258
        %v1867 = vunpack.c.h.b16 %v1258
        %v1868 = vunpack.c.l.b16 %v1259
        %v1869 = vunpack.c.h.b16 %v1259
        %v1870 = vunpack.c.l.b16 %v1260
        %v1871 = vunpack.c.h.b16 %v1260
        %v1872 = vunpack.c.l.b16 %v1261
        %v1873 = vunpack.c.h.b16 %v1261
        %v1874 = vunpack.c.l.b16 %v1262
        %v1875 = vunpack.c.l.b16 %v1263
        %v1876 = vunpack.c.h.b16 %v1263
        %v1877 = vunpack.c.l.b16 %v1264
        %v1878 = vunpack.c.h.b16 %v1264
        %v1879 = vunpack.c.l.b16 %v1265
        %v1880 = vunpack.c.h.b16 %v1265
        %v1881 = vunpack.c.l.b16 %v1266
        %v1882 = vunpack.c.h.b16 %v1266
        %v1883 = vunpack.c.l.b16 %v1267
        %v1884 = vunpack.c.l.b16 %v1268
        %v1885 = vunpack.c.h.b16 %v1268
        %v1886 = vunpack.c.l.b16 %v1269
        %v1887 = vunpack.c.h.b16 %v1269
        %v1888 = vunpack.c.l.b16 %v1270
        %v1889 = vunpack.c.h.b16 %v1270
        %v1890 = vunpack.c.l.b16 %v1271
        %v1891 = vunpack.c.h.b16 %v1271
        %v1892 = vunpack.c.l.b16 %v1272
        %v1893 = vunpack.c.l.b16 %v1273
        %v1894 = vunpack.c.h.b16 %v1273
        %v1895 = vunpack.c.l.b16 %v1274
        %v1896 = vunpack.c.h.b16 %v1274
        %v1897 = vunpack.c.l.b16 %v1275
        %v1898 = vunpack.c.h.b16 %v1275
        %v1899 = vunpack.c.l.b16 %v1276
        %v1900 = vunpack.c.h.b16 %v1276
        %v1901 = vunpack.c.l.b16 %v1277
        %v1902 = vunpack.c.l.b16 %v1278
        %v1903 = vunpack.c.h.b16 %v1278
        %v1904 = vunpack.c.l.b16 %v1279
        %v1905 = vunpack.c.h.b16 %v1279
        %v1906 = vunpack.c.l.b16 %v1280
        %v1907 = vunpack.c.h.b16 %v1280
        %v1908 = vunpack.c.l.b16 %v1281
        %v1909 = vunpack.c.h.b16 %v1281
        %v1910 = vunpack.c.l.b16 %v1282
        %v1911 = vunpack.c.l.b16 %v1283
        %v1912 = vunpack.c.h.b16 %v1283
        %v1913 = vunpack.c.l.b16 %v1284
        %v1914 = vunpack.c.h.b16 %v1284
        %v1915 = vunpack.c.l.b16 %v1285
        %v1916 = vunpack.c.h.b16 %v1285
        %v1917 = vunpack.c.l.b16 %v1286
        %v1918 = vunpack.c.h.b16 %v1286
        %v1919 = vunpack.c.l.b16 %v1287
        %v1920 = vunpack.c.l.b16 %v1288
        %v1921 = vunpack.c.h.b16 %v1288
        %v1922 = vunpack.c.l.b16 %v1289
        %v1923 = vunpack.c.h.b16 %v1289
        %v1924 = vunpack.c.l.b16 %v1290
        %v1925 = vunpack.c.h.b16 %v1290
        %v1926 = vunpack.c.l.b16 %v1291
        %v1927 = vunpack.c.h.b16 %v1291
        %v1928 = vunpack.c.l.b16 %v1292
        %v1929 = vunpack.c.l.b16 %v1293
        %v1930 = vunpack.c.h.b16 %v1293
        %v1931 = vunpack.c.l.b16 %v1294
        %v1932 = vunpack.c.h.b16 %v1294
        %v1933 = vunpack.c.l.b16 %v1295
        %v1934 = vunpack.c.h.b16 %v1295
        %v1935 = vunpack.c.l.b16 %v1296
        %v1936 = vunpack.c.h.b16 %v1296
        %v1937 = vunpack.c.l.b16 %v1297
        %v1938 = vunpack.c.l.b16 %v1298
        %v1939 = vunpack.c.h.b16 %v1298
        %v1940 = vunpack.c.l.b16 %v1299
        %v1941 = vunpack.c.h.b16 %v1299
        %v1942 = vunpack.c.l.b16 %v1300
        %v1943 = vunpack.c.h.b16 %v1300
        %v1944 = vunpack.c.l.b16 %v1301
        %v1945 = vunpack.c.h.b16 %v1301
        %v1946 = vunpack.c.l.b16 %v1302
        %v1947 = vunpack.c.l.b16 %v1303
        %v1948 = vunpack.c.h.b16 %v1303
        %v1949 = vunpack.c.l.b16 %v1304
        %v1950 = vunpack.c.h.b16 %v1304
        %v1951 = vunpack.c.l.b16 %v1305
        %v1952 = vunpack.c.h.b16 %v1305
        %v1953 = vunpack.c.l.b16 %v1306
        %v1954 = vunpack.c.h.b16 %v1306
        %v1955 = vunpack.c.l.b16 %v1307
        %v1956 = vunpack.c.l.b16 %v1308
        %v1957 = vunpack.c.h.b16 %v1308
        %v1958 = vunpack.c.l.b16 %v1309
        %v1959 = vunpack.c.h.b16 %v1309
        %v1960 = vunpack.c.l.b16 %v1310
        %v1961 = vunpack.c.h.b16 %v1310
        %v1962 = vunpack.c.l.b16 %v1311
        %v1963 = vunpack.c.h.b16 %v1311
        %v1964 = vunpack.c.l.b16 %v1312
        %v1965 = vunpack.c.l.b16 %v1313
        %v1966 = vunpack.c.h.b16 %v1313
        %v1967 = vunpack.c.l.b16 %v1314
        %v1968 = vunpack.c.h.b16 %v1314
        %v1969 = vunpack.c.l.b16 %v1315
        %v1970 = vunpack.c.h.b16 %v1315
        %v1971 = vunpack.c.l.b16 %v1316
        %v1972 = vunpack.c.h.b16 %v1316
        %v1973 = vunpack.c.l.b16 %v1317
        %v1974 = vunpack.c.l.b16 %v1318
        %v1975 = vunpack.c.h.b16 %v1318
        %v1976 = vunpack.c.l.b16 %v1319
        %v1977 = vunpack.c.h.b16 %v1319
        %v1978 = vunpack.c.l.b16 %v1320
        %v1979 = vunpack.c.h.b16 %v1320
        %v1980 = vunpack.c.l.b16 %v1321
        %v1981 = vunpack.c.h.b16 %v1321
        %v1982 = vunpack.c.l.b16 %v1322
        %v1983 = vunpack.c.l.b16 %v1323
        %v1984 = vunpack.c.h.b16 %v1323
        %v1985 = vunpack.c.l.b16 %v1324
        %v1986 = vunpack.c.h.b16 %v1324
        %v1987 = vunpack.c.l.b16 %v1325
        %v1988 = vunpack.c.h.b16 %v1325
        %v1989 = vunpack.c.l.b16 %v1326
        %v1990 = vunpack.c.h.b16 %v1326
        %v1991 = vunpack.c.l.b16 %v1327
        %v1992 = vunpack.c.l.b16 %v1328
        %v1993 = vunpack.c.h.b16 %v1328
        %v1994 = vunpack.c.l.b16 %v1329
        %v1995 = vunpack.c.h.b16 %v1329
        %v1996 = vunpack.c.l.b16 %v1330
        %v1997 = vunpack.c.h.b16 %v1330
        %v1998 = vunpack.c.l.b16 %v1331
        %v1999 = vunpack.c.h.b16 %v1331
        %v2000 = vunpack.c.l.b16 %v1332
        %v2001 = vunpack.c.l.b16 %v1333
        %v2002 = vunpack.c.h.b16 %v1333
        %v2003 = vunpack.c.l.b16 %v1334
        %v2004 = vunpack.c.h.b16 %v1334
        %v2005 = vunpack.c.l.b16 %v1335
        %v2006 = vunpack.c.h.b16 %v1335
        %v2007 = vunpack.c.l.b16 %v1336
        %v2008 = vunpack.c.h.b16 %v1336
        %v2009 = vunpack.c.l.b16 %v1337
        %v2010 = vpack.c.b16 %v1587, %v1578
        %v2011 = vpack.c.b16 %v1588, %v1579
        %v2012 = vpack.c.b16 %v1589, %v1580
        %v2013 = vpack.c.b16 %v1590, %v1581
        %v2014 = vpack.c.b16 %v1591, %v1582
        %v2015 = vpack.c.b16 %v1592, %v1583
        %v2016 = vpack.c.b16 %v1593, %v1584
        %v2017 = vpack.c.b16 %v1594, %v1585
        %v2018 = vpack.c.b16 %v1595, %v1586
        %v2019 = vpack.c.b16 %v1605, %v1596
        %v2020 = vpack.c.b16 %v1606, %v1597
        %v2021 = vpack.c.b16 %v1607, %v1598
        %v2022 = vpack.c.b16 %v1608, %v1599
        %v2023 = vpack.c.b16 %v1609, %v1600
        %v2024 = vpack.c.b16 %v1610, %v1601
        %v2025 = vpack.c.b16 %v1611, %v1602
        %v2026 = vpack.c.b16 %v1612, %v1603
        %v2027 = vpack.c.b16 %v1613, %v1604
        %v2028 = vpack.c.b16 %v1623, %v1614
        %v2029 = vpack.c.b16 %v1624, %v1615
        %v2030 = vpack.c.b16 %v1625, %v1616
        %v2031 = vpack.c.b16 %v1626, %v1617
        %v2032 = vpack.c.b16 %v1627, %v1618
        %v2033 = vpack.c.b16 %v1628, %v1619
        %v2034 = vpack.c.b16 %v1629, %v1620
        %v2035 = vpack.c.b16 %v1630, %v1621
        %v2036 = vpack.c.b16 %v1631, %v1622
        %v2037 = vpack.c.b16 %v1641, %v1632
        %v2038 = vpack.c.b16 %v1642, %v1633
        %v2039 = vpack.c.b16 %v1643, %v1634
        %v2040 = vpack.c.b16 %v1644, %v1635
        %v2041 = vpack.c.b16 %v1645, %v1636
        %v2042 = vpack.c.b16 %v1646, %v1637
        %v2043 = vpack.c.b16 %v1647, %v1638
        %v2044 = vpack.c.b16 %v1648, %v1639
        %v2045 = vpack.c.b16 %v1649, %v1640
        %v2046 = vpack.c.b16 %v1659, %v1650
        %v2047 = vpack.c.b16 %v1660, %v1651
        %v2048 = vpack.c.b16 %v1661, %v1652
        %v2049 = vpack.c.b16 %v1662, %v1653
        %v2050 = vpack.c.b16 %v1663, %v1654
        %v2051 = vpack.c.b16 %v1664, %v1655
        %v2052 = vpack.c.b16 %v1665, %v1656
        %v2053 = vpack.c.b16 %v1666, %v1657
        %v2054 = vpack.c.b16 %v1667, %v1658
        %v2055 = vpack.c.b16 %v1677, %v1668
        %v2056 = vpack.c.b16 %v1678, %v1669
        %v2057 = vpack.c.b16 %v1679, %v1670
        %v2058 = vpack.c.b16 %v1680, %v1671
        %v2059 = vpack.c.b16 %v1681, %v1672
        %v2060 = vpack.c.b16 %v1682, %v1673
        %v2061 = vpack.c.b16 %v1683, %v1674
        %v2062 = vpack.c.b16 %v1684, %v1675
        %v2063 = vpack.c.b16 %v1685, %v1676
        %v2064 = vpack.c.b16 %v1695, %v1686
        %v2065 = vpack.c.b16 %v1696, %v1687
        %v2066 = vpack.c.b16 %v1697, %v1688
        %v2067 = vpack.c.b16 %v1698, %v1689
        %v2068 = vpack.c.b16 %v1699, %v1690
        %v2069 = vpack.c.b16 %v1700, %v1691
        %v2070 = vpack.c.b16 %v1701, %v1692
        %v2071 = vpack.c.b16 %v1702, %v1693
        %v2072 = vpack.c.b16 %v1703, %v1694
        %v2073 = vpack.c.b16 %v1713, %v1704
        %v2074 = vpack.c.b16 %v1714, %v1705
        %v2075 = vpack.c.b16 %v1715, %v1706
        %v2076 = vpack.c.b16 %v1716, %v1707
        %v2077 = vpack.c.b16 %v1717, %v1708
        %v2078 = vpack.c.b16 %v1718, %v1709
        %v2079 = vpack.c.b16 %v1719, %v1710
        %v2080 = vpack.c.b16 %v1720, %v1711
        %v2081 = vpack.c.b16 %v1721, %v1712
        %v2082 = vpack.c.b16 %v1731, %v1722
        %v2083 = vpack.c.b16 %v1732, %v1723
        %v2084 = vpack.c.b16 %v1733, %v1724
        %v2085 = vpack.c.b16 %v1734, %v1725
        %v2086 = vpack.c.b16 %v1735, %v1726
        %v2087 = vpack.c.b16 %v1736, %v1727
        %v2088 = vpack.c.b16 %v1737, %v1728
        %v2089 = vpack.c.b16 %v1738, %v1729
        %v2090 = vpack.c.b16 %v1739, %v1730
        %v2091 = vpack.c.b16 %v1749, %v1740
        %v2092 = vpack.c.b16 %v1750, %v1741
        %v2093 = vpack.c.b16 %v1751, %v1742
        %v2094 = vpack.c.b16 %v1752, %v1743
        %v2095 = vpack.c.b16 %v1753, %v1744
        %v2096 = vpack.c.b16 %v1754, %v1745
        %v2097 = vpack.c.b16 %v1755, %v1746
        %v2098 = vpack.c.b16 %v1756, %v1747
        %v2099 = vpack.c.b16 %v1757, %v1748
        %v2100 = vpack.c.b16 %v1767, %v1758
        %v2101 = vpack.c.b16 %v1768, %v1759
        %v2102 = vpack.c.b16 %v1769, %v1760
        %v2103 = vpack.c.b16 %v1770, %v1761
        %v2104 = vpack.c.b16 %v1771, %v1762
        %v2105 = vpack.c.b16 %v1772, %v1763
        %v2106 = vpack.c.b16 %v1773, %v1764
        %v2107 = vpack.c.b16 %v1774, %v1765
        %v2108 = vpack.c.b16 %v1775, %v1766
        %v2109 = vpack.c.b16 %v1785, %v1776
        %v2110 = vpack.c.b16 %v1786, %v1777
        %v2111 = vpack.c.b16 %v1787, %v1778
        %v2112 = vpack.c.b16 %v1788, %v1779
        %v2113 = vpack.c.b16 %v1789, %v1780
        %v2114 = vpack.c.b16 %v1790, %v1781
        %v2115 = vpack.c.b16 %v1791, %v1782
        %v2116 = vpack.c.b16 %v1792, %v1783
        %v2117 = vpack.c.b16 %v1793, %v1784
        %v2118 = vpack.c.b16 %v1803, %v1794
        %v2119 = vpack.c.b16 %v1804, %v1795
        %v2120 = vpack.c.b16 %v1805, %v1796
        %v2121 = vpack.c.b16 %v1806, %v1797
        %v2122 = vpack.c.b16 %v1807, %v1798
        %v2123 = vpack.c.b16 %v1808, %v1799
        %v2124 = vpack.c.b16 %v1809, %v1800
        %v2125 = vpack.c.b16 %v1810, %v1801
        %v2126 = vpack.c.b16 %v1811, %v1802
        %v2127 = vpack.c.b16 %v1821, %v1812
        %v2128 = vpack.c.b16 %v1822, %v1813
        %v2129 = vpack.c.b16 %v1823, %v1814
        %v2130 = vpack.c.b16 %v1824, %v1815
        %v2131 = vpack.c.b16 %v1825, %v1816
        %v2132 = vpack.c.b16 %v1826, %v1817
        %v2133 = vpack.c.b16 %v1827, %v1818
        %v2134 = vpack.c.b16 %v1828, %v1819
        %v2135 = vpack.c.b16 %v1829, %v1820
        %v2136 = vpack.c.b16 %v1839, %v1830
        %v2137 = vpack.c.b16 %v1840, %v1831
        %v2138 = vpack.c.b16 %v1841, %v1832
        %v2139 = vpack.c.b16 %v1842, %v1833
        %v2140 = vpack.c.b16 %v1843, %v1834
        %v2141 = vpack.c.b16 %v1844, %v1835
        %v2142 = vpack.c.b16 %v1845, %v1836
        %v2143 = vpack.c.b16 %v1846, %v1837
        %v2144 = vpack.c.b16 %v1847, %v1838
        %v2145 = vpack.c.b16 %v1857, %v1848
        %v2146 = vpack.c.b16 %v1858, %v1849
        %v2147 = vpack.c.b16 %v1859, %v1850
        %v2148 = vpack.c.b16 %v1860, %v1851
        %v2149 = vpack.c.b16 %v1861, %v1852
        %v2150 = vpack.c.b16 %v1862, %v1853
        %v2151 = vpack.c.b16 %v1863, %v1854
        %v2152 = vpack.c.b16 %v1864, %v1855
        %v2153 = vpack.c.b16 %v1865, %v1856
        %v2154 = vpack.c.b16 %v1875, %v1866
        %v2155 = vpack.c.b16 %v1876, %v1867
        %v2156 = vpack.c.b16 %v1877, %v1868
        %v2157 = vpack.c.b16 %v1878, %v1869
        %v2158 = vpack.c.b16 %v1879, %v1870
        %v2159 = vpack.c.b16 %v1880, %v1871
        %v2160 = vpack.c.b16 %v1881, %v1872
        %v2161 = vpack.c.b16 %v1882, %v1873
        %v2162 = vpack.c.b16 %v1883, %v1874
        %v2163 = vpack.c.b16 %v1893, %v1884
        %v2164 = vpack.c.b16 %v1894, %v1885
        %v2165 = vpack.c.b16 %v1895, %v1886
        %v2166 = vpack.c.b16 %v1896, %v1887
        %v2167 = vpack.c.b16 %v1897, %v1888
        %v2168 = vpack.c.b16 %v1898, %v1889
        %v2169 = vpack.c.b16 %v1899, %v1890
        %v2170 = vpack.c.b16 %v1900, %v1891
        %v2171 = vpack.c.b16 %v1901, %v1892
        %v2172 = vpack.c.b16 %v1911, %v1902
        %v2173 = vpack.c.b16 %v1912, %v1903
        %v2174 = vpack.c.b16 %v1913, %v1904
        %v2175 = vpack.c.b16 %v1914, %v1905
        %v2176 = vpack.c.b16 %v1915, %v1906
        %v2177 = vpack.c.b16 %v1916, %v1907
        %v2178 = vpack.c.b16 %v1917, %v1908
        %v2179 = vpack.c.b16 %v1918, %v1909
        %v2180 = vpack.c.b16 %v1919, %v1910
        %v2181 = vpack.c.b16 %v1929, %v1920
        %v2182 = vpack.c.b16 %v1930, %v1921
        %v2183 = vpack.c.b16 %v1931, %v1922
        %v2184 = vpack.c.b16 %v1932, %v1923
        %v2185 = vpack.c.b16 %v1933, %v1924
        %v2186 = vpack.c.b16 %v1934, %v1925
        %v2187 = vpack.c.b16 %v1935, %v1926
        %v2188 = vpack.c.b16 %v1936, %v1927
        %v2189 = vpack.c.b16 %v1937, %v1928
        %v2190 = vpack.c.b16 %v1947, %v1938
        %v2191 = vpack.c.b16 %v1948, %v1939
        %v2192 = vpack.c.b16 %v1949, %v1940
        %v2193 = vpack.c.b16 %v1950, %v1941
        %v2194 = vpack.c.b16 %v1951, %v1942
        %v2195 = vpack.c.b16 %v1952, %v1943
        %v2196 = vpack.c.b16 %v1953, %v1944
        %v2197 = vpack.c.b16 %v1954, %v1945
        %v2198 = vpack.c.b16 %v1955, %v1946
        %v2199 = vpack.c.b16 %v1965, %v1956
        %v2200 = vpack.c.b16 %v1966, %v1957
        %v2201 = vpack.c.b16 %v1967, %v1958
        %v2202 = vpack.c.b16 %v1968, %v1959
        %v2203 = vpack.c.b16 %v1969, %v1960
        %v2204 = vpack.c.b16 %v1970, %v1961
        %v2205 = vpack.c.b16 %v1971, %v1962
        %v2206 = vpack.c.b16 %v1972, %v1963
        %v2207 = vpack.c.b16 %v1973, %v1964
        %v2208 = vpack.c.b16 %v1983, %v1974
        %v2209 = vpack.c.b16 %v1984, %v1975
        %v2210 = vpack.c.b16 %v1985, %v1976
        %v2211 = vpack.c.b16 %v1986, %v1977
        %v2212 = vpack.c.b16 %v1987, %v1978
        %v2213 = vpack.c.b16 %v1988, %v1979
        %v2214 = vpack.c.b16 %v1989, %v1980
        %v2215 = vpack.c.b16 %v1990, %v1981
        %v2216 = vpack.c.b16 %v1991, %v1982
        %v2217 = vpack.c.b16 %v2001, %v1992
        %v2218 = vpack.c.b16 %v2002, %v1993
        %v2219 = vpack.c.b16 %v2003, %v1994
        %v2220 = vpack.c.b16 %v2004, %v1995
        %v2221 = vpack.c.b16 %v2005, %v1996
        %v2222 = vpack.c.b16 %v2006, %v1997
        %v2223 = vpack.c.b16 %v2007, %v1998
        %v2224 = vpack.c.b16 %v2008, %v1999
        %v2225 = vpack.c.b16 %v2009, %v2000
        %2442 = vmatprep.subr.bf16.mxu0 %v2011
        %2443 = vmatpush1.bf16.msra.mxu0 %v2010
        %2444 = vmatprep.subr.bf16.mxu0 %v2020
        %2445 = vmatpush1.bf16.msra.mxu0 %v2019
        %2446 = vmatprep.subr.bf16.mxu0 %v2029
        %2447 = vmatpush1.bf16.msra.mxu0 %v2028
        %2448 = vmatprep.subr.bf16.mxu0 %v2038
        %2449 = vmatpush1.bf16.msra.mxu0 %v2037
        %2450 = vmatprep.subr.bf16.mxu0 %v2047
        %2451 = vmatpush1.bf16.msra.mxu0 %v2046
        %2452 = vmatprep.subr.bf16.mxu0 %v2056
        %2453 = vmatpush1.bf16.msra.mxu0 %v2055
        %2454 = vmatprep.subr.bf16.mxu0 %v2065
        %2455 = vmatpush1.bf16.msra.mxu0 %v2064
        %2456 = vmatprep.subr.bf16.mxu0 %v2074
        %2457 = vmatpush1.bf16.msra.mxu0 %v2073
        %2458 = vmatprep.subr.bf16.mxu0 %v2083
        %2459 = vmatpush1.bf16.msra.mxu0 %v2082
        %2460 = vmatprep.subr.bf16.mxu0 %v2092
        %2461 = vmatpush1.bf16.msra.mxu0 %v2091
        %2462 = vmatprep.subr.bf16.mxu0 %v2101
        %2463 = vmatpush1.bf16.msra.mxu0 %v2100
        %2464 = vmatprep.subr.bf16.mxu0 %v2110
        %2465 = vmatpush1.bf16.msra.mxu0 %v2109
        %2466 = vmatprep.subr.bf16.mxu0 %v2119
        %2467 = vmatpush1.bf16.msra.mxu0 %v2118
        %2468 = vmatprep.subr.bf16.mxu0 %v2128
        %2469 = vmatpush1.bf16.msra.mxu0 %v2127
        %2470 = vmatprep.subr.bf16.mxu0 %v2137
        %2471 = vmatpush1.bf16.msra.mxu0 %v2136
        %2472 = vmatprep.subr.bf16.mxu0 %v2146
        %2473 = vmatpush1.bf16.msra.mxu0 %v2145
        %2474 = vmatprep.mubr.bf16.mxu0 %v1096
        %2475 = vmatmul.mubr.bf16.gmra.mrb[0].mxu0 %v1095
        %v2476 = vpop.f32.mrb[0].mxu0
        %v2477 = vadd.f32 0.0, %v2476
        %v2478 = vpop.f32.mrb[0].mxu0
        %v2479 = vadd.f32 0.0, %v2478
        %v2480 = vpop.f32.mrb[0].mxu0
        %v2481 = vpop.f32.mrb[0].mxu0
        %2482 = vdwg.mxu0
        %2483 = vmatprep.subr.bf16.mxu0 %v2155
        %2484 = vmatpush1.bf16.msra.mxu0 %v2154
        %2485 = vmatprep.subr.bf16.mxu0 %v2164
        %2486 = vmatpush1.bf16.msra.mxu0 %v2163
        %2487 = vmatprep.subr.bf16.mxu0 %v2173
        %2488 = vmatpush1.bf16.msra.mxu0 %v2172
        %2489 = vmatprep.subr.bf16.mxu0 %v2182
        %2490 = vmatpush1.bf16.msra.mxu0 %v2181
        %2491 = vmatprep.subr.bf16.mxu0 %v2191
        %2492 = vmatpush1.bf16.msra.mxu0 %v2190
        %2493 = vmatprep.subr.bf16.mxu0 %v2200
        %2494 = vmatpush1.bf16.msra.mxu0 %v2199
        %2495 = vmatprep.subr.bf16.mxu0 %v2209
        %2496 = vmatpush1.bf16.msra.mxu0 %v2208
        %2497 = vmatprep.subr.bf16.mxu0 %v2218
        %2498 = vmatpush1.bf16.msra.mxu0 %v2217
        %2499 = vmatprep.subr.bf16.mxu0 0
        %2500 = vmatpush1.bf16.msra.mxu0 0
        %2501 = vmatprep.subr.bf16.mxu0 0
        %2502 = vmatpush1.bf16.msra.mxu0 0
        %2503 = vmatprep.subr.bf16.mxu0 0
        %2504 = vmatpush1.bf16.msra.mxu0 0
        %2505 = vmatprep.subr.bf16.mxu0 0
        %2506 = vmatpush1.bf16.msra.mxu0 0
        %2507 = vmatprep.subr.bf16.mxu0 0
        %2508 = vmatpush1.bf16.msra.mxu0 0
        %2509 = vmatprep.subr.bf16.mxu0 0
        %2510 = vmatpush1.bf16.msra.mxu0 0
        %2511 = vmatprep.subr.bf16.mxu0 0
        %2512 = vmatpush1.bf16.msra.mxu0 0
        %2513 = vmatprep.subr.bf16.mxu0 0
        %2514 = vmatpush1.bf16.msra.mxu0 0
        %2515 = vmatprep.mubr.bf16.mxu0 0
        %2516 = vmatmul.mubr.bf16.gmra.mrb[0].mxu0 %v1097
        %v2517 = vpop.f32.mrb[0].mxu0
        %v2518 = vadd.f32 %v2477, %v2517
        %v2519 = vpop.f32.mrb[0].mxu0
        %v2520 = vadd.f32 %v2479, %v2519
        %v2521 = vpop.f32.mrb[0].mxu0
        %v2522 = vpop.f32.mrb[0].mxu0
        %2523 = vdwg.mxu0
        %2524 = vmatprep.subr.bf16.mxu0 %v2013
        %2525 = vmatpush1.bf16.msra.mxu0 %v2012
        %2526 = vmatprep.subr.bf16.mxu0 %v2022
        %2527 = vmatpush1.bf16.msra.mxu0 %v2021
        %2528 = vmatprep.subr.bf16.mxu0 %v2031
        %2529 = vmatpush1.bf16.msra.mxu0 %v2030
        %2530 = vmatprep.subr.bf16.mxu0 %v2040
        %2531 = vmatpush1.bf16.msra.mxu0 %v2039
        %2532 = vmatprep.subr.bf16.mxu0 %v2049
        %2533 = vmatpush1.bf16.msra.mxu0 %v2048
        %2534 = vmatprep.subr.bf16.mxu0 %v2058
        %2535 = vmatpush1.bf16.msra.mxu0 %v2057
        %2536 = vmatprep.subr.bf16.mxu0 %v2067
        %2537 = vmatpush1.bf16.msra.mxu0 %v2066
        %2538 = vmatprep.subr.bf16.mxu0 %v2076
        %2539 = vmatpush1.bf16.msra.mxu0 %v2075
        %2540 = vmatprep.subr.bf16.mxu0 %v2085
        %2541 = vmatpush1.bf16.msra.mxu0 %v2084
        %2542 = vmatprep.subr.bf16.mxu0 %v2094
        %2543 = vmatpush1.bf16.msra.mxu0 %v2093
        %2544 = vmatprep.subr.bf16.mxu0 %v2103
        %2545 = vmatpush1.bf16.msra.mxu0 %v2102
        %2546 = vmatprep.subr.bf16.mxu0 %v2112
        %2547 = vmatpush1.bf16.msra.mxu0 %v2111
        %2548 = vmatprep.subr.bf16.mxu0 %v2121
        %2549 = vmatpush1.bf16.msra.mxu0 %v2120
        %2550 = vmatprep.subr.bf16.mxu0 %v2130
        %2551 = vmatpush1.bf16.msra.mxu0 %v2129
        %2552 = vmatprep.subr.bf16.mxu0 %v2139
        %2553 = vmatpush1.bf16.msra.mxu0 %v2138
        %2554 = vmatprep.subr.bf16.mxu0 %v2148
        %2555 = vmatpush1.bf16.msra.mxu0 %v2147
        %2556 = vmatprep.mubr.bf16.mxu0 %v1096
        %2557 = vmatmul.mubr.bf16.gmra.mrb[0].mxu0 %v1095
        %v2558 = vpop.f32.mrb[0].mxu0
        %v2559 = vadd.f32 0.0, %v2558
        %v2560 = vpop.f32.mrb[0].mxu0
        %v2561 = vadd.f32 0.0, %v2560
        %v2562 = vpop.f32.mrb[0].mxu0
        %v2563 = vpop.f32.mrb[0].mxu0
        %2564 = vdwg.mxu0
        %2565 = vmatprep.subr.bf16.mxu0 %v2157
        %2566 = vmatpush1.bf16.msra.mxu0 %v2156
        %2567 = vmatprep.subr.bf16.mxu0 %v2166
        %2568 = vmatpush1.bf16.msra.mxu0 %v2165
        %2569 = vmatprep.subr.bf16.mxu0 %v2175
        %2570 = vmatpush1.bf16.msra.mxu0 %v2174
        %2571 = vmatprep.subr.bf16.mxu0 %v2184
        %2572 = vmatpush1.bf16.msra.mxu0 %v2183
        %2573 = vmatprep.subr.bf16.mxu0 %v2193
        %2574 = vmatpush1.bf16.msra.mxu0 %v2192
        %2575 = vmatprep.subr.bf16.mxu0 %v2202
        %2576 = vmatpush1.bf16.msra.mxu0 %v2201
        %2577 = vmatprep.subr.bf16.mxu0 %v2211
        %2578 = vmatpush1.bf16.msra.mxu0 %v2210
        %2579 = vmatprep.subr.bf16.mxu0 %v2220
        %2580 = vmatpush1.bf16.msra.mxu0 %v2219
        %2581 = vmatprep.subr.bf16.mxu0 0
        %2582 = vmatpush1.bf16.msra.mxu0 0
        %2583 = vmatprep.subr.bf16.mxu0 0
        %2584 = vmatpush1.bf16.msra.mxu0 0
        %2585 = vmatprep.subr.bf16.mxu0 0
        %2586 = vmatpush1.bf16.msra.mxu0 0
        %2587 = vmatprep.subr.bf16.mxu0 0
        %2588 = vmatpush1.bf16.msra.mxu0 0
        %2589 = vmatprep.subr.bf16.mxu0 0
        %2590 = vmatpush1.bf16.msra.mxu0 0
        %2591 = vmatprep.subr.bf16.mxu0 0
        %2592 = vmatpush1.bf16.msra.mxu0 0
        %2593 = vmatprep.subr.bf16.mxu0 0
        %2594 = vmatpush1.bf16.msra.mxu0 0
        %2595 = vmatprep.subr.bf16.mxu0 0
        %2596 = vmatpush1.bf16.msra.mxu0 0
        %2597 = vmatprep.mubr.bf16.mxu0 0
        %2598 = vmatmul.mubr.bf16.gmra.mrb[0].mxu0 %v1097
        %v2599 = vpop.f32.mrb[0].mxu0
        %v2600 = vadd.f32 %v2559, %v2599
        %v2601 = vpop.f32.mrb[0].mxu0
        %v2602 = vadd.f32 %v2561, %v2601
        %v2603 = vpop.f32.mrb[0].mxu0
        %v2604 = vpop.f32.mrb[0].mxu0
        %2605 = vdwg.mxu0
        %2606 = vmatprep.subr.bf16.mxu0 %v2015
        %2607 = vmatpush1.bf16.msra.mxu0 %v2014
        %2608 = vmatprep.subr.bf16.mxu0 %v2024
        %2609 = vmatpush1.bf16.msra.mxu0 %v2023
        %2610 = vmatprep.subr.bf16.mxu0 %v2033
        %2611 = vmatpush1.bf16.msra.mxu0 %v2032
        %2612 = vmatprep.subr.bf16.mxu0 %v2042
        %2613 = vmatpush1.bf16.msra.mxu0 %v2041
        %2614 = vmatprep.subr.bf16.mxu0 %v2051
        %2615 = vmatpush1.bf16.msra.mxu0 %v2050
        %2616 = vmatprep.subr.bf16.mxu0 %v2060
        %2617 = vmatpush1.bf16.msra.mxu0 %v2059
        %2618 = vmatprep.subr.bf16.mxu0 %v2069
        %2619 = vmatpush1.bf16.msra.mxu0 %v2068
        %2620 = vmatprep.subr.bf16.mxu0 %v2078
        %2621 = vmatpush1.bf16.msra.mxu0 %v2077
        %2622 = vmatprep.subr.bf16.mxu0 %v2087
        %2623 = vmatpush1.bf16.msra.mxu0 %v2086
        %2624 = vmatprep.subr.bf16.mxu0 %v2096
        %2625 = vmatpush1.bf16.msra.mxu0 %v2095
        %2626 = vmatprep.subr.bf16.mxu0 %v2105
        %2627 = vmatpush1.bf16.msra.mxu0 %v2104
        %2628 = vmatprep.subr.bf16.mxu0 %v2114
        %2629 = vmatpush1.bf16.msra.mxu0 %v2113
        %2630 = vmatprep.subr.bf16.mxu0 %v2123
        %2631 = vmatpush1.bf16.msra.mxu0 %v2122
        %2632 = vmatprep.subr.bf16.mxu0 %v2132
        %2633 = vmatpush1.bf16.msra.mxu0 %v2131
        %2634 = vmatprep.subr.bf16.mxu0 %v2141
        %2635 = vmatpush1.bf16.msra.mxu0 %v2140
        %2636 = vmatprep.subr.bf16.mxu0 %v2150
        %2637 = vmatpush1.bf16.msra.mxu0 %v2149
        %2638 = vmatprep.mubr.bf16.mxu0 %v1096
        %2639 = vmatmul.mubr.bf16.gmra.mrb[0].mxu0 %v1095
        %v2640 = vpop.f32.mrb[0].mxu0
        %v2641 = vadd.f32 0.0, %v2640
        %v2642 = vpop.f32.mrb[0].mxu0
        %v2643 = vadd.f32 0.0, %v2642
        %v2644 = vpop.f32.mrb[0].mxu0
        %v2645 = vpop.f32.mrb[0].mxu0
        %2646 = vdwg.mxu0
        %2647 = vmatprep.subr.bf16.mxu0 %v2159
        %2648 = vmatpush1.bf16.msra.mxu0 %v2158
        %2649 = vmatprep.subr.bf16.mxu0 %v2168
        %2650 = vmatpush1.bf16.msra.mxu0 %v2167
        %2651 = vmatprep.subr.bf16.mxu0 %v2177
        %2652 = vmatpush1.bf16.msra.mxu0 %v2176
        %2653 = vmatprep.subr.bf16.mxu0 %v2186
        %2654 = vmatpush1.bf16.msra.mxu0 %v2185
        %2655 = vmatprep.subr.bf16.mxu0 %v2195
        %2656 = vmatpush1.bf16.msra.mxu0 %v2194
        %2657 = vmatprep.subr.bf16.mxu0 %v2204
        %2658 = vmatpush1.bf16.msra.mxu0 %v2203
        %2659 = vmatprep.subr.bf16.mxu0 %v2213
        %2660 = vmatpush1.bf16.msra.mxu0 %v2212
        %2661 = vmatprep.subr.bf16.mxu0 %v2222
        %2662 = vmatpush1.bf16.msra.mxu0 %v2221
        %2663 = vmatprep.subr.bf16.mxu0 0
        %2664 = vmatpush1.bf16.msra.mxu0 0
        %2665 = vmatprep.subr.bf16.mxu0 0
        %2666 = vmatpush1.bf16.msra.mxu0 0
        %2667 = vmatprep.subr.bf16.mxu0 0
        %2668 = vmatpush1.bf16.msra.mxu0 0
        %2669 = vmatprep.subr.bf16.mxu0 0
        %2670 = vmatpush1.bf16.msra.mxu0 0
        %2671 = vmatprep.subr.bf16.mxu0 0
        %2672 = vmatpush1.bf16.msra.mxu0 0
        %2673 = vmatprep.subr.bf16.mxu0 0
        %2674 = vmatpush1.bf16.msra.mxu0 0
        %2675 = vmatprep.subr.bf16.mxu0 0
        %2676 = vmatpush1.bf16.msra.mxu0 0
        %2677 = vmatprep.subr.bf16.mxu0 0
        %2678 = vmatpush1.bf16.msra.mxu0 0
        %2679 = vmatprep.mubr.bf16.mxu0 0
        %2680 = vmatmul.mubr.bf16.gmra.mrb[0].mxu0 %v1097
        %v2681 = vpop.f32.mrb[0].mxu0
        %v2682 = vadd.f32 %v2641, %v2681
        %v2683 = vpop.f32.mrb[0].mxu0
        %v2684 = vadd.f32 %v2643, %v2683
        %v2685 = vpop.f32.mrb[0].mxu0
        %v2686 = vpop.f32.mrb[0].mxu0
        %2687 = vdwg.mxu0
        %2688 = vmatprep.subr.bf16.mxu0 %v2017
        %2689 = vmatpush1.bf16.msra.mxu0 %v2016
        %2690 = vmatprep.subr.bf16.mxu0 %v2026
        %2691 = vmatpush1.bf16.msra.mxu0 %v2025
        %2692 = vmatprep.subr.bf16.mxu0 %v2035
        %2693 = vmatpush1.bf16.msra.mxu0 %v2034
        %2694 = vmatprep.subr.bf16.mxu0 %v2044
        %2695 = vmatpush1.bf16.msra.mxu0 %v2043
        %2696 = vmatprep.subr.bf16.mxu0 %v2053
        %2697 = vmatpush1.bf16.msra.mxu0 %v2052
        %2698 = vmatprep.subr.bf16.mxu0 %v2062
        %2699 = vmatpush1.bf16.msra.mxu0 %v2061
        %2700 = vmatprep.subr.bf16.mxu0 %v2071
        %2701 = vmatpush1.bf16.msra.mxu0 %v2070
        %2702 = vmatprep.subr.bf16.mxu0 %v2080
        %2703 = vmatpush1.bf16.msra.mxu0 %v2079
        %2704 = vmatprep.subr.bf16.mxu0 %v2089
        %2705 = vmatpush1.bf16.msra.mxu0 %v2088
        %2706 = vmatprep.subr.bf16.mxu0 %v2098
        %2707 = vmatpush1.bf16.msra.mxu0 %v2097
        %2708 = vmatprep.subr.bf16.mxu0 %v2107
        %2709 = vmatpush1.bf16.msra.mxu0 %v2106
        %2710 = vmatprep.subr.bf16.mxu0 %v2116
        %2711 = vmatpush1.bf16.msra.mxu0 %v2115
        %2712 = vmatprep.subr.bf16.mxu0 %v2125
        %2713 = vmatpush1.bf16.msra.mxu0 %v2124
        %2714 = vmatprep.subr.bf16.mxu0 %v2134
        %2715 = vmatpush1.bf16.msra.mxu0 %v2133
        %2716 = vmatprep.subr.bf16.mxu0 %v2143
        %2717 = vmatpush1.bf16.msra.mxu0 %v2142
        %2718 = vmatprep.subr.bf16.mxu0 %v2152
        %2719 = vmatpush1.bf16.msra.mxu0 %v2151
        %2720 = vmatprep.mubr.bf16.mxu0 %v1096
        %2721 = vmatmul.mubr.bf16.gmra.mrb[0].mxu0 %v1095
        %v2722 = vpop.f32.mrb[0].mxu0
        %v2723 = vadd.f32 0.0, %v2722
        %v2724 = vpop.f32.mrb[0].mxu0
        %v2725 = vadd.f32 0.0, %v2724
        %v2726 = vpop.f32.mrb[0].mxu0
        %v2727 = vpop.f32.mrb[0].mxu0
        %2728 = vdwg.mxu0
        %2729 = vmatprep.subr.bf16.mxu0 %v2161
        %2730 = vmatpush1.bf16.msra.mxu0 %v2160
        %2731 = vmatprep.subr.bf16.mxu0 %v2170
        %2732 = vmatpush1.bf16.msra.mxu0 %v2169
        %2733 = vmatprep.subr.bf16.mxu0 %v2179
        %2734 = vmatpush1.bf16.msra.mxu0 %v2178
        %2735 = vmatprep.subr.bf16.mxu0 %v2188
        %2736 = vmatpush1.bf16.msra.mxu0 %v2187
        %2737 = vmatprep.subr.bf16.mxu0 %v2197
        %2738 = vmatpush1.bf16.msra.mxu0 %v2196
        %2739 = vmatprep.subr.bf16.mxu0 %v2206
        %2740 = vmatpush1.bf16.msra.mxu0 %v2205
        %2741 = vmatprep.subr.bf16.mxu0 %v2215
        %2742 = vmatpush1.bf16.msra.mxu0 %v2214
        %2743 = vmatprep.subr.bf16.mxu0 %v2224
        %2744 = vmatpush1.bf16.msra.mxu0 %v2223
        %2745 = vmatprep.subr.bf16.mxu0 0
        %2746 = vmatpush1.bf16.msra.mxu0 0
        %2747 = vmatprep.subr.bf16.mxu0 0
        %2748 = vmatpush1.bf16.msra.mxu0 0
        %2749 = vmatprep.subr.bf16.mxu0 0
        %2750 = vmatpush1.bf16.msra.mxu0 0
        %2751 = vmatprep.subr.bf16.mxu0 0
        %2752 = vmatpush1.bf16.msra.mxu0 0
        %2753 = vmatprep.subr.bf16.mxu0 0
        %2754 = vmatpush1.bf16.msra.mxu0 0
        %2755 = vmatprep.subr.bf16.mxu0 0
        %2756 = vmatpush1.bf16.msra.mxu0 0
        %2757 = vmatprep.subr.bf16.mxu0 0
        %2758 = vmatpush1.bf16.msra.mxu0 0
        %2759 = vmatprep.subr.bf16.mxu0 0
        %2760 = vmatpush1.bf16.msra.mxu0 0
        %2761 = vmatprep.mubr.bf16.mxu0 0
        %2762 = vmatmul.mubr.bf16.gmra.mrb[0].mxu0 %v1097
        %v2763 = vpop.f32.mrb[0].mxu0
        %v2764 = vadd.f32 %v2723, %v2763
        %v2765 = vpop.f32.mrb[0].mxu0
        %v2766 = vadd.f32 %v2725, %v2765
        %v2767 = vpop.f32.mrb[0].mxu0
        %v2768 = vpop.f32.mrb[0].mxu0
        %2769 = vdwg.mxu0
        %2770 = vmatprep.subr.bf16.mxu0 0
        %2771 = vmatpush1.bf16.msra.mxu0 %v2018
        %2772 = vmatprep.subr.bf16.mxu0 0
        %2773 = vmatpush1.bf16.msra.mxu0 %v2027
        %2774 = vmatprep.subr.bf16.mxu0 0
        %2775 = vmatpush1.bf16.msra.mxu0 %v2036
        %2776 = vmatprep.subr.bf16.mxu0 0
        %2777 = vmatpush1.bf16.msra.mxu0 %v2045
        %2778 = vmatprep.subr.bf16.mxu0 0
        %2779 = vmatpush1.bf16.msra.mxu0 %v2054
        %2780 = vmatprep.subr.bf16.mxu0 0
        %2781 = vmatpush1.bf16.msra.mxu0 %v2063
        %2782 = vmatprep.subr.bf16.mxu0 0
        %2783 = vmatpush1.bf16.msra.mxu0 %v2072
        %2784 = vmatprep.subr.bf16.mxu0 0
        %2785 = vmatpush1.bf16.msra.mxu0 %v2081
        %2786 = vmatprep.subr.bf16.mxu0 0
        %2787 = vmatpush1.bf16.msra.mxu0 %v2090
        %2788 = vmatprep.subr.bf16.mxu0 0
        %2789 = vmatpush1.bf16.msra.mxu0 %v2099
        %2790 = vmatprep.subr.bf16.mxu0 0
        %2791 = vmatpush1.bf16.msra.mxu0 %v2108
        %2792 = vmatprep.subr.bf16.mxu0 0
        %2793 = vmatpush1.bf16.msra.mxu0 %v2117
        %2794 = vmatprep.subr.bf16.mxu0 0
        %2795 = vmatpush1.bf16.msra.mxu0 %v2126
        %2796 = vmatprep.subr.bf16.mxu0 0
        %2797 = vmatpush1.bf16.msra.mxu0 %v2135
        %2798 = vmatprep.subr.bf16.mxu0 0
        %2799 = vmatpush1.bf16.msra.mxu0 %v2144
        %2800 = vmatprep.subr.bf16.mxu0 0
        %2801 = vmatpush1.bf16.msra.mxu0 %v2153
        %2802 = vmatprep.mubr.bf16.mxu0 %v1096
        %2803 = vmatmul.mubr.bf16.gmra.mrb[0].mxu0 %v1095
        %v2804 = vpop.f32.mrb[0].mxu0
        %v2805 = vadd.f32 0.0, %v2804
        %v2806 = vpop.f32.mrb[0].mxu0
        %v2807 = vpop.f32.mrb[0].mxu0
        %v2808 = vpop.f32.mrb[0].mxu0
        %2809 = vdwg.mxu0
        %2810 = vmatprep.subr.bf16.mxu0 0
        %2811 = vmatpush1.bf16.msra.mxu0 %v2162
        %2812 = vmatprep.subr.bf16.mxu0 0
        %2813 = vmatpush1.bf16.msra.mxu0 %v2171
        %2814 = vmatprep.subr.bf16.mxu0 0
        %2815 = vmatpush1.bf16.msra.mxu0 %v2180
        %2816 = vmatprep.subr.bf16.mxu0 0
        %2817 = vmatpush1.bf16.msra.mxu0 %v2189
        %2818 = vmatprep.subr.bf16.mxu0 0
        %2819 = vmatpush1.bf16.msra.mxu0 %v2198
        %2820 = vmatprep.subr.bf16.mxu0 0
        %2821 = vmatpush1.bf16.msra.mxu0 %v2207
        %2822 = vmatprep.subr.bf16.mxu0 0
        %2823 = vmatpush1.bf16.msra.mxu0 %v2216
        %2824 = vmatprep.subr.bf16.mxu0 0
        %2825 = vmatpush1.bf16.msra.mxu0 %v2225
        %2826 = vmatprep.subr.bf16.mxu0 0
        %2827 = vmatpush1.bf16.msra.mxu0 0
        %2828 = vmatprep.subr.bf16.mxu0 0
        %2829 = vmatpush1.bf16.msra.mxu0 0
        %2830 = vmatprep.subr.bf16.mxu0 0
        %2831 = vmatpush1.bf16.msra.mxu0 0
        %2832 = vmatprep.subr.bf16.mxu0 0
        %2833 = vmatpush1.bf16.msra.mxu0 0
        %2834 = vmatprep.subr.bf16.mxu0 0
        %2835 = vmatpush1.bf16.msra.mxu0 0
        %2836 = vmatprep.subr.bf16.mxu0 0
        %2837 = vmatpush1.bf16.msra.mxu0 0
        %2838 = vmatprep.subr.bf16.mxu0 0
        %2839 = vmatpush1.bf16.msra.mxu0 0
        %2840 = vmatprep.subr.bf16.mxu0 0
        %2841 = vmatpush1.bf16.msra.mxu0 0
        %2842 = vmatprep.mubr.bf16.mxu0 0
        %2843 = vmatmul.mubr.bf16.gmra.mrb[0].mxu0 %v1097
        %v2844 = vpop.f32.mrb[0].mxu0
        %v2845 = vadd.f32 %v2805, %v2844
        %v2846 = vpop.f32.mrb[0].mxu0
        %v2847 = vpop.f32.mrb[0].mxu0
        %v2848 = vpop.f32.mrb[0].mxu0
        %2849 = vdwg.mxu0
        %v2850 = vpack.c.bf16 %v2518, %v2518
        %v2851 = vpack.c.bf16 %v2602, %v2602
        %vm2852 = vcmask 523264
        %v2854 = vsel %vm2852, %v2850, 0
        %v2857 = vsel %vm2852, %v2851, 0
        %2859 = vmatprep.subr.bf16.mxu0 0
        %2860 = vmatpush1.bf16.xpose.msra.mxu0 %v2857
        %2861 = vmatprep.subr.bf16.mxu0 0
        %2862 = vmatpush1.bf16.xpose.msra.mxu0 0
        %2863 = vmatprep.subr.bf16.mxu0 0
        %2864 = vmatpush1.bf16.xpose.msra.mxu0 0
        %2865 = vmatprep.subr.bf16.mxu0 0
        %2866 = vmatpush1.bf16.xpose.msra.mxu0 0
        %2867 = vmatprep.subr.bf16.mxu0 0
        %2868 = vmatpush1.bf16.xpose.msra.mxu0 0
        %2869 = vmatprep.subr.bf16.mxu0 0
        %2870 = vmatpush1.bf16.xpose.msra.mxu0 0
        %2871 = vmatprep.subr.bf16.mxu0 0
        %2872 = vmatpush1.bf16.xpose.msra.mxu0 0
        %2873 = vmatprep.subr.bf16.mxu0 0
        %2874 = vmatpush1.bf16.xpose.msra.mxu0 0
        %2875 = vmatprep.subr.bf16.mxu0 0
        %2876 = vmatpush1.bf16.xpose.msra.mxu0 0
        %2877 = vmatprep.subr.bf16.mxu0 0
        %2878 = vmatpush1.bf16.xpose.msra.mxu0 0
        %2879 = vmatprep.subr.bf16.mxu0 0
        %2880 = vmatpush1.bf16.xpose.msra.mxu0 0
        %2881 = vmatprep.subr.bf16.mxu0 0
        %2882 = vmatpush1.bf16.xpose.msra.mxu0 0
        %2883 = vmatprep.subr.bf16.mxu0 0
        %2884 = vmatpush1.bf16.xpose.msra.mxu0 0
        %2885 = vmatprep.subr.bf16.mxu0 0
        %2886 = vmatpush1.bf16.xpose.msra.mxu0 0
        %2887 = vmatprep.subr.bf16.mxu0 0
        %2888 = vmatpush1.bf16.xpose.msra.mxu0 0
        %2889 = vmatprep.subr.bf16.mxu0 0
        %2890 = vmatpush1.bf16.xpose.msra.mxu0 0
        %2891 = vmatprep.mubr.bf16.mxu0 0
        %2892 = vmatmul.mubr.bf16.gmra.mrb[0].mxu0 %v2854
        %v2893 = vpop.f32.mrb[0].mxu0
        %v2894 = vadd.f32 %v1032, %v2893
        %v2895 = vpop.f32.mrb[0].mxu0
        %v2896 = vpop.f32.mrb[0].mxu0
        %v2897 = vpop.f32.mrb[0].mxu0
        %2898 = vdwg.mxu0
        %vm2899 = vcmask 64512
        %v2900 = vsel %vm2899, %v2894, -inf
        %2901 = vmax.xlane.f32.xlu0 %v2900
        %v2902 = vpop.xlane.xlu0 %2901
        %v2903 = vsub.f32 %v2894, %v2902
        %v2904 = vmul.f32 %v2903, 1.442695
        %v2905 = vpow.pop %v2904
        %v2906 = vsel %vm2899, %v2905, 0.0
        %2907 = vadd.xlane.f32.xlu0 %v2906
        %v2908 = vpop.xlane.xlu0 %2907
        %v2909 = vrcp.pop %v2908
        %v2910 = vmul.f32 %v2905, %v2909
        %v2911 = vpack.c.bf16 %v2910, %v2910
        %v2912 = vpack.c.bf16 %v2764, %v2764
        %v2914 = vsel %vm2899, %v2911, 0
        %vm2916 = vcmask 1043456
        %v2918 = vsel %vm2916, %v2912, 0
        %2920 = vmatprep.subr.bf16.mxu0 0
        %2921 = vmatpush1.bf16.msra.mxu0 %v2918
        %2922 = vmatprep.subr.bf16.mxu0 0
        %2923 = vmatpush1.bf16.msra.mxu0 0
        %2924 = vmatprep.subr.bf16.mxu0 0
        %2925 = vmatpush1.bf16.msra.mxu0 0
        %2926 = vmatprep.subr.bf16.mxu0 0
        %2927 = vmatpush1.bf16.msra.mxu0 0
        %2928 = vmatprep.subr.bf16.mxu0 0
        %2929 = vmatpush1.bf16.msra.mxu0 0
        %2930 = vmatprep.subr.bf16.mxu0 0
        %2931 = vmatpush1.bf16.msra.mxu0 0
        %2932 = vmatprep.subr.bf16.mxu0 0
        %2933 = vmatpush1.bf16.msra.mxu0 0
        %2934 = vmatprep.subr.bf16.mxu0 0
        %2935 = vmatpush1.bf16.msra.mxu0 0
        %2936 = vmatprep.subr.bf16.mxu0 0
        %2937 = vmatpush1.bf16.msra.mxu0 0
        %2938 = vmatprep.subr.bf16.mxu0 0
        %2939 = vmatpush1.bf16.msra.mxu0 0
        %2940 = vmatprep.subr.bf16.mxu0 0
        %2941 = vmatpush1.bf16.msra.mxu0 0
        %2942 = vmatprep.subr.bf16.mxu0 0
        %2943 = vmatpush1.bf16.msra.mxu0 0
        %2944 = vmatprep.subr.bf16.mxu0 0
        %2945 = vmatpush1.bf16.msra.mxu0 0
        %2946 = vmatprep.subr.bf16.mxu0 0
        %2947 = vmatpush1.bf16.msra.mxu0 0
        %2948 = vmatprep.subr.bf16.mxu0 0
        %2949 = vmatpush1.bf16.msra.mxu0 0
        %2950 = vmatprep.subr.bf16.mxu0 0
        %2951 = vmatpush1.bf16.msra.mxu0 0
        %2952 = vmatprep.mubr.bf16.mxu0 0
        %2953 = vmatmul.mubr.bf16.gmra.mrb[0].mxu0 %v2914
        %v2954 = vpop.f32.mrb[0].mxu0
        %v2955 = vadd.f32 0.0, %v2954
        %v2956 = vpop.f32.mrb[0].mxu0
        %v2957 = vpop.f32.mrb[0].mxu0
        %v2958 = vpop.f32.mrb[0].mxu0
        %2959 = vdwg.mxu0
        %v2960 = vpack.c.bf16 %v2955, %v2955
        %vm2961 = vcmask 519168
        %2962 = vst.msk [vmem:[#allocation3] sm:$0xf] %vm2961, %v2960
        %2964 = vrot.lane.b32.xlu0 %v2850, 64
        %v2965 = vpop.permute.xlu0 %2964
        %2967 = vrot.lane.b32.xlu0 %v2851, 64
        %v2968 = vpop.permute.xlu0 %2967
        %v2970 = vsel %vm2852, %v2965, 0
        %v2973 = vsel %vm2852, %v2968, 0
        %2975 = vmatprep.subr.bf16.mxu0 0
        %2976 = vmatpush1.bf16.xpose.msra.mxu0 %v2973
        %2977 = vmatprep.subr.bf16.mxu0 0
        %2978 = vmatpush1.bf16.xpose.msra.mxu0 0
        %2979 = vmatprep.subr.bf16.mxu0 0
        %2980 = vmatpush1.bf16.xpose.msra.mxu0 0
        %2981 = vmatprep.subr.bf16.mxu0 0
        %2982 = vmatpush1.bf16.xpose.msra.mxu0 0
        %2983 = vmatprep.subr.bf16.mxu0 0
        %2984 = vmatpush1.bf16.xpose.msra.mxu0 0
        %2985 = vmatprep.subr.bf16.mxu0 0
        %2986 = vmatpush1.bf16.xpose.msra.mxu0 0
        %2987 = vmatprep.subr.bf16.mxu0 0
        %2988 = vmatpush1.bf16.xpose.msra.mxu0 0
        %2989 = vmatprep.subr.bf16.mxu0 0
        %2990 = vmatpush1.bf16.xpose.msra.mxu0 0
        %2991 = vmatprep.subr.bf16.mxu0 0
        %2992 = vmatpush1.bf16.xpose.msra.mxu0 0
        %2993 = vmatprep.subr.bf16.mxu0 0
        %2994 = vmatpush1.bf16.xpose.msra.mxu0 0
        %2995 = vmatprep.subr.bf16.mxu0 0
        %2996 = vmatpush1.bf16.xpose.msra.mxu0 0
        %2997 = vmatprep.subr.bf16.mxu0 0
        %2998 = vmatpush1.bf16.xpose.msra.mxu0 0
        %2999 = vmatprep.subr.bf16.mxu0 0
        %3000 = vmatpush1.bf16.xpose.msra.mxu0 0
        %3001 = vmatprep.subr.bf16.mxu0 0
        %3002 = vmatpush1.bf16.xpose.msra.mxu0 0
        %3003 = vmatprep.subr.bf16.mxu0 0
        %3004 = vmatpush1.bf16.xpose.msra.mxu0 0
        %3005 = vmatprep.subr.bf16.mxu0 0
        %3006 = vmatpush1.bf16.xpose.msra.mxu0 0
        %3007 = vmatprep.mubr.bf16.mxu0 0
        %3008 = vmatmul.mubr.bf16.gmra.mrb[0].mxu0 %v2970
        %v3009 = vpop.f32.mrb[0].mxu0
        %v3010 = vadd.f32 %v1032, %v3009
        %v3011 = vpop.f32.mrb[0].mxu0
        %v3012 = vpop.f32.mrb[0].mxu0
        %v3013 = vpop.f32.mrb[0].mxu0
        %3014 = vdwg.mxu0
        %v3015 = vsel %vm2899, %v3010, -inf
        %3016 = vmax.xlane.f32.xlu0 %v3015
        %v3017 = vpop.xlane.xlu0 %3016
        %v3018 = vsub.f32 %v3010, %v3017
        %v3019 = vmul.f32 %v3018, 1.442695
        %v3020 = vpow.pop %v3019
        %v3021 = vsel %vm2899, %v3020, 0.0
        %3022 = vadd.xlane.f32.xlu0 %v3021
        %v3023 = vpop.xlane.xlu0 %3022
        %v3024 = vrcp.pop %v3023
        %v3025 = vmul.f32 %v3020, %v3024
        %v3026 = vpack.c.bf16 %v3025, %v3025
        %3028 = vrot.lane.b32.xlu0 %v2912, 64
        %v3029 = vpop.permute.xlu0 %3028
        %v3031 = vsel %vm2899, %v3026, 0
        %v3034 = vsel %vm2916, %v3029, 0
        %3036 = vmatprep.subr.bf16.mxu0 0
        %3037 = vmatpush1.bf16.msra.mxu0 %v3034
        %3038 = vmatprep.subr.bf16.mxu0 0
        %3039 = vmatpush1.bf16.msra.mxu0 0
        %3040 = vmatprep.subr.bf16.mxu0 0
        %3041 = vmatpush1.bf16.msra.mxu0 0
        %3042 = vmatprep.subr.bf16.mxu0 0
        %3043 = vmatpush1.bf16.msra.mxu0 0
        %3044 = vmatprep.subr.bf16.mxu0 0
        %3045 = vmatpush1.bf16.msra.mxu0 0
        %3046 = vmatprep.subr.bf16.mxu0 0
        %3047 = vmatpush1.bf16.msra.mxu0 0
        %3048 = vmatprep.subr.bf16.mxu0 0
        %3049 = vmatpush1.bf16.msra.mxu0 0
        %3050 = vmatprep.subr.bf16.mxu0 0
        %3051 = vmatpush1.bf16.msra.mxu0 0
        %3052 = vmatprep.subr.bf16.mxu0 0
        %3053 = vmatpush1.bf16.msra.mxu0 0
        %3054 = vmatprep.subr.bf16.mxu0 0
        %3055 = vmatpush1.bf16.msra.mxu0 0
        %3056 = vmatprep.subr.bf16.mxu0 0
        %3057 = vmatpush1.bf16.msra.mxu0 0
        %3058 = vmatprep.subr.bf16.mxu0 0
        %3059 = vmatpush1.bf16.msra.mxu0 0
        %3060 = vmatprep.subr.bf16.mxu0 0
        %3061 = vmatpush1.bf16.msra.mxu0 0
        %3062 = vmatprep.subr.bf16.mxu0 0
        %3063 = vmatpush1.bf16.msra.mxu0 0
        %3064 = vmatprep.subr.bf16.mxu0 0
        %3065 = vmatpush1.bf16.msra.mxu0 0
        %3066 = vmatprep.subr.bf16.mxu0 0
        %3067 = vmatpush1.bf16.msra.mxu0 0
        %3068 = vmatprep.mubr.bf16.mxu0 0
        %3069 = vmatmul.mubr.bf16.gmra.mrb[0].mxu0 %v3031
        %v3070 = vpop.f32.mrb[0].mxu0
        %v3071 = vadd.f32 0.0, %v3070
        %v3072 = vpop.f32.mrb[0].mxu0
        %v3073 = vpop.f32.mrb[0].mxu0
        %v3074 = vpop.f32.mrb[0].mxu0
        %3075 = vdwg.mxu0
        %v3076 = vpack.c.bf16 %v3071, %v3071
        %v3078 = vunpack.c.l.b16 %v3076
        %v3079 = vpack.c.b16 %v3078, %v3078
        %3080 = vrot.lane.b32.xlu0 %v3079, 64
        %v3081 = vpop.permute.xlu0 %3080
        %vm3083 = vcmask 1043968
        %3084 = vst.msk [vmem:[#allocation3] sm:$0xf] %vm3083, %v3081
        %v3085 = vpack.c.bf16 %v2520, %v2520
        %v3086 = vpack.c.bf16 %v2682, %v2682
        %v3088 = vsel %vm2852, %v3085, 0
        %v3091 = vsel %vm2852, %v3086, 0
        %3093 = vmatprep.subr.bf16.mxu0 0
        %3094 = vmatpush1.bf16.xpose.msra.mxu0 %v3091
        %3095 = vmatprep.subr.bf16.mxu0 0
        %3096 = vmatpush1.bf16.xpose.msra.mxu0 0
        %3097 = vmatprep.subr.bf16.mxu0 0
        %3098 = vmatpush1.bf16.xpose.msra.mxu0 0
        %3099 = vmatprep.subr.bf16.mxu0 0
        %3100 = vmatpush1.bf16.xpose.msra.mxu0 0
        %3101 = vmatprep.subr.bf16.mxu0 0
        %3102 = vmatpush1.bf16.xpose.msra.mxu0 0
        %3103 = vmatprep.subr.bf16.mxu0 0
        %3104 = vmatpush1.bf16.xpose.msra.mxu0 0
        %3105 = vmatprep.subr.bf16.mxu0 0
        %3106 = vmatpush1.bf16.xpose.msra.mxu0 0
        %3107 = vmatprep.subr.bf16.mxu0 0
        %3108 = vmatpush1.bf16.xpose.msra.mxu0 0
        %3109 = vmatprep.subr.bf16.mxu0 0
        %3110 = vmatpush1.bf16.xpose.msra.mxu0 0
        %3111 = vmatprep.subr.bf16.mxu0 0
        %3112 = vmatpush1.bf16.xpose.msra.mxu0 0
        %3113 = vmatprep.subr.bf16.mxu0 0
        %3114 = vmatpush1.bf16.xpose.msra.mxu0 0
        %3115 = vmatprep.subr.bf16.mxu0 0
        %3116 = vmatpush1.bf16.xpose.msra.mxu0 0
        %3117 = vmatprep.subr.bf16.mxu0 0
        %3118 = vmatpush1.bf16.xpose.msra.mxu0 0
        %3119 = vmatprep.subr.bf16.mxu0 0
        %3120 = vmatpush1.bf16.xpose.msra.mxu0 0
        %3121 = vmatprep.subr.bf16.mxu0 0
        %3122 = vmatpush1.bf16.xpose.msra.mxu0 0
        %3123 = vmatprep.subr.bf16.mxu0 0
        %3124 = vmatpush1.bf16.xpose.msra.mxu0 0
        %3125 = vmatprep.mubr.bf16.mxu0 0
        %3126 = vmatmul.mubr.bf16.gmra.mrb[0].mxu0 %v3088
        %v3127 = vpop.f32.mrb[0].mxu0
        %v3128 = vadd.f32 %v1032, %v3127
        %v3129 = vpop.f32.mrb[0].mxu0
        %v3130 = vpop.f32.mrb[0].mxu0
        %v3131 = vpop.f32.mrb[0].mxu0
        %3132 = vdwg.mxu0
        %v3133 = vsel %vm2899, %v3128, -inf
        %3134 = vmax.xlane.f32.xlu0 %v3133
        %v3135 = vpop.xlane.xlu0 %3134
        %v3136 = vsub.f32 %v3128, %v3135
        %v3137 = vmul.f32 %v3136, 1.442695
        %v3138 = vpow.pop %v3137
        %v3139 = vsel %vm2899, %v3138, 0.0
        %3140 = vadd.xlane.f32.xlu0 %v3139
        %v3141 = vpop.xlane.xlu0 %3140
        %v3142 = vrcp.pop %v3141
        %v3143 = vmul.f32 %v3138, %v3142
        %v3144 = vpack.c.bf16 %v3143, %v3143
        %v3145 = vpack.c.bf16 %v2766, %v2766
        %v3147 = vsel %vm2899, %v3144, 0
        %v3150 = vsel %vm2916, %v3145, 0
        %3152 = vmatprep.subr.bf16.mxu0 0
        %3153 = vmatpush1.bf16.msra.mxu0 %v3150
        %3154 = vmatprep.subr.bf16.mxu0 0
        %3155 = vmatpush1.bf16.msra.mxu0 0
        %3156 = vmatprep.subr.bf16.mxu0 0
        %3157 = vmatpush1.bf16.msra.mxu0 0
        %3158 = vmatprep.subr.bf16.mxu0 0
        %3159 = vmatpush1.bf16.msra.mxu0 0
        %3160 = vmatprep.subr.bf16.mxu0 0
        %3161 = vmatpush1.bf16.msra.mxu0 0
        %3162 = vmatprep.subr.bf16.mxu0 0
        %3163 = vmatpush1.bf16.msra.mxu0 0
        %3164 = vmatprep.subr.bf16.mxu0 0
        %3165 = vmatpush1.bf16.msra.mxu0 0
        %3166 = vmatprep.subr.bf16.mxu0 0
        %3167 = vmatpush1.bf16.msra.mxu0 0
        %3168 = vmatprep.subr.bf16.mxu0 0
        %3169 = vmatpush1.bf16.msra.mxu0 0
        %3170 = vmatprep.subr.bf16.mxu0 0
        %3171 = vmatpush1.bf16.msra.mxu0 0
        %3172 = vmatprep.subr.bf16.mxu0 0
        %3173 = vmatpush1.bf16.msra.mxu0 0
        %3174 = vmatprep.subr.bf16.mxu0 0
        %3175 = vmatpush1.bf16.msra.mxu0 0
        %3176 = vmatprep.subr.bf16.mxu0 0
        %3177 = vmatpush1.bf16.msra.mxu0 0
        %3178 = vmatprep.subr.bf16.mxu0 0
        %3179 = vmatpush1.bf16.msra.mxu0 0
        %3180 = vmatprep.subr.bf16.mxu0 0
        %3181 = vmatpush1.bf16.msra.mxu0 0
        %3182 = vmatprep.subr.bf16.mxu0 0
        %3183 = vmatpush1.bf16.msra.mxu0 0
        %3184 = vmatprep.mubr.bf16.mxu0 0
        %3185 = vmatmul.mubr.bf16.gmra.mrb[0].mxu0 %v3147
        %v3186 = vpop.f32.mrb[0].mxu0
        %v3187 = vadd.f32 0.0, %v3186
        %v3188 = vpop.f32.mrb[0].mxu0
        %v3189 = vpop.f32.mrb[0].mxu0
        %v3190 = vpop.f32.mrb[0].mxu0
        %3191 = vdwg.mxu0
        %v3192 = vpack.c.bf16 %v3187, %v3187
        %3193 = vst.msk [vmem:[#allocation3 + $0x4] sm:$0xf] %vm2961, %v3192
        %3195 = vrot.lane.b32.xlu0 %v3085, 64
        %v3196 = vpop.permute.xlu0 %3195
        %3198 = vrot.lane.b32.xlu0 %v3086, 64
        %v3199 = vpop.permute.xlu0 %3198
        %v3201 = vsel %vm2852, %v3196, 0
        %v3204 = vsel %vm2852, %v3199, 0
        %3206 = vmatprep.subr.bf16.mxu0 0
        %3207 = vmatpush1.bf16.xpose.msra.mxu0 %v3204
        %3208 = vmatprep.subr.bf16.mxu0 0
        %3209 = vmatpush1.bf16.xpose.msra.mxu0 0
        %3210 = vmatprep.subr.bf16.mxu0 0
        %3211 = vmatpush1.bf16.xpose.msra.mxu0 0
        %3212 = vmatprep.subr.bf16.mxu0 0
        %3213 = vmatpush1.bf16.xpose.msra.mxu0 0
        %3214 = vmatprep.subr.bf16.mxu0 0
        %3215 = vmatpush1.bf16.xpose.msra.mxu0 0
        %3216 = vmatprep.subr.bf16.mxu0 0
        %3217 = vmatpush1.bf16.xpose.msra.mxu0 0
        %3218 = vmatprep.subr.bf16.mxu0 0
        %3219 = vmatpush1.bf16.xpose.msra.mxu0 0
        %3220 = vmatprep.subr.bf16.mxu0 0
        %3221 = vmatpush1.bf16.xpose.msra.mxu0 0
        %3222 = vmatprep.subr.bf16.mxu0 0
        %3223 = vmatpush1.bf16.xpose.msra.mxu0 0
        %3224 = vmatprep.subr.bf16.mxu0 0
        %3225 = vmatpush1.bf16.xpose.msra.mxu0 0
        %3226 = vmatprep.subr.bf16.mxu0 0
        %3227 = vmatpush1.bf16.xpose.msra.mxu0 0
        %3228 = vmatprep.subr.bf16.mxu0 0
        %3229 = vmatpush1.bf16.xpose.msra.mxu0 0
        %3230 = vmatprep.subr.bf16.mxu0 0
        %3231 = vmatpush1.bf16.xpose.msra.mxu0 0
        %3232 = vmatprep.subr.bf16.mxu0 0
        %3233 = vmatpush1.bf16.xpose.msra.mxu0 0
        %3234 = vmatprep.subr.bf16.mxu0 0
        %3235 = vmatpush1.bf16.xpose.msra.mxu0 0
        %3236 = vmatprep.subr.bf16.mxu0 0
        %3237 = vmatpush1.bf16.xpose.msra.mxu0 0
        %3238 = vmatprep.mubr.bf16.mxu0 0
        %3239 = vmatmul.mubr.bf16.gmra.mrb[0].mxu0 %v3201
        %v3240 = vpop.f32.mrb[0].mxu0
        %v3241 = vadd.f32 %v1032, %v3240
        %v3242 = vpop.f32.mrb[0].mxu0
        %v3243 = vpop.f32.mrb[0].mxu0
        %v3244 = vpop.f32.mrb[0].mxu0
        %3245 = vdwg.mxu0
        %v3246 = vsel %vm2899, %v3241, -inf
        %3247 = vmax.xlane.f32.xlu0 %v3246
        %v3248 = vpop.xlane.xlu0 %3247
        %v3249 = vsub.f32 %v3241, %v3248
        %v3250 = vmul.f32 %v3249, 1.442695
        %v3251 = vpow.pop %v3250
        %v3252 = vsel %vm2899, %v3251, 0.0
        %3253 = vadd.xlane.f32.xlu0 %v3252
        %v3254 = vpop.xlane.xlu0 %3253
        %v3255 = vrcp.pop %v3254
        %v3256 = vmul.f32 %v3251, %v3255
        %v3257 = vpack.c.bf16 %v3256, %v3256
        %3259 = vrot.lane.b32.xlu0 %v3145, 64
        %v3260 = vpop.permute.xlu0 %3259
        %v3262 = vsel %vm2899, %v3257, 0
        %v3265 = vsel %vm2916, %v3260, 0
        %3267 = vmatprep.subr.bf16.mxu0 0
        %3268 = vmatpush1.bf16.msra.mxu0 %v3265
        %3269 = vmatprep.subr.bf16.mxu0 0
        %3270 = vmatpush1.bf16.msra.mxu0 0
        %3271 = vmatprep.subr.bf16.mxu0 0
        %3272 = vmatpush1.bf16.msra.mxu0 0
        %3273 = vmatprep.subr.bf16.mxu0 0
        %3274 = vmatpush1.bf16.msra.mxu0 0
        %3275 = vmatprep.subr.bf16.mxu0 0
        %3276 = vmatpush1.bf16.msra.mxu0 0
        %3277 = vmatprep.subr.bf16.mxu0 0
        %3278 = vmatpush1.bf16.msra.mxu0 0
        %3279 = vmatprep.subr.bf16.mxu0 0
        %3280 = vmatpush1.bf16.msra.mxu0 0
        %3281 = vmatprep.subr.bf16.mxu0 0
        %3282 = vmatpush1.bf16.msra.mxu0 0
        %3283 = vmatprep.subr.bf16.mxu0 0
        %3284 = vmatpush1.bf16.msra.mxu0 0
        %3285 = vmatprep.subr.bf16.mxu0 0
        %3286 = vmatpush1.bf16.msra.mxu0 0
        %3287 = vmatprep.subr.bf16.mxu0 0
        %3288 = vmatpush1.bf16.msra.mxu0 0
        %3289 = vmatprep.subr.bf16.mxu0 0
        %3290 = vmatpush1.bf16.msra.mxu0 0
        %3291 = vmatprep.subr.bf16.mxu0 0
        %3292 = vmatpush1.bf16.msra.mxu0 0
        %3293 = vmatprep.subr.bf16.mxu0 0
        %3294 = vmatpush1.bf16.msra.mxu0 0
        %3295 = vmatprep.subr.bf16.mxu0 0
        %3296 = vmatpush1.bf16.msra.mxu0 0
        %3297 = vmatprep.subr.bf16.mxu0 0
        %3298 = vmatpush1.bf16.msra.mxu0 0
        %3299 = vmatprep.mubr.bf16.mxu0 0
        %3300 = vmatmul.mubr.bf16.gmra.mrb[0].mxu0 %v3262
        %v3301 = vpop.f32.mrb[0].mxu0
        %v3302 = vadd.f32 0.0, %v3301
        %v3303 = vpop.f32.mrb[0].mxu0
        %v3304 = vpop.f32.mrb[0].mxu0
        %v3305 = vpop.f32.mrb[0].mxu0
        %3306 = vdwg.mxu0
        %v3307 = vpack.c.bf16 %v3302, %v3302
        %v3309 = vunpack.c.l.b16 %v3307
        %v3310 = vpack.c.b16 %v3309, %v3309
        %3311 = vrot.lane.b32.xlu0 %v3310, 64
        %v3312 = vpop.permute.xlu0 %3311
        %3314 = vst.msk [vmem:[#allocation3 + $0x4] sm:$0xf] %vm3083, %v3312
        %v3315 = vpack.c.bf16 %v2600, %v2600
        %v3316 = vpack.c.bf16 %v2684, %v2684
        %v3318 = vsel %vm2852, %v3315, 0
        %v3321 = vsel %vm2852, %v3316, 0
        %3323 = vmatprep.subr.bf16.mxu0 0
        %3324 = vmatpush1.bf16.xpose.msra.mxu0 %v3321
        %3325 = vmatprep.subr.bf16.mxu0 0
        %3326 = vmatpush1.bf16.xpose.msra.mxu0 0
        %3327 = vmatprep.subr.bf16.mxu0 0
        %3328 = vmatpush1.bf16.xpose.msra.mxu0 0
        %3329 = vmatprep.subr.bf16.mxu0 0
        %3330 = vmatpush1.bf16.xpose.msra.mxu0 0
        %3331 = vmatprep.subr.bf16.mxu0 0
        %3332 = vmatpush1.bf16.xpose.msra.mxu0 0
        %3333 = vmatprep.subr.bf16.mxu0 0
        %3334 = vmatpush1.bf16.xpose.msra.mxu0 0
        %3335 = vmatprep.subr.bf16.mxu0 0
        %3336 = vmatpush1.bf16.xpose.msra.mxu0 0
        %3337 = vmatprep.subr.bf16.mxu0 0
        %3338 = vmatpush1.bf16.xpose.msra.mxu0 0
        %3339 = vmatprep.subr.bf16.mxu0 0
        %3340 = vmatpush1.bf16.xpose.msra.mxu0 0
        %3341 = vmatprep.subr.bf16.mxu0 0
        %3342 = vmatpush1.bf16.xpose.msra.mxu0 0
        %3343 = vmatprep.subr.bf16.mxu0 0
        %3344 = vmatpush1.bf16.xpose.msra.mxu0 0
        %3345 = vmatprep.subr.bf16.mxu0 0
        %3346 = vmatpush1.bf16.xpose.msra.mxu0 0
        %3347 = vmatprep.subr.bf16.mxu0 0
        %3348 = vmatpush1.bf16.xpose.msra.mxu0 0
        %3349 = vmatprep.subr.bf16.mxu0 0
        %3350 = vmatpush1.bf16.xpose.msra.mxu0 0
        %3351 = vmatprep.subr.bf16.mxu0 0
        %3352 = vmatpush1.bf16.xpose.msra.mxu0 0
        %3353 = vmatprep.subr.bf16.mxu0 0
        %3354 = vmatpush1.bf16.xpose.msra.mxu0 0
        %3355 = vmatprep.mubr.bf16.mxu0 0
        %3356 = vmatmul.mubr.bf16.gmra.mrb[0].mxu0 %v3318
        %v3357 = vpop.f32.mrb[0].mxu0
        %v3358 = vadd.f32 %v1032, %v3357
        %v3359 = vpop.f32.mrb[0].mxu0
        %v3360 = vpop.f32.mrb[0].mxu0
        %v3361 = vpop.f32.mrb[0].mxu0
        %3362 = vdwg.mxu0
        %v3363 = vsel %vm2899, %v3358, -inf
        %3364 = vmax.xlane.f32.xlu0 %v3363
        %v3365 = vpop.xlane.xlu0 %3364
        %v3366 = vsub.f32 %v3358, %v3365
        %v3367 = vmul.f32 %v3366, 1.442695
        %v3368 = vpow.pop %v3367
        %v3369 = vsel %vm2899, %v3368, 0.0
        %3370 = vadd.xlane.f32.xlu0 %v3369
        %v3371 = vpop.xlane.xlu0 %3370
        %v3372 = vrcp.pop %v3371
        %v3373 = vmul.f32 %v3368, %v3372
        %v3374 = vpack.c.bf16 %v3373, %v3373
        %v3375 = vpack.c.bf16 %v2845, %v2845
        %v3377 = vsel %vm2899, %v3374, 0
        %v3380 = vsel %vm2916, %v3375, 0
        %3382 = vmatprep.subr.bf16.mxu0 0
        %3383 = vmatpush1.bf16.msra.mxu0 %v3380
        %3384 = vmatprep.subr.bf16.mxu0 0
        %3385 = vmatpush1.bf16.msra.mxu0 0
        %3386 = vmatprep.subr.bf16.mxu0 0
        %3387 = vmatpush1.bf16.msra.mxu0 0
        %3388 = vmatprep.subr.bf16.mxu0 0
        %3389 = vmatpush1.bf16.msra.mxu0 0
        %3390 = vmatprep.subr.bf16.mxu0 0
        %3391 = vmatpush1.bf16.msra.mxu0 0
        %3392 = vmatprep.subr.bf16.mxu0 0
        %3393 = vmatpush1.bf16.msra.mxu0 0
        %3394 = vmatprep.subr.bf16.mxu0 0
        %3395 = vmatpush1.bf16.msra.mxu0 0
        %3396 = vmatprep.subr.bf16.mxu0 0
        %3397 = vmatpush1.bf16.msra.mxu0 0
        %3398 = vmatprep.subr.bf16.mxu0 0
        %3399 = vmatpush1.bf16.msra.mxu0 0
        %3400 = vmatprep.subr.bf16.mxu0 0
        %3401 = vmatpush1.bf16.msra.mxu0 0
        %3402 = vmatprep.subr.bf16.mxu0 0
        %3403 = vmatpush1.bf16.msra.mxu0 0
        %3404 = vmatprep.subr.bf16.mxu0 0
        %3405 = vmatpush1.bf16.msra.mxu0 0
        %3406 = vmatprep.subr.bf16.mxu0 0
        %3407 = vmatpush1.bf16.msra.mxu0 0
        %3408 = vmatprep.subr.bf16.mxu0 0
        %3409 = vmatpush1.bf16.msra.mxu0 0
        %3410 = vmatprep.subr.bf16.mxu0 0
        %3411 = vmatpush1.bf16.msra.mxu0 0
        %3412 = vmatprep.subr.bf16.mxu0 0
        %3413 = vmatpush1.bf16.msra.mxu0 0
        %3414 = vmatprep.mubr.bf16.mxu0 0
        %3415 = vmatmul.mubr.bf16.gmra.mrb[0].mxu0 %v3377
        %v3416 = vpop.f32.mrb[0].mxu0
        %v3417 = vadd.f32 0.0, %v3416
        %v3418 = vpop.f32.mrb[0].mxu0
        %v3419 = vpop.f32.mrb[0].mxu0
        %v3420 = vpop.f32.mrb[0].mxu0
        %3421 = vdwg.mxu0
        %v3422 = vpack.c.bf16 %v3417, %v3417
        %3423 = vst.msk [vmem:[#allocation3 + $0x8] sm:$0xf] %vm2961, %v3422
        %3425 = vrot.lane.b32.xlu0 %v3315, 64
        %v3426 = vpop.permute.xlu0 %3425
        %3428 = vrot.lane.b32.xlu0 %v3316, 64
        %v3429 = vpop.permute.xlu0 %3428
        %v3431 = vsel %vm2852, %v3426, 0
        %v3434 = vsel %vm2852, %v3429, 0
        %3436 = vmatprep.subr.bf16.mxu0 0
        %3437 = vmatpush1.bf16.xpose.msra.mxu0 %v3434
        %3438 = vmatprep.subr.bf16.mxu0 0
        %3439 = vmatpush1.bf16.xpose.msra.mxu0 0
        %3440 = vmatprep.subr.bf16.mxu0 0
        %3441 = vmatpush1.bf16.xpose.msra.mxu0 0
        %3442 = vmatprep.subr.bf16.mxu0 0
        %3443 = vmatpush1.bf16.xpose.msra.mxu0 0
        %3444 = vmatprep.subr.bf16.mxu0 0
        %3445 = vmatpush1.bf16.xpose.msra.mxu0 0
        %3446 = vmatprep.subr.bf16.mxu0 0
        %3447 = vmatpush1.bf16.xpose.msra.mxu0 0
        %3448 = vmatprep.subr.bf16.mxu0 0
        %3449 = vmatpush1.bf16.xpose.msra.mxu0 0
        %3450 = vmatprep.subr.bf16.mxu0 0
        %3451 = vmatpush1.bf16.xpose.msra.mxu0 0
        %3452 = vmatprep.subr.bf16.mxu0 0
        %3453 = vmatpush1.bf16.xpose.msra.mxu0 0
        %3454 = vmatprep.subr.bf16.mxu0 0
        %3455 = vmatpush1.bf16.xpose.msra.mxu0 0
        %3456 = vmatprep.subr.bf16.mxu0 0
        %3457 = vmatpush1.bf16.xpose.msra.mxu0 0
        %3458 = vmatprep.subr.bf16.mxu0 0
        %3459 = vmatpush1.bf16.xpose.msra.mxu0 0
        %3460 = vmatprep.subr.bf16.mxu0 0
        %3461 = vmatpush1.bf16.xpose.msra.mxu0 0
        %3462 = vmatprep.subr.bf16.mxu0 0
        %3463 = vmatpush1.bf16.xpose.msra.mxu0 0
        %3464 = vmatprep.subr.bf16.mxu0 0
        %3465 = vmatpush1.bf16.xpose.msra.mxu0 0
        %3466 = vmatprep.subr.bf16.mxu0 0
        %3467 = vmatpush1.bf16.xpose.msra.mxu0 0
        %3468 = vmatprep.mubr.bf16.mxu0 0
        %3469 = vmatmul.mubr.bf16.gmra.mrb[0].mxu0 %v3431
        %v3470 = vpop.f32.mrb[0].mxu0
        %v3471 = vadd.f32 %v1032, %v3470
        %v3472 = vpop.f32.mrb[0].mxu0
        %v3473 = vpop.f32.mrb[0].mxu0
        %v3474 = vpop.f32.mrb[0].mxu0
        %3475 = vdwg.mxu0
        %v3476 = vsel %vm2899, %v3471, -inf
        %3477 = vmax.xlane.f32.xlu0 %v3476
        %v3478 = vpop.xlane.xlu0 %3477
        %v3479 = vsub.f32 %v3471, %v3478
        %v3480 = vmul.f32 %v3479, 1.442695
        %v3481 = vpow.pop %v3480
        %v3482 = vsel %vm2899, %v3481, 0.0
        %3483 = vadd.xlane.f32.xlu0 %v3482
        %v3484 = vpop.xlane.xlu0 %3483
        %v3485 = vrcp.pop %v3484
        %v3486 = vmul.f32 %v3481, %v3485
        %v3487 = vpack.c.bf16 %v3486, %v3486
        %3489 = vrot.lane.b32.xlu0 %v3375, 64
        %v3490 = vpop.permute.xlu0 %3489
        %v3492 = vsel %vm2899, %v3487, 0
        %v3495 = vsel %vm2916, %v3490, 0
        %3497 = vmatprep.subr.bf16.mxu0 0
        %3498 = vmatpush1.bf16.msra.mxu0 %v3495
        %3499 = vmatprep.subr.bf16.mxu0 0
        %3500 = vmatpush1.bf16.msra.mxu0 0
        %3501 = vmatprep.subr.bf16.mxu0 0
        %3502 = vmatpush1.bf16.msra.mxu0 0
        %3503 = vmatprep.subr.bf16.mxu0 0
        %3504 = vmatpush1.bf16.msra.mxu0 0
        %3505 = vmatprep.subr.bf16.mxu0 0
        %3506 = vmatpush1.bf16.msra.mxu0 0
        %3507 = vmatprep.subr.bf16.mxu0 0
        %3508 = vmatpush1.bf16.msra.mxu0 0
        %3509 = vmatprep.subr.bf16.mxu0 0
        %3510 = vmatpush1.bf16.msra.mxu0 0
        %3511 = vmatprep.subr.bf16.mxu0 0
        %3512 = vmatpush1.bf16.msra.mxu0 0
        %3513 = vmatprep.subr.bf16.mxu0 0
        %3514 = vmatpush1.bf16.msra.mxu0 0
        %3515 = vmatprep.subr.bf16.mxu0 0
        %3516 = vmatpush1.bf16.msra.mxu0 0
        %3517 = vmatprep.subr.bf16.mxu0 0
        %3518 = vmatpush1.bf16.msra.mxu0 0
        %3519 = vmatprep.subr.bf16.mxu0 0
        %3520 = vmatpush1.bf16.msra.mxu0 0
        %3521 = vmatprep.subr.bf16.mxu0 0
        %3522 = vmatpush1.bf16.msra.mxu0 0
        %3523 = vmatprep.subr.bf16.mxu0 0
        %3524 = vmatpush1.bf16.msra.mxu0 0
        %3525 = vmatprep.subr.bf16.mxu0 0
        %3526 = vmatpush1.bf16.msra.mxu0 0
        %3527 = vmatprep.subr.bf16.mxu0 0
        %3528 = vmatpush1.bf16.msra.mxu0 0
        %3529 = vmatprep.mubr.bf16.mxu0 0
        %3530 = vmatmul.mubr.bf16.gmra.mrb[0].mxu0 %v3492
        %v3531 = vpop.f32.mrb[0].mxu0
        %v3532 = vadd.f32 0.0, %v3531
        %v3533 = vpop.f32.mrb[0].mxu0
        %v3534 = vpop.f32.mrb[0].mxu0
        %v3535 = vpop.f32.mrb[0].mxu0
        %3536 = vdwg.mxu0
        %v3537 = vpack.c.bf16 %v3532, %v3532
        %v3539 = vunpack.c.l.b16 %v3537
        %v3540 = vpack.c.b16 %v3539, %v3539
        %3541 = vrot.lane.b32.xlu0 %v3540, 64
        %v3542 = vpop.permute.xlu0 %3541
        %3544 = vst.msk [vmem:[#allocation3 + $0x8] sm:$0xf] %vm3083, %v3542
        %v3545 = vld [vmem:[#allocation3] sm:$0xff]
        %v3546 = vld [vmem:[#allocation3 + $0x8] sm:$0xf]
        %v3547 = vld [vmem:[%s830] sm:$0xff]
        %v3548 = vld [vmem:[%s830 + $0x8] sm:$0xf]
        %v3549 = vld [vmem:[%s830 + $0xc] sm:$0xff]
        %v3550 = vld [vmem:[%s830 + $0x14] sm:$0xf]
        %v3551 = vld [vmem:[%s830 + $0x18] sm:$0xff]
        %v3552 = vld [vmem:[%s830 + $0x20] sm:$0xf]
        %v3553 = vld [vmem:[%s830 + $0x24] sm:$0xff]
        %v3554 = vld [vmem:[%s830 + $0x2c] sm:$0xf]
        %v3555 = vld [vmem:[%s830 + $0x30] sm:$0xff]
        %v3556 = vld [vmem:[%s830 + $0x38] sm:$0xf]
        %v3557 = vld [vmem:[%s830 + $0x3c] sm:$0xff]
        %v3558 = vld [vmem:[%s830 + $0x44] sm:$0xf]
        %v3559 = vld [vmem:[%s830 + $0x48] sm:$0xff]
        %v3560 = vld [vmem:[%s830 + $0x50] sm:$0xf]
        %v3561 = vld [vmem:[%s830 + $0x54] sm:$0xff]
        %v3562 = vld [vmem:[%s830 + $0x5c] sm:$0xf]
        %v3563 = vld [vmem:[%s830 + $0x60] sm:$0xff]
        %v3564 = vld [vmem:[%s830 + $0x68] sm:$0xf]
        %v3565 = vld [vmem:[%s830 + $0x6c] sm:$0xff]
        %v3566 = vld [vmem:[%s830 + $0x74] sm:$0xf]
        %v3567 = vld [vmem:[%s830 + $0x78] sm:$0xff]
        %v3568 = vld [vmem:[%s830 + $0x80] sm:$0xf]
        %v3569 = vld [vmem:[%s830 + $0x84] sm:$0xff]
        %v3570 = vld [vmem:[%s830 + $0x8c] sm:$0xf]
        %v3571 = vld [vmem:[%s830 + $0x90] sm:$0xff]
        %v3572 = vld [vmem:[%s830 + $0x98] sm:$0xf]
        %v3573 = vld [vmem:[%s830 + $0x9c] sm:$0xff]
        %v3574 = vld [vmem:[%s830 + $0xa4] sm:$0xf]
        %v3575 = vld [vmem:[%s830 + $0xa8] sm:$0xff]
        %v3576 = vld [vmem:[%s830 + $0xb0] sm:$0xf]
        %v3577 = vld [vmem:[%s830 + $0xb4] sm:$0xff]
        %v3578 = vld [vmem:[%s830 + $0xbc] sm:$0xf]
        %v3579 = vld [vmem:[%s830 + $0xc0] sm:$0xff]
        %v3580 = vld [vmem:[%s830 + $0xc8] sm:$0xf]
        %v3581 = vld [vmem:[%s830 + $0xcc] sm:$0xff]
        %v3582 = vld [vmem:[%s830 + $0xd4] sm:$0xf]
        %v3583 = vld [vmem:[%s830 + $0xd8] sm:$0xff]
        %v3584 = vld [vmem:[%s830 + $0xe0] sm:$0xf]
        %v3585 = vld [vmem:[%s830 + $0xe4] sm:$0xff]
        %v3586 = vld [vmem:[%s830 + $0xec] sm:$0xf]
        %v3587 = vld [vmem:[%s830 + $0xf0] sm:$0xff]
        %v3588 = vld [vmem:[%s830 + $0xf8] sm:$0xf]
        %v3589 = vld [vmem:[%s830 + $0xfc] sm:$0xff]
        %v3590 = vld [vmem:[%s830 + $0x104] sm:$0xf]
        %v3591 = vld [vmem:[%s830 + $0x108] sm:$0xff]
        %v3592 = vld [vmem:[%s830 + $0x110] sm:$0xf]
        %v3593 = vld [vmem:[%s830 + $0x114] sm:$0xff]
        %v3594 = vld [vmem:[%s830 + $0x11c] sm:$0xf]
        %v3595 = vld [vmem:[%s830 + $0x120] sm:$0xff]
        %v3596 = vld [vmem:[%s830 + $0x128] sm:$0xf]
        %v3597 = vld [vmem:[%s830 + $0x12c] sm:$0xff]
        %v3598 = vld [vmem:[%s830 + $0x134] sm:$0xf]
        %v3599 = vld [vmem:[%s830 + $0x138] sm:$0xff]
        %v3600 = vld [vmem:[%s830 + $0x140] sm:$0xf]
        %v3601 = vld [vmem:[%s830 + $0x144] sm:$0xff]
        %v3602 = vld [vmem:[%s830 + $0x14c] sm:$0xf]
        %v3603 = vld [vmem:[%s830 + $0x150] sm:$0xff]
        %v3604 = vld [vmem:[%s830 + $0x158] sm:$0xf]
        %v3605 = vld [vmem:[%s830 + $0x15c] sm:$0xff]
        %v3606 = vld [vmem:[%s830 + $0x164] sm:$0xf]
        %v3607 = vld [vmem:[%s830 + $0x168] sm:$0xff]
        %v3608 = vld [vmem:[%s830 + $0x170] sm:$0xf]
        %v3609 = vld [vmem:[%s830 + $0x174] sm:$0xff]
        %v3610 = vld [vmem:[%s830 + $0x17c] sm:$0xf]
        %v3611 = vld [vmem:[%s830 + $0x180] sm:$0xff]
        %v3612 = vld [vmem:[%s830 + $0x188] sm:$0xf]
        %v3613 = vld [vmem:[%s830 + $0x18c] sm:$0xff]
        %v3614 = vld [vmem:[%s830 + $0x194] sm:$0xf]
        %v3615 = vld [vmem:[%s830 + $0x198] sm:$0xff]
        %v3616 = vld [vmem:[%s830 + $0x1a0] sm:$0xf]
        %v3617 = vld [vmem:[%s830 + $0x1a4] sm:$0xff]
        %v3618 = vld [vmem:[%s830 + $0x1ac] sm:$0xf]
        %v3619 = vld [vmem:[%s830 + $0x1b0] sm:$0xff]
        %v3620 = vld [vmem:[%s830 + $0x1b8] sm:$0xf]
        %v3621 = vld [vmem:[%s830 + $0x1bc] sm:$0xff]
        %v3622 = vld [vmem:[%s830 + $0x1c4] sm:$0xf]
        %v3623 = vld [vmem:[%s830 + $0x1c8] sm:$0xff]
        %v3624 = vld [vmem:[%s830 + $0x1d0] sm:$0xf]
        %v3625 = vld [vmem:[%s830 + $0x1d4] sm:$0xff]
        %v3626 = vld [vmem:[%s830 + $0x1dc] sm:$0xf]
        %v3627 = vld [vmem:[%s830 + $0x1e0] sm:$0xff]
        %v3628 = vld [vmem:[%s830 + $0x1e8] sm:$0xf]
        %v3629 = vld [vmem:[%s830 + $0x1ec] sm:$0xff]
        %v3630 = vld [vmem:[%s830 + $0x1f4] sm:$0xf]
        %v3631 = vld [vmem:[%s830 + $0x1f8] sm:$0xff]
        %v3632 = vld [vmem:[%s830 + $0x200] sm:$0xf]
        %v3633 = vld [vmem:[%s830 + $0x204] sm:$0xff]
        %v3634 = vld [vmem:[%s830 + $0x20c] sm:$0xf]
        %v3635 = vld [vmem:[%s830 + $0x210] sm:$0xff]
        %v3636 = vld [vmem:[%s830 + $0x218] sm:$0xf]
        %v3637 = vld [vmem:[%s830 + $0x21c] sm:$0xff]
        %v3638 = vld [vmem:[%s830 + $0x224] sm:$0xf]
        %v3639 = vld [vmem:[%s830 + $0x228] sm:$0xff]
        %v3640 = vld [vmem:[%s830 + $0x230] sm:$0xf]
        %v3641 = vld [vmem:[%s830 + $0x234] sm:$0xff]
        %v3642 = vld [vmem:[%s830 + $0x23c] sm:$0xf]
        %v3645 = vunpack.c.l.b16 %v3545
        %v3646 = vunpack.c.h.b16 %v3545
        %v3647 = vunpack.c.l.b16 %v3546
        %v3648 = vpack.c.b16 %v3645, %v3645
        %v3649 = vpack.c.b16 %v3646, %v3646
        %v3650 = vpack.c.b16 %v3647, %v3647
        %v3750 = vunpack.c.l.b16 %v3547
        %v3751 = vunpack.c.h.b16 %v3547
        %v3752 = vunpack.c.l.b16 %v3548
        %v3753 = vunpack.c.l.b16 %v3549
        %v3754 = vunpack.c.h.b16 %v3549
        %v3755 = vunpack.c.l.b16 %v3550
        %v3756 = vunpack.c.l.b16 %v3551
        %v3757 = vunpack.c.h.b16 %v3551
        %v3758 = vunpack.c.l.b16 %v3552
        %v3759 = vunpack.c.l.b16 %v3553
        %v3760 = vunpack.c.h.b16 %v3553
        %v3761 = vunpack.c.l.b16 %v3554
        %v3762 = vunpack.c.l.b16 %v3555
        %v3763 = vunpack.c.h.b16 %v3555
        %v3764 = vunpack.c.l.b16 %v3556
        %v3765 = vunpack.c.l.b16 %v3557
        %v3766 = vunpack.c.h.b16 %v3557
        %v3767 = vunpack.c.l.b16 %v3558
        %v3768 = vunpack.c.l.b16 %v3559
        %v3769 = vunpack.c.h.b16 %v3559
        %v3770 = vunpack.c.l.b16 %v3560
        %v3771 = vunpack.c.l.b16 %v3561
        %v3772 = vunpack.c.h.b16 %v3561
        %v3773 = vunpack.c.l.b16 %v3562
        %v3774 = vunpack.c.l.b16 %v3563
        %v3775 = vunpack.c.h.b16 %v3563
        %v3776 = vunpack.c.l.b16 %v3564
        %v3777 = vunpack.c.l.b16 %v3565
        %v3778 = vunpack.c.h.b16 %v3565
        %v3779 = vunpack.c.l.b16 %v3566
        %v3780 = vunpack.c.l.b16 %v3567
        %v3781 = vunpack.c.h.b16 %v3567
        %v3782 = vunpack.c.l.b16 %v3568
        %v3783 = vunpack.c.l.b16 %v3569
        %v3784 = vunpack.c.h.b16 %v3569
        %v3785 = vunpack.c.l.b16 %v3570
        %v3786 = vunpack.c.l.b16 %v3571
        %v3787 = vunpack.c.h.b16 %v3571
        %v3788 = vunpack.c.l.b16 %v3572
        %v3789 = vunpack.c.l.b16 %v3573
        %v3790 = vunpack.c.h.b16 %v3573
        %v3791 = vunpack.c.l.b16 %v3574
        %v3792 = vunpack.c.l.b16 %v3575
        %v3793 = vunpack.c.h.b16 %v3575
        %v3794 = vunpack.c.l.b16 %v3576
        %v3795 = vunpack.c.l.b16 %v3577
        %v3796 = vunpack.c.h.b16 %v3577
        %v3797 = vunpack.c.l.b16 %v3578
        %v3798 = vunpack.c.l.b16 %v3579
        %v3799 = vunpack.c.h.b16 %v3579
        %v3800 = vunpack.c.l.b16 %v3580
        %v3801 = vunpack.c.l.b16 %v3581
        %v3802 = vunpack.c.h.b16 %v3581
        %v3803 = vunpack.c.l.b16 %v3582
        %v3804 = vunpack.c.l.b16 %v3583
        %v3805 = vunpack.c.h.b16 %v3583
        %v3806 = vunpack.c.l.b16 %v3584
        %v3807 = vunpack.c.l.b16 %v3585
        %v3808 = vunpack.c.h.b16 %v3585
        %v3809 = vunpack.c.l.b16 %v3586
        %v3810 = vunpack.c.l.b16 %v3587
        %v3811 = vunpack.c.h.b16 %v3587
        %v3812 = vunpack.c.l.b16 %v3588
        %v3813 = vunpack.c.l.b16 %v3589
        %v3814 = vunpack.c.h.b16 %v3589
        %v3815 = vunpack.c.l.b16 %v3590
        %v3816 = vunpack.c.l.b16 %v3591
        %v3817 = vunpack.c.h.b16 %v3591
        %v3818 = vunpack.c.l.b16 %v3592
        %v3819 = vunpack.c.l.b16 %v3593
        %v3820 = vunpack.c.h.b16 %v3593
        %v3821 = vunpack.c.l.b16 %v3594
        %v3822 = vunpack.c.l.b16 %v3595
        %v3823 = vunpack.c.h.b16 %v3595
        %v3824 = vunpack.c.l.b16 %v3596
        %v3825 = vunpack.c.l.b16 %v3597
        %v3826 = vunpack.c.h.b16 %v3597
        %v3827 = vunpack.c.l.b16 %v3598
        %v3828 = vunpack.c.l.b16 %v3599
        %v3829 = vunpack.c.h.b16 %v3599
        %v3830 = vunpack.c.l.b16 %v3600
        %v3831 = vunpack.c.l.b16 %v3601
        %v3832 = vunpack.c.h.b16 %v3601
        %v3833 = vunpack.c.l.b16 %v3602
        %v3834 = vunpack.c.l.b16 %v3603
        %v3835 = vunpack.c.h.b16 %v3603
        %v3836 = vunpack.c.l.b16 %v3604
        %v3837 = vunpack.c.l.b16 %v3605
        %v3838 = vunpack.c.h.b16 %v3605
        %v3839 = vunpack.c.l.b16 %v3606
        %v3840 = vunpack.c.l.b16 %v3607
        %v3841 = vunpack.c.h.b16 %v3607
        %v3842 = vunpack.c.l.b16 %v3608
        %v3843 = vunpack.c.l.b16 %v3609
        %v3844 = vunpack.c.h.b16 %v3609
        %v3845 = vunpack.c.l.b16 %v3610
        %v3846 = vunpack.c.l.b16 %v3611
        %v3847 = vunpack.c.h.b16 %v3611
        %v3848 = vunpack.c.l.b16 %v3612
        %v3849 = vunpack.c.l.b16 %v3613
        %v3850 = vunpack.c.h.b16 %v3613
        %v3851 = vunpack.c.l.b16 %v3614
        %v3852 = vunpack.c.l.b16 %v3615
        %v3853 = vunpack.c.h.b16 %v3615
        %v3854 = vunpack.c.l.b16 %v3616
        %v3855 = vunpack.c.l.b16 %v3617
        %v3856 = vunpack.c.h.b16 %v3617
        %v3857 = vunpack.c.l.b16 %v3618
        %v3858 = vunpack.c.l.b16 %v3619
        %v3859 = vunpack.c.h.b16 %v3619
        %v3860 = vunpack.c.l.b16 %v3620
        %v3861 = vunpack.c.l.b16 %v3621
        %v3862 = vunpack.c.h.b16 %v3621
        %v3863 = vunpack.c.l.b16 %v3622
        %v3864 = vunpack.c.l.b16 %v3623
        %v3865 = vunpack.c.h.b16 %v3623
        %v3866 = vunpack.c.l.b16 %v3624
        %v3867 = vunpack.c.l.b16 %v3625
        %v3868 = vunpack.c.h.b16 %v3625
        %v3869 = vunpack.c.l.b16 %v3626
        %v3870 = vunpack.c.l.b16 %v3627
        %v3871 = vunpack.c.h.b16 %v3627
        %v3872 = vunpack.c.l.b16 %v3628
        %v3873 = vunpack.c.l.b16 %v3629
        %v3874 = vunpack.c.h.b16 %v3629
        %v3875 = vunpack.c.l.b16 %v3630
        %v3876 = vunpack.c.l.b16 %v3631
        %v3877 = vunpack.c.h.b16 %v3631
        %v3878 = vunpack.c.l.b16 %v3632
        %v3879 = vunpack.c.l.b16 %v3633
        %v3880 = vunpack.c.h.b16 %v3633
        %v3881 = vunpack.c.l.b16 %v3634
        %v3882 = vunpack.c.l.b16 %v3635
        %v3883 = vunpack.c.h.b16 %v3635
        %v3884 = vunpack.c.l.b16 %v3636
        %v3885 = vunpack.c.l.b16 %v3637
        %v3886 = vunpack.c.h.b16 %v3637
        %v3887 = vunpack.c.l.b16 %v3638
        %v3888 = vunpack.c.l.b16 %v3639
        %v3889 = vunpack.c.h.b16 %v3639
        %v3890 = vunpack.c.l.b16 %v3640
        %v3891 = vunpack.c.l.b16 %v3641
        %v3892 = vunpack.c.h.b16 %v3641
        %v3893 = vunpack.c.l.b16 %v3642
        %v3894 = vpack.c.b16 %v3753, %v3750
        %v3895 = vpack.c.b16 %v3754, %v3751
        %v3896 = vpack.c.b16 %v3755, %v3752
        %v3897 = vpack.c.b16 %v3759, %v3756
        %v3898 = vpack.c.b16 %v3760, %v3757
        %v3899 = vpack.c.b16 %v3761, %v3758
        %v3900 = vpack.c.b16 %v3765, %v3762
        %v3901 = vpack.c.b16 %v3766, %v3763
        %v3902 = vpack.c.b16 %v3767, %v3764
        %v3903 = vpack.c.b16 %v3771, %v3768
        %v3904 = vpack.c.b16 %v3772, %v3769
        %v3905 = vpack.c.b16 %v3773, %v3770
        %v3906 = vpack.c.b16 %v3777, %v3774
        %v3907 = vpack.c.b16 %v3778, %v3775
        %v3908 = vpack.c.b16 %v3779, %v3776
        %v3909 = vpack.c.b16 %v3783, %v3780
        %v3910 = vpack.c.b16 %v3784, %v3781
        %v3911 = vpack.c.b16 %v3785, %v3782
        %v3912 = vpack.c.b16 %v3789, %v3786
        %v3913 = vpack.c.b16 %v3790, %v3787
        %v3914 = vpack.c.b16 %v3791, %v3788
        %v3915 = vpack.c.b16 %v3795, %v3792
        %v3916 = vpack.c.b16 %v3796, %v3793
        %v3917 = vpack.c.b16 %v3797, %v3794
        %v3918 = vpack.c.b16 %v3801, %v3798
        %v3919 = vpack.c.b16 %v3802, %v3799
        %v3920 = vpack.c.b16 %v3803, %v3800
        %v3921 = vpack.c.b16 %v3807, %v3804
        %v3922 = vpack.c.b16 %v3808, %v3805
        %v3923 = vpack.c.b16 %v3809, %v3806
        %v3924 = vpack.c.b16 %v3813, %v3810
        %v3925 = vpack.c.b16 %v3814, %v3811
        %v3926 = vpack.c.b16 %v3815, %v3812
        %v3927 = vpack.c.b16 %v3819, %v3816
        %v3928 = vpack.c.b16 %v3820, %v3817
        %v3929 = vpack.c.b16 %v3821, %v3818
        %v3930 = vpack.c.b16 %v3825, %v3822
        %v3931 = vpack.c.b16 %v3826, %v3823
        %v3932 = vpack.c.b16 %v3827, %v3824
        %v3933 = vpack.c.b16 %v3831, %v3828
        %v3934 = vpack.c.b16 %v3832, %v3829
        %v3935 = vpack.c.b16 %v3833, %v3830
        %v3936 = vpack.c.b16 %v3837, %v3834
        %v3937 = vpack.c.b16 %v3838, %v3835
        %v3938 = vpack.c.b16 %v3839, %v3836
        %v3939 = vpack.c.b16 %v3843, %v3840
        %v3940 = vpack.c.b16 %v3844, %v3841
        %v3941 = vpack.c.b16 %v3845, %v3842
        %v3942 = vpack.c.b16 %v3849, %v3846
        %v3943 = vpack.c.b16 %v3850, %v3847
        %v3944 = vpack.c.b16 %v3851, %v3848
        %v3945 = vpack.c.b16 %v3855, %v3852
        %v3946 = vpack.c.b16 %v3856, %v3853
        %v3947 = vpack.c.b16 %v3857, %v3854
        %v3948 = vpack.c.b16 %v3861, %v3858
        %v3949 = vpack.c.b16 %v3862, %v3859
        %v3950 = vpack.c.b16 %v3863, %v3860
        %v3951 = vpack.c.b16 %v3867, %v3864
        %v3952 = vpack.c.b16 %v3868, %v3865
        %v3953 = vpack.c.b16 %v3869, %v3866
        %v3954 = vpack.c.b16 %v3873, %v3870
        %v3955 = vpack.c.b16 %v3874, %v3871
        %v3956 = vpack.c.b16 %v3875, %v3872
        %v3957 = vpack.c.b16 %v3879, %v3876
        %v3958 = vpack.c.b16 %v3880, %v3877
        %v3959 = vpack.c.b16 %v3881, %v3878
        %v3960 = vpack.c.b16 %v3885, %v3882
        %v3961 = vpack.c.b16 %v3886, %v3883
        %v3962 = vpack.c.b16 %v3887, %v3884
        %v3963 = vpack.c.b16 %v3891, %v3888
        %v3964 = vpack.c.b16 %v3892, %v3889
        %v3965 = vpack.c.b16 %v3893, %v3890
        %4038 = vmatprep.subr.bf16.mxu0 %v3895
        %4039 = vmatpush1.bf16.msra.mxu0 %v3894
        %4040 = vmatprep.subr.bf16.mxu0 %v3898
        %4041 = vmatpush1.bf16.msra.mxu0 %v3897
        %4042 = vmatprep.subr.bf16.mxu0 %v3901
        %4043 = vmatpush1.bf16.msra.mxu0 %v3900
        %4044 = vmatprep.subr.bf16.mxu0 %v3904
        %4045 = vmatpush1.bf16.msra.mxu0 %v3903
        %4046 = vmatprep.subr.bf16.mxu0 %v3907
        %4047 = vmatpush1.bf16.msra.mxu0 %v3906
        %4048 = vmatprep.subr.bf16.mxu0 %v3910
        %4049 = vmatpush1.bf16.msra.mxu0 %v3909
        %4050 = vmatprep.subr.bf16.mxu0 %v3913
        %4051 = vmatpush1.bf16.msra.mxu0 %v3912
        %4052 = vmatprep.subr.bf16.mxu0 %v3916
        %4053 = vmatpush1.bf16.msra.mxu0 %v3915
        %4054 = vmatprep.subr.bf16.mxu0 %v3919
        %4055 = vmatpush1.bf16.msra.mxu0 %v3918
        %4056 = vmatprep.subr.bf16.mxu0 %v3922
        %4057 = vmatpush1.bf16.msra.mxu0 %v3921
        %4058 = vmatprep.subr.bf16.mxu0 %v3925
        %4059 = vmatpush1.bf16.msra.mxu0 %v3924
        %4060 = vmatprep.subr.bf16.mxu0 %v3928
        %4061 = vmatpush1.bf16.msra.mxu0 %v3927
        %4062 = vmatprep.subr.bf16.mxu0 %v3931
        %4063 = vmatpush1.bf16.msra.mxu0 %v3930
        %4064 = vmatprep.subr.bf16.mxu0 %v3934
        %4065 = vmatpush1.bf16.msra.mxu0 %v3933
        %4066 = vmatprep.subr.bf16.mxu0 %v3937
        %4067 = vmatpush1.bf16.msra.mxu0 %v3936
        %4068 = vmatprep.subr.bf16.mxu0 %v3940
        %4069 = vmatpush1.bf16.msra.mxu0 %v3939
        %4070 = vmatprep.mubr.bf16.mxu0 %v3649
        %4071 = vmatmul.mubr.bf16.gmra.mrb[0].mxu0 %v3648
        %v4072 = vpop.f32.mrb[0].mxu0
        %v4073 = vadd.f32 0.0, %v4072
        %v4074 = vpop.f32.mrb[0].mxu0
        %v4075 = vadd.f32 0.0, %v4074
        %v4076 = vpop.f32.mrb[0].mxu0
        %v4077 = vpop.f32.mrb[0].mxu0
        %4078 = vdwg.mxu0
        %4079 = vmatprep.subr.bf16.mxu0 %v3943
        %4080 = vmatpush1.bf16.msra.mxu0 %v3942
        %4081 = vmatprep.subr.bf16.mxu0 %v3946
        %4082 = vmatpush1.bf16.msra.mxu0 %v3945
        %4083 = vmatprep.subr.bf16.mxu0 %v3949
        %4084 = vmatpush1.bf16.msra.mxu0 %v3948
        %4085 = vmatprep.subr.bf16.mxu0 %v3952
        %4086 = vmatpush1.bf16.msra.mxu0 %v3951
        %4087 = vmatprep.subr.bf16.mxu0 %v3955
        %4088 = vmatpush1.bf16.msra.mxu0 %v3954
        %4089 = vmatprep.subr.bf16.mxu0 %v3958
        %4090 = vmatpush1.bf16.msra.mxu0 %v3957
        %4091 = vmatprep.subr.bf16.mxu0 %v3961
        %4092 = vmatpush1.bf16.msra.mxu0 %v3960
        %4093 = vmatprep.subr.bf16.mxu0 %v3964
        %4094 = vmatpush1.bf16.msra.mxu0 %v3963
        %4095 = vmatprep.subr.bf16.mxu0 0
        %4096 = vmatpush1.bf16.msra.mxu0 0
        %4097 = vmatprep.subr.bf16.mxu0 0
        %4098 = vmatpush1.bf16.msra.mxu0 0
        %4099 = vmatprep.subr.bf16.mxu0 0
        %4100 = vmatpush1.bf16.msra.mxu0 0
        %4101 = vmatprep.subr.bf16.mxu0 0
        %4102 = vmatpush1.bf16.msra.mxu0 0
        %4103 = vmatprep.subr.bf16.mxu0 0
        %4104 = vmatpush1.bf16.msra.mxu0 0
        %4105 = vmatprep.subr.bf16.mxu0 0
        %4106 = vmatpush1.bf16.msra.mxu0 0
        %4107 = vmatprep.subr.bf16.mxu0 0
        %4108 = vmatpush1.bf16.msra.mxu0 0
        %4109 = vmatprep.subr.bf16.mxu0 0
        %4110 = vmatpush1.bf16.msra.mxu0 0
        %4111 = vmatprep.mubr.bf16.mxu0 0
        %4112 = vmatmul.mubr.bf16.gmra.mrb[0].mxu0 %v3650
        %v4113 = vpop.f32.mrb[0].mxu0
        %v4114 = vadd.f32 %v4073, %v4113
        %v4115 = vpop.f32.mrb[0].mxu0
        %v4116 = vadd.f32 %v4075, %v4115
        %v4117 = vpop.f32.mrb[0].mxu0
        %v4118 = vpop.f32.mrb[0].mxu0
        %4119 = vdwg.mxu0
        %4120 = vmatprep.subr.bf16.mxu0 0
        %4121 = vmatpush1.bf16.msra.mxu0 %v3896
        %4122 = vmatprep.subr.bf16.mxu0 0
        %4123 = vmatpush1.bf16.msra.mxu0 %v3899
        %4124 = vmatprep.subr.bf16.mxu0 0
        %4125 = vmatpush1.bf16.msra.mxu0 %v3902
        %4126 = vmatprep.subr.bf16.mxu0 0
        %4127 = vmatpush1.bf16.msra.mxu0 %v3905
        %4128 = vmatprep.subr.bf16.mxu0 0
        %4129 = vmatpush1.bf16.msra.mxu0 %v3908
        %4130 = vmatprep.subr.bf16.mxu0 0
        %4131 = vmatpush1.bf16.msra.mxu0 %v3911
        %4132 = vmatprep.subr.bf16.mxu0 0
        %4133 = vmatpush1.bf16.msra.mxu0 %v3914
        %4134 = vmatprep.subr.bf16.mxu0 0
        %4135 = vmatpush1.bf16.msra.mxu0 %v3917
        %4136 = vmatprep.subr.bf16.mxu0 0
        %4137 = vmatpush1.bf16.msra.mxu0 %v3920
        %4138 = vmatprep.subr.bf16.mxu0 0
        %4139 = vmatpush1.bf16.msra.mxu0 %v3923
        %4140 = vmatprep.subr.bf16.mxu0 0
        %4141 = vmatpush1.bf16.msra.mxu0 %v3926
        %4142 = vmatprep.subr.bf16.mxu0 0
        %4143 = vmatpush1.bf16.msra.mxu0 %v3929
        %4144 = vmatprep.subr.bf16.mxu0 0
        %4145 = vmatpush1.bf16.msra.mxu0 %v3932
        %4146 = vmatprep.subr.bf16.mxu0 0
        %4147 = vmatpush1.bf16.msra.mxu0 %v3935
        %4148 = vmatprep.subr.bf16.mxu0 0
        %4149 = vmatpush1.bf16.msra.mxu0 %v3938
        %4150 = vmatprep.subr.bf16.mxu0 0
        %4151 = vmatpush1.bf16.msra.mxu0 %v3941
        %4152 = vmatprep.mubr.bf16.mxu0 %v3649
        %4153 = vmatmul.mubr.bf16.gmra.mrb[0].mxu0 %v3648
        %v4154 = vpop.f32.mrb[0].mxu0
        %v4155 = vadd.f32 0.0, %v4154
        %v4156 = vpop.f32.mrb[0].mxu0
        %v4157 = vpop.f32.mrb[0].mxu0
        %v4158 = vpop.f32.mrb[0].mxu0
        %4159 = vdwg.mxu0
        %4160 = vmatprep.subr.bf16.mxu0 0
        %4161 = vmatpush1.bf16.msra.mxu0 %v3944
        %4162 = vmatprep.subr.bf16.mxu0 0
        %4163 = vmatpush1.bf16.msra.mxu0 %v3947
        %4164 = vmatprep.subr.bf16.mxu0 0
        %4165 = vmatpush1.bf16.msra.mxu0 %v3950
        %4166 = vmatprep.subr.bf16.mxu0 0
        %4167 = vmatpush1.bf16.msra.mxu0 %v3953
        %4168 = vmatprep.subr.bf16.mxu0 0
        %4169 = vmatpush1.bf16.msra.mxu0 %v3956
        %4170 = vmatprep.subr.bf16.mxu0 0
        %4171 = vmatpush1.bf16.msra.mxu0 %v3959
        %4172 = vmatprep.subr.bf16.mxu0 0
        %4173 = vmatpush1.bf16.msra.mxu0 %v3962
        %4174 = vmatprep.subr.bf16.mxu0 0
        %4175 = vmatpush1.bf16.msra.mxu0 %v3965
        %4176 = vmatprep.subr.bf16.mxu0 0
        %4177 = vmatpush1.bf16.msra.mxu0 0
        %4178 = vmatprep.subr.bf16.mxu0 0
        %4179 = vmatpush1.bf16.msra.mxu0 0
        %4180 = vmatprep.subr.bf16.mxu0 0
        %4181 = vmatpush1.bf16.msra.mxu0 0
        %4182 = vmatprep.subr.bf16.mxu0 0
        %4183 = vmatpush1.bf16.msra.mxu0 0
        %4184 = vmatprep.subr.bf16.mxu0 0
        %4185 = vmatpush1.bf16.msra.mxu0 0
        %4186 = vmatprep.subr.bf16.mxu0 0
        %4187 = vmatpush1.bf16.msra.mxu0 0
        %4188 = vmatprep.subr.bf16.mxu0 0
        %4189 = vmatpush1.bf16.msra.mxu0 0
        %4190 = vmatprep.subr.bf16.mxu0 0
        %4191 = vmatpush1.bf16.msra.mxu0 0
        %4192 = vmatprep.mubr.bf16.mxu0 0
        %4193 = vmatmul.mubr.bf16.gmra.mrb[0].mxu0 %v3650
        %v4194 = vpop.f32.mrb[0].mxu0
        %v4195 = vadd.f32 %v4155, %v4194
        %v4196 = vpop.f32.mrb[0].mxu0
        %v4197 = vpop.f32.mrb[0].mxu0
        %v4198 = vpop.f32.mrb[0].mxu0
        %4199 = vdwg.mxu0
        %v4200 = vadd.f32 %v1024, %v4114
        %v4201 = vadd.f32 %v1025, %v4116
        %v4202 = vadd.f32 %v1026, %v4195
        %v4203 = vld [vmem:[%s839] sm:$0x7]
        %v4205 = vlaneseq
        %v4206 = vshrl.u32 %v4205, 7
        %v4207 = vsub.s32 0, %v4206
        %v4208 = vrot.slane %v4203, %v4207
        %v4209 = vlaneseq
        %v4210 = vshrl.u32 %v4209, 7
        %v4211 = vsub.s32 1, %v4210
        %v4212 = vrot.slane %v4203, %v4211
        %v4213 = vlaneseq
        %v4214 = vshrl.u32 %v4213, 7
        %v4215 = vsub.s32 2, %v4214
        %v4216 = vrot.slane %v4203, %v4215
        %v4220 = vadd.f32 %v4200, %v4208
        %v4221 = vadd.f32 %v4201, %v4212
        %v4222 = vadd.f32 %v4202, %v4216
        %v4223 = vld [vmem:[%s848] sm:$0x7]
        %v4224 = vld [vmem:[%s857] sm:$0x7]
        %v4225 = vadd.f32 %v4220, %v4221
        %v4226 = vadd.f32 %v4225, %v4222
        %4227 = vadd.xlane.f32.xlu0 %v4226
        %v4228 = vpop.xlane.xlu0 %4227
        %v4229 = vmul.f32 %v4228, %v1039
        %v4230 = vsub.f32 %v4220, %v4229
        %v4231 = vsub.f32 %v4221, %v4229
        %v4232 = vsub.f32 %v4222, %v4229
        %v4233 = vmul.f32 %v4230, %v4230
        %v4234 = vmul.f32 %v4231, %v4231
        %v4235 = vmul.f32 %v4232, %v4232
        %v4236 = vadd.f32 %v4233, %v4234
        %v4237 = vadd.f32 %v4236, %v4235
        %4238 = vadd.xlane.f32.xlu0 %v4237
        %v4239 = vpop.xlane.xlu0 %4238
        %v4240 = vmul.f32 %v4239, %v1039
        %v4241 = vadd.f32 %v4240, 1e-05
        %v4242 = vrsqrt.pop %v4241
        %v4243 = vmul.f32 %v4230, %v4242
        %v4244 = vmul.f32 %v4231, %v4242
        %v4245 = vmul.f32 %v4232, %v4242
        %v4247 = vlaneseq
        %v4248 = vshrl.u32 %v4247, 7
        %v4249 = vsub.s32 0, %v4248
        %v4250 = vrot.slane %v4223, %v4249
        %v4251 = vlaneseq
        %v4252 = vshrl.u32 %v4251, 7
        %v4253 = vsub.s32 1, %v4252
        %v4254 = vrot.slane %v4223, %v4253
        %v4255 = vlaneseq
        %v4256 = vshrl.u32 %v4255, 7
        %v4257 = vsub.s32 2, %v4256
        %v4258 = vrot.slane %v4223, %v4257
        %v4262 = vmul.f32 %v4243, %v4250
        %v4263 = vmul.f32 %v4244, %v4254
        %v4264 = vmul.f32 %v4245, %v4258
        %v4266 = vlaneseq
        %v4267 = vshrl.u32 %v4266, 7
        %v4268 = vsub.s32 0, %v4267
        %v4269 = vrot.slane %v4224, %v4268
        %v4270 = vlaneseq
        %v4271 = vshrl.u32 %v4270, 7
        %v4272 = vsub.s32 1, %v4271
        %v4273 = vrot.slane %v4224, %v4272
        %v4274 = vlaneseq
        %v4275 = vshrl.u32 %v4274, 7
        %v4276 = vsub.s32 2, %v4275
        %v4277 = vrot.slane %v4224, %v4276
        %v4281 = vadd.f32 %v4262, %v4269
        %v4282 = vadd.f32 %v4263, %v4273
        %v4283 = vadd.f32 %v4264, %v4277
        %v4284 = vpack.c.bf16 %v4281, %v4281
        %v4285 = vpack.c.bf16 %v4282, %v4282
        %v4286 = vpack.c.bf16 %v4283, %v4283
        %v4287 = vld [vmem:[%s866] sm:$0xff]
        %v4288 = vld [vmem:[%s866 + $0x8] sm:$0xff]
        %v4289 = vld [vmem:[%s866 + $0x10] sm:$0xff]
        %v4290 = vld [vmem:[%s866 + $0x18] sm:$0xff]
        %v4291 = vld [vmem:[%s866 + $0x20] sm:$0xff]
        %v4292 = vld [vmem:[%s866 + $0x28] sm:$0xff]
        %v4293 = vld [vmem:[%s866 + $0x30] sm:$0xff]
        %v4294 = vld [vmem:[%s866 + $0x38] sm:$0xff]
        %v4295 = vld [vmem:[%s866 + $0x40] sm:$0xff]
        %v4296 = vld [vmem:[%s866 + $0x48] sm:$0xff]
        %v4297 = vld [vmem:[%s866 + $0x50] sm:$0xff]
        %v4298 = vld [vmem:[%s866 + $0x58] sm:$0xff]
        %v4299 = vld [vmem:[%s866 + $0x60] sm:$0xff]
        %v4300 = vld [vmem:[%s866 + $0x68] sm:$0xff]
        %v4301 = vld [vmem:[%s866 + $0x70] sm:$0xff]
        %v4302 = vld [vmem:[%s866 + $0x78] sm:$0xff]
        %v4303 = vld [vmem:[%s866 + $0x80] sm:$0xff]
        %v4304 = vld [vmem:[%s866 + $0x88] sm:$0xff]
        %v4305 = vld [vmem:[%s866 + $0x90] sm:$0xff]
        %v4306 = vld [vmem:[%s866 + $0x98] sm:$0xff]
        %v4307 = vld [vmem:[%s866 + $0xa0] sm:$0xff]
        %v4308 = vld [vmem:[%s866 + $0xa8] sm:$0xff]
        %v4309 = vld [vmem:[%s866 + $0xb0] sm:$0xff]
        %v4310 = vld [vmem:[%s866 + $0xb8] sm:$0xff]
        %v4311 = vld [vmem:[%s866 + $0xc0] sm:$0xff]
        %v4312 = vld [vmem:[%s866 + $0xc8] sm:$0xff]
        %v4313 = vld [vmem:[%s866 + $0xd0] sm:$0xff]
        %v4314 = vld [vmem:[%s866 + $0xd8] sm:$0xff]
        %v4315 = vld [vmem:[%s866 + $0xe0] sm:$0xff]
        %v4316 = vld [vmem:[%s866 + $0xe8] sm:$0xff]
        %v4317 = vld [vmem:[%s866 + $0xf0] sm:$0xff]
        %v4318 = vld [vmem:[%s866 + $0xf8] sm:$0xff]
        %v4319 = vld [vmem:[%s866 + $0x100] sm:$0xff]
        %v4320 = vld [vmem:[%s866 + $0x108] sm:$0xff]
        %v4321 = vld [vmem:[%s866 + $0x110] sm:$0xff]
        %v4322 = vld [vmem:[%s866 + $0x118] sm:$0xff]
        %v4323 = vld [vmem:[%s866 + $0x120] sm:$0xff]
        %v4324 = vld [vmem:[%s866 + $0x128] sm:$0xff]
        %v4325 = vld [vmem:[%s866 + $0x130] sm:$0xff]
        %v4326 = vld [vmem:[%s866 + $0x138] sm:$0xff]
        %v4327 = vld [vmem:[%s866 + $0x140] sm:$0xff]
        %v4328 = vld [vmem:[%s866 + $0x148] sm:$0xff]
        %v4329 = vld [vmem:[%s866 + $0x150] sm:$0xff]
        %v4330 = vld [vmem:[%s866 + $0x158] sm:$0xff]
        %v4331 = vld [vmem:[%s866 + $0x160] sm:$0xff]
        %v4332 = vld [vmem:[%s866 + $0x168] sm:$0xff]
        %v4333 = vld [vmem:[%s866 + $0x170] sm:$0xff]
        %v4334 = vld [vmem:[%s866 + $0x178] sm:$0xff]
        %v4335 = vld [vmem:[%s866 + $0x180] sm:$0xff]
        %v4336 = vld [vmem:[%s866 + $0x188] sm:$0xff]
        %v4337 = vld [vmem:[%s866 + $0x190] sm:$0xff]
        %v4338 = vld [vmem:[%s866 + $0x198] sm:$0xff]
        %v4339 = vld [vmem:[%s866 + $0x1a0] sm:$0xff]
        %v4340 = vld [vmem:[%s866 + $0x1a8] sm:$0xff]
        %v4341 = vld [vmem:[%s866 + $0x1b0] sm:$0xff]
        %v4342 = vld [vmem:[%s866 + $0x1b8] sm:$0xff]
        %v4343 = vld [vmem:[%s866 + $0x1c0] sm:$0xff]
        %v4344 = vld [vmem:[%s866 + $0x1c8] sm:$0xff]
        %v4345 = vld [vmem:[%s866 + $0x1d0] sm:$0xff]
        %v4346 = vld [vmem:[%s866 + $0x1d8] sm:$0xff]
        %v4347 = vld [vmem:[%s866 + $0x1e0] sm:$0xff]
        %v4348 = vld [vmem:[%s866 + $0x1e8] sm:$0xff]
        %v4349 = vld [vmem:[%s866 + $0x1f0] sm:$0xff]
        %v4350 = vld [vmem:[%s866 + $0x1f8] sm:$0xff]
        %v4351 = vld [vmem:[%s866 + $0x200] sm:$0xff]
        %v4352 = vld [vmem:[%s866 + $0x208] sm:$0xff]
        %v4353 = vld [vmem:[%s866 + $0x210] sm:$0xff]
        %v4354 = vld [vmem:[%s866 + $0x218] sm:$0xff]
        %v4355 = vld [vmem:[%s866 + $0x220] sm:$0xff]
        %v4356 = vld [vmem:[%s866 + $0x228] sm:$0xff]
        %v4357 = vld [vmem:[%s866 + $0x230] sm:$0xff]
        %v4358 = vld [vmem:[%s866 + $0x238] sm:$0xff]
        %v4359 = vld [vmem:[%s866 + $0x240] sm:$0xff]
        %v4360 = vld [vmem:[%s866 + $0x248] sm:$0xff]
        %v4361 = vld [vmem:[%s866 + $0x250] sm:$0xff]
        %v4362 = vld [vmem:[%s866 + $0x258] sm:$0xff]
        %v4363 = vld [vmem:[%s866 + $0x260] sm:$0xff]
        %v4364 = vld [vmem:[%s866 + $0x268] sm:$0xff]
        %v4365 = vld [vmem:[%s866 + $0x270] sm:$0xff]
        %v4366 = vld [vmem:[%s866 + $0x278] sm:$0xff]
        %v4367 = vld [vmem:[%s866 + $0x280] sm:$0xff]
        %v4368 = vld [vmem:[%s866 + $0x288] sm:$0xff]
        %v4369 = vld [vmem:[%s866 + $0x290] sm:$0xff]
        %v4370 = vld [vmem:[%s866 + $0x298] sm:$0xff]
        %v4371 = vld [vmem:[%s866 + $0x2a0] sm:$0xff]
        %v4372 = vld [vmem:[%s866 + $0x2a8] sm:$0xff]
        %v4373 = vld [vmem:[%s866 + $0x2b0] sm:$0xff]
        %v4374 = vld [vmem:[%s866 + $0x2b8] sm:$0xff]
        %v4375 = vld [vmem:[%s866 + $0x2c0] sm:$0xff]
        %v4376 = vld [vmem:[%s866 + $0x2c8] sm:$0xff]
        %v4377 = vld [vmem:[%s866 + $0x2d0] sm:$0xff]
        %v4378 = vld [vmem:[%s866 + $0x2d8] sm:$0xff]
        %v4379 = vld [vmem:[%s866 + $0x2e0] sm:$0xff]
        %v4380 = vld [vmem:[%s866 + $0x2e8] sm:$0xff]
        %v4381 = vld [vmem:[%s866 + $0x2f0] sm:$0xff]
        %v4382 = vld [vmem:[%s866 + $0x2f8] sm:$0xff]
        %v4383 = vld [vmem:[%s866 + $0x300] sm:$0xff]
        %v4384 = vld [vmem:[%s866 + $0x308] sm:$0xff]
        %v4385 = vld [vmem:[%s866 + $0x310] sm:$0xff]
        %v4386 = vld [vmem:[%s866 + $0x318] sm:$0xff]
        %v4387 = vld [vmem:[%s866 + $0x320] sm:$0xff]
        %v4388 = vld [vmem:[%s866 + $0x328] sm:$0xff]
        %v4389 = vld [vmem:[%s866 + $0x330] sm:$0xff]
        %v4390 = vld [vmem:[%s866 + $0x338] sm:$0xff]
        %v4391 = vld [vmem:[%s866 + $0x340] sm:$0xff]
        %v4392 = vld [vmem:[%s866 + $0x348] sm:$0xff]
        %v4393 = vld [vmem:[%s866 + $0x350] sm:$0xff]
        %v4394 = vld [vmem:[%s866 + $0x358] sm:$0xff]
        %v4395 = vld [vmem:[%s866 + $0x360] sm:$0xff]
        %v4396 = vld [vmem:[%s866 + $0x368] sm:$0xff]
        %v4397 = vld [vmem:[%s866 + $0x370] sm:$0xff]
        %v4398 = vld [vmem:[%s866 + $0x378] sm:$0xff]
        %v4399 = vld [vmem:[%s866 + $0x380] sm:$0xff]
        %v4400 = vld [vmem:[%s866 + $0x388] sm:$0xff]
        %v4401 = vld [vmem:[%s866 + $0x390] sm:$0xff]
        %v4402 = vld [vmem:[%s866 + $0x398] sm:$0xff]
        %v4403 = vld [vmem:[%s866 + $0x3a0] sm:$0xff]
        %v4404 = vld [vmem:[%s866 + $0x3a8] sm:$0xff]
        %v4405 = vld [vmem:[%s866 + $0x3b0] sm:$0xff]
        %v4406 = vld [vmem:[%s866 + $0x3b8] sm:$0xff]
        %v4407 = vld [vmem:[%s866 + $0x3c0] sm:$0xff]
        %v4408 = vld [vmem:[%s866 + $0x3c8] sm:$0xff]
        %v4409 = vld [vmem:[%s866 + $0x3d0] sm:$0xff]
        %v4410 = vld [vmem:[%s866 + $0x3d8] sm:$0xff]
        %v4411 = vld [vmem:[%s866 + $0x3e0] sm:$0xff]
        %v4412 = vld [vmem:[%s866 + $0x3e8] sm:$0xff]
        %v4413 = vld [vmem:[%s866 + $0x3f0] sm:$0xff]
        %v4414 = vld [vmem:[%s866 + $0x3f8] sm:$0xff]
        %v4415 = vld [vmem:[%s866 + $0x400] sm:$0xff]
        %v4416 = vld [vmem:[%s866 + $0x408] sm:$0xff]
        %v4417 = vld [vmem:[%s866 + $0x410] sm:$0xff]
        %v4418 = vld [vmem:[%s866 + $0x418] sm:$0xff]
        %v4419 = vld [vmem:[%s866 + $0x420] sm:$0xff]
        %v4420 = vld [vmem:[%s866 + $0x428] sm:$0xff]
        %v4421 = vld [vmem:[%s866 + $0x430] sm:$0xff]
        %v4422 = vld [vmem:[%s866 + $0x438] sm:$0xff]
        %v4423 = vld [vmem:[%s866 + $0x440] sm:$0xff]
        %v4424 = vld [vmem:[%s866 + $0x448] sm:$0xff]
        %v4425 = vld [vmem:[%s866 + $0x450] sm:$0xff]
        %v4426 = vld [vmem:[%s866 + $0x458] sm:$0xff]
        %v4427 = vld [vmem:[%s866 + $0x460] sm:$0xff]
        %v4428 = vld [vmem:[%s866 + $0x468] sm:$0xff]
        %v4429 = vld [vmem:[%s866 + $0x470] sm:$0xff]
        %v4430 = vld [vmem:[%s866 + $0x478] sm:$0xff]
        %v4431 = vld [vmem:[%s866 + $0x480] sm:$0xff]
        %v4432 = vld [vmem:[%s866 + $0x488] sm:$0xff]
        %v4433 = vld [vmem:[%s866 + $0x490] sm:$0xff]
        %v4434 = vld [vmem:[%s866 + $0x498] sm:$0xff]
        %v4435 = vld [vmem:[%s866 + $0x4a0] sm:$0xff]
        %v4436 = vld [vmem:[%s866 + $0x4a8] sm:$0xff]
        %v4437 = vld [vmem:[%s866 + $0x4b0] sm:$0xff]
        %v4438 = vld [vmem:[%s866 + $0x4b8] sm:$0xff]
        %v4439 = vld [vmem:[%s866 + $0x4c0] sm:$0xff]
        %v4440 = vld [vmem:[%s866 + $0x4c8] sm:$0xff]
        %v4441 = vld [vmem:[%s866 + $0x4d0] sm:$0xff]
        %v4442 = vld [vmem:[%s866 + $0x4d8] sm:$0xff]
        %v4443 = vld [vmem:[%s866 + $0x4e0] sm:$0xff]
        %v4444 = vld [vmem:[%s866 + $0x4e8] sm:$0xff]
        %v4445 = vld [vmem:[%s866 + $0x4f0] sm:$0xff]
        %v4446 = vld [vmem:[%s866 + $0x4f8] sm:$0xff]
        %v4447 = vld [vmem:[%s866 + $0x500] sm:$0xff]
        %v4448 = vld [vmem:[%s866 + $0x508] sm:$0xff]
        %v4449 = vld [vmem:[%s866 + $0x510] sm:$0xff]
        %v4450 = vld [vmem:[%s866 + $0x518] sm:$0xff]
        %v4451 = vld [vmem:[%s866 + $0x520] sm:$0xff]
        %v4452 = vld [vmem:[%s866 + $0x528] sm:$0xff]
        %v4453 = vld [vmem:[%s866 + $0x530] sm:$0xff]
        %v4454 = vld [vmem:[%s866 + $0x538] sm:$0xff]
        %v4455 = vld [vmem:[%s866 + $0x540] sm:$0xff]
        %v4456 = vld [vmem:[%s866 + $0x548] sm:$0xff]
        %v4457 = vld [vmem:[%s866 + $0x550] sm:$0xff]
        %v4458 = vld [vmem:[%s866 + $0x558] sm:$0xff]
        %v4459 = vld [vmem:[%s866 + $0x560] sm:$0xff]
        %v4460 = vld [vmem:[%s866 + $0x568] sm:$0xff]
        %v4461 = vld [vmem:[%s866 + $0x570] sm:$0xff]
        %v4462 = vld [vmem:[%s866 + $0x578] sm:$0xff]
        %v4463 = vld [vmem:[%s866 + $0x580] sm:$0xff]
        %v4464 = vld [vmem:[%s866 + $0x588] sm:$0xff]
        %v4465 = vld [vmem:[%s866 + $0x590] sm:$0xff]
        %v4466 = vld [vmem:[%s866 + $0x598] sm:$0xff]
        %v4467 = vld [vmem:[%s866 + $0x5a0] sm:$0xff]
        %v4468 = vld [vmem:[%s866 + $0x5a8] sm:$0xff]
        %v4469 = vld [vmem:[%s866 + $0x5b0] sm:$0xff]
        %v4470 = vld [vmem:[%s866 + $0x5b8] sm:$0xff]
        %v4471 = vld [vmem:[%s866 + $0x5c0] sm:$0xff]
        %v4472 = vld [vmem:[%s866 + $0x5c8] sm:$0xff]
        %v4473 = vld [vmem:[%s866 + $0x5d0] sm:$0xff]
        %v4474 = vld [vmem:[%s866 + $0x5d8] sm:$0xff]
        %v4475 = vld [vmem:[%s866 + $0x5e0] sm:$0xff]
        %v4476 = vld [vmem:[%s866 + $0x5e8] sm:$0xff]
        %v4477 = vld [vmem:[%s866 + $0x5f0] sm:$0xff]
        %v4478 = vld [vmem:[%s866 + $0x5f8] sm:$0xff]
        %v4479 = vld [vmem:[%s866 + $0x600] sm:$0xff]
        %v4480 = vld [vmem:[%s866 + $0x608] sm:$0xff]
        %v4481 = vld [vmem:[%s866 + $0x610] sm:$0xff]
        %v4482 = vld [vmem:[%s866 + $0x618] sm:$0xff]
        %v4483 = vld [vmem:[%s866 + $0x620] sm:$0xff]
        %v4484 = vld [vmem:[%s866 + $0x628] sm:$0xff]
        %v4485 = vld [vmem:[%s866 + $0x630] sm:$0xff]
        %v4486 = vld [vmem:[%s866 + $0x638] sm:$0xff]
        %v4487 = vld [vmem:[%s866 + $0x640] sm:$0xff]
        %v4488 = vld [vmem:[%s866 + $0x648] sm:$0xff]
        %v4489 = vld [vmem:[%s866 + $0x650] sm:$0xff]
        %v4490 = vld [vmem:[%s866 + $0x658] sm:$0xff]
        %v4491 = vld [vmem:[%s866 + $0x660] sm:$0xff]
        %v4492 = vld [vmem:[%s866 + $0x668] sm:$0xff]
        %v4493 = vld [vmem:[%s866 + $0x670] sm:$0xff]
        %v4494 = vld [vmem:[%s866 + $0x678] sm:$0xff]
        %v4495 = vld [vmem:[%s866 + $0x680] sm:$0xff]
        %v4496 = vld [vmem:[%s866 + $0x688] sm:$0xff]
        %v4497 = vld [vmem:[%s866 + $0x690] sm:$0xff]
        %v4498 = vld [vmem:[%s866 + $0x698] sm:$0xff]
        %v4499 = vld [vmem:[%s866 + $0x6a0] sm:$0xff]
        %v4500 = vld [vmem:[%s866 + $0x6a8] sm:$0xff]
        %v4501 = vld [vmem:[%s866 + $0x6b0] sm:$0xff]
        %v4502 = vld [vmem:[%s866 + $0x6b8] sm:$0xff]
        %v4503 = vld [vmem:[%s866 + $0x6c0] sm:$0xff]
        %v4504 = vld [vmem:[%s866 + $0x6c8] sm:$0xff]
        %v4505 = vld [vmem:[%s866 + $0x6d0] sm:$0xff]
        %v4506 = vld [vmem:[%s866 + $0x6d8] sm:$0xff]
        %v4507 = vld [vmem:[%s866 + $0x6e0] sm:$0xff]
        %v4508 = vld [vmem:[%s866 + $0x6e8] sm:$0xff]
        %v4509 = vld [vmem:[%s866 + $0x6f0] sm:$0xff]
        %v4510 = vld [vmem:[%s866 + $0x6f8] sm:$0xff]
        %v4511 = vld [vmem:[%s866 + $0x700] sm:$0xff]
        %v4512 = vld [vmem:[%s866 + $0x708] sm:$0xff]
        %v4513 = vld [vmem:[%s866 + $0x710] sm:$0xff]
        %v4514 = vld [vmem:[%s866 + $0x718] sm:$0xff]
        %v4515 = vld [vmem:[%s866 + $0x720] sm:$0xff]
        %v4516 = vld [vmem:[%s866 + $0x728] sm:$0xff]
        %v4517 = vld [vmem:[%s866 + $0x730] sm:$0xff]
        %v4518 = vld [vmem:[%s866 + $0x738] sm:$0xff]
        %v4519 = vld [vmem:[%s866 + $0x740] sm:$0xff]
        %v4520 = vld [vmem:[%s866 + $0x748] sm:$0xff]
        %v4521 = vld [vmem:[%s866 + $0x750] sm:$0xff]
        %v4522 = vld [vmem:[%s866 + $0x758] sm:$0xff]
        %v4523 = vld [vmem:[%s866 + $0x760] sm:$0xff]
        %v4524 = vld [vmem:[%s866 + $0x768] sm:$0xff]
        %v4525 = vld [vmem:[%s866 + $0x770] sm:$0xff]
        %v4526 = vld [vmem:[%s866 + $0x778] sm:$0xff]
        %v4527 = vld [vmem:[%s866 + $0x780] sm:$0xff]
        %v4528 = vld [vmem:[%s866 + $0x788] sm:$0xff]
        %v4529 = vld [vmem:[%s866 + $0x790] sm:$0xff]
        %v4530 = vld [vmem:[%s866 + $0x798] sm:$0xff]
        %v4531 = vld [vmem:[%s866 + $0x7a0] sm:$0xff]
        %v4532 = vld [vmem:[%s866 + $0x7a8] sm:$0xff]
        %v4533 = vld [vmem:[%s866 + $0x7b0] sm:$0xff]
        %v4534 = vld [vmem:[%s866 + $0x7b8] sm:$0xff]
        %v4535 = vld [vmem:[%s866 + $0x7c0] sm:$0xff]
        %v4536 = vld [vmem:[%s866 + $0x7c8] sm:$0xff]
        %v4537 = vld [vmem:[%s866 + $0x7d0] sm:$0xff]
        %v4538 = vld [vmem:[%s866 + $0x7d8] sm:$0xff]
        %v4539 = vld [vmem:[%s866 + $0x7e0] sm:$0xff]
        %v4540 = vld [vmem:[%s866 + $0x7e8] sm:$0xff]
        %v4541 = vld [vmem:[%s866 + $0x7f0] sm:$0xff]
        %v4542 = vld [vmem:[%s866 + $0x7f8] sm:$0xff]
        %v4543 = vld [vmem:[%s866 + $0x800] sm:$0xff]
        %v4544 = vld [vmem:[%s866 + $0x808] sm:$0xff]
        %v4545 = vld [vmem:[%s866 + $0x810] sm:$0xff]
        %v4546 = vld [vmem:[%s866 + $0x818] sm:$0xff]
        %v4547 = vld [vmem:[%s866 + $0x820] sm:$0xff]
        %v4548 = vld [vmem:[%s866 + $0x828] sm:$0xff]
        %v4549 = vld [vmem:[%s866 + $0x830] sm:$0xff]
        %v4550 = vld [vmem:[%s866 + $0x838] sm:$0xff]
        %v4551 = vld [vmem:[%s866 + $0x840] sm:$0xff]
        %v4552 = vld [vmem:[%s866 + $0x848] sm:$0xff]
        %v4553 = vld [vmem:[%s866 + $0x850] sm:$0xff]
        %v4554 = vld [vmem:[%s866 + $0x858] sm:$0xff]
        %v4555 = vld [vmem:[%s866 + $0x860] sm:$0xff]
        %v4556 = vld [vmem:[%s866 + $0x868] sm:$0xff]
        %v4557 = vld [vmem:[%s866 + $0x870] sm:$0xff]
        %v4558 = vld [vmem:[%s866 + $0x878] sm:$0xff]
        %v4559 = vld [vmem:[%s866 + $0x880] sm:$0xff]
        %v4560 = vld [vmem:[%s866 + $0x888] sm:$0xff]
        %v4561 = vld [vmem:[%s866 + $0x890] sm:$0xff]
        %v4562 = vld [vmem:[%s866 + $0x898] sm:$0xff]
        %v4563 = vld [vmem:[%s866 + $0x8a0] sm:$0xff]
        %v4564 = vld [vmem:[%s866 + $0x8a8] sm:$0xff]
        %v4565 = vld [vmem:[%s866 + $0x8b0] sm:$0xff]
        %v4566 = vld [vmem:[%s866 + $0x8b8] sm:$0xff]
        %v4567 = vld [vmem:[%s866 + $0x8c0] sm:$0xff]
        %v4568 = vld [vmem:[%s866 + $0x8c8] sm:$0xff]
        %v4569 = vld [vmem:[%s866 + $0x8d0] sm:$0xff]
        %v4570 = vld [vmem:[%s866 + $0x8d8] sm:$0xff]
        %v4571 = vld [vmem:[%s866 + $0x8e0] sm:$0xff]
        %v4572 = vld [vmem:[%s866 + $0x8e8] sm:$0xff]
        %v4573 = vld [vmem:[%s866 + $0x8f0] sm:$0xff]
        %v4574 = vld [vmem:[%s866 + $0x8f8] sm:$0xff]
        %v4575 = vld [vmem:[%s875] sm:$0xff]
        %v4576 = vld [vmem:[%s875 + $0x8] sm:$0xf]
        %v4579 = vlaneseq
        %v4580 = vshrl.u32 %v4579, 7
        %v4581 = vsub.s32 0, %v4580
        %v4582 = vrot.slane %v4575, %v4581
        %v4583 = vlaneseq
        %v4584 = vshrl.u32 %v4583, 7
        %v4585 = vsub.s32 1, %v4584
        %v4586 = vrot.slane %v4575, %v4585
        %v4587 = vlaneseq
        %v4588 = vshrl.u32 %v4587, 7
        %v4589 = vsub.s32 2, %v4588
        %v4590 = vrot.slane %v4575, %v4589
        %v4591 = vlaneseq
        %v4592 = vshrl.u32 %v4591, 7
        %v4593 = vsub.s32 3, %v4592
        %v4594 = vrot.slane %v4575, %v4593
        %v4595 = vlaneseq
        %v4596 = vshrl.u32 %v4595, 7
        %v4597 = vsub.s32 4, %v4596
        %v4598 = vrot.slane %v4575, %v4597
        %v4599 = vlaneseq
        %v4600 = vshrl.u32 %v4599, 7
        %v4601 = vsub.s32 5, %v4600
        %v4602 = vrot.slane %v4575, %v4601
        %v4603 = vlaneseq
        %v4604 = vshrl.u32 %v4603, 7
        %v4605 = vsub.s32 6, %v4604
        %v4606 = vrot.slane %v4575, %v4605
        %v4607 = vlaneseq
        %v4608 = vshrl.u32 %v4607, 7
        %v4609 = vsub.s32 7, %v4608
        %v4610 = vrot.slane %v4575, %v4609
        %v4611 = vlaneseq
        %v4612 = vshrl.u32 %v4611, 7
        %v4613 = vsub.s32 0, %v4612
        %v4614 = vrot.slane %v4576, %v4613
        %v4615 = vlaneseq
        %v4616 = vshrl.u32 %v4615, 7
        %v4617 = vsub.s32 1, %v4616
        %v4618 = vrot.slane %v4576, %v4617
        %v4619 = vlaneseq
        %v4620 = vshrl.u32 %v4619, 7
        %v4621 = vsub.s32 2, %v4620
        %v4622 = vrot.slane %v4576, %v4621
        %v4623 = vlaneseq
        %v4624 = vshrl.u32 %v4623, 7
        %v4625 = vsub.s32 3, %v4624
        %v4626 = vrot.slane %v4576, %v4625
        %v4927 = vunpack.c.l.b16 %v4287
        %v4928 = vunpack.c.h.b16 %v4287
        %v4929 = vunpack.c.l.b16 %v4288
        %v4930 = vunpack.c.h.b16 %v4288
        %v4931 = vunpack.c.l.b16 %v4289
        %v4932 = vunpack.c.h.b16 %v4289
        %v4933 = vunpack.c.l.b16 %v4290
        %v4934 = vunpack.c.h.b16 %v4290
        %v4935 = vunpack.c.l.b16 %v4291
        %v4936 = vunpack.c.h.b16 %v4291
        %v4937 = vunpack.c.l.b16 %v4292
        %v4938 = vunpack.c.h.b16 %v4292
        %v4939 = vunpack.c.l.b16 %v4293
        %v4940 = vunpack.c.h.b16 %v4293
        %v4941 = vunpack.c.l.b16 %v4294
        %v4942 = vunpack.c.h.b16 %v4294
        %v4943 = vunpack.c.l.b16 %v4295
        %v4944 = vunpack.c.h.b16 %v4295
        %v4945 = vunpack.c.l.b16 %v4296
        %v4946 = vunpack.c.h.b16 %v4296
        %v4947 = vunpack.c.l.b16 %v4297
        %v4948 = vunpack.c.h.b16 %v4297
        %v4949 = vunpack.c.l.b16 %v4298
        %v4950 = vunpack.c.h.b16 %v4298
        %v4951 = vunpack.c.l.b16 %v4299
        %v4952 = vunpack.c.h.b16 %v4299
        %v4953 = vunpack.c.l.b16 %v4300
        %v4954 = vunpack.c.h.b16 %v4300
        %v4955 = vunpack.c.l.b16 %v4301
        %v4956 = vunpack.c.h.b16 %v4301
        %v4957 = vunpack.c.l.b16 %v4302
        %v4958 = vunpack.c.h.b16 %v4302
        %v4959 = vunpack.c.l.b16 %v4303
        %v4960 = vunpack.c.h.b16 %v4303
        %v4961 = vunpack.c.l.b16 %v4304
        %v4962 = vunpack.c.h.b16 %v4304
        %v4963 = vunpack.c.l.b16 %v4305
        %v4964 = vunpack.c.h.b16 %v4305
        %v4965 = vunpack.c.l.b16 %v4306
        %v4966 = vunpack.c.h.b16 %v4306
        %v4967 = vunpack.c.l.b16 %v4307
        %v4968 = vunpack.c.h.b16 %v4307
        %v4969 = vunpack.c.l.b16 %v4308
        %v4970 = vunpack.c.h.b16 %v4308
        %v4971 = vunpack.c.l.b16 %v4309
        %v4972 = vunpack.c.h.b16 %v4309
        %v4973 = vunpack.c.l.b16 %v4310
        %v4974 = vunpack.c.h.b16 %v4310
        %v4975 = vunpack.c.l.b16 %v4311
        %v4976 = vunpack.c.h.b16 %v4311
        %v4977 = vunpack.c.l.b16 %v4312
        %v4978 = vunpack.c.h.b16 %v4312
        %v4979 = vunpack.c.l.b16 %v4313
        %v4980 = vunpack.c.h.b16 %v4313
        %v4981 = vunpack.c.l.b16 %v4314
        %v4982 = vunpack.c.h.b16 %v4314
        %v4983 = vunpack.c.l.b16 %v4315
        %v4984 = vunpack.c.h.b16 %v4315
        %v4985 = vunpack.c.l.b16 %v4316
        %v4986 = vunpack.c.h.b16 %v4316
        %v4987 = vunpack.c.l.b16 %v4317
        %v4988 = vunpack.c.h.b16 %v4317
        %v4989 = vunpack.c.l.b16 %v4318
        %v4990 = vunpack.c.h.b16 %v4318
        %v4991 = vunpack.c.l.b16 %v4319
        %v4992 = vunpack.c.h.b16 %v4319
        %v4993 = vunpack.c.l.b16 %v4320
        %v4994 = vunpack.c.h.b16 %v4320
        %v4995 = vunpack.c.l.b16 %v4321
        %v4996 = vunpack.c.h.b16 %v4321
        %v4997 = vunpack.c.l.b16 %v4322
        %v4998 = vunpack.c.h.b16 %v4322
        %v4999 = vunpack.c.l.b16 %v4323
        %v5000 = vunpack.c.h.b16 %v4323
        %v5001 = vunpack.c.l.b16 %v4324
        %v5002 = vunpack.c.h.b16 %v4324
        %v5003 = vunpack.c.l.b16 %v4325
        %v5004 = vunpack.c.h.b16 %v4325
        %v5005 = vunpack.c.l.b16 %v4326
        %v5006 = vunpack.c.h.b16 %v4326
        %v5007 = vunpack.c.l.b16 %v4327
        %v5008 = vunpack.c.h.b16 %v4327
        %v5009 = vunpack.c.l.b16 %v4328
        %v5010 = vunpack.c.h.b16 %v4328
        %v5011 = vunpack.c.l.b16 %v4329
        %v5012 = vunpack.c.h.b16 %v4329
        %v5013 = vunpack.c.l.b16 %v4330
        %v5014 = vunpack.c.h.b16 %v4330
        %v5015 = vunpack.c.l.b16 %v4331
        %v5016 = vunpack.c.h.b16 %v4331
        %v5017 = vunpack.c.l.b16 %v4332
        %v5018 = vunpack.c.h.b16 %v4332
        %v5019 = vunpack.c.l.b16 %v4333
        %v5020 = vunpack.c.h.b16 %v4333
        %v5021 = vunpack.c.l.b16 %v4334
        %v5022 = vunpack.c.h.b16 %v4334
        %v5023 = vunpack.c.l.b16 %v4335
        %v5024 = vunpack.c.h.b16 %v4335
        %v5025 = vunpack.c.l.b16 %v4336
        %v5026 = vunpack.c.h.b16 %v4336
        %v5027 = vunpack.c.l.b16 %v4337
        %v5028 = vunpack.c.h.b16 %v4337
        %v5029 = vunpack.c.l.b16 %v4338
        %v5030 = vunpack.c.h.b16 %v4338
        %v5031 = vunpack.c.l.b16 %v4339
        %v5032 = vunpack.c.h.b16 %v4339
        %v5033 = vunpack.c.l.b16 %v4340
        %v5034 = vunpack.c.h.b16 %v4340
        %v5035 = vunpack.c.l.b16 %v4341
        %v5036 = vunpack.c.h.b16 %v4341
        %v5037 = vunpack.c.l.b16 %v4342
        %v5038 = vunpack.c.h.b16 %v4342
        %v5039 = vunpack.c.l.b16 %v4343
        %v5040 = vunpack.c.h.b16 %v4343
        %v5041 = vunpack.c.l.b16 %v4344
        %v5042 = vunpack.c.h.b16 %v4344
        %v5043 = vunpack.c.l.b16 %v4345
        %v5044 = vunpack.c.h.b16 %v4345
        %v5045 = vunpack.c.l.b16 %v4346
        %v5046 = vunpack.c.h.b16 %v4346
        %v5047 = vunpack.c.l.b16 %v4347
        %v5048 = vunpack.c.h.b16 %v4347
        %v5049 = vunpack.c.l.b16 %v4348
        %v5050 = vunpack.c.h.b16 %v4348
        %v5051 = vunpack.c.l.b16 %v4349
        %v5052 = vunpack.c.h.b16 %v4349
        %v5053 = vunpack.c.l.b16 %v4350
        %v5054 = vunpack.c.h.b16 %v4350
        %v5055 = vunpack.c.l.b16 %v4351
        %v5056 = vunpack.c.h.b16 %v4351
        %v5057 = vunpack.c.l.b16 %v4352
        %v5058 = vunpack.c.h.b16 %v4352
        %v5059 = vunpack.c.l.b16 %v4353
        %v5060 = vunpack.c.h.b16 %v4353
        %v5061 = vunpack.c.l.b16 %v4354
        %v5062 = vunpack.c.h.b16 %v4354
        %v5063 = vunpack.c.l.b16 %v4355
        %v5064 = vunpack.c.h.b16 %v4355
        %v5065 = vunpack.c.l.b16 %v4356
        %v5066 = vunpack.c.h.b16 %v4356
        %v5067 = vunpack.c.l.b16 %v4357
        %v5068 = vunpack.c.h.b16 %v4357
        %v5069 = vunpack.c.l.b16 %v4358
        %v5070 = vunpack.c.h.b16 %v4358
        %v5071 = vunpack.c.l.b16 %v4359
        %v5072 = vunpack.c.h.b16 %v4359
        %v5073 = vunpack.c.l.b16 %v4360
        %v5074 = vunpack.c.h.b16 %v4360
        %v5075 = vunpack.c.l.b16 %v4361
        %v5076 = vunpack.c.h.b16 %v4361
        %v5077 = vunpack.c.l.b16 %v4362
        %v5078 = vunpack.c.h.b16 %v4362
        %v5079 = vunpack.c.l.b16 %v4363
        %v5080 = vunpack.c.h.b16 %v4363
        %v5081 = vunpack.c.l.b16 %v4364
        %v5082 = vunpack.c.h.b16 %v4364
        %v5083 = vunpack.c.l.b16 %v4365
        %v5084 = vunpack.c.h.b16 %v4365
        %v5085 = vunpack.c.l.b16 %v4366
        %v5086 = vunpack.c.h.b16 %v4366
        %v5087 = vunpack.c.l.b16 %v4367
        %v5088 = vunpack.c.h.b16 %v4367
        %v5089 = vunpack.c.l.b16 %v4368
        %v5090 = vunpack.c.h.b16 %v4368
        %v5091 = vunpack.c.l.b16 %v4369
        %v5092 = vunpack.c.h.b16 %v4369
        %v5093 = vunpack.c.l.b16 %v4370
        %v5094 = vunpack.c.h.b16 %v4370
        %v5095 = vunpack.c.l.b16 %v4371
        %v5096 = vunpack.c.h.b16 %v4371
        %v5097 = vunpack.c.l.b16 %v4372
        %v5098 = vunpack.c.h.b16 %v4372
        %v5099 = vunpack.c.l.b16 %v4373
        %v5100 = vunpack.c.h.b16 %v4373
        %v5101 = vunpack.c.l.b16 %v4374
        %v5102 = vunpack.c.h.b16 %v4374
        %v5103 = vunpack.c.l.b16 %v4375
        %v5104 = vunpack.c.h.b16 %v4375
        %v5105 = vunpack.c.l.b16 %v4376
        %v5106 = vunpack.c.h.b16 %v4376
        %v5107 = vunpack.c.l.b16 %v4377
        %v5108 = vunpack.c.h.b16 %v4377
        %v5109 = vunpack.c.l.b16 %v4378
        %v5110 = vunpack.c.h.b16 %v4378
        %v5111 = vunpack.c.l.b16 %v4379
        %v5112 = vunpack.c.h.b16 %v4379
        %v5113 = vunpack.c.l.b16 %v4380
        %v5114 = vunpack.c.h.b16 %v4380
        %v5115 = vunpack.c.l.b16 %v4381
        %v5116 = vunpack.c.h.b16 %v4381
        %v5117 = vunpack.c.l.b16 %v4382
        %v5118 = vunpack.c.h.b16 %v4382
        %v5119 = vunpack.c.l.b16 %v4383
        %v5120 = vunpack.c.h.b16 %v4383
        %v5121 = vunpack.c.l.b16 %v4384
        %v5122 = vunpack.c.h.b16 %v4384
        %v5123 = vunpack.c.l.b16 %v4385
        %v5124 = vunpack.c.h.b16 %v4385
        %v5125 = vunpack.c.l.b16 %v4386
        %v5126 = vunpack.c.h.b16 %v4386
        %v5127 = vunpack.c.l.b16 %v4387
        %v5128 = vunpack.c.h.b16 %v4387
        %v5129 = vunpack.c.l.b16 %v4388
        %v5130 = vunpack.c.h.b16 %v4388
        %v5131 = vunpack.c.l.b16 %v4389
        %v5132 = vunpack.c.h.b16 %v4389
        %v5133 = vunpack.c.l.b16 %v4390
        %v5134 = vunpack.c.h.b16 %v4390
        %v5135 = vunpack.c.l.b16 %v4391
        %v5136 = vunpack.c.h.b16 %v4391
        %v5137 = vunpack.c.l.b16 %v4392
        %v5138 = vunpack.c.h.b16 %v4392
        %v5139 = vunpack.c.l.b16 %v4393
        %v5140 = vunpack.c.h.b16 %v4393
        %v5141 = vunpack.c.l.b16 %v4394
        %v5142 = vunpack.c.h.b16 %v4394
        %v5143 = vunpack.c.l.b16 %v4395
        %v5144 = vunpack.c.h.b16 %v4395
        %v5145 = vunpack.c.l.b16 %v4396
        %v5146 = vunpack.c.h.b16 %v4396
        %v5147 = vunpack.c.l.b16 %v4397
        %v5148 = vunpack.c.h.b16 %v4397
        %v5149 = vunpack.c.l.b16 %v4398
        %v5150 = vunpack.c.h.b16 %v4398
        %v5151 = vunpack.c.l.b16 %v4399
        %v5152 = vunpack.c.h.b16 %v4399
        %v5153 = vunpack.c.l.b16 %v4400
        %v5154 = vunpack.c.h.b16 %v4400
        %v5155 = vunpack.c.l.b16 %v4401
        %v5156 = vunpack.c.h.b16 %v4401
        %v5157 = vunpack.c.l.b16 %v4402
        %v5158 = vunpack.c.h.b16 %v4402
        %v5159 = vunpack.c.l.b16 %v4403
        %v5160 = vunpack.c.h.b16 %v4403
        %v5161 = vunpack.c.l.b16 %v4404
        %v5162 = vunpack.c.h.b16 %v4404
        %v5163 = vunpack.c.l.b16 %v4405
        %v5164 = vunpack.c.h.b16 %v4405
        %v5165 = vunpack.c.l.b16 %v4406
        %v5166 = vunpack.c.h.b16 %v4406
        %v5167 = vunpack.c.l.b16 %v4407
        %v5168 = vunpack.c.h.b16 %v4407
        %v5169 = vunpack.c.l.b16 %v4408
        %v5170 = vunpack.c.h.b16 %v4408
        %v5171 = vunpack.c.l.b16 %v4409
        %v5172 = vunpack.c.h.b16 %v4409
        %v5173 = vunpack.c.l.b16 %v4410
        %v5174 = vunpack.c.h.b16 %v4410
        %v5175 = vunpack.c.l.b16 %v4411
        %v5176 = vunpack.c.h.b16 %v4411
        %v5177 = vunpack.c.l.b16 %v4412
        %v5178 = vunpack.c.h.b16 %v4412
        %v5179 = vunpack.c.l.b16 %v4413
        %v5180 = vunpack.c.h.b16 %v4413
        %v5181 = vunpack.c.l.b16 %v4414
        %v5182 = vunpack.c.h.b16 %v4414
        %v5183 = vunpack.c.l.b16 %v4415
        %v5184 = vunpack.c.h.b16 %v4415
        %v5185 = vunpack.c.l.b16 %v4416
        %v5186 = vunpack.c.h.b16 %v4416
        %v5187 = vunpack.c.l.b16 %v4417
        %v5188 = vunpack.c.h.b16 %v4417
        %v5189 = vunpack.c.l.b16 %v4418
        %v5190 = vunpack.c.h.b16 %v4418
        %v5191 = vunpack.c.l.b16 %v4419
        %v5192 = vunpack.c.h.b16 %v4419
        %v5193 = vunpack.c.l.b16 %v4420
        %v5194 = vunpack.c.h.b16 %v4420
        %v5195 = vunpack.c.l.b16 %v4421
        %v5196 = vunpack.c.h.b16 %v4421
        %v5197 = vunpack.c.l.b16 %v4422
        %v5198 = vunpack.c.h.b16 %v4422
        %v5199 = vunpack.c.l.b16 %v4423
        %v5200 = vunpack.c.h.b16 %v4423
        %v5201 = vunpack.c.l.b16 %v4424
        %v5202 = vunpack.c.h.b16 %v4424
        %v5203 = vunpack.c.l.b16 %v4425
        %v5204 = vunpack.c.h.b16 %v4425
        %v5205 = vunpack.c.l.b16 %v4426
        %v5206 = vunpack.c.h.b16 %v4426
        %v5207 = vunpack.c.l.b16 %v4427
        %v5208 = vunpack.c.h.b16 %v4427
        %v5209 = vunpack.c.l.b16 %v4428
        %v5210 = vunpack.c.h.b16 %v4428
        %v5211 = vunpack.c.l.b16 %v4429
        %v5212 = vunpack.c.h.b16 %v4429
        %v5213 = vunpack.c.l.b16 %v4430
        %v5214 = vunpack.c.h.b16 %v4430
        %v5215 = vunpack.c.l.b16 %v4431
        %v5216 = vunpack.c.h.b16 %v4431
        %v5217 = vunpack.c.l.b16 %v4432
        %v5218 = vunpack.c.h.b16 %v4432
        %v5219 = vunpack.c.l.b16 %v4433
        %v5220 = vunpack.c.h.b16 %v4433
        %v5221 = vunpack.c.l.b16 %v4434
        %v5222 = vunpack.c.h.b16 %v4434
        %v5223 = vunpack.c.l.b16 %v4435
        %v5224 = vunpack.c.h.b16 %v4435
        %v5225 = vunpack.c.l.b16 %v4436
        %v5226 = vunpack.c.h.b16 %v4436
        %v5227 = vunpack.c.l.b16 %v4437
        %v5228 = vunpack.c.h.b16 %v4437
        %v5229 = vunpack.c.l.b16 %v4438
        %v5230 = vunpack.c.h.b16 %v4438
        %v5231 = vunpack.c.l.b16 %v4439
        %v5232 = vunpack.c.h.b16 %v4439
        %v5233 = vunpack.c.l.b16 %v4440
        %v5234 = vunpack.c.h.b16 %v4440
        %v5235 = vunpack.c.l.b16 %v4441
        %v5236 = vunpack.c.h.b16 %v4441
        %v5237 = vunpack.c.l.b16 %v4442
        %v5238 = vunpack.c.h.b16 %v4442
        %v5239 = vunpack.c.l.b16 %v4443
        %v5240 = vunpack.c.h.b16 %v4443
        %v5241 = vunpack.c.l.b16 %v4444
        %v5242 = vunpack.c.h.b16 %v4444
        %v5243 = vunpack.c.l.b16 %v4445
        %v5244 = vunpack.c.h.b16 %v4445
        %v5245 = vunpack.c.l.b16 %v4446
        %v5246 = vunpack.c.h.b16 %v4446
        %v5247 = vunpack.c.l.b16 %v4447
        %v5248 = vunpack.c.h.b16 %v4447
        %v5249 = vunpack.c.l.b16 %v4448
        %v5250 = vunpack.c.h.b16 %v4448
        %v5251 = vunpack.c.l.b16 %v4449
        %v5252 = vunpack.c.h.b16 %v4449
        %v5253 = vunpack.c.l.b16 %v4450
        %v5254 = vunpack.c.h.b16 %v4450
        %v5255 = vunpack.c.l.b16 %v4451
        %v5256 = vunpack.c.h.b16 %v4451
        %v5257 = vunpack.c.l.b16 %v4452
        %v5258 = vunpack.c.h.b16 %v4452
        %v5259 = vunpack.c.l.b16 %v4453
        %v5260 = vunpack.c.h.b16 %v4453
        %v5261 = vunpack.c.l.b16 %v4454
        %v5262 = vunpack.c.h.b16 %v4454
        %v5263 = vunpack.c.l.b16 %v4455
        %v5264 = vunpack.c.h.b16 %v4455
        %v5265 = vunpack.c.l.b16 %v4456
        %v5266 = vunpack.c.h.b16 %v4456
        %v5267 = vunpack.c.l.b16 %v4457
        %v5268 = vunpack.c.h.b16 %v4457
        %v5269 = vunpack.c.l.b16 %v4458
        %v5270 = vunpack.c.h.b16 %v4458
        %v5271 = vunpack.c.l.b16 %v4459
        %v5272 = vunpack.c.h.b16 %v4459
        %v5273 = vunpack.c.l.b16 %v4460
        %v5274 = vunpack.c.h.b16 %v4460
        %v5275 = vunpack.c.l.b16 %v4461
        %v5276 = vunpack.c.h.b16 %v4461
        %v5277 = vunpack.c.l.b16 %v4462
        %v5278 = vunpack.c.h.b16 %v4462
        %v5279 = vunpack.c.l.b16 %v4463
        %v5280 = vunpack.c.h.b16 %v4463
        %v5281 = vunpack.c.l.b16 %v4464
        %v5282 = vunpack.c.h.b16 %v4464
        %v5283 = vunpack.c.l.b16 %v4465
        %v5284 = vunpack.c.h.b16 %v4465
        %v5285 = vunpack.c.l.b16 %v4466
        %v5286 = vunpack.c.h.b16 %v4466
        %v5287 = vunpack.c.l.b16 %v4467
        %v5288 = vunpack.c.h.b16 %v4467
        %v5289 = vunpack.c.l.b16 %v4468
        %v5290 = vunpack.c.h.b16 %v4468
        %v5291 = vunpack.c.l.b16 %v4469
        %v5292 = vunpack.c.h.b16 %v4469
        %v5293 = vunpack.c.l.b16 %v4470
        %v5294 = vunpack.c.h.b16 %v4470
        %v5295 = vunpack.c.l.b16 %v4471
        %v5296 = vunpack.c.h.b16 %v4471
        %v5297 = vunpack.c.l.b16 %v4472
        %v5298 = vunpack.c.h.b16 %v4472
        %v5299 = vunpack.c.l.b16 %v4473
        %v5300 = vunpack.c.h.b16 %v4473
        %v5301 = vunpack.c.l.b16 %v4474
        %v5302 = vunpack.c.h.b16 %v4474
        %v5303 = vunpack.c.l.b16 %v4475
        %v5304 = vunpack.c.h.b16 %v4475
        %v5305 = vunpack.c.l.b16 %v4476
        %v5306 = vunpack.c.h.b16 %v4476
        %v5307 = vunpack.c.l.b16 %v4477
        %v5308 = vunpack.c.h.b16 %v4477
        %v5309 = vunpack.c.l.b16 %v4478
        %v5310 = vunpack.c.h.b16 %v4478
        %v5311 = vunpack.c.l.b16 %v4479
        %v5312 = vunpack.c.h.b16 %v4479
        %v5313 = vunpack.c.l.b16 %v4480
        %v5314 = vunpack.c.h.b16 %v4480
        %v5315 = vunpack.c.l.b16 %v4481
        %v5316 = vunpack.c.h.b16 %v4481
        %v5317 = vunpack.c.l.b16 %v4482
        %v5318 = vunpack.c.h.b16 %v4482
        %v5319 = vunpack.c.l.b16 %v4483
        %v5320 = vunpack.c.h.b16 %v4483
        %v5321 = vunpack.c.l.b16 %v4484
        %v5322 = vunpack.c.h.b16 %v4484
        %v5323 = vunpack.c.l.b16 %v4485
        %v5324 = vunpack.c.h.b16 %v4485
        %v5325 = vunpack.c.l.b16 %v4486
        %v5326 = vunpack.c.h.b16 %v4486
        %v5327 = vunpack.c.l.b16 %v4487
        %v5328 = vunpack.c.h.b16 %v4487
        %v5329 = vunpack.c.l.b16 %v4488
        %v5330 = vunpack.c.h.b16 %v4488
        %v5331 = vunpack.c.l.b16 %v4489
        %v5332 = vunpack.c.h.b16 %v4489
        %v5333 = vunpack.c.l.b16 %v4490
        %v5334 = vunpack.c.h.b16 %v4490
        %v5335 = vunpack.c.l.b16 %v4491
        %v5336 = vunpack.c.h.b16 %v4491
        %v5337 = vunpack.c.l.b16 %v4492
        %v5338 = vunpack.c.h.b16 %v4492
        %v5339 = vunpack.c.l.b16 %v4493
        %v5340 = vunpack.c.h.b16 %v4493
        %v5341 = vunpack.c.l.b16 %v4494
        %v5342 = vunpack.c.h.b16 %v4494
        %v5343 = vunpack.c.l.b16 %v4495
        %v5344 = vunpack.c.h.b16 %v4495
        %v5345 = vunpack.c.l.b16 %v4496
        %v5346 = vunpack.c.h.b16 %v4496
        %v5347 = vunpack.c.l.b16 %v4497
        %v5348 = vunpack.c.h.b16 %v4497
        %v5349 = vunpack.c.l.b16 %v4498
        %v5350 = vunpack.c.h.b16 %v4498
        %v5351 = vunpack.c.l.b16 %v4499
        %v5352 = vunpack.c.h.b16 %v4499
        %v5353 = vunpack.c.l.b16 %v4500
        %v5354 = vunpack.c.h.b16 %v4500
        %v5355 = vunpack.c.l.b16 %v4501
        %v5356 = vunpack.c.h.b16 %v4501
        %v5357 = vunpack.c.l.b16 %v4502
        %v5358 = vunpack.c.h.b16 %v4502
        %v5359 = vunpack.c.l.b16 %v4503
        %v5360 = vunpack.c.h.b16 %v4503
        %v5361 = vunpack.c.l.b16 %v4504
        %v5362 = vunpack.c.h.b16 %v4504
        %v5363 = vunpack.c.l.b16 %v4505
        %v5364 = vunpack.c.h.b16 %v4505
        %v5365 = vunpack.c.l.b16 %v4506
        %v5366 = vunpack.c.h.b16 %v4506
        %v5367 = vunpack.c.l.b16 %v4507
        %v5368 = vunpack.c.h.b16 %v4507
        %v5369 = vunpack.c.l.b16 %v4508
        %v5370 = vunpack.c.h.b16 %v4508
        %v5371 = vunpack.c.l.b16 %v4509
        %v5372 = vunpack.c.h.b16 %v4509
        %v5373 = vunpack.c.l.b16 %v4510
        %v5374 = vunpack.c.h.b16 %v4510
        %v5375 = vunpack.c.l.b16 %v4511
        %v5376 = vunpack.c.h.b16 %v4511
        %v5377 = vunpack.c.l.b16 %v4512
        %v5378 = vunpack.c.h.b16 %v4512
        %v5379 = vunpack.c.l.b16 %v4513
        %v5380 = vunpack.c.h.b16 %v4513
        %v5381 = vunpack.c.l.b16 %v4514
        %v5382 = vunpack.c.h.b16 %v4514
        %v5383 = vunpack.c.l.b16 %v4515
        %v5384 = vunpack.c.h.b16 %v4515
        %v5385 = vunpack.c.l.b16 %v4516
        %v5386 = vunpack.c.h.b16 %v4516
        %v5387 = vunpack.c.l.b16 %v4517
        %v5388 = vunpack.c.h.b16 %v4517
        %v5389 = vunpack.c.l.b16 %v4518
        %v5390 = vunpack.c.h.b16 %v4518
        %v5391 = vunpack.c.l.b16 %v4519
        %v5392 = vunpack.c.h.b16 %v4519
        %v5393 = vunpack.c.l.b16 %v4520
        %v5394 = vunpack.c.h.b16 %v4520
        %v5395 = vunpack.c.l.b16 %v4521
        %v5396 = vunpack.c.h.b16 %v4521
        %v5397 = vunpack.c.l.b16 %v4522
        %v5398 = vunpack.c.h.b16 %v4522
        %v5399 = vunpack.c.l.b16 %v4523
        %v5400 = vunpack.c.h.b16 %v4523
        %v5401 = vunpack.c.l.b16 %v4524
        %v5402 = vunpack.c.h.b16 %v4524
        %v5403 = vunpack.c.l.b16 %v4525
        %v5404 = vunpack.c.h.b16 %v4525
        %v5405 = vunpack.c.l.b16 %v4526
        %v5406 = vunpack.c.h.b16 %v4526
        %v5407 = vunpack.c.l.b16 %v4527
        %v5408 = vunpack.c.h.b16 %v4527
        %v5409 = vunpack.c.l.b16 %v4528
        %v5410 = vunpack.c.h.b16 %v4528
        %v5411 = vunpack.c.l.b16 %v4529
        %v5412 = vunpack.c.h.b16 %v4529
        %v5413 = vunpack.c.l.b16 %v4530
        %v5414 = vunpack.c.h.b16 %v4530
        %v5415 = vunpack.c.l.b16 %v4531
        %v5416 = vunpack.c.h.b16 %v4531
        %v5417 = vunpack.c.l.b16 %v4532
        %v5418 = vunpack.c.h.b16 %v4532
        %v5419 = vunpack.c.l.b16 %v4533
        %v5420 = vunpack.c.h.b16 %v4533
        %v5421 = vunpack.c.l.b16 %v4534
        %v5422 = vunpack.c.h.b16 %v4534
        %v5423 = vunpack.c.l.b16 %v4535
        %v5424 = vunpack.c.h.b16 %v4535
        %v5425 = vunpack.c.l.b16 %v4536
        %v5426 = vunpack.c.h.b16 %v4536
        %v5427 = vunpack.c.l.b16 %v4537
        %v5428 = vunpack.c.h.b16 %v4537
        %v5429 = vunpack.c.l.b16 %v4538
        %v5430 = vunpack.c.h.b16 %v4538
        %v5431 = vunpack.c.l.b16 %v4539
        %v5432 = vunpack.c.h.b16 %v4539
        %v5433 = vunpack.c.l.b16 %v4540
        %v5434 = vunpack.c.h.b16 %v4540
        %v5435 = vunpack.c.l.b16 %v4541
        %v5436 = vunpack.c.h.b16 %v4541
        %v5437 = vunpack.c.l.b16 %v4542
        %v5438 = vunpack.c.h.b16 %v4542
        %v5439 = vunpack.c.l.b16 %v4543
        %v5440 = vunpack.c.h.b16 %v4543
        %v5441 = vunpack.c.l.b16 %v4544
        %v5442 = vunpack.c.h.b16 %v4544
        %v5443 = vunpack.c.l.b16 %v4545
        %v5444 = vunpack.c.h.b16 %v4545
        %v5445 = vunpack.c.l.b16 %v4546
        %v5446 = vunpack.c.h.b16 %v4546
        %v5447 = vunpack.c.l.b16 %v4547
        %v5448 = vunpack.c.h.b16 %v4547
        %v5449 = vunpack.c.l.b16 %v4548
        %v5450 = vunpack.c.h.b16 %v4548
        %v5451 = vunpack.c.l.b16 %v4549
        %v5452 = vunpack.c.h.b16 %v4549
        %v5453 = vunpack.c.l.b16 %v4550
        %v5454 = vunpack.c.h.b16 %v4550
        %v5455 = vunpack.c.l.b16 %v4551
        %v5456 = vunpack.c.h.b16 %v4551
        %v5457 = vunpack.c.l.b16 %v4552
        %v5458 = vunpack.c.h.b16 %v4552
        %v5459 = vunpack.c.l.b16 %v4553
        %v5460 = vunpack.c.h.b16 %v4553
        %v5461 = vunpack.c.l.b16 %v4554
        %v5462 = vunpack.c.h.b16 %v4554
        %v5463 = vunpack.c.l.b16 %v4555
        %v5464 = vunpack.c.h.b16 %v4555
        %v5465 = vunpack.c.l.b16 %v4556
        %v5466 = vunpack.c.h.b16 %v4556
        %v5467 = vunpack.c.l.b16 %v4557
        %v5468 = vunpack.c.h.b16 %v4557
        %v5469 = vunpack.c.l.b16 %v4558
        %v5470 = vunpack.c.h.b16 %v4558
        %v5471 = vunpack.c.l.b16 %v4559
        %v5472 = vunpack.c.h.b16 %v4559
        %v5473 = vunpack.c.l.b16 %v4560
        %v5474 = vunpack.c.h.b16 %v4560
        %v5475 = vunpack.c.l.b16 %v4561
        %v5476 = vunpack.c.h.b16 %v4561
        %v5477 = vunpack.c.l.b16 %v4562
        %v5478 = vunpack.c.h.b16 %v4562
        %v5479 = vunpack.c.l.b16 %v4563
        %v5480 = vunpack.c.h.b16 %v4563
        %v5481 = vunpack.c.l.b16 %v4564
        %v5482 = vunpack.c.h.b16 %v4564
        %v5483 = vunpack.c.l.b16 %v4565
        %v5484 = vunpack.c.h.b16 %v4565
        %v5485 = vunpack.c.l.b16 %v4566
        %v5486 = vunpack.c.h.b16 %v4566
        %v5487 = vunpack.c.l.b16 %v4567
        %v5488 = vunpack.c.h.b16 %v4567
        %v5489 = vunpack.c.l.b16 %v4568
        %v5490 = vunpack.c.h.b16 %v4568
        %v5491 = vunpack.c.l.b16 %v4569
        %v5492 = vunpack.c.h.b16 %v4569
        %v5493 = vunpack.c.l.b16 %v4570
        %v5494 = vunpack.c.h.b16 %v4570
        %v5495 = vunpack.c.l.b16 %v4571
        %v5496 = vunpack.c.h.b16 %v4571
        %v5497 = vunpack.c.l.b16 %v4572
        %v5498 = vunpack.c.h.b16 %v4572
        %v5499 = vunpack.c.l.b16 %v4573
        %v5500 = vunpack.c.h.b16 %v4573
        %v5501 = vunpack.c.l.b16 %v4574
        %v5502 = vunpack.c.h.b16 %v4574
        %v5503 = vpack.c.b16 %v4939, %v4927
        %v5504 = vpack.c.b16 %v4940, %v4928
        %v5505 = vpack.c.b16 %v4941, %v4929
        %v5506 = vpack.c.b16 %v4942, %v4930
        %v5507 = vpack.c.b16 %v4943, %v4931
        %v5508 = vpack.c.b16 %v4944, %v4932
        %v5509 = vpack.c.b16 %v4945, %v4933
        %v5510 = vpack.c.b16 %v4946, %v4934
        %v5511 = vpack.c.b16 %v4947, %v4935
        %v5512 = vpack.c.b16 %v4948, %v4936
        %v5513 = vpack.c.b16 %v4949, %v4937
        %v5514 = vpack.c.b16 %v4950, %v4938
        %v5515 = vpack.c.b16 %v4963, %v4951
        %v5516 = vpack.c.b16 %v4964, %v4952
        %v5517 = vpack.c.b16 %v4965, %v4953
        %v5518 = vpack.c.b16 %v4966, %v4954
        %v5519 = vpack.c.b16 %v4967, %v4955
        %v5520 = vpack.c.b16 %v4968, %v4956
        %v5521 = vpack.c.b16 %v4969, %v4957
        %v5522 = vpack.c.b16 %v4970, %v4958
        %v5523 = vpack.c.b16 %v4971, %v4959
        %v5524 = vpack.c.b16 %v4972, %v4960
        %v5525 = vpack.c.b16 %v4973, %v4961
        %v5526 = vpack.c.b16 %v4974, %v4962
        %v5527 = vpack.c.b16 %v4987, %v4975
        %v5528 = vpack.c.b16 %v4988, %v4976
        %v5529 = vpack.c.b16 %v4989, %v4977
        %v5530 = vpack.c.b16 %v4990, %v4978
        %v5531 = vpack.c.b16 %v4991, %v4979
        %v5532 = vpack.c.b16 %v4992, %v4980
        %v5533 = vpack.c.b16 %v4993, %v4981
        %v5534 = vpack.c.b16 %v4994, %v4982
        %v5535 = vpack.c.b16 %v4995, %v4983
        %v5536 = vpack.c.b16 %v4996, %v4984
        %v5537 = vpack.c.b16 %v4997, %v4985
        %v5538 = vpack.c.b16 %v4998, %v4986
        %v5539 = vpack.c.b16 %v5011, %v4999
        %v5540 = vpack.c.b16 %v5012, %v5000
        %v5541 = vpack.c.b16 %v5013, %v5001
        %v5542 = vpack.c.b16 %v5014, %v5002
        %v5543 = vpack.c.b16 %v5015, %v5003
        %v5544 = vpack.c.b16 %v5016, %v5004
        %v5545 = vpack.c.b16 %v5017, %v5005
        %v5546 = vpack.c.b16 %v5018, %v5006
        %v5547 = vpack.c.b16 %v5019, %v5007
        %v5548 = vpack.c.b16 %v5020, %v5008
        %v5549 = vpack.c.b16 %v5021, %v5009
        %v5550 = vpack.c.b16 %v5022, %v5010
        %v5551 = vpack.c.b16 %v5035, %v5023
        %v5552 = vpack.c.b16 %v5036, %v5024
        %v5553 = vpack.c.b16 %v5037, %v5025
        %v5554 = vpack.c.b16 %v5038, %v5026
        %v5555 = vpack.c.b16 %v5039, %v5027
        %v5556 = vpack.c.b16 %v5040, %v5028
        %v5557 = vpack.c.b16 %v5041, %v5029
        %v5558 = vpack.c.b16 %v5042, %v5030
        %v5559 = vpack.c.b16 %v5043, %v5031
        %v5560 = vpack.c.b16 %v5044, %v5032
        %v5561 = vpack.c.b16 %v5045, %v5033
        %v5562 = vpack.c.b16 %v5046, %v5034
        %v5563 = vpack.c.b16 %v5059, %v5047
        %v5564 = vpack.c.b16 %v5060, %v5048
        %v5565 = vpack.c.b16 %v5061, %v5049
        %v5566 = vpack.c.b16 %v5062, %v5050
        %v5567 = vpack.c.b16 %v5063, %v5051
        %v5568 = vpack.c.b16 %v5064, %v5052
        %v5569 = vpack.c.b16 %v5065, %v5053
        %v5570 = vpack.c.b16 %v5066, %v5054
        %v5571 = vpack.c.b16 %v5067, %v5055
        %v5572 = vpack.c.b16 %v5068, %v5056
        %v5573 = vpack.c.b16 %v5069, %v5057
        %v5574 = vpack.c.b16 %v5070, %v5058
        %v5575 = vpack.c.b16 %v5083, %v5071
        %v5576 = vpack.c.b16 %v5084, %v5072
        %v5577 = vpack.c.b16 %v5085, %v5073
        %v5578 = vpack.c.b16 %v5086, %v5074
        %v5579 = vpack.c.b16 %v5087, %v5075
        %v5580 = vpack.c.b16 %v5088, %v5076
        %v5581 = vpack.c.b16 %v5089, %v5077
        %v5582 = vpack.c.b16 %v5090, %v5078
        %v5583 = vpack.c.b16 %v5091, %v5079
        %v5584 = vpack.c.b16 %v5092, %v5080
        %v5585 = vpack.c.b16 %v5093, %v5081
        %v5586 = vpack.c.b16 %v5094, %v5082
        %v5587 = vpack.c.b16 %v5107, %v5095
        %v5588 = vpack.c.b16 %v5108, %v5096
        %v5589 = vpack.c.b16 %v5109, %v5097
        %v5590 = vpack.c.b16 %v5110, %v5098
        %v5591 = vpack.c.b16 %v5111, %v5099
        %v5592 = vpack.c.b16 %v5112, %v5100
        %v5593 = vpack.c.b16 %v5113, %v5101
        %v5594 = vpack.c.b16 %v5114, %v5102
        %v5595 = vpack.c.b16 %v5115, %v5103
        %v5596 = vpack.c.b16 %v5116, %v5104
        %v5597 = vpack.c.b16 %v5117, %v5105
        %v5598 = vpack.c.b16 %v5118, %v5106
        %v5599 = vpack.c.b16 %v5131, %v5119
        %v5600 = vpack.c.b16 %v5132, %v5120
        %v5601 = vpack.c.b16 %v5133, %v5121
        %v5602 = vpack.c.b16 %v5134, %v5122
        %v5603 = vpack.c.b16 %v5135, %v5123
        %v5604 = vpack.c.b16 %v5136, %v5124
        %v5605 = vpack.c.b16 %v5137, %v5125
        %v5606 = vpack.c.b16 %v5138, %v5126
        %v5607 = vpack.c.b16 %v5139, %v5127
        %v5608 = vpack.c.b16 %v5140, %v5128
        %v5609 = vpack.c.b16 %v5141, %v5129
        %v5610 = vpack.c.b16 %v5142, %v5130
        %v5611 = vpack.c.b16 %v5155, %v5143
        %v5612 = vpack.c.b16 %v5156, %v5144
        %v5613 = vpack.c.b16 %v5157, %v5145
        %v5614 = vpack.c.b16 %v5158, %v5146
        %v5615 = vpack.c.b16 %v5159, %v5147
        %v5616 = vpack.c.b16 %v5160, %v5148
        %v5617 = vpack.c.b16 %v5161, %v5149
        %v5618 = vpack.c.b16 %v5162, %v5150
        %v5619 = vpack.c.b16 %v5163, %v5151
        %v5620 = vpack.c.b16 %v5164, %v5152
        %v5621 = vpack.c.b16 %v5165, %v5153
        %v5622 = vpack.c.b16 %v5166, %v5154
        %v5623 = vpack.c.b16 %v5179, %v5167
        %v5624 = vpack.c.b16 %v5180, %v5168
        %v5625 = vpack.c.b16 %v5181, %v5169
        %v5626 = vpack.c.b16 %v5182, %v5170
        %v5627 = vpack.c.b16 %v5183, %v5171
        %v5628 = vpack.c.b16 %v5184, %v5172
        %v5629 = vpack.c.b16 %v5185, %v5173
        %v5630 = vpack.c.b16 %v5186, %v5174
        %v5631 = vpack.c.b16 %v5187, %v5175
        %v5632 = vpack.c.b16 %v5188, %v5176
        %v5633 = vpack.c.b16 %v5189, %v5177
        %v5634 = vpack.c.b16 %v5190, %v5178
        %v5635 = vpack.c.b16 %v5203, %v5191
        %v5636 = vpack.c.b16 %v5204, %v5192
        %v5637 = vpack.c.b16 %v5205, %v5193
        %v5638 = vpack.c.b16 %v5206, %v5194
        %v5639 = vpack.c.b16 %v5207, %v5195
        %v5640 = vpack.c.b16 %v5208, %v5196
        %v5641 = vpack.c.b16 %v5209, %v5197
        %v5642 = vpack.c.b16 %v5210, %v5198
        %v5643 = vpack.c.b16 %v5211, %v5199
        %v5644 = vpack.c.b16 %v5212, %v5200
        %v5645 = vpack.c.b16 %v5213, %v5201
        %v5646 = vpack.c.b16 %v5214, %v5202
        %v5647 = vpack.c.b16 %v5227, %v5215
        %v5648 = vpack.c.b16 %v5228, %v5216
        %v5649 = vpack.c.b16 %v5229, %v5217
        %v5650 = vpack.c.b16 %v5230, %v5218
        %v5651 = vpack.c.b16 %v5231, %v5219
        %v5652 = vpack.c.b16 %v5232, %v5220
        %v5653 = vpack.c.b16 %v5233, %v5221
        %v5654 = vpack.c.b16 %v5234, %v5222
        %v5655 = vpack.c.b16 %v5235, %v5223
        %v5656 = vpack.c.b16 %v5236, %v5224
        %v5657 = vpack.c.b16 %v5237, %v5225
        %v5658 = vpack.c.b16 %v5238, %v5226
        %v5659 = vpack.c.b16 %v5251, %v5239
        %v5660 = vpack.c.b16 %v5252, %v5240
        %v5661 = vpack.c.b16 %v5253, %v5241
        %v5662 = vpack.c.b16 %v5254, %v5242
        %v5663 = vpack.c.b16 %v5255, %v5243
        %v5664 = vpack.c.b16 %v5256, %v5244
        %v5665 = vpack.c.b16 %v5257, %v5245
        %v5666 = vpack.c.b16 %v5258, %v5246
        %v5667 = vpack.c.b16 %v5259, %v5247
        %v5668 = vpack.c.b16 %v5260, %v5248
        %v5669 = vpack.c.b16 %v5261, %v5249
        %v5670 = vpack.c.b16 %v5262, %v5250
        %v5671 = vpack.c.b16 %v5275, %v5263
        %v5672 = vpack.c.b16 %v5276, %v5264
        %v5673 = vpack.c.b16 %v5277, %v5265
        %v5674 = vpack.c.b16 %v5278, %v5266
        %v5675 = vpack.c.b16 %v5279, %v5267
        %v5676 = vpack.c.b16 %v5280, %v5268
        %v5677 = vpack.c.b16 %v5281, %v5269
        %v5678 = vpack.c.b16 %v5282, %v5270
        %v5679 = vpack.c.b16 %v5283, %v5271
        %v5680 = vpack.c.b16 %v5284, %v5272
        %v5681 = vpack.c.b16 %v5285, %v5273
        %v5682 = vpack.c.b16 %v5286, %v5274
        %v5683 = vpack.c.b16 %v5299, %v5287
        %v5684 = vpack.c.b16 %v5300, %v5288
        %v5685 = vpack.c.b16 %v5301, %v5289
        %v5686 = vpack.c.b16 %v5302, %v5290
        %v5687 = vpack.c.b16 %v5303, %v5291
        %v5688 = vpack.c.b16 %v5304, %v5292
        %v5689 = vpack.c.b16 %v5305, %v5293
        %v5690 = vpack.c.b16 %v5306, %v5294
        %v5691 = vpack.c.b16 %v5307, %v5295
        %v5692 = vpack.c.b16 %v5308, %v5296
        %v5693 = vpack.c.b16 %v5309, %v5297
        %v5694 = vpack.c.b16 %v5310, %v5298
        %v5695 = vpack.c.b16 %v5323, %v5311
        %v5696 = vpack.c.b16 %v5324, %v5312
        %v5697 = vpack.c.b16 %v5325, %v5313
        %v5698 = vpack.c.b16 %v5326, %v5314
        %v5699 = vpack.c.b16 %v5327, %v5315
        %v5700 = vpack.c.b16 %v5328, %v5316
        %v5701 = vpack.c.b16 %v5329, %v5317
        %v5702 = vpack.c.b16 %v5330, %v5318
        %v5703 = vpack.c.b16 %v5331, %v5319
        %v5704 = vpack.c.b16 %v5332, %v5320
        %v5705 = vpack.c.b16 %v5333, %v5321
        %v5706 = vpack.c.b16 %v5334, %v5322
        %v5707 = vpack.c.b16 %v5347, %v5335
        %v5708 = vpack.c.b16 %v5348, %v5336
        %v5709 = vpack.c.b16 %v5349, %v5337
        %v5710 = vpack.c.b16 %v5350, %v5338
        %v5711 = vpack.c.b16 %v5351, %v5339
        %v5712 = vpack.c.b16 %v5352, %v5340
        %v5713 = vpack.c.b16 %v5353, %v5341
        %v5714 = vpack.c.b16 %v5354, %v5342
        %v5715 = vpack.c.b16 %v5355, %v5343
        %v5716 = vpack.c.b16 %v5356, %v5344
        %v5717 = vpack.c.b16 %v5357, %v5345
        %v5718 = vpack.c.b16 %v5358, %v5346
        %v5719 = vpack.c.b16 %v5371, %v5359
        %v5720 = vpack.c.b16 %v5372, %v5360
        %v5721 = vpack.c.b16 %v5373, %v5361
        %v5722 = vpack.c.b16 %v5374, %v5362
        %v5723 = vpack.c.b16 %v5375, %v5363
        %v5724 = vpack.c.b16 %v5376, %v5364
        %v5725 = vpack.c.b16 %v5377, %v5365
        %v5726 = vpack.c.b16 %v5378, %v5366
        %v5727 = vpack.c.b16 %v5379, %v5367
        %v5728 = vpack.c.b16 %v5380, %v5368
        %v5729 = vpack.c.b16 %v5381, %v5369
        %v5730 = vpack.c.b16 %v5382, %v5370
        %v5731 = vpack.c.b16 %v5395, %v5383
        %v5732 = vpack.c.b16 %v5396, %v5384
        %v5733 = vpack.c.b16 %v5397, %v5385
        %v5734 = vpack.c.b16 %v5398, %v5386
        %v5735 = vpack.c.b16 %v5399, %v5387
        %v5736 = vpack.c.b16 %v5400, %v5388
        %v5737 = vpack.c.b16 %v5401, %v5389
        %v5738 = vpack.c.b16 %v5402, %v5390
        %v5739 = vpack.c.b16 %v5403, %v5391
        %v5740 = vpack.c.b16 %v5404, %v5392
        %v5741 = vpack.c.b16 %v5405, %v5393
        %v5742 = vpack.c.b16 %v5406, %v5394
        %v5743 = vpack.c.b16 %v5419, %v5407
        %v5744 = vpack.c.b16 %v5420, %v5408
        %v5745 = vpack.c.b16 %v5421, %v5409
        %v5746 = vpack.c.b16 %v5422, %v5410
        %v5747 = vpack.c.b16 %v5423, %v5411
        %v5748 = vpack.c.b16 %v5424, %v5412
        %v5749 = vpack.c.b16 %v5425, %v5413
        %v5750 = vpack.c.b16 %v5426, %v5414
        %v5751 = vpack.c.b16 %v5427, %v5415
        %v5752 = vpack.c.b16 %v5428, %v5416
        %v5753 = vpack.c.b16 %v5429, %v5417
        %v5754 = vpack.c.b16 %v5430, %v5418
        %v5755 = vpack.c.b16 %v5443, %v5431
        %v5756 = vpack.c.b16 %v5444, %v5432
        %v5757 = vpack.c.b16 %v5445, %v5433
        %v5758 = vpack.c.b16 %v5446, %v5434
        %v5759 = vpack.c.b16 %v5447, %v5435
        %v5760 = vpack.c.b16 %v5448, %v5436
        %v5761 = vpack.c.b16 %v5449, %v5437
        %v5762 = vpack.c.b16 %v5450, %v5438
        %v5763 = vpack.c.b16 %v5451, %v5439
        %v5764 = vpack.c.b16 %v5452, %v5440
        %v5765 = vpack.c.b16 %v5453, %v5441
        %v5766 = vpack.c.b16 %v5454, %v5442
        %v5767 = vpack.c.b16 %v5467, %v5455
        %v5768 = vpack.c.b16 %v5468, %v5456
        %v5769 = vpack.c.b16 %v5469, %v5457
        %v5770 = vpack.c.b16 %v5470, %v5458
        %v5771 = vpack.c.b16 %v5471, %v5459
        %v5772 = vpack.c.b16 %v5472, %v5460
        %v5773 = vpack.c.b16 %v5473, %v5461
        %v5774 = vpack.c.b16 %v5474, %v5462
        %v5775 = vpack.c.b16 %v5475, %v5463
        %v5776 = vpack.c.b16 %v5476, %v5464
        %v5777 = vpack.c.b16 %v5477, %v5465
        %v5778 = vpack.c.b16 %v5478, %v5466
        %v5779 = vpack.c.b16 %v5491, %v5479
        %v5780 = vpack.c.b16 %v5492, %v5480
        %v5781 = vpack.c.b16 %v5493, %v5481
        %v5782 = vpack.c.b16 %v5494, %v5482
        %v5783 = vpack.c.b16 %v5495, %v5483
        %v5784 = vpack.c.b16 %v5496, %v5484
        %v5785 = vpack.c.b16 %v5497, %v5485
        %v5786 = vpack.c.b16 %v5498, %v5486
        %v5787 = vpack.c.b16 %v5499, %v5487
        %v5788 = vpack.c.b16 %v5500, %v5488
        %v5789 = vpack.c.b16 %v5501, %v5489
        %v5790 = vpack.c.b16 %v5502, %v5490
        %6079 = vmatprep.subr.bf16.mxu0 %v5504
        %6080 = vmatpush1.bf16.msra.mxu0 %v5503
        %6081 = vmatprep.subr.bf16.mxu0 %v5516
        %6082 = vmatpush1.bf16.msra.mxu0 %v5515
        %6083 = vmatprep.subr.bf16.mxu0 %v5528
        %6084 = vmatpush1.bf16.msra.mxu0 %v5527
        %6085 = vmatprep.subr.bf16.mxu0 %v5540
        %6086 = vmatpush1.bf16.msra.mxu0 %v5539
        %6087 = vmatprep.subr.bf16.mxu0 %v5552
        %6088 = vmatpush1.bf16.msra.mxu0 %v5551
        %6089 = vmatprep.subr.bf16.mxu0 %v5564
        %6090 = vmatpush1.bf16.msra.mxu0 %v5563
        %6091 = vmatprep.subr.bf16.mxu0 %v5576
        %6092 = vmatpush1.bf16.msra.mxu0 %v5575
        %6093 = vmatprep.subr.bf16.mxu0 %v5588
        %6094 = vmatpush1.bf16.msra.mxu0 %v5587
        %6095 = vmatprep.subr.bf16.mxu0 %v5600
        %6096 = vmatpush1.bf16.msra.mxu0 %v5599
        %6097 = vmatprep.subr.bf16.mxu0 %v5612
        %6098 = vmatpush1.bf16.msra.mxu0 %v5611
        %6099 = vmatprep.subr.bf16.mxu0 %v5624
        %6100 = vmatpush1.bf16.msra.mxu0 %v5623
        %6101 = vmatprep.subr.bf16.mxu0 %v5636
        %6102 = vmatpush1.bf16.msra.mxu0 %v5635
        %6103 = vmatprep.subr.bf16.mxu0 %v5648
        %6104 = vmatpush1.bf16.msra.mxu0 %v5647
        %6105 = vmatprep.subr.bf16.mxu0 %v5660
        %6106 = vmatpush1.bf16.msra.mxu0 %v5659
        %6107 = vmatprep.subr.bf16.mxu0 %v5672
        %6108 = vmatpush1.bf16.msra.mxu0 %v5671
        %6109 = vmatprep.subr.bf16.mxu0 %v5684
        %6110 = vmatpush1.bf16.msra.mxu0 %v5683
        %6111 = vmatprep.mubr.bf16.mxu0 %v4285
        %6112 = vmatmul.mubr.bf16.gmra.mrb[0].mxu0 %v4284
        %v6113 = vpop.f32.mrb[0].mxu0
        %v6114 = vadd.f32 %v4582, %v6113
        %v6115 = vpop.f32.mrb[0].mxu0
        %v6116 = vadd.f32 %v4586, %v6115
        %v6117 = vpop.f32.mrb[0].mxu0
        %v6118 = vpop.f32.mrb[0].mxu0
        %6119 = vdwg.mxu0
        %6120 = vmatprep.subr.bf16.mxu0 %v5696
        %6121 = vmatpush1.bf16.msra.mxu0 %v5695
        %6122 = vmatprep.subr.bf16.mxu0 %v5708
        %6123 = vmatpush1.bf16.msra.mxu0 %v5707
        %6124 = vmatprep.subr.bf16.mxu0 %v5720
        %6125 = vmatpush1.bf16.msra.mxu0 %v5719
        %6126 = vmatprep.subr.bf16.mxu0 %v5732
        %6127 = vmatpush1.bf16.msra.mxu0 %v5731
        %6128 = vmatprep.subr.bf16.mxu0 %v5744
        %6129 = vmatpush1.bf16.msra.mxu0 %v5743
        %6130 = vmatprep.subr.bf16.mxu0 %v5756
        %6131 = vmatpush1.bf16.msra.mxu0 %v5755
        %6132 = vmatprep.subr.bf16.mxu0 %v5768
        %6133 = vmatpush1.bf16.msra.mxu0 %v5767
        %6134 = vmatprep.subr.bf16.mxu0 %v5780
        %6135 = vmatpush1.bf16.msra.mxu0 %v5779
        %6136 = vmatprep.subr.bf16.mxu0 0
        %6137 = vmatpush1.bf16.msra.mxu0 0
        %6138 = vmatprep.subr.bf16.mxu0 0
        %6139 = vmatpush1.bf16.msra.mxu0 0
        %6140 = vmatprep.subr.bf16.mxu0 0
        %6141 = vmatpush1.bf16.msra.mxu0 0
        %6142 = vmatprep.subr.bf16.mxu0 0
        %6143 = vmatpush1.bf16.msra.mxu0 0
        %6144 = vmatprep.subr.bf16.mxu0 0
        %6145 = vmatpush1.bf16.msra.mxu0 0
        %6146 = vmatprep.subr.bf16.mxu0 0
        %6147 = vmatpush1.bf16.msra.mxu0 0
        %6148 = vmatprep.subr.bf16.mxu0 0
        %6149 = vmatpush1.bf16.msra.mxu0 0
        %6150 = vmatprep.subr.bf16.mxu0 0
        %6151 = vmatpush1.bf16.msra.mxu0 0
        %6152 = vmatprep.mubr.bf16.mxu0 0
        %6153 = vmatmul.mubr.bf16.gmra.mrb[0].mxu0 %v4286
        %v6154 = vpop.f32.mrb[0].mxu0
        %v6155 = vadd.f32 %v6114, %v6154
        %v6156 = vpop.f32.mrb[0].mxu0
        %v6157 = vadd.f32 %v6116, %v6156
        %v6158 = vpop.f32.mrb[0].mxu0
        %v6159 = vpop.f32.mrb[0].mxu0
        %6160 = vdwg.mxu0
        %6161 = vmatprep.subr.bf16.mxu0 %v5506
        %6162 = vmatpush1.bf16.msra.mxu0 %v5505
        %6163 = vmatprep.subr.bf16.mxu0 %v5518
        %6164 = vmatpush1.bf16.msra.mxu0 %v5517
        %6165 = vmatprep.subr.bf16.mxu0 %v5530
        %6166 = vmatpush1.bf16.msra.mxu0 %v5529
        %6167 = vmatprep.subr.bf16.mxu0 %v5542
        %6168 = vmatpush1.bf16.msra.mxu0 %v5541
        %6169 = vmatprep.subr.bf16.mxu0 %v5554
        %6170 = vmatpush1.bf16.msra.mxu0 %v5553
        %6171 = vmatprep.subr.bf16.mxu0 %v5566
        %6172 = vmatpush1.bf16.msra.mxu0 %v5565
        %6173 = vmatprep.subr.bf16.mxu0 %v5578
        %6174 = vmatpush1.bf16.msra.mxu0 %v5577
        %6175 = vmatprep.subr.bf16.mxu0 %v5590
        %6176 = vmatpush1.bf16.msra.mxu0 %v5589
        %6177 = vmatprep.subr.bf16.mxu0 %v5602
        %6178 = vmatpush1.bf16.msra.mxu0 %v5601
        %6179 = vmatprep.subr.bf16.mxu0 %v5614
        %6180 = vmatpush1.bf16.msra.mxu0 %v5613
        %6181 = vmatprep.subr.bf16.mxu0 %v5626
        %6182 = vmatpush1.bf16.msra.mxu0 %v5625
        %6183 = vmatprep.subr.bf16.mxu0 %v5638
        %6184 = vmatpush1.bf16.msra.mxu0 %v5637
        %6185 = vmatprep.subr.bf16.mxu0 %v5650
        %6186 = vmatpush1.bf16.msra.mxu0 %v5649
        %6187 = vmatprep.subr.bf16.mxu0 %v5662
        %6188 = vmatpush1.bf16.msra.mxu0 %v5661
        %6189 = vmatprep.subr.bf16.mxu0 %v5674
        %6190 = vmatpush1.bf16.msra.mxu0 %v5673
        %6191 = vmatprep.subr.bf16.mxu0 %v5686
        %6192 = vmatpush1.bf16.msra.mxu0 %v5685
        %6193 = vmatprep.mubr.bf16.mxu0 %v4285
        %6194 = vmatmul.mubr.bf16.gmra.mrb[0].mxu0 %v4284
        %v6195 = vpop.f32.mrb[0].mxu0
        %v6196 = vadd.f32 %v4590, %v6195
        %v6197 = vpop.f32.mrb[0].mxu0
        %v6198 = vadd.f32 %v4594, %v6197
        %v6199 = vpop.f32.mrb[0].mxu0
        %v6200 = vpop.f32.mrb[0].mxu0
        %6201 = vdwg.mxu0
        %6202 = vmatprep.subr.bf16.mxu0 %v5698
        %6203 = vmatpush1.bf16.msra.mxu0 %v5697
        %6204 = vmatprep.subr.bf16.mxu0 %v5710
        %6205 = vmatpush1.bf16.msra.mxu0 %v5709
        %6206 = vmatprep.subr.bf16.mxu0 %v5722
        %6207 = vmatpush1.bf16.msra.mxu0 %v5721
        %6208 = vmatprep.subr.bf16.mxu0 %v5734
        %6209 = vmatpush1.bf16.msra.mxu0 %v5733
        %6210 = vmatprep.subr.bf16.mxu0 %v5746
        %6211 = vmatpush1.bf16.msra.mxu0 %v5745
        %6212 = vmatprep.subr.bf16.mxu0 %v5758
        %6213 = vmatpush1.bf16.msra.mxu0 %v5757
        %6214 = vmatprep.subr.bf16.mxu0 %v5770
        %6215 = vmatpush1.bf16.msra.mxu0 %v5769
        %6216 = vmatprep.subr.bf16.mxu0 %v5782
        %6217 = vmatpush1.bf16.msra.mxu0 %v5781
        %6218 = vmatprep.subr.bf16.mxu0 0
        %6219 = vmatpush1.bf16.msra.mxu0 0
        %6220 = vmatprep.subr.bf16.mxu0 0
        %6221 = vmatpush1.bf16.msra.mxu0 0
        %6222 = vmatprep.subr.bf16.mxu0 0
        %6223 = vmatpush1.bf16.msra.mxu0 0
        %6224 = vmatprep.subr.bf16.mxu0 0
        %6225 = vmatpush1.bf16.msra.mxu0 0
        %6226 = vmatprep.subr.bf16.mxu0 0
        %6227 = vmatpush1.bf16.msra.mxu0 0
        %6228 = vmatprep.subr.bf16.mxu0 0
        %6229 = vmatpush1.bf16.msra.mxu0 0
        %6230 = vmatprep.subr.bf16.mxu0 0
        %6231 = vmatpush1.bf16.msra.mxu0 0
        %6232 = vmatprep.subr.bf16.mxu0 0
        %6233 = vmatpush1.bf16.msra.mxu0 0
        %6234 = vmatprep.mubr.bf16.mxu0 0
        %6235 = vmatmul.mubr.bf16.gmra.mrb[0].mxu0 %v4286
        %v6236 = vpop.f32.mrb[0].mxu0
        %v6237 = vadd.f32 %v6196, %v6236
        %v6238 = vpop.f32.mrb[0].mxu0
        %v6239 = vadd.f32 %v6198, %v6238
        %v6240 = vpop.f32.mrb[0].mxu0
        %v6241 = vpop.f32.mrb[0].mxu0
        %6242 = vdwg.mxu0
        %6243 = vmatprep.subr.bf16.mxu0 %v5508
        %6244 = vmatpush1.bf16.msra.mxu0 %v5507
        %6245 = vmatprep.subr.bf16.mxu0 %v5520
        %6246 = vmatpush1.bf16.msra.mxu0 %v5519
        %6247 = vmatprep.subr.bf16.mxu0 %v5532
        %6248 = vmatpush1.bf16.msra.mxu0 %v5531
        %6249 = vmatprep.subr.bf16.mxu0 %v5544
        %6250 = vmatpush1.bf16.msra.mxu0 %v5543
        %6251 = vmatprep.subr.bf16.mxu0 %v5556
        %6252 = vmatpush1.bf16.msra.mxu0 %v5555
        %6253 = vmatprep.subr.bf16.mxu0 %v5568
        %6254 = vmatpush1.bf16.msra.mxu0 %v5567
        %6255 = vmatprep.subr.bf16.mxu0 %v5580
        %6256 = vmatpush1.bf16.msra.mxu0 %v5579
        %6257 = vmatprep.subr.bf16.mxu0 %v5592
        %6258 = vmatpush1.bf16.msra.mxu0 %v5591
        %6259 = vmatprep.subr.bf16.mxu0 %v5604
        %6260 = vmatpush1.bf16.msra.mxu0 %v5603
        %6261 = vmatprep.subr.bf16.mxu0 %v5616
        %6262 = vmatpush1.bf16.msra.mxu0 %v5615
        %6263 = vmatprep.subr.bf16.mxu0 %v5628
        %6264 = vmatpush1.bf16.msra.mxu0 %v5627
        %6265 = vmatprep.subr.bf16.mxu0 %v5640
        %6266 = vmatpush1.bf16.msra.mxu0 %v5639
        %6267 = vmatprep.subr.bf16.mxu0 %v5652
        %6268 = vmatpush1.bf16.msra.mxu0 %v5651
        %6269 = vmatprep.subr.bf16.mxu0 %v5664
        %6270 = vmatpush1.bf16.msra.mxu0 %v5663
        %6271 = vmatprep.subr.bf16.mxu0 %v5676
        %6272 = vmatpush1.bf16.msra.mxu0 %v5675
        %6273 = vmatprep.subr.bf16.mxu0 %v5688
        %6274 = vmatpush1.bf16.msra.mxu0 %v5687
        %6275 = vmatprep.mubr.bf16.mxu0 %v4285
        %6276 = vmatmul.mubr.bf16.gmra.mrb[0].mxu0 %v4284
        %v6277 = vpop.f32.mrb[0].mxu0
        %v6278 = vadd.f32 %v4598, %v6277
        %v6279 = vpop.f32.mrb[0].mxu0
        %v6280 = vadd.f32 %v4602, %v6279
        %v6281 = vpop.f32.mrb[0].mxu0
        %v6282 = vpop.f32.mrb[0].mxu0
        %6283 = vdwg.mxu0
        %6284 = vmatprep.subr.bf16.mxu0 %v5700
        %6285 = vmatpush1.bf16.msra.mxu0 %v5699
        %6286 = vmatprep.subr.bf16.mxu0 %v5712
        %6287 = vmatpush1.bf16.msra.mxu0 %v5711
        %6288 = vmatprep.subr.bf16.mxu0 %v5724
        %6289 = vmatpush1.bf16.msra.mxu0 %v5723
        %6290 = vmatprep.subr.bf16.mxu0 %v5736
        %6291 = vmatpush1.bf16.msra.mxu0 %v5735
        %6292 = vmatprep.subr.bf16.mxu0 %v5748
        %6293 = vmatpush1.bf16.msra.mxu0 %v5747
        %6294 = vmatprep.subr.bf16.mxu0 %v5760
        %6295 = vmatpush1.bf16.msra.mxu0 %v5759
        %6296 = vmatprep.subr.bf16.mxu0 %v5772
        %6297 = vmatpush1.bf16.msra.mxu0 %v5771
        %6298 = vmatprep.subr.bf16.mxu0 %v5784
        %6299 = vmatpush1.bf16.msra.mxu0 %v5783
        %6300 = vmatprep.subr.bf16.mxu0 0
        %6301 = vmatpush1.bf16.msra.mxu0 0
        %6302 = vmatprep.subr.bf16.mxu0 0
        %6303 = vmatpush1.bf16.msra.mxu0 0
        %6304 = vmatprep.subr.bf16.mxu0 0
        %6305 = vmatpush1.bf16.msra.mxu0 0
        %6306 = vmatprep.subr.bf16.mxu0 0
        %6307 = vmatpush1.bf16.msra.mxu0 0
        %6308 = vmatprep.subr.bf16.mxu0 0
        %6309 = vmatpush1.bf16.msra.mxu0 0
        %6310 = vmatprep.subr.bf16.mxu0 0
        %6311 = vmatpush1.bf16.msra.mxu0 0
        %6312 = vmatprep.subr.bf16.mxu0 0
        %6313 = vmatpush1.bf16.msra.mxu0 0
        %6314 = vmatprep.subr.bf16.mxu0 0
        %6315 = vmatpush1.bf16.msra.mxu0 0
        %6316 = vmatprep.mubr.bf16.mxu0 0
        %6317 = vmatmul.mubr.bf16.gmra.mrb[0].mxu0 %v4286
        %v6318 = vpop.f32.mrb[0].mxu0
        %v6319 = vadd.f32 %v6278, %v6318
        %v6320 = vpop.f32.mrb[0].mxu0
        %v6321 = vadd.f32 %v6280, %v6320
        %v6322 = vpop.f32.mrb[0].mxu0
        %v6323 = vpop.f32.mrb[0].mxu0
        %6324 = vdwg.mxu0
        %6325 = vmatprep.subr.bf16.mxu0 %v5510
        %6326 = vmatpush1.bf16.msra.mxu0 %v5509
        %6327 = vmatprep.subr.bf16.mxu0 %v5522
        %6328 = vmatpush1.bf16.msra.mxu0 %v5521
        %6329 = vmatprep.subr.bf16.mxu0 %v5534
        %6330 = vmatpush1.bf16.msra.mxu0 %v5533
        %6331 = vmatprep.subr.bf16.mxu0 %v5546
        %6332 = vmatpush1.bf16.msra.mxu0 %v5545
        %6333 = vmatprep.subr.bf16.mxu0 %v5558
        %6334 = vmatpush1.bf16.msra.mxu0 %v5557
        %6335 = vmatprep.subr.bf16.mxu0 %v5570
        %6336 = vmatpush1.bf16.msra.mxu0 %v5569
        %6337 = vmatprep.subr.bf16.mxu0 %v5582
        %6338 = vmatpush1.bf16.msra.mxu0 %v5581
        %6339 = vmatprep.subr.bf16.mxu0 %v5594
        %6340 = vmatpush1.bf16.msra.mxu0 %v5593
        %6341 = vmatprep.subr.bf16.mxu0 %v5606
        %6342 = vmatpush1.bf16.msra.mxu0 %v5605
        %6343 = vmatprep.subr.bf16.mxu0 %v5618
        %6344 = vmatpush1.bf16.msra.mxu0 %v5617
        %6345 = vmatprep.subr.bf16.mxu0 %v5630
        %6346 = vmatpush1.bf16.msra.mxu0 %v5629
        %6347 = vmatprep.subr.bf16.mxu0 %v5642
        %6348 = vmatpush1.bf16.msra.mxu0 %v5641
        %6349 = vmatprep.subr.bf16.mxu0 %v5654
        %6350 = vmatpush1.bf16.msra.mxu0 %v5653
        %6351 = vmatprep.subr.bf16.mxu0 %v5666
        %6352 = vmatpush1.bf16.msra.mxu0 %v5665
        %6353 = vmatprep.subr.bf16.mxu0 %v5678
        %6354 = vmatpush1.bf16.msra.mxu0 %v5677
        %6355 = vmatprep.subr.bf16.mxu0 %v5690
        %6356 = vmatpush1.bf16.msra.mxu0 %v5689
        %6357 = vmatprep.mubr.bf16.mxu0 %v4285
        %6358 = vmatmul.mubr.bf16.gmra.mrb[0].mxu0 %v4284
        %v6359 = vpop.f32.mrb[0].mxu0
        %v6360 = vadd.f32 %v4606, %v6359
        %v6361 = vpop.f32.mrb[0].mxu0
        %v6362 = vadd.f32 %v4610, %v6361
        %v6363 = vpop.f32.mrb[0].mxu0
        %v6364 = vpop.f32.mrb[0].mxu0
        %6365 = vdwg.mxu0
        %6366 = vmatprep.subr.bf16.mxu0 %v5702
        %6367 = vmatpush1.bf16.msra.mxu0 %v5701
        %6368 = vmatprep.subr.bf16.mxu0 %v5714
        %6369 = vmatpush1.bf16.msra.mxu0 %v5713
        %6370 = vmatprep.subr.bf16.mxu0 %v5726
        %6371 = vmatpush1.bf16.msra.mxu0 %v5725
        %6372 = vmatprep.subr.bf16.mxu0 %v5738
        %6373 = vmatpush1.bf16.msra.mxu0 %v5737
        %6374 = vmatprep.subr.bf16.mxu0 %v5750
        %6375 = vmatpush1.bf16.msra.mxu0 %v5749
        %6376 = vmatprep.subr.bf16.mxu0 %v5762
        %6377 = vmatpush1.bf16.msra.mxu0 %v5761
        %6378 = vmatprep.subr.bf16.mxu0 %v5774
        %6379 = vmatpush1.bf16.msra.mxu0 %v5773
        %6380 = vmatprep.subr.bf16.mxu0 %v5786
        %6381 = vmatpush1.bf16.msra.mxu0 %v5785
        %6382 = vmatprep.subr.bf16.mxu0 0
        %6383 = vmatpush1.bf16.msra.mxu0 0
        %6384 = vmatprep.subr.bf16.mxu0 0
        %6385 = vmatpush1.bf16.msra.mxu0 0
        %6386 = vmatprep.subr.bf16.mxu0 0
        %6387 = vmatpush1.bf16.msra.mxu0 0
        %6388 = vmatprep.subr.bf16.mxu0 0
        %6389 = vmatpush1.bf16.msra.mxu0 0
        %6390 = vmatprep.subr.bf16.mxu0 0
        %6391 = vmatpush1.bf16.msra.mxu0 0
        %6392 = vmatprep.subr.bf16.mxu0 0
        %6393 = vmatpush1.bf16.msra.mxu0 0
        %6394 = vmatprep.subr.bf16.mxu0 0
        %6395 = vmatpush1.bf16.msra.mxu0 0
        %6396 = vmatprep.subr.bf16.mxu0 0
        %6397 = vmatpush1.bf16.msra.mxu0 0
        %6398 = vmatprep.mubr.bf16.mxu0 0
        %6399 = vmatmul.mubr.bf16.gmra.mrb[0].mxu0 %v4286
        %v6400 = vpop.f32.mrb[0].mxu0
        %v6401 = vadd.f32 %v6360, %v6400
        %v6402 = vpop.f32.mrb[0].mxu0
        %v6403 = vadd.f32 %v6362, %v6402
        %v6404 = vpop.f32.mrb[0].mxu0
        %v6405 = vpop.f32.mrb[0].mxu0
        %6406 = vdwg.mxu0
        %6407 = vmatprep.subr.bf16.mxu0 %v5512
        %6408 = vmatpush1.bf16.msra.mxu0 %v5511
        %6409 = vmatprep.subr.bf16.mxu0 %v5524
        %6410 = vmatpush1.bf16.msra.mxu0 %v5523
        %6411 = vmatprep.subr.bf16.mxu0 %v5536
        %6412 = vmatpush1.bf16.msra.mxu0 %v5535
        %6413 = vmatprep.subr.bf16.mxu0 %v5548
        %6414 = vmatpush1.bf16.msra.mxu0 %v5547
        %6415 = vmatprep.subr.bf16.mxu0 %v5560
        %6416 = vmatpush1.bf16.msra.mxu0 %v5559
        %6417 = vmatprep.subr.bf16.mxu0 %v5572
        %6418 = vmatpush1.bf16.msra.mxu0 %v5571
        %6419 = vmatprep.subr.bf16.mxu0 %v5584
        %6420 = vmatpush1.bf16.msra.mxu0 %v5583
        %6421 = vmatprep.subr.bf16.mxu0 %v5596
        %6422 = vmatpush1.bf16.msra.mxu0 %v5595
        %6423 = vmatprep.subr.bf16.mxu0 %v5608
        %6424 = vmatpush1.bf16.msra.mxu0 %v5607
        %6425 = vmatprep.subr.bf16.mxu0 %v5620
        %6426 = vmatpush1.bf16.msra.mxu0 %v5619
        %6427 = vmatprep.subr.bf16.mxu0 %v5632
        %6428 = vmatpush1.bf16.msra.mxu0 %v5631
        %6429 = vmatprep.subr.bf16.mxu0 %v5644
        %6430 = vmatpush1.bf16.msra.mxu0 %v5643
        %6431 = vmatprep.subr.bf16.mxu0 %v5656
        %6432 = vmatpush1.bf16.msra.mxu0 %v5655
        %6433 = vmatprep.subr.bf16.mxu0 %v5668
        %6434 = vmatpush1.bf16.msra.mxu0 %v5667
        %6435 = vmatprep.subr.bf16.mxu0 %v5680
        %6436 = vmatpush1.bf16.msra.mxu0 %v5679
        %6437 = vmatprep.subr.bf16.mxu0 %v5692
        %6438 = vmatpush1.bf16.msra.mxu0 %v5691
        %6439 = vmatprep.mubr.bf16.mxu0 %v4285
        %6440 = vmatmul.mubr.bf16.gmra.mrb[0].mxu0 %v4284
        %v6441 = vpop.f32.mrb[0].mxu0
        %v6442 = vadd.f32 %v4614, %v6441
        %v6443 = vpop.f32.mrb[0].mxu0
        %v6444 = vadd.f32 %v4618, %v6443
        %v6445 = vpop.f32.mrb[0].mxu0
        %v6446 = vpop.f32.mrb[0].mxu0
        %6447 = vdwg.mxu0
        %6448 = vmatprep.subr.bf16.mxu0 %v5704
        %6449 = vmatpush1.bf16.msra.mxu0 %v5703
        %6450 = vmatprep.subr.bf16.mxu0 %v5716
        %6451 = vmatpush1.bf16.msra.mxu0 %v5715
        %6452 = vmatprep.subr.bf16.mxu0 %v5728
        %6453 = vmatpush1.bf16.msra.mxu0 %v5727
        %6454 = vmatprep.subr.bf16.mxu0 %v5740
        %6455 = vmatpush1.bf16.msra.mxu0 %v5739
        %6456 = vmatprep.subr.bf16.mxu0 %v5752
        %6457 = vmatpush1.bf16.msra.mxu0 %v5751
        %6458 = vmatprep.subr.bf16.mxu0 %v5764
        %6459 = vmatpush1.bf16.msra.mxu0 %v5763
        %6460 = vmatprep.subr.bf16.mxu0 %v5776
        %6461 = vmatpush1.bf16.msra.mxu0 %v5775
        %6462 = vmatprep.subr.bf16.mxu0 %v5788
        %6463 = vmatpush1.bf16.msra.mxu0 %v5787
        %6464 = vmatprep.subr.bf16.mxu0 0
        %6465 = vmatpush1.bf16.msra.mxu0 0
        %6466 = vmatprep.subr.bf16.mxu0 0
        %6467 = vmatpush1.bf16.msra.mxu0 0
        %6468 = vmatprep.subr.bf16.mxu0 0
        %6469 = vmatpush1.bf16.msra.mxu0 0
        %6470 = vmatprep.subr.bf16.mxu0 0
        %6471 = vmatpush1.bf16.msra.mxu0 0
        %6472 = vmatprep.subr.bf16.mxu0 0
        %6473 = vmatpush1.bf16.msra.mxu0 0
        %6474 = vmatprep.subr.bf16.mxu0 0
        %6475 = vmatpush1.bf16.msra.mxu0 0
        %6476 = vmatprep.subr.bf16.mxu0 0
        %6477 = vmatpush1.bf16.msra.mxu0 0
        %6478 = vmatprep.subr.bf16.mxu0 0
        %6479 = vmatpush1.bf16.msra.mxu0 0
        %6480 = vmatprep.mubr.bf16.mxu0 0
        %6481 = vmatmul.mubr.bf16.gmra.mrb[0].mxu0 %v4286
        %v6482 = vpop.f32.mrb[0].mxu0
        %v6483 = vadd.f32 %v6442, %v6482
        %v6484 = vpop.f32.mrb[0].mxu0
        %v6485 = vadd.f32 %v6444, %v6484
        %v6486 = vpop.f32.mrb[0].mxu0
        %v6487 = vpop.f32.mrb[0].mxu0
        %6488 = vdwg.mxu0
        %6489 = vmatprep.subr.bf16.mxu0 %v5514
        %6490 = vmatpush1.bf16.msra.mxu0 %v5513
        %6491 = vmatprep.subr.bf16.mxu0 %v5526
        %6492 = vmatpush1.bf16.msra.mxu0 %v5525
        %6493 = vmatprep.subr.bf16.mxu0 %v5538
        %6494 = vmatpush1.bf16.msra.mxu0 %v5537
        %6495 = vmatprep.subr.bf16.mxu0 %v5550
        %6496 = vmatpush1.bf16.msra.mxu0 %v5549
        %6497 = vmatprep.subr.bf16.mxu0 %v5562
        %6498 = vmatpush1.bf16.msra.mxu0 %v5561
        %6499 = vmatprep.subr.bf16.mxu0 %v5574
        %6500 = vmatpush1.bf16.msra.mxu0 %v5573
        %6501 = vmatprep.subr.bf16.mxu0 %v5586
        %6502 = vmatpush1.bf16.msra.mxu0 %v5585
        %6503 = vmatprep.subr.bf16.mxu0 %v5598
        %6504 = vmatpush1.bf16.msra.mxu0 %v5597
        %6505 = vmatprep.subr.bf16.mxu0 %v5610
        %6506 = vmatpush1.bf16.msra.mxu0 %v5609
        %6507 = vmatprep.subr.bf16.mxu0 %v5622
        %6508 = vmatpush1.bf16.msra.mxu0 %v5621
        %6509 = vmatprep.subr.bf16.mxu0 %v5634
        %6510 = vmatpush1.bf16.msra.mxu0 %v5633
        %6511 = vmatprep.subr.bf16.mxu0 %v5646
        %6512 = vmatpush1.bf16.msra.mxu0 %v5645
        %6513 = vmatprep.subr.bf16.mxu0 %v5658
        %6514 = vmatpush1.bf16.msra.mxu0 %v5657
        %6515 = vmatprep.subr.bf16.mxu0 %v5670
        %6516 = vmatpush1.bf16.msra.mxu0 %v5669
        %6517 = vmatprep.subr.bf16.mxu0 %v5682
        %6518 = vmatpush1.bf16.msra.mxu0 %v5681
        %6519 = vmatprep.subr.bf16.mxu0 %v5694
        %6520 = vmatpush1.bf16.msra.mxu0 %v5693
        %6521 = vmatprep.mubr.bf16.mxu0 %v4285
        %6522 = vmatmul.mubr.bf16.gmra.mrb[0].mxu0 %v4284
        %v6523 = vpop.f32.mrb[0].mxu0
        %v6524 = vadd.f32 %v4622, %v6523
        %v6525 = vpop.f32.mrb[0].mxu0
        %v6526 = vadd.f32 %v4626, %v6525
        %v6527 = vpop.f32.mrb[0].mxu0
        %v6528 = vpop.f32.mrb[0].mxu0
        %6529 = vdwg.mxu0
        %6530 = vmatprep.subr.bf16.mxu0 %v5706
        %6531 = vmatpush1.bf16.msra.mxu0 %v5705
        %6532 = vmatprep.subr.bf16.mxu0 %v5718
        %6533 = vmatpush1.bf16.msra.mxu0 %v5717
        %6534 = vmatprep.subr.bf16.mxu0 %v5730
        %6535 = vmatpush1.bf16.msra.mxu0 %v5729
        %6536 = vmatprep.subr.bf16.mxu0 %v5742
        %6537 = vmatpush1.bf16.msra.mxu0 %v5741
        %6538 = vmatprep.subr.bf16.mxu0 %v5754
        %6539 = vmatpush1.bf16.msra.mxu0 %v5753
        %6540 = vmatprep.subr.bf16.mxu0 %v5766
        %6541 = vmatpush1.bf16.msra.mxu0 %v5765
        %6542 = vmatprep.subr.bf16.mxu0 %v5778
        %6543 = vmatpush1.bf16.msra.mxu0 %v5777
        %6544 = vmatprep.subr.bf16.mxu0 %v5790
        %6545 = vmatpush1.bf16.msra.mxu0 %v5789
        %6546 = vmatprep.subr.bf16.mxu0 0
        %6547 = vmatpush1.bf16.msra.mxu0 0
        %6548 = vmatprep.subr.bf16.mxu0 0
        %6549 = vmatpush1.bf16.msra.mxu0 0
        %6550 = vmatprep.subr.bf16.mxu0 0
        %6551 = vmatpush1.bf16.msra.mxu0 0
        %6552 = vmatprep.subr.bf16.mxu0 0
        %6553 = vmatpush1.bf16.msra.mxu0 0
        %6554 = vmatprep.subr.bf16.mxu0 0
        %6555 = vmatpush1.bf16.msra.mxu0 0
        %6556 = vmatprep.subr.bf16.mxu0 0
        %6557 = vmatpush1.bf16.msra.mxu0 0
        %6558 = vmatprep.subr.bf16.mxu0 0
        %6559 = vmatpush1.bf16.msra.mxu0 0
        %6560 = vmatprep.subr.bf16.mxu0 0
        %6561 = vmatpush1.bf16.msra.mxu0 0
        %6562 = vmatprep.mubr.bf16.mxu0 0
        %6563 = vmatmul.mubr.bf16.gmra.mrb[0].mxu0 %v4286
        %v6564 = vpop.f32.mrb[0].mxu0
        %v6565 = vadd.f32 %v6524, %v6564
        %v6566 = vpop.f32.mrb[0].mxu0
        %v6567 = vadd.f32 %v6526, %v6566
        %v6568 = vpop.f32.mrb[0].mxu0
        %v6569 = vpop.f32.mrb[0].mxu0
        %6570 = vdwg.mxu0
        %v6571 = vmul.f32 %v6155, 0.5
        %v6572 = vmul.f32 %v6157, 0.5
        %v6573 = vmul.f32 %v6237, 0.5
        %v6574 = vmul.f32 %v6239, 0.5
        %v6575 = vmul.f32 %v6319, 0.5
        %v6576 = vmul.f32 %v6321, 0.5
        %v6577 = vmul.f32 %v6401, 0.5
        %v6578 = vmul.f32 %v6403, 0.5
        %v6579 = vmul.f32 %v6483, 0.5
        %v6580 = vmul.f32 %v6485, 0.5
        %v6581 = vmul.f32 %v6565, 0.5
        %v6582 = vmul.f32 %v6567, 0.5
        %v6583 = vmul.f32 %v6155, 0.044715
        %v6584 = vmul.f32 %v6157, 0.044715
        %v6585 = vmul.f32 %v6237, 0.044715
        %v6586 = vmul.f32 %v6239, 0.044715
        %v6587 = vmul.f32 %v6319, 0.044715
        %v6588 = vmul.f32 %v6321, 0.044715
        %v6589 = vmul.f32 %v6401, 0.044715
        %v6590 = vmul.f32 %v6403, 0.044715
        %v6591 = vmul.f32 %v6483, 0.044715
        %v6592 = vmul.f32 %v6485, 0.044715
        %v6593 = vmul.f32 %v6565, 0.044715
        %v6594 = vmul.f32 %v6567, 0.044715
        %v6595 = vmul.f32 %v6583, %v6155
        %v6596 = vmul.f32 %v6584, %v6157
        %v6597 = vmul.f32 %v6585, %v6237
        %v6598 = vmul.f32 %v6586, %v6239
        %v6599 = vmul.f32 %v6587, %v6319
        %v6600 = vmul.f32 %v6588, %v6321
        %v6601 = vmul.f32 %v6589, %v6401
        %v6602 = vmul.f32 %v6590, %v6403
        %v6603 = vmul.f32 %v6591, %v6483
        %v6604 = vmul.f32 %v6592, %v6485
        %v6605 = vmul.f32 %v6593, %v6565
        %v6606 = vmul.f32 %v6594, %v6567
        %v6607 = vmul.f32 %v6595, %v6155
        %v6608 = vmul.f32 %v6596, %v6157
        %v6609 = vmul.f32 %v6597, %v6237
        %v6610 = vmul.f32 %v6598, %v6239
        %v6611 = vmul.f32 %v6599, %v6319
        %v6612 = vmul.f32 %v6600, %v6321
        %v6613 = vmul.f32 %v6601, %v6401
        %v6614 = vmul.f32 %v6602, %v6403
        %v6615 = vmul.f32 %v6603, %v6483
        %v6616 = vmul.f32 %v6604, %v6485
        %v6617 = vmul.f32 %v6605, %v6565
        %v6618 = vmul.f32 %v6606, %v6567
        %v6619 = vadd.f32 %v6155, %v6607
        %v6620 = vadd.f32 %v6157, %v6608
        %v6621 = vadd.f32 %v6237, %v6609
        %v6622 = vadd.f32 %v6239, %v6610
        %v6623 = vadd.f32 %v6319, %v6611
        %v6624 = vadd.f32 %v6321, %v6612
        %v6625 = vadd.f32 %v6401, %v6613
        %v6626 = vadd.f32 %v6403, %v6614
        %v6627 = vadd.f32 %v6483, %v6615
        %v6628 = vadd.f32 %v6485, %v6616
        %v6629 = vadd.f32 %v6565, %v6617
        %v6630 = vadd.f32 %v6567, %v6618
        %v6631 = vmul.f32 %v6619, 0.7978846
        %v6632 = vmul.f32 %v6620, 0.7978846
        %v6633 = vmul.f32 %v6621, 0.7978846
        %v6634 = vmul.f32 %v6622, 0.7978846
        %v6635 = vmul.f32 %v6623, 0.7978846
        %v6636 = vmul.f32 %v6624, 0.7978846
        %v6637 = vmul.f32 %v6625, 0.7978846
        %v6638 = vmul.f32 %v6626, 0.7978846
        %v6639 = vmul.f32 %v6627, 0.7978846
        %v6640 = vmul.f32 %v6628, 0.7978846
        %v6641 = vmul.f32 %v6629, 0.7978846
        %v6642 = vmul.f32 %v6630, 0.7978846
        %v6643 = vtanh.pop %v6631
        %v6644 = vtanh.pop %v6632
        %v6645 = vtanh.pop %v6633
        %v6646 = vtanh.pop %v6634
        %v6647 = vtanh.pop %v6635
        %v6648 = vtanh.pop %v6636
        %v6649 = vtanh.pop %v6637
        %v6650 = vtanh.pop %v6638
        %v6651 = vtanh.pop %v6639
        %v6652 = vtanh.pop %v6640
        %v6653 = vtanh.pop %v6641
        %v6654 = vtanh.pop %v6642
        %v6655 = vadd.f32 %v6643, 1.0
        %v6656 = vadd.f32 %v6644, 1.0
        %v6657 = vadd.f32 %v6645, 1.0
        %v6658 = vadd.f32 %v6646, 1.0
        %v6659 = vadd.f32 %v6647, 1.0
        %v6660 = vadd.f32 %v6648, 1.0
        %v6661 = vadd.f32 %v6649, 1.0
        %v6662 = vadd.f32 %v6650, 1.0
        %v6663 = vadd.f32 %v6651, 1.0
        %v6664 = vadd.f32 %v6652, 1.0
        %v6665 = vadd.f32 %v6653, 1.0
        %v6666 = vadd.f32 %v6654, 1.0
        %v6667 = vmul.f32 %v6571, %v6655
        %v6668 = vmul.f32 %v6572, %v6656
        %v6669 = vmul.f32 %v6573, %v6657
        %v6670 = vmul.f32 %v6574, %v6658
        %v6671 = vmul.f32 %v6575, %v6659
        %v6672 = vmul.f32 %v6576, %v6660
        %v6673 = vmul.f32 %v6577, %v6661
        %v6674 = vmul.f32 %v6578, %v6662
        %v6675 = vmul.f32 %v6579, %v6663
        %v6676 = vmul.f32 %v6580, %v6664
        %v6677 = vmul.f32 %v6581, %v6665
        %v6678 = vmul.f32 %v6582, %v6666
        %v6679 = vpack.c.bf16 %v6667, %v6667
        %v6680 = vpack.c.bf16 %v6668, %v6668
        %v6681 = vpack.c.bf16 %v6669, %v6669
        %v6682 = vpack.c.bf16 %v6670, %v6670
        %v6683 = vpack.c.bf16 %v6671, %v6671
        %v6684 = vpack.c.bf16 %v6672, %v6672
        %v6685 = vpack.c.bf16 %v6673, %v6673
        %v6686 = vpack.c.bf16 %v6674, %v6674
        %v6687 = vpack.c.bf16 %v6675, %v6675
        %v6688 = vpack.c.bf16 %v6676, %v6676
        %v6689 = vpack.c.bf16 %v6677, %v6677
        %v6690 = vpack.c.bf16 %v6678, %v6678
        %v6691 = vld [vmem:[%s884] sm:$0xff]
        %v6692 = vld [vmem:[%s884 + $0x8] sm:$0xf]
        %v6693 = vld [vmem:[%s884 + $0xc] sm:$0xff]
        %v6694 = vld [vmem:[%s884 + $0x14] sm:$0xf]
        %v6695 = vld [vmem:[%s884 + $0x18] sm:$0xff]
        %v6696 = vld [vmem:[%s884 + $0x20] sm:$0xf]
        %v6697 = vld [vmem:[%s884 + $0x24] sm:$0xff]
        %v6698 = vld [vmem:[%s884 + $0x2c] sm:$0xf]
        %v6699 = vld [vmem:[%s884 + $0x30] sm:$0xff]
        %v6700 = vld [vmem:[%s884 + $0x38] sm:$0xf]
        %v6701 = vld [vmem:[%s884 + $0x3c] sm:$0xff]
        %v6702 = vld [vmem:[%s884 + $0x44] sm:$0xf]
        %v6703 = vld [vmem:[%s884 + $0x48] sm:$0xff]
        %v6704 = vld [vmem:[%s884 + $0x50] sm:$0xf]
        %v6705 = vld [vmem:[%s884 + $0x54] sm:$0xff]
        %v6706 = vld [vmem:[%s884 + $0x5c] sm:$0xf]
        %v6707 = vld [vmem:[%s884 + $0x60] sm:$0xff]
        %v6708 = vld [vmem:[%s884 + $0x68] sm:$0xf]
        %v6709 = vld [vmem:[%s884 + $0x6c] sm:$0xff]
        %v6710 = vld [vmem:[%s884 + $0x74] sm:$0xf]
        %v6711 = vld [vmem:[%s884 + $0x78] sm:$0xff]
        %v6712 = vld [vmem:[%s884 + $0x80] sm:$0xf]
        %v6713 = vld [vmem:[%s884 + $0x84] sm:$0xff]
        %v6714 = vld [vmem:[%s884 + $0x8c] sm:$0xf]
        %v6715 = vld [vmem:[%s884 + $0x90] sm:$0xff]
        %v6716 = vld [vmem:[%s884 + $0x98] sm:$0xf]
        %v6717 = vld [vmem:[%s884 + $0x9c] sm:$0xff]
        %v6718 = vld [vmem:[%s884 + $0xa4] sm:$0xf]
        %v6719 = vld [vmem:[%s884 + $0xa8] sm:$0xff]
        %v6720 = vld [vmem:[%s884 + $0xb0] sm:$0xf]
        %v6721 = vld [vmem:[%s884 + $0xb4] sm:$0xff]
        %v6722 = vld [vmem:[%s884 + $0xbc] sm:$0xf]
        %v6723 = vld [vmem:[%s884 + $0xc0] sm:$0xff]
        %v6724 = vld [vmem:[%s884 + $0xc8] sm:$0xf]
        %v6725 = vld [vmem:[%s884 + $0xcc] sm:$0xff]
        %v6726 = vld [vmem:[%s884 + $0xd4] sm:$0xf]
        %v6727 = vld [vmem:[%s884 + $0xd8] sm:$0xff]
        %v6728 = vld [vmem:[%s884 + $0xe0] sm:$0xf]
        %v6729 = vld [vmem:[%s884 + $0xe4] sm:$0xff]
        %v6730 = vld [vmem:[%s884 + $0xec] sm:$0xf]
        %v6731 = vld [vmem:[%s884 + $0xf0] sm:$0xff]
        %v6732 = vld [vmem:[%s884 + $0xf8] sm:$0xf]
        %v6733 = vld [vmem:[%s884 + $0xfc] sm:$0xff]
        %v6734 = vld [vmem:[%s884 + $0x104] sm:$0xf]
        %v6735 = vld [vmem:[%s884 + $0x108] sm:$0xff]
        %v6736 = vld [vmem:[%s884 + $0x110] sm:$0xf]
        %v6737 = vld [vmem:[%s884 + $0x114] sm:$0xff]
        %v6738 = vld [vmem:[%s884 + $0x11c] sm:$0xf]
        %v6739 = vld [vmem:[%s884 + $0x120] sm:$0xff]
        %v6740 = vld [vmem:[%s884 + $0x128] sm:$0xf]
        %v6741 = vld [vmem:[%s884 + $0x12c] sm:$0xff]
        %v6742 = vld [vmem:[%s884 + $0x134] sm:$0xf]
        %v6743 = vld [vmem:[%s884 + $0x138] sm:$0xff]
        %v6744 = vld [vmem:[%s884 + $0x140] sm:$0xf]
        %v6745 = vld [vmem:[%s884 + $0x144] sm:$0xff]
        %v6746 = vld [vmem:[%s884 + $0x14c] sm:$0xf]
        %v6747 = vld [vmem:[%s884 + $0x150] sm:$0xff]
        %v6748 = vld [vmem:[%s884 + $0x158] sm:$0xf]
        %v6749 = vld [vmem:[%s884 + $0x15c] sm:$0xff]
        %v6750 = vld [vmem:[%s884 + $0x164] sm:$0xf]
        %v6751 = vld [vmem:[%s884 + $0x168] sm:$0xff]
        %v6752 = vld [vmem:[%s884 + $0x170] sm:$0xf]
        %v6753 = vld [vmem:[%s884 + $0x174] sm:$0xff]
        %v6754 = vld [vmem:[%s884 + $0x17c] sm:$0xf]
        %v6755 = vld [vmem:[%s884 + $0x180] sm:$0xff]
        %v6756 = vld [vmem:[%s884 + $0x188] sm:$0xf]
        %v6757 = vld [vmem:[%s884 + $0x18c] sm:$0xff]
        %v6758 = vld [vmem:[%s884 + $0x194] sm:$0xf]
        %v6759 = vld [vmem:[%s884 + $0x198] sm:$0xff]
        %v6760 = vld [vmem:[%s884 + $0x1a0] sm:$0xf]
        %v6761 = vld [vmem:[%s884 + $0x1a4] sm:$0xff]
        %v6762 = vld [vmem:[%s884 + $0x1ac] sm:$0xf]
        %v6763 = vld [vmem:[%s884 + $0x1b0] sm:$0xff]
        %v6764 = vld [vmem:[%s884 + $0x1b8] sm:$0xf]
        %v6765 = vld [vmem:[%s884 + $0x1bc] sm:$0xff]
        %v6766 = vld [vmem:[%s884 + $0x1c4] sm:$0xf]
        %v6767 = vld [vmem:[%s884 + $0x1c8] sm:$0xff]
        %v6768 = vld [vmem:[%s884 + $0x1d0] sm:$0xf]
        %v6769 = vld [vmem:[%s884 + $0x1d4] sm:$0xff]
        %v6770 = vld [vmem:[%s884 + $0x1dc] sm:$0xf]
        %v6771 = vld [vmem:[%s884 + $0x1e0] sm:$0xff]
        %v6772 = vld [vmem:[%s884 + $0x1e8] sm:$0xf]
        %v6773 = vld [vmem:[%s884 + $0x1ec] sm:$0xff]
        %v6774 = vld [vmem:[%s884 + $0x1f4] sm:$0xf]
        %v6775 = vld [vmem:[%s884 + $0x1f8] sm:$0xff]
        %v6776 = vld [vmem:[%s884 + $0x200] sm:$0xf]
        %v6777 = vld [vmem:[%s884 + $0x204] sm:$0xff]
        %v6778 = vld [vmem:[%s884 + $0x20c] sm:$0xf]
        %v6779 = vld [vmem:[%s884 + $0x210] sm:$0xff]
        %v6780 = vld [vmem:[%s884 + $0x218] sm:$0xf]
        %v6781 = vld [vmem:[%s884 + $0x21c] sm:$0xff]
        %v6782 = vld [vmem:[%s884 + $0x224] sm:$0xf]
        %v6783 = vld [vmem:[%s884 + $0x228] sm:$0xff]
        %v6784 = vld [vmem:[%s884 + $0x230] sm:$0xf]
        %v6785 = vld [vmem:[%s884 + $0x234] sm:$0xff]
        %v6786 = vld [vmem:[%s884 + $0x23c] sm:$0xf]
        %v6787 = vld [vmem:[%s884 + $0x240] sm:$0xff]
        %v6788 = vld [vmem:[%s884 + $0x248] sm:$0xf]
        %v6789 = vld [vmem:[%s884 + $0x24c] sm:$0xff]
        %v6790 = vld [vmem:[%s884 + $0x254] sm:$0xf]
        %v6791 = vld [vmem:[%s884 + $0x258] sm:$0xff]
        %v6792 = vld [vmem:[%s884 + $0x260] sm:$0xf]
        %v6793 = vld [vmem:[%s884 + $0x264] sm:$0xff]
        %v6794 = vld [vmem:[%s884 + $0x26c] sm:$0xf]
        %v6795 = vld [vmem:[%s884 + $0x270] sm:$0xff]
        %v6796 = vld [vmem:[%s884 + $0x278] sm:$0xf]
        %v6797 = vld [vmem:[%s884 + $0x27c] sm:$0xff]
        %v6798 = vld [vmem:[%s884 + $0x284] sm:$0xf]
        %v6799 = vld [vmem:[%s884 + $0x288] sm:$0xff]
        %v6800 = vld [vmem:[%s884 + $0x290] sm:$0xf]
        %v6801 = vld [vmem:[%s884 + $0x294] sm:$0xff]
        %v6802 = vld [vmem:[%s884 + $0x29c] sm:$0xf]
        %v6803 = vld [vmem:[%s884 + $0x2a0] sm:$0xff]
        %v6804 = vld [vmem:[%s884 + $0x2a8] sm:$0xf]
        %v6805 = vld [vmem:[%s884 + $0x2ac] sm:$0xff]
        %v6806 = vld [vmem:[%s884 + $0x2b4] sm:$0xf]
        %v6807 = vld [vmem:[%s884 + $0x2b8] sm:$0xff]
        %v6808 = vld [vmem:[%s884 + $0x2c0] sm:$0xf]
        %v6809 = vld [vmem:[%s884 + $0x2c4] sm:$0xff]
        %v6810 = vld [vmem:[%s884 + $0x2cc] sm:$0xf]
        %v6811 = vld [vmem:[%s884 + $0x2d0] sm:$0xff]
        %v6812 = vld [vmem:[%s884 + $0x2d8] sm:$0xf]
        %v6813 = vld [vmem:[%s884 + $0x2dc] sm:$0xff]
        %v6814 = vld [vmem:[%s884 + $0x2e4] sm:$0xf]
        %v6815 = vld [vmem:[%s884 + $0x2e8] sm:$0xff]
        %v6816 = vld [vmem:[%s884 + $0x2f0] sm:$0xf]
        %v6817 = vld [vmem:[%s884 + $0x2f4] sm:$0xff]
        %v6818 = vld [vmem:[%s884 + $0x2fc] sm:$0xf]
        %v6819 = vld [vmem:[%s884 + $0x300] sm:$0xff]
        %v6820 = vld [vmem:[%s884 + $0x308] sm:$0xf]
        %v6821 = vld [vmem:[%s884 + $0x30c] sm:$0xff]
        %v6822 = vld [vmem:[%s884 + $0x314] sm:$0xf]
        %v6823 = vld [vmem:[%s884 + $0x318] sm:$0xff]
        %v6824 = vld [vmem:[%s884 + $0x320] sm:$0xf]
        %v6825 = vld [vmem:[%s884 + $0x324] sm:$0xff]
        %v6826 = vld [vmem:[%s884 + $0x32c] sm:$0xf]
        %v6827 = vld [vmem:[%s884 + $0x330] sm:$0xff]
        %v6828 = vld [vmem:[%s884 + $0x338] sm:$0xf]
        %v6829 = vld [vmem:[%s884 + $0x33c] sm:$0xff]
        %v6830 = vld [vmem:[%s884 + $0x344] sm:$0xf]
        %v6831 = vld [vmem:[%s884 + $0x348] sm:$0xff]
        %v6832 = vld [vmem:[%s884 + $0x350] sm:$0xf]
        %v6833 = vld [vmem:[%s884 + $0x354] sm:$0xff]
        %v6834 = vld [vmem:[%s884 + $0x35c] sm:$0xf]
        %v6835 = vld [vmem:[%s884 + $0x360] sm:$0xff]
        %v6836 = vld [vmem:[%s884 + $0x368] sm:$0xf]
        %v6837 = vld [vmem:[%s884 + $0x36c] sm:$0xff]
        %v6838 = vld [vmem:[%s884 + $0x374] sm:$0xf]
        %v6839 = vld [vmem:[%s884 + $0x378] sm:$0xff]
        %v6840 = vld [vmem:[%s884 + $0x380] sm:$0xf]
        %v6841 = vld [vmem:[%s884 + $0x384] sm:$0xff]
        %v6842 = vld [vmem:[%s884 + $0x38c] sm:$0xf]
        %v6843 = vld [vmem:[%s884 + $0x390] sm:$0xff]
        %v6844 = vld [vmem:[%s884 + $0x398] sm:$0xf]
        %v6845 = vld [vmem:[%s884 + $0x39c] sm:$0xff]
        %v6846 = vld [vmem:[%s884 + $0x3a4] sm:$0xf]
        %v6847 = vld [vmem:[%s884 + $0x3a8] sm:$0xff]
        %v6848 = vld [vmem:[%s884 + $0x3b0] sm:$0xf]
        %v6849 = vld [vmem:[%s884 + $0x3b4] sm:$0xff]
        %v6850 = vld [vmem:[%s884 + $0x3bc] sm:$0xf]
        %v6851 = vld [vmem:[%s884 + $0x3c0] sm:$0xff]
        %v6852 = vld [vmem:[%s884 + $0x3c8] sm:$0xf]
        %v6853 = vld [vmem:[%s884 + $0x3cc] sm:$0xff]
        %v6854 = vld [vmem:[%s884 + $0x3d4] sm:$0xf]
        %v6855 = vld [vmem:[%s884 + $0x3d8] sm:$0xff]
        %v6856 = vld [vmem:[%s884 + $0x3e0] sm:$0xf]
        %v6857 = vld [vmem:[%s884 + $0x3e4] sm:$0xff]
        %v6858 = vld [vmem:[%s884 + $0x3ec] sm:$0xf]
        %v6859 = vld [vmem:[%s884 + $0x3f0] sm:$0xff]
        %v6860 = vld [vmem:[%s884 + $0x3f8] sm:$0xf]
        %v6861 = vld [vmem:[%s884 + $0x3fc] sm:$0xff]
        %v6862 = vld [vmem:[%s884 + $0x404] sm:$0xf]
        %v6863 = vld [vmem:[%s884 + $0x408] sm:$0xff]
        %v6864 = vld [vmem:[%s884 + $0x410] sm:$0xf]
        %v6865 = vld [vmem:[%s884 + $0x414] sm:$0xff]
        %v6866 = vld [vmem:[%s884 + $0x41c] sm:$0xf]
        %v6867 = vld [vmem:[%s884 + $0x420] sm:$0xff]
        %v6868 = vld [vmem:[%s884 + $0x428] sm:$0xf]
        %v6869 = vld [vmem:[%s884 + $0x42c] sm:$0xff]
        %v6870 = vld [vmem:[%s884 + $0x434] sm:$0xf]
        %v6871 = vld [vmem:[%s884 + $0x438] sm:$0xff]
        %v6872 = vld [vmem:[%s884 + $0x440] sm:$0xf]
        %v6873 = vld [vmem:[%s884 + $0x444] sm:$0xff]
        %v6874 = vld [vmem:[%s884 + $0x44c] sm:$0xf]
        %v6875 = vld [vmem:[%s884 + $0x450] sm:$0xff]
        %v6876 = vld [vmem:[%s884 + $0x458] sm:$0xf]
        %v6877 = vld [vmem:[%s884 + $0x45c] sm:$0xff]
        %v6878 = vld [vmem:[%s884 + $0x464] sm:$0xf]
        %v6879 = vld [vmem:[%s884 + $0x468] sm:$0xff]
        %v6880 = vld [vmem:[%s884 + $0x470] sm:$0xf]
        %v6881 = vld [vmem:[%s884 + $0x474] sm:$0xff]
        %v6882 = vld [vmem:[%s884 + $0x47c] sm:$0xf]
        %v6883 = vld [vmem:[%s884 + $0x480] sm:$0xff]
        %v6884 = vld [vmem:[%s884 + $0x488] sm:$0xf]
        %v6885 = vld [vmem:[%s884 + $0x48c] sm:$0xff]
        %v6886 = vld [vmem:[%s884 + $0x494] sm:$0xf]
        %v6887 = vld [vmem:[%s884 + $0x498] sm:$0xff]
        %v6888 = vld [vmem:[%s884 + $0x4a0] sm:$0xf]
        %v6889 = vld [vmem:[%s884 + $0x4a4] sm:$0xff]
        %v6890 = vld [vmem:[%s884 + $0x4ac] sm:$0xf]
        %v6891 = vld [vmem:[%s884 + $0x4b0] sm:$0xff]
        %v6892 = vld [vmem:[%s884 + $0x4b8] sm:$0xf]
        %v6893 = vld [vmem:[%s884 + $0x4bc] sm:$0xff]
        %v6894 = vld [vmem:[%s884 + $0x4c4] sm:$0xf]
        %v6895 = vld [vmem:[%s884 + $0x4c8] sm:$0xff]
        %v6896 = vld [vmem:[%s884 + $0x4d0] sm:$0xf]
        %v6897 = vld [vmem:[%s884 + $0x4d4] sm:$0xff]
        %v6898 = vld [vmem:[%s884 + $0x4dc] sm:$0xf]
        %v6899 = vld [vmem:[%s884 + $0x4e0] sm:$0xff]
        %v6900 = vld [vmem:[%s884 + $0x4e8] sm:$0xf]
        %v6901 = vld [vmem:[%s884 + $0x4ec] sm:$0xff]
        %v6902 = vld [vmem:[%s884 + $0x4f4] sm:$0xf]
        %v6903 = vld [vmem:[%s884 + $0x4f8] sm:$0xff]
        %v6904 = vld [vmem:[%s884 + $0x500] sm:$0xf]
        %v6905 = vld [vmem:[%s884 + $0x504] sm:$0xff]
        %v6906 = vld [vmem:[%s884 + $0x50c] sm:$0xf]
        %v6907 = vld [vmem:[%s884 + $0x510] sm:$0xff]
        %v6908 = vld [vmem:[%s884 + $0x518] sm:$0xf]
        %v6909 = vld [vmem:[%s884 + $0x51c] sm:$0xff]
        %v6910 = vld [vmem:[%s884 + $0x524] sm:$0xf]
        %v6911 = vld [vmem:[%s884 + $0x528] sm:$0xff]
        %v6912 = vld [vmem:[%s884 + $0x530] sm:$0xf]
        %v6913 = vld [vmem:[%s884 + $0x534] sm:$0xff]
        %v6914 = vld [vmem:[%s884 + $0x53c] sm:$0xf]
        %v6915 = vld [vmem:[%s884 + $0x540] sm:$0xff]
        %v6916 = vld [vmem:[%s884 + $0x548] sm:$0xf]
        %v6917 = vld [vmem:[%s884 + $0x54c] sm:$0xff]
        %v6918 = vld [vmem:[%s884 + $0x554] sm:$0xf]
        %v6919 = vld [vmem:[%s884 + $0x558] sm:$0xff]
        %v6920 = vld [vmem:[%s884 + $0x560] sm:$0xf]
        %v6921 = vld [vmem:[%s884 + $0x564] sm:$0xff]
        %v6922 = vld [vmem:[%s884 + $0x56c] sm:$0xf]
        %v6923 = vld [vmem:[%s884 + $0x570] sm:$0xff]
        %v6924 = vld [vmem:[%s884 + $0x578] sm:$0xf]
        %v6925 = vld [vmem:[%s884 + $0x57c] sm:$0xff]
        %v6926 = vld [vmem:[%s884 + $0x584] sm:$0xf]
        %v6927 = vld [vmem:[%s884 + $0x588] sm:$0xff]
        %v6928 = vld [vmem:[%s884 + $0x590] sm:$0xf]
        %v6929 = vld [vmem:[%s884 + $0x594] sm:$0xff]
        %v6930 = vld [vmem:[%s884 + $0x59c] sm:$0xf]
        %v6931 = vld [vmem:[%s884 + $0x5a0] sm:$0xff]
        %v6932 = vld [vmem:[%s884 + $0x5a8] sm:$0xf]
        %v6933 = vld [vmem:[%s884 + $0x5ac] sm:$0xff]
        %v6934 = vld [vmem:[%s884 + $0x5b4] sm:$0xf]
        %v6935 = vld [vmem:[%s884 + $0x5b8] sm:$0xff]
        %v6936 = vld [vmem:[%s884 + $0x5c0] sm:$0xf]
        %v6937 = vld [vmem:[%s884 + $0x5c4] sm:$0xff]
        %v6938 = vld [vmem:[%s884 + $0x5cc] sm:$0xf]
        %v6939 = vld [vmem:[%s884 + $0x5d0] sm:$0xff]
        %v6940 = vld [vmem:[%s884 + $0x5d8] sm:$0xf]
        %v6941 = vld [vmem:[%s884 + $0x5dc] sm:$0xff]
        %v6942 = vld [vmem:[%s884 + $0x5e4] sm:$0xf]
        %v6943 = vld [vmem:[%s884 + $0x5e8] sm:$0xff]
        %v6944 = vld [vmem:[%s884 + $0x5f0] sm:$0xf]
        %v6945 = vld [vmem:[%s884 + $0x5f4] sm:$0xff]
        %v6946 = vld [vmem:[%s884 + $0x5fc] sm:$0xf]
        %v6947 = vld [vmem:[%s884 + $0x600] sm:$0xff]
        %v6948 = vld [vmem:[%s884 + $0x608] sm:$0xf]
        %v6949 = vld [vmem:[%s884 + $0x60c] sm:$0xff]
        %v6950 = vld [vmem:[%s884 + $0x614] sm:$0xf]
        %v6951 = vld [vmem:[%s884 + $0x618] sm:$0xff]
        %v6952 = vld [vmem:[%s884 + $0x620] sm:$0xf]
        %v6953 = vld [vmem:[%s884 + $0x624] sm:$0xff]
        %v6954 = vld [vmem:[%s884 + $0x62c] sm:$0xf]
        %v6955 = vld [vmem:[%s884 + $0x630] sm:$0xff]
        %v6956 = vld [vmem:[%s884 + $0x638] sm:$0xf]
        %v6957 = vld [vmem:[%s884 + $0x63c] sm:$0xff]
        %v6958 = vld [vmem:[%s884 + $0x644] sm:$0xf]
        %v6959 = vld [vmem:[%s884 + $0x648] sm:$0xff]
        %v6960 = vld [vmem:[%s884 + $0x650] sm:$0xf]
        %v6961 = vld [vmem:[%s884 + $0x654] sm:$0xff]
        %v6962 = vld [vmem:[%s884 + $0x65c] sm:$0xf]
        %v6963 = vld [vmem:[%s884 + $0x660] sm:$0xff]
        %v6964 = vld [vmem:[%s884 + $0x668] sm:$0xf]
        %v6965 = vld [vmem:[%s884 + $0x66c] sm:$0xff]
        %v6966 = vld [vmem:[%s884 + $0x674] sm:$0xf]
        %v6967 = vld [vmem:[%s884 + $0x678] sm:$0xff]
        %v6968 = vld [vmem:[%s884 + $0x680] sm:$0xf]
        %v6969 = vld [vmem:[%s884 + $0x684] sm:$0xff]
        %v6970 = vld [vmem:[%s884 + $0x68c] sm:$0xf]
        %v6971 = vld [vmem:[%s884 + $0x690] sm:$0xff]
        %v6972 = vld [vmem:[%s884 + $0x698] sm:$0xf]
        %v6973 = vld [vmem:[%s884 + $0x69c] sm:$0xff]
        %v6974 = vld [vmem:[%s884 + $0x6a4] sm:$0xf]
        %v6975 = vld [vmem:[%s884 + $0x6a8] sm:$0xff]
        %v6976 = vld [vmem:[%s884 + $0x6b0] sm:$0xf]
        %v6977 = vld [vmem:[%s884 + $0x6b4] sm:$0xff]
        %v6978 = vld [vmem:[%s884 + $0x6bc] sm:$0xf]
        %v6979 = vld [vmem:[%s884 + $0x6c0] sm:$0xff]
        %v6980 = vld [vmem:[%s884 + $0x6c8] sm:$0xf]
        %v6981 = vld [vmem:[%s884 + $0x6cc] sm:$0xff]
        %v6982 = vld [vmem:[%s884 + $0x6d4] sm:$0xf]
        %v6983 = vld [vmem:[%s884 + $0x6d8] sm:$0xff]
        %v6984 = vld [vmem:[%s884 + $0x6e0] sm:$0xf]
        %v6985 = vld [vmem:[%s884 + $0x6e4] sm:$0xff]
        %v6986 = vld [vmem:[%s884 + $0x6ec] sm:$0xf]
        %v6987 = vld [vmem:[%s884 + $0x6f0] sm:$0xff]
        %v6988 = vld [vmem:[%s884 + $0x6f8] sm:$0xf]
        %v6989 = vld [vmem:[%s884 + $0x6fc] sm:$0xff]
        %v6990 = vld [vmem:[%s884 + $0x704] sm:$0xf]
        %v6991 = vld [vmem:[%s884 + $0x708] sm:$0xff]
        %v6992 = vld [vmem:[%s884 + $0x710] sm:$0xf]
        %v6993 = vld [vmem:[%s884 + $0x714] sm:$0xff]
        %v6994 = vld [vmem:[%s884 + $0x71c] sm:$0xf]
        %v6995 = vld [vmem:[%s884 + $0x720] sm:$0xff]
        %v6996 = vld [vmem:[%s884 + $0x728] sm:$0xf]
        %v6997 = vld [vmem:[%s884 + $0x72c] sm:$0xff]
        %v6998 = vld [vmem:[%s884 + $0x734] sm:$0xf]
        %v6999 = vld [vmem:[%s884 + $0x738] sm:$0xff]
        %v7000 = vld [vmem:[%s884 + $0x740] sm:$0xf]
        %v7001 = vld [vmem:[%s884 + $0x744] sm:$0xff]
        %v7002 = vld [vmem:[%s884 + $0x74c] sm:$0xf]
        %v7003 = vld [vmem:[%s884 + $0x750] sm:$0xff]
        %v7004 = vld [vmem:[%s884 + $0x758] sm:$0xf]
        %v7005 = vld [vmem:[%s884 + $0x75c] sm:$0xff]
        %v7006 = vld [vmem:[%s884 + $0x764] sm:$0xf]
        %v7007 = vld [vmem:[%s884 + $0x768] sm:$0xff]
        %v7008 = vld [vmem:[%s884 + $0x770] sm:$0xf]
        %v7009 = vld [vmem:[%s884 + $0x774] sm:$0xff]
        %v7010 = vld [vmem:[%s884 + $0x77c] sm:$0xf]
        %v7011 = vld [vmem:[%s884 + $0x780] sm:$0xff]
        %v7012 = vld [vmem:[%s884 + $0x788] sm:$0xf]
        %v7013 = vld [vmem:[%s884 + $0x78c] sm:$0xff]
        %v7014 = vld [vmem:[%s884 + $0x794] sm:$0xf]
        %v7015 = vld [vmem:[%s884 + $0x798] sm:$0xff]
        %v7016 = vld [vmem:[%s884 + $0x7a0] sm:$0xf]
        %v7017 = vld [vmem:[%s884 + $0x7a4] sm:$0xff]
        %v7018 = vld [vmem:[%s884 + $0x7ac] sm:$0xf]
        %v7019 = vld [vmem:[%s884 + $0x7b0] sm:$0xff]
        %v7020 = vld [vmem:[%s884 + $0x7b8] sm:$0xf]
        %v7021 = vld [vmem:[%s884 + $0x7bc] sm:$0xff]
        %v7022 = vld [vmem:[%s884 + $0x7c4] sm:$0xf]
        %v7023 = vld [vmem:[%s884 + $0x7c8] sm:$0xff]
        %v7024 = vld [vmem:[%s884 + $0x7d0] sm:$0xf]
        %v7025 = vld [vmem:[%s884 + $0x7d4] sm:$0xff]
        %v7026 = vld [vmem:[%s884 + $0x7dc] sm:$0xf]
        %v7027 = vld [vmem:[%s884 + $0x7e0] sm:$0xff]
        %v7028 = vld [vmem:[%s884 + $0x7e8] sm:$0xf]
        %v7029 = vld [vmem:[%s884 + $0x7ec] sm:$0xff]
        %v7030 = vld [vmem:[%s884 + $0x7f4] sm:$0xf]
        %v7031 = vld [vmem:[%s884 + $0x7f8] sm:$0xff]
        %v7032 = vld [vmem:[%s884 + $0x800] sm:$0xf]
        %v7033 = vld [vmem:[%s884 + $0x804] sm:$0xff]
        %v7034 = vld [vmem:[%s884 + $0x80c] sm:$0xf]
        %v7035 = vld [vmem:[%s884 + $0x810] sm:$0xff]
        %v7036 = vld [vmem:[%s884 + $0x818] sm:$0xf]
        %v7037 = vld [vmem:[%s884 + $0x81c] sm:$0xff]
        %v7038 = vld [vmem:[%s884 + $0x824] sm:$0xf]
        %v7039 = vld [vmem:[%s884 + $0x828] sm:$0xff]
        %v7040 = vld [vmem:[%s884 + $0x830] sm:$0xf]
        %v7041 = vld [vmem:[%s884 + $0x834] sm:$0xff]
        %v7042 = vld [vmem:[%s884 + $0x83c] sm:$0xf]
        %v7043 = vld [vmem:[%s884 + $0x840] sm:$0xff]
        %v7044 = vld [vmem:[%s884 + $0x848] sm:$0xf]
        %v7045 = vld [vmem:[%s884 + $0x84c] sm:$0xff]
        %v7046 = vld [vmem:[%s884 + $0x854] sm:$0xf]
        %v7047 = vld [vmem:[%s884 + $0x858] sm:$0xff]
        %v7048 = vld [vmem:[%s884 + $0x860] sm:$0xf]
        %v7049 = vld [vmem:[%s884 + $0x864] sm:$0xff]
        %v7050 = vld [vmem:[%s884 + $0x86c] sm:$0xf]
        %v7051 = vld [vmem:[%s884 + $0x870] sm:$0xff]
        %v7052 = vld [vmem:[%s884 + $0x878] sm:$0xf]
        %v7053 = vld [vmem:[%s884 + $0x87c] sm:$0xff]
        %v7054 = vld [vmem:[%s884 + $0x884] sm:$0xf]
        %v7055 = vld [vmem:[%s884 + $0x888] sm:$0xff]
        %v7056 = vld [vmem:[%s884 + $0x890] sm:$0xf]
        %v7057 = vld [vmem:[%s884 + $0x894] sm:$0xff]
        %v7058 = vld [vmem:[%s884 + $0x89c] sm:$0xf]
        %v7059 = vld [vmem:[%s884 + $0x8a0] sm:$0xff]
        %v7060 = vld [vmem:[%s884 + $0x8a8] sm:$0xf]
        %v7061 = vld [vmem:[%s884 + $0x8ac] sm:$0xff]
        %v7062 = vld [vmem:[%s884 + $0x8b4] sm:$0xf]
        %v7063 = vld [vmem:[%s884 + $0x8b8] sm:$0xff]
        %v7064 = vld [vmem:[%s884 + $0x8c0] sm:$0xf]
        %v7065 = vld [vmem:[%s884 + $0x8c4] sm:$0xff]
        %v7066 = vld [vmem:[%s884 + $0x8cc] sm:$0xf]
        %v7067 = vld [vmem:[%s884 + $0x8d0] sm:$0xff]
        %v7068 = vld [vmem:[%s884 + $0x8d8] sm:$0xf]
        %v7069 = vld [vmem:[%s884 + $0x8dc] sm:$0xff]
        %v7070 = vld [vmem:[%s884 + $0x8e4] sm:$0xf]
        %v7071 = vld [vmem:[%s884 + $0x8e8] sm:$0xff]
        %v7072 = vld [vmem:[%s884 + $0x8f0] sm:$0xf]
        %v7073 = vld [vmem:[%s884 + $0x8f4] sm:$0xff]
        %v7074 = vld [vmem:[%s884 + $0x8fc] sm:$0xf]
        %v7459 = vunpack.c.l.b16 %v6691
        %v7460 = vunpack.c.h.b16 %v6691
        %v7461 = vunpack.c.l.b16 %v6692
        %v7462 = vunpack.c.l.b16 %v6693
        %v7463 = vunpack.c.h.b16 %v6693
        %v7464 = vunpack.c.l.b16 %v6694
        %v7465 = vunpack.c.l.b16 %v6695
        %v7466 = vunpack.c.h.b16 %v6695
        %v7467 = vunpack.c.l.b16 %v6696
        %v7468 = vunpack.c.l.b16 %v6697
        %v7469 = vunpack.c.h.b16 %v6697
        %v7470 = vunpack.c.l.b16 %v6698
        %v7471 = vunpack.c.l.b16 %v6699
        %v7472 = vunpack.c.h.b16 %v6699
        %v7473 = vunpack.c.l.b16 %v6700
        %v7474 = vunpack.c.l.b16 %v6701
        %v7475 = vunpack.c.h.b16 %v6701
        %v7476 = vunpack.c.l.b16 %v6702
        %v7477 = vunpack.c.l.b16 %v6703
        %v7478 = vunpack.c.h.b16 %v6703
        %v7479 = vunpack.c.l.b16 %v6704
        %v7480 = vunpack.c.l.b16 %v6705
        %v7481 = vunpack.c.h.b16 %v6705
        %v7482 = vunpack.c.l.b16 %v6706
        %v7483 = vunpack.c.l.b16 %v6707
        %v7484 = vunpack.c.h.b16 %v6707
        %v7485 = vunpack.c.l.b16 %v6708
        %v7486 = vunpack.c.l.b16 %v6709
        %v7487 = vunpack.c.h.b16 %v6709
        %v7488 = vunpack.c.l.b16 %v6710
        %v7489 = vunpack.c.l.b16 %v6711
        %v7490 = vunpack.c.h.b16 %v6711
        %v7491 = vunpack.c.l.b16 %v6712
        %v7492 = vunpack.c.l.b16 %v6713
        %v7493 = vunpack.c.h.b16 %v6713
        %v7494 = vunpack.c.l.b16 %v6714
        %v7495 = vunpack.c.l.b16 %v6715
        %v7496 = vunpack.c.h.b16 %v6715
        %v7497 = vunpack.c.l.b16 %v6716
        %v7498 = vunpack.c.l.b16 %v6717
        %v7499 = vunpack.c.h.b16 %v6717
        %v7500 = vunpack.c.l.b16 %v6718
        %v7501 = vunpack.c.l.b16 %v6719
        %v7502 = vunpack.c.h.b16 %v6719
        %v7503 = vunpack.c.l.b16 %v6720
        %v7504 = vunpack.c.l.b16 %v6721
        %v7505 = vunpack.c.h.b16 %v6721
        %v7506 = vunpack.c.l.b16 %v6722
        %v7507 = vunpack.c.l.b16 %v6723
        %v7508 = vunpack.c.h.b16 %v6723
        %v7509 = vunpack.c.l.b16 %v6724
        %v7510 = vunpack.c.l.b16 %v6725
        %v7511 = vunpack.c.h.b16 %v6725
        %v7512 = vunpack.c.l.b16 %v6726
        %v7513 = vunpack.c.l.b16 %v6727
        %v7514 = vunpack.c.h.b16 %v6727
        %v7515 = vunpack.c.l.b16 %v6728
        %v7516 = vunpack.c.l.b16 %v6729
        %v7517 = vunpack.c.h.b16 %v6729
        %v7518 = vunpack.c.l.b16 %v6730
        %v7519 = vunpack.c.l.b16 %v6731
        %v7520 = vunpack.c.h.b16 %v6731
        %v7521 = vunpack.c.l.b16 %v6732
        %v7522 = vunpack.c.l.b16 %v6733
        %v7523 = vunpack.c.h.b16 %v6733
        %v7524 = vunpack.c.l.b16 %v6734
        %v7525 = vunpack.c.l.b16 %v6735
        %v7526 = vunpack.c.h.b16 %v6735
        %v7527 = vunpack.c.l.b16 %v6736
        %v7528 = vunpack.c.l.b16 %v6737
        %v7529 = vunpack.c.h.b16 %v6737
        %v7530 = vunpack.c.l.b16 %v6738
        %v7531 = vunpack.c.l.b16 %v6739
        %v7532 = vunpack.c.h.b16 %v6739
        %v7533 = vunpack.c.l.b16 %v6740
        %v7534 = vunpack.c.l.b16 %v6741
        %v7535 = vunpack.c.h.b16 %v6741
        %v7536 = vunpack.c.l.b16 %v6742
        %v7537 = vunpack.c.l.b16 %v6743
        %v7538 = vunpack.c.h.b16 %v6743
        %v7539 = vunpack.c.l.b16 %v6744
        %v7540 = vunpack.c.l.b16 %v6745
        %v7541 = vunpack.c.h.b16 %v6745
        %v7542 = vunpack.c.l.b16 %v6746
        %v7543 = vunpack.c.l.b16 %v6747
        %v7544 = vunpack.c.h.b16 %v6747
        %v7545 = vunpack.c.l.b16 %v6748
        %v7546 = vunpack.c.l.b16 %v6749
        %v7547 = vunpack.c.h.b16 %v6749
        %v7548 = vunpack.c.l.b16 %v6750
        %v7549 = vunpack.c.l.b16 %v6751
        %v7550 = vunpack.c.h.b16 %v6751
        %v7551 = vunpack.c.l.b16 %v6752
        %v7552 = vunpack.c.l.b16 %v6753
        %v7553 = vunpack.c.h.b16 %v6753
        %v7554 = vunpack.c.l.b16 %v6754
        %v7555 = vunpack.c.l.b16 %v6755
        %v7556 = vunpack.c.h.b16 %v6755
        %v7557 = vunpack.c.l.b16 %v6756
        %v7558 = vunpack.c.l.b16 %v6757
        %v7559 = vunpack.c.h.b16 %v6757
        %v7560 = vunpack.c.l.b16 %v6758
        %v7561 = vunpack.c.l.b16 %v6759
        %v7562 = vunpack.c.h.b16 %v6759
        %v7563 = vunpack.c.l.b16 %v6760
        %v7564 = vunpack.c.l.b16 %v6761
        %v7565 = vunpack.c.h.b16 %v6761
        %v7566 = vunpack.c.l.b16 %v6762
        %v7567 = vunpack.c.l.b16 %v6763
        %v7568 = vunpack.c.h.b16 %v6763
        %v7569 = vunpack.c.l.b16 %v6764
        %v7570 = vunpack.c.l.b16 %v6765
        %v7571 = vunpack.c.h.b16 %v6765
        %v7572 = vunpack.c.l.b16 %v6766
        %v7573 = vunpack.c.l.b16 %v6767
        %v7574 = vunpack.c.h.b16 %v6767
        %v7575 = vunpack.c.l.b16 %v6768
        %v7576 = vunpack.c.l.b16 %v6769
        %v7577 = vunpack.c.h.b16 %v6769
        %v7578 = vunpack.c.l.b16 %v6770
        %v7579 = vunpack.c.l.b16 %v6771
        %v7580 = vunpack.c.h.b16 %v6771
        %v7581 = vunpack.c.l.b16 %v6772
        %v7582 = vunpack.c.l.b16 %v6773
        %v7583 = vunpack.c.h.b16 %v6773
        %v7584 = vunpack.c.l.b16 %v6774
        %v7585 = vunpack.c.l.b16 %v6775
        %v7586 = vunpack.c.h.b16 %v6775
        %v7587 = vunpack.c.l.b16 %v6776
        %v7588 = vunpack.c.l.b16 %v6777
        %v7589 = vunpack.c.h.b16 %v6777
        %v7590 = vunpack.c.l.b16 %v6778
        %v7591 = vunpack.c.l.b16 %v6779
        %v7592 = vunpack.c.h.b16 %v6779
        %v7593 = vunpack.c.l.b16 %v6780
        %v7594 = vunpack.c.l.b16 %v6781
        %v7595 = vunpack.c.h.b16 %v6781
        %v7596 = vunpack.c.l.b16 %v6782
        %v7597 = vunpack.c.l.b16 %v6783
        %v7598 = vunpack.c.h.b16 %v6783
        %v7599 = vunpack.c.l.b16 %v6784
        %v7600 = vunpack.c.l.b16 %v6785
        %v7601 = vunpack.c.h.b16 %v6785
        %v7602 = vunpack.c.l.b16 %v6786
        %v7603 = vunpack.c.l.b16 %v6787
        %v7604 = vunpack.c.h.b16 %v6787
        %v7605 = vunpack.c.l.b16 %v6788
        %v7606 = vunpack.c.l.b16 %v6789
        %v7607 = vunpack.c.h.b16 %v6789
        %v7608 = vunpack.c.l.b16 %v6790
        %v7609 = vunpack.c.l.b16 %v6791
        %v7610 = vunpack.c.h.b16 %v6791
        %v7611 = vunpack.c.l.b16 %v6792
        %v7612 = vunpack.c.l.b16 %v6793
        %v7613 = vunpack.c.h.b16 %v6793
        %v7614 = vunpack.c.l.b16 %v6794
        %v7615 = vunpack.c.l.b16 %v6795
        %v7616 = vunpack.c.h.b16 %v6795
        %v7617 = vunpack.c.l.b16 %v6796
        %v7618 = vunpack.c.l.b16 %v6797
        %v7619 = vunpack.c.h.b16 %v6797
        %v7620 = vunpack.c.l.b16 %v6798
        %v7621 = vunpack.c.l.b16 %v6799
        %v7622 = vunpack.c.h.b16 %v6799
        %v7623 = vunpack.c.l.b16 %v6800
        %v7624 = vunpack.c.l.b16 %v6801
        %v7625 = vunpack.c.h.b16 %v6801
        %v7626 = vunpack.c.l.b16 %v6802
        %v7627 = vunpack.c.l.b16 %v6803
        %v7628 = vunpack.c.h.b16 %v6803
        %v7629 = vunpack.c.l.b16 %v6804
        %v7630 = vunpack.c.l.b16 %v6805
        %v7631 = vunpack.c.h.b16 %v6805
        %v7632 = vunpack.c.l.b16 %v6806
        %v7633 = vunpack.c.l.b16 %v6807
        %v7634 = vunpack.c.h.b16 %v6807
        %v7635 = vunpack.c.l.b16 %v6808
        %v7636 = vunpack.c.l.b16 %v6809
        %v7637 = vunpack.c.h.b16 %v6809
        %v7638 = vunpack.c.l.b16 %v6810
        %v7639 = vunpack.c.l.b16 %v6811
        %v7640 = vunpack.c.h.b16 %v6811
        %v7641 = vunpack.c.l.b16 %v6812
        %v7642 = vunpack.c.l.b16 %v6813
        %v7643 = vunpack.c.h.b16 %v6813
        %v7644 = vunpack.c.l.b16 %v6814
        %v7645 = vunpack.c.l.b16 %v6815
        %v7646 = vunpack.c.h.b16 %v6815
        %v7647 = vunpack.c.l.b16 %v6816
        %v7648 = vunpack.c.l.b16 %v6817
        %v7649 = vunpack.c.h.b16 %v6817
        %v7650 = vunpack.c.l.b16 %v6818
        %v7651 = vunpack.c.l.b16 %v6819
        %v7652 = vunpack.c.h.b16 %v6819
        %v7653 = vunpack.c.l.b16 %v6820
        %v7654 = vunpack.c.l.b16 %v6821
        %v7655 = vunpack.c.h.b16 %v6821
        %v7656 = vunpack.c.l.b16 %v6822
        %v7657 = vunpack.c.l.b16 %v6823
        %v7658 = vunpack.c.h.b16 %v6823
        %v7659 = vunpack.c.l.b16 %v6824
        %v7660 = vunpack.c.l.b16 %v6825
        %v7661 = vunpack.c.h.b16 %v6825
        %v7662 = vunpack.c.l.b16 %v6826
        %v7663 = vunpack.c.l.b16 %v6827
        %v7664 = vunpack.c.h.b16 %v6827
        %v7665 = vunpack.c.l.b16 %v6828
        %v7666 = vunpack.c.l.b16 %v6829
        %v7667 = vunpack.c.h.b16 %v6829
        %v7668 = vunpack.c.l.b16 %v6830
        %v7669 = vunpack.c.l.b16 %v6831
        %v7670 = vunpack.c.h.b16 %v6831
        %v7671 = vunpack.c.l.b16 %v6832
        %v7672 = vunpack.c.l.b16 %v6833
        %v7673 = vunpack.c.h.b16 %v6833
        %v7674 = vunpack.c.l.b16 %v6834
        %v7675 = vunpack.c.l.b16 %v6835
        %v7676 = vunpack.c.h.b16 %v6835
        %v7677 = vunpack.c.l.b16 %v6836
        %v7678 = vunpack.c.l.b16 %v6837
        %v7679 = vunpack.c.h.b16 %v6837
        %v7680 = vunpack.c.l.b16 %v6838
        %v7681 = vunpack.c.l.b16 %v6839
        %v7682 = vunpack.c.h.b16 %v6839
        %v7683 = vunpack.c.l.b16 %v6840
        %v7684 = vunpack.c.l.b16 %v6841
        %v7685 = vunpack.c.h.b16 %v6841
        %v7686 = vunpack.c.l.b16 %v6842
        %v7687 = vunpack.c.l.b16 %v6843
        %v7688 = vunpack.c.h.b16 %v6843
        %v7689 = vunpack.c.l.b16 %v6844
        %v7690 = vunpack.c.l.b16 %v6845
        %v7691 = vunpack.c.h.b16 %v6845
        %v7692 = vunpack.c.l.b16 %v6846
        %v7693 = vunpack.c.l.b16 %v6847
        %v7694 = vunpack.c.h.b16 %v6847
        %v7695 = vunpack.c.l.b16 %v6848
        %v7696 = vunpack.c.l.b16 %v6849
        %v7697 = vunpack.c.h.b16 %v6849
        %v7698 = vunpack.c.l.b16 %v6850
        %v7699 = vunpack.c.l.b16 %v6851
        %v7700 = vunpack.c.h.b16 %v6851
        %v7701 = vunpack.c.l.b16 %v6852
        %v7702 = vunpack.c.l.b16 %v6853
        %v7703 = vunpack.c.h.b16 %v6853
        %v7704 = vunpack.c.l.b16 %v6854
        %v7705 = vunpack.c.l.b16 %v6855
        %v7706 = vunpack.c.h.b16 %v6855
        %v7707 = vunpack.c.l.b16 %v6856
        %v7708 = vunpack.c.l.b16 %v6857
        %v7709 = vunpack.c.h.b16 %v6857
        %v7710 = vunpack.c.l.b16 %v6858
        %v7711 = vunpack.c.l.b16 %v6859
        %v7712 = vunpack.c.h.b16 %v6859
        %v7713 = vunpack.c.l.b16 %v6860
        %v7714 = vunpack.c.l.b16 %v6861
        %v7715 = vunpack.c.h.b16 %v6861
        %v7716 = vunpack.c.l.b16 %v6862
        %v7717 = vunpack.c.l.b16 %v6863
        %v7718 = vunpack.c.h.b16 %v6863
        %v7719 = vunpack.c.l.b16 %v6864
        %v7720 = vunpack.c.l.b16 %v6865
        %v7721 = vunpack.c.h.b16 %v6865
        %v7722 = vunpack.c.l.b16 %v6866
        %v7723 = vunpack.c.l.b16 %v6867
        %v7724 = vunpack.c.h.b16 %v6867
        %v7725 = vunpack.c.l.b16 %v6868
        %v7726 = vunpack.c.l.b16 %v6869
        %v7727 = vunpack.c.h.b16 %v6869
        %v7728 = vunpack.c.l.b16 %v6870
        %v7729 = vunpack.c.l.b16 %v6871
        %v7730 = vunpack.c.h.b16 %v6871
        %v7731 = vunpack.c.l.b16 %v6872
        %v7732 = vunpack.c.l.b16 %v6873
        %v7733 = vunpack.c.h.b16 %v6873
        %v7734 = vunpack.c.l.b16 %v6874
        %v7735 = vunpack.c.l.b16 %v6875
        %v7736 = vunpack.c.h.b16 %v6875
        %v7737 = vunpack.c.l.b16 %v6876
        %v7738 = vunpack.c.l.b16 %v6877
        %v7739 = vunpack.c.h.b16 %v6877
        %v7740 = vunpack.c.l.b16 %v6878
        %v7741 = vunpack.c.l.b16 %v6879
        %v7742 = vunpack.c.h.b16 %v6879
        %v7743 = vunpack.c.l.b16 %v6880
        %v7744 = vunpack.c.l.b16 %v6881
        %v7745 = vunpack.c.h.b16 %v6881
        %v7746 = vunpack.c.l.b16 %v6882
        %v7747 = vunpack.c.l.b16 %v6883
        %v7748 = vunpack.c.h.b16 %v6883
        %v7749 = vunpack.c.l.b16 %v6884
        %v7750 = vunpack.c.l.b16 %v6885
        %v7751 = vunpack.c.h.b16 %v6885
        %v7752 = vunpack.c.l.b16 %v6886
        %v7753 = vunpack.c.l.b16 %v6887
        %v7754 = vunpack.c.h.b16 %v6887
        %v7755 = vunpack.c.l.b16 %v6888
        %v7756 = vunpack.c.l.b16 %v6889
        %v7757 = vunpack.c.h.b16 %v6889
        %v7758 = vunpack.c.l.b16 %v6890
        %v7759 = vunpack.c.l.b16 %v6891
        %v7760 = vunpack.c.h.b16 %v6891
        %v7761 = vunpack.c.l.b16 %v6892
        %v7762 = vunpack.c.l.b16 %v6893
        %v7763 = vunpack.c.h.b16 %v6893
        %v7764 = vunpack.c.l.b16 %v6894
        %v7765 = vunpack.c.l.b16 %v6895
        %v7766 = vunpack.c.h.b16 %v6895
        %v7767 = vunpack.c.l.b16 %v6896
        %v7768 = vunpack.c.l.b16 %v6897
        %v7769 = vunpack.c.h.b16 %v6897
        %v7770 = vunpack.c.l.b16 %v6898
        %v7771 = vunpack.c.l.b16 %v6899
        %v7772 = vunpack.c.h.b16 %v6899
        %v7773 = vunpack.c.l.b16 %v6900
        %v7774 = vunpack.c.l.b16 %v6901
        %v7775 = vunpack.c.h.b16 %v6901
        %v7776 = vunpack.c.l.b16 %v6902
        %v7777 = vunpack.c.l.b16 %v6903
        %v7778 = vunpack.c.h.b16 %v6903
        %v7779 = vunpack.c.l.b16 %v6904
        %v7780 = vunpack.c.l.b16 %v6905
        %v7781 = vunpack.c.h.b16 %v6905
        %v7782 = vunpack.c.l.b16 %v6906
        %v7783 = vunpack.c.l.b16 %v6907
        %v7784 = vunpack.c.h.b16 %v6907
        %v7785 = vunpack.c.l.b16 %v6908
        %v7786 = vunpack.c.l.b16 %v6909
        %v7787 = vunpack.c.h.b16 %v6909
        %v7788 = vunpack.c.l.b16 %v6910
        %v7789 = vunpack.c.l.b16 %v6911
        %v7790 = vunpack.c.h.b16 %v6911
        %v7791 = vunpack.c.l.b16 %v6912
        %v7792 = vunpack.c.l.b16 %v6913
        %v7793 = vunpack.c.h.b16 %v6913
        %v7794 = vunpack.c.l.b16 %v6914
        %v7795 = vunpack.c.l.b16 %v6915
        %v7796 = vunpack.c.h.b16 %v6915
        %v7797 = vunpack.c.l.b16 %v6916
        %v7798 = vunpack.c.l.b16 %v6917
        %v7799 = vunpack.c.h.b16 %v6917
        %v7800 = vunpack.c.l.b16 %v6918
        %v7801 = vunpack.c.l.b16 %v6919
        %v7802 = vunpack.c.h.b16 %v6919
        %v7803 = vunpack.c.l.b16 %v6920
        %v7804 = vunpack.c.l.b16 %v6921
        %v7805 = vunpack.c.h.b16 %v6921
        %v7806 = vunpack.c.l.b16 %v6922
        %v7807 = vunpack.c.l.b16 %v6923
        %v7808 = vunpack.c.h.b16 %v6923
        %v7809 = vunpack.c.l.b16 %v6924
        %v7810 = vunpack.c.l.b16 %v6925
        %v7811 = vunpack.c.h.b16 %v6925
        %v7812 = vunpack.c.l.b16 %v6926
        %v7813 = vunpack.c.l.b16 %v6927
        %v7814 = vunpack.c.h.b16 %v6927
        %v7815 = vunpack.c.l.b16 %v6928
        %v7816 = vunpack.c.l.b16 %v6929
        %v7817 = vunpack.c.h.b16 %v6929
        %v7818 = vunpack.c.l.b16 %v6930
        %v7819 = vunpack.c.l.b16 %v6931
        %v7820 = vunpack.c.h.b16 %v6931
        %v7821 = vunpack.c.l.b16 %v6932
        %v7822 = vunpack.c.l.b16 %v6933
        %v7823 = vunpack.c.h.b16 %v6933
        %v7824 = vunpack.c.l.b16 %v6934
        %v7825 = vunpack.c.l.b16 %v6935
        %v7826 = vunpack.c.h.b16 %v6935
        %v7827 = vunpack.c.l.b16 %v6936
        %v7828 = vunpack.c.l.b16 %v6937
        %v7829 = vunpack.c.h.b16 %v6937
        %v7830 = vunpack.c.l.b16 %v6938
        %v7831 = vunpack.c.l.b16 %v6939
        %v7832 = vunpack.c.h.b16 %v6939
        %v7833 = vunpack.c.l.b16 %v6940
        %v7834 = vunpack.c.l.b16 %v6941
        %v7835 = vunpack.c.h.b16 %v6941
        %v7836 = vunpack.c.l.b16 %v6942
        %v7837 = vunpack.c.l.b16 %v6943
        %v7838 = vunpack.c.h.b16 %v6943
        %v7839 = vunpack.c.l.b16 %v6944
        %v7840 = vunpack.c.l.b16 %v6945
        %v7841 = vunpack.c.h.b16 %v6945
        %v7842 = vunpack.c.l.b16 %v6946
        %v7843 = vunpack.c.l.b16 %v6947
        %v7844 = vunpack.c.h.b16 %v6947
        %v7845 = vunpack.c.l.b16 %v6948
        %v7846 = vunpack.c.l.b16 %v6949
        %v7847 = vunpack.c.h.b16 %v6949
        %v7848 = vunpack.c.l.b16 %v6950
        %v7849 = vunpack.c.l.b16 %v6951
        %v7850 = vunpack.c.h.b16 %v6951
        %v7851 = vunpack.c.l.b16 %v6952
        %v7852 = vunpack.c.l.b16 %v6953
        %v7853 = vunpack.c.h.b16 %v6953
        %v7854 = vunpack.c.l.b16 %v6954
        %v7855 = vunpack.c.l.b16 %v6955
        %v7856 = vunpack.c.h.b16 %v6955
        %v7857 = vunpack.c.l.b16 %v6956
        %v7858 = vunpack.c.l.b16 %v6957
        %v7859 = vunpack.c.h.b16 %v6957
        %v7860 = vunpack.c.l.b16 %v6958
        %v7861 = vunpack.c.l.b16 %v6959
        %v7862 = vunpack.c.h.b16 %v6959
        %v7863 = vunpack.c.l.b16 %v6960
        %v7864 = vunpack.c.l.b16 %v6961
        %v7865 = vunpack.c.h.b16 %v6961
        %v7866 = vunpack.c.l.b16 %v6962
        %v7867 = vunpack.c.l.b16 %v6963
        %v7868 = vunpack.c.h.b16 %v6963
        %v7869 = vunpack.c.l.b16 %v6964
        %v7870 = vunpack.c.l.b16 %v6965
        %v7871 = vunpack.c.h.b16 %v6965
        %v7872 = vunpack.c.l.b16 %v6966
        %v7873 = vunpack.c.l.b16 %v6967
        %v7874 = vunpack.c.h.b16 %v6967
        %v7875 = vunpack.c.l.b16 %v6968
        %v7876 = vunpack.c.l.b16 %v6969
        %v7877 = vunpack.c.h.b16 %v6969
        %v7878 = vunpack.c.l.b16 %v6970
        %v7879 = vunpack.c.l.b16 %v6971
        %v7880 = vunpack.c.h.b16 %v6971
        %v7881 = vunpack.c.l.b16 %v6972
        %v7882 = vunpack.c.l.b16 %v6973
        %v7883 = vunpack.c.h.b16 %v6973
        %v7884 = vunpack.c.l.b16 %v6974
        %v7885 = vunpack.c.l.b16 %v6975
        %v7886 = vunpack.c.h.b16 %v6975
        %v7887 = vunpack.c.l.b16 %v6976
        %v7888 = vunpack.c.l.b16 %v6977
        %v7889 = vunpack.c.h.b16 %v6977
        %v7890 = vunpack.c.l.b16 %v6978
        %v7891 = vunpack.c.l.b16 %v6979
        %v7892 = vunpack.c.h.b16 %v6979
        %v7893 = vunpack.c.l.b16 %v6980
        %v7894 = vunpack.c.l.b16 %v6981
        %v7895 = vunpack.c.h.b16 %v6981
        %v7896 = vunpack.c.l.b16 %v6982
        %v7897 = vunpack.c.l.b16 %v6983
        %v7898 = vunpack.c.h.b16 %v6983
        %v7899 = vunpack.c.l.b16 %v6984
        %v7900 = vunpack.c.l.b16 %v6985
        %v7901 = vunpack.c.h.b16 %v6985
        %v7902 = vunpack.c.l.b16 %v6986
        %v7903 = vunpack.c.l.b16 %v6987
        %v7904 = vunpack.c.h.b16 %v6987
        %v7905 = vunpack.c.l.b16 %v6988
        %v7906 = vunpack.c.l.b16 %v6989
        %v7907 = vunpack.c.h.b16 %v6989
        %v7908 = vunpack.c.l.b16 %v6990
        %v7909 = vunpack.c.l.b16 %v6991
        %v7910 = vunpack.c.h.b16 %v6991
        %v7911 = vunpack.c.l.b16 %v6992
        %v7912 = vunpack.c.l.b16 %v6993
        %v7913 = vunpack.c.h.b16 %v6993
        %v7914 = vunpack.c.l.b16 %v6994
        %v7915 = vunpack.c.l.b16 %v6995
        %v7916 = vunpack.c.h.b16 %v6995
        %v7917 = vunpack.c.l.b16 %v6996
        %v7918 = vunpack.c.l.b16 %v6997
        %v7919 = vunpack.c.h.b16 %v6997
        %v7920 = vunpack.c.l.b16 %v6998
        %v7921 = vunpack.c.l.b16 %v6999
        %v7922 = vunpack.c.h.b16 %v6999
        %v7923 = vunpack.c.l.b16 %v7000
        %v7924 = vunpack.c.l.b16 %v7001
        %v7925 = vunpack.c.h.b16 %v7001
        %v7926 = vunpack.c.l.b16 %v7002
        %v7927 = vunpack.c.l.b16 %v7003
        %v7928 = vunpack.c.h.b16 %v7003
        %v7929 = vunpack.c.l.b16 %v7004
        %v7930 = vunpack.c.l.b16 %v7005
        %v7931 = vunpack.c.h.b16 %v7005
        %v7932 = vunpack.c.l.b16 %v7006
        %v7933 = vunpack.c.l.b16 %v7007
        %v7934 = vunpack.c.h.b16 %v7007
        %v7935 = vunpack.c.l.b16 %v7008
        %v7936 = vunpack.c.l.b16 %v7009
        %v7937 = vunpack.c.h.b16 %v7009
        %v7938 = vunpack.c.l.b16 %v7010
        %v7939 = vunpack.c.l.b16 %v7011
        %v7940 = vunpack.c.h.b16 %v7011
        %v7941 = vunpack.c.l.b16 %v7012
        %v7942 = vunpack.c.l.b16 %v7013
        %v7943 = vunpack.c.h.b16 %v7013
        %v7944 = vunpack.c.l.b16 %v7014
        %v7945 = vunpack.c.l.b16 %v7015
        %v7946 = vunpack.c.h.b16 %v7015
        %v7947 = vunpack.c.l.b16 %v7016
        %v7948 = vunpack.c.l.b16 %v7017
        %v7949 = vunpack.c.h.b16 %v7017
        %v7950 = vunpack.c.l.b16 %v7018
        %v7951 = vunpack.c.l.b16 %v7019
        %v7952 = vunpack.c.h.b16 %v7019
        %v7953 = vunpack.c.l.b16 %v7020
        %v7954 = vunpack.c.l.b16 %v7021
        %v7955 = vunpack.c.h.b16 %v7021
        %v7956 = vunpack.c.l.b16 %v7022
        %v7957 = vunpack.c.l.b16 %v7023
        %v7958 = vunpack.c.h.b16 %v7023
        %v7959 = vunpack.c.l.b16 %v7024
        %v7960 = vunpack.c.l.b16 %v7025
        %v7961 = vunpack.c.h.b16 %v7025
        %v7962 = vunpack.c.l.b16 %v7026
        %v7963 = vunpack.c.l.b16 %v7027
        %v7964 = vunpack.c.h.b16 %v7027
        %v7965 = vunpack.c.l.b16 %v7028
        %v7966 = vunpack.c.l.b16 %v7029
        %v7967 = vunpack.c.h.b16 %v7029
        %v7968 = vunpack.c.l.b16 %v7030
        %v7969 = vunpack.c.l.b16 %v7031
        %v7970 = vunpack.c.h.b16 %v7031
        %v7971 = vunpack.c.l.b16 %v7032
        %v7972 = vunpack.c.l.b16 %v7033
        %v7973 = vunpack.c.h.b16 %v7033
        %v7974 = vunpack.c.l.b16 %v7034
        %v7975 = vunpack.c.l.b16 %v7035
        %v7976 = vunpack.c.h.b16 %v7035
        %v7977 = vunpack.c.l.b16 %v7036
        %v7978 = vunpack.c.l.b16 %v7037
        %v7979 = vunpack.c.h.b16 %v7037
        %v7980 = vunpack.c.l.b16 %v7038
        %v7981 = vunpack.c.l.b16 %v7039
        %v7982 = vunpack.c.h.b16 %v7039
        %v7983 = vunpack.c.l.b16 %v7040
        %v7984 = vunpack.c.l.b16 %v7041
        %v7985 = vunpack.c.h.b16 %v7041
        %v7986 = vunpack.c.l.b16 %v7042
        %v7987 = vunpack.c.l.b16 %v7043
        %v7988 = vunpack.c.h.b16 %v7043
        %v7989 = vunpack.c.l.b16 %v7044
        %v7990 = vunpack.c.l.b16 %v7045
        %v7991 = vunpack.c.h.b16 %v7045
        %v7992 = vunpack.c.l.b16 %v7046
        %v7993 = vunpack.c.l.b16 %v7047
        %v7994 = vunpack.c.h.b16 %v7047
        %v7995 = vunpack.c.l.b16 %v7048
        %v7996 = vunpack.c.l.b16 %v7049
        %v7997 = vunpack.c.h.b16 %v7049
        %v7998 = vunpack.c.l.b16 %v7050
        %v7999 = vunpack.c.l.b16 %v7051
        %v8000 = vunpack.c.h.b16 %v7051
        %v8001 = vunpack.c.l.b16 %v7052
        %v8002 = vunpack.c.l.b16 %v7053
        %v8003 = vunpack.c.h.b16 %v7053
        %v8004 = vunpack.c.l.b16 %v7054
        %v8005 = vunpack.c.l.b16 %v7055
        %v8006 = vunpack.c.h.b16 %v7055
        %v8007 = vunpack.c.l.b16 %v7056
        %v8008 = vunpack.c.l.b16 %v7057
        %v8009 = vunpack.c.h.b16 %v7057
        %v8010 = vunpack.c.l.b16 %v7058
        %v8011 = vunpack.c.l.b16 %v7059
        %v8012 = vunpack.c.h.b16 %v7059
        %v8013 = vunpack.c.l.b16 %v7060
        %v8014 = vunpack.c.l.b16 %v7061
        %v8015 = vunpack.c.h.b16 %v7061
        %v8016 = vunpack.c.l.b16 %v7062
        %v8017 = vunpack.c.l.b16 %v7063
        %v8018 = vunpack.c.h.b16 %v7063
        %v8019 = vunpack.c.l.b16 %v7064
        %v8020 = vunpack.c.l.b16 %v7065
        %v8021 = vunpack.c.h.b16 %v7065
        %v8022 = vunpack.c.l.b16 %v7066
        %v8023 = vunpack.c.l.b16 %v7067
        %v8024 = vunpack.c.h.b16 %v7067
        %v8025 = vunpack.c.l.b16 %v7068
        %v8026 = vunpack.c.l.b16 %v7069
        %v8027 = vunpack.c.h.b16 %v7069
        %v8028 = vunpack.c.l.b16 %v7070
        %v8029 = vunpack.c.l.b16 %v7071
        %v8030 = vunpack.c.h.b16 %v7071
        %v8031 = vunpack.c.l.b16 %v7072
        %v8032 = vunpack.c.l.b16 %v7073
        %v8033 = vunpack.c.h.b16 %v7073
        %v8034 = vunpack.c.l.b16 %v7074
        %v8035 = vpack.c.b16 %v7462, %v7459
        %v8036 = vpack.c.b16 %v7463, %v7460
        %v8037 = vpack.c.b16 %v7464, %v7461
        %v8038 = vpack.c.b16 %v7468, %v7465
        %v8039 = vpack.c.b16 %v7469, %v7466
        %v8040 = vpack.c.b16 %v7470, %v7467
        %v8041 = vpack.c.b16 %v7474, %v7471
        %v8042 = vpack.c.b16 %v7475, %v7472
        %v8043 = vpack.c.b16 %v7476, %v7473
        %v8044 = vpack.c.b16 %v7480, %v7477
        %v8045 = vpack.c.b16 %v7481, %v7478
        %v8046 = vpack.c.b16 %v7482, %v7479
        %v8047 = vpack.c.b16 %v7486, %v7483
        %v8048 = vpack.c.b16 %v7487, %v7484
        %v8049 = vpack.c.b16 %v7488, %v7485
        %v8050 = vpack.c.b16 %v7492, %v7489
        %v8051 = vpack.c.b16 %v7493, %v7490
        %v8052 = vpack.c.b16 %v7494, %v7491
        %v8053 = vpack.c.b16 %v7498, %v7495
        %v8054 = vpack.c.b16 %v7499, %v7496
        %v8055 = vpack.c.b16 %v7500, %v7497
        %v8056 = vpack.c.b16 %v7504, %v7501
        %v8057 = vpack.c.b16 %v7505, %v7502
        %v8058 = vpack.c.b16 %v7506, %v7503
        %v8059 = vpack.c.b16 %v7510, %v7507
        %v8060 = vpack.c.b16 %v7511, %v7508
        %v8061 = vpack.c.b16 %v7512, %v7509
        %v8062 = vpack.c.b16 %v7516, %v7513
        %v8063 = vpack.c.b16 %v7517, %v7514
        %v8064 = vpack.c.b16 %v7518, %v7515
        %v8065 = vpack.c.b16 %v7522, %v7519
        %v8066 = vpack.c.b16 %v7523, %v7520
        %v8067 = vpack.c.b16 %v7524, %v7521
        %v8068 = vpack.c.b16 %v7528, %v7525
        %v8069 = vpack.c.b16 %v7529, %v7526
        %v8070 = vpack.c.b16 %v7530, %v7527
        %v8071 = vpack.c.b16 %v7534, %v7531
        %v8072 = vpack.c.b16 %v7535, %v7532
        %v8073 = vpack.c.b16 %v7536, %v7533
        %v8074 = vpack.c.b16 %v7540, %v7537
        %v8075 = vpack.c.b16 %v7541, %v7538
        %v8076 = vpack.c.b16 %v7542, %v7539
        %v8077 = vpack.c.b16 %v7546, %v7543
        %v8078 = vpack.c.b16 %v7547, %v7544
        %v8079 = vpack.c.b16 %v7548, %v7545
        %v8080 = vpack.c.b16 %v7552, %v7549
        %v8081 = vpack.c.b16 %v7553, %v7550
        %v8082 = vpack.c.b16 %v7554, %v7551
        %v8083 = vpack.c.b16 %v7558, %v7555
        %v8084 = vpack.c.b16 %v7559, %v7556
        %v8085 = vpack.c.b16 %v7560, %v7557
        %v8086 = vpack.c.b16 %v7564, %v7561
        %v8087 = vpack.c.b16 %v7565, %v7562
        %v8088 = vpack.c.b16 %v7566, %v7563
        %v8089 = vpack.c.b16 %v7570, %v7567
        %v8090 = vpack.c.b16 %v7571, %v7568
        %v8091 = vpack.c.b16 %v7572, %v7569
        %v8092 = vpack.c.b16 %v7576, %v7573
        %v8093 = vpack.c.b16 %v7577, %v7574
        %v8094 = vpack.c.b16 %v7578, %v7575
        %v8095 = vpack.c.b16 %v7582, %v7579
        %v8096 = vpack.c.b16 %v7583, %v7580
        %v8097 = vpack.c.b16 %v7584, %v7581
        %v8098 = vpack.c.b16 %v7588, %v7585
        %v8099 = vpack.c.b16 %v7589, %v7586
        %v8100 = vpack.c.b16 %v7590, %v7587
        %v8101 = vpack.c.b16 %v7594, %v7591
        %v8102 = vpack.c.b16 %v7595, %v7592
        %v8103 = vpack.c.b16 %v7596, %v7593
        %v8104 = vpack.c.b16 %v7600, %v7597
        %v8105 = vpack.c.b16 %v7601, %v7598
        %v8106 = vpack.c.b16 %v7602, %v7599
        %v8107 = vpack.c.b16 %v7606, %v7603
        %v8108 = vpack.c.b16 %v7607, %v7604
        %v8109 = vpack.c.b16 %v7608, %v7605
        %v8110 = vpack.c.b16 %v7612, %v7609
        %v8111 = vpack.c.b16 %v7613, %v7610
        %v8112 = vpack.c.b16 %v7614, %v7611
        %v8113 = vpack.c.b16 %v7618, %v7615
        %v8114 = vpack.c.b16 %v7619, %v7616
        %v8115 = vpack.c.b16 %v7620, %v7617
        %v8116 = vpack.c.b16 %v7624, %v7621
        %v8117 = vpack.c.b16 %v7625, %v7622
        %v8118 = vpack.c.b16 %v7626, %v7623
        %v8119 = vpack.c.b16 %v7630, %v7627
        %v8120 = vpack.c.b16 %v7631, %v7628
        %v8121 = vpack.c.b16 %v7632, %v7629
        %v8122 = vpack.c.b16 %v7636, %v7633
        %v8123 = vpack.c.b16 %v7637, %v7634
        %v8124 = vpack.c.b16 %v7638, %v7635
        %v8125 = vpack.c.b16 %v7642, %v7639
        %v8126 = vpack.c.b16 %v7643, %v7640
        %v8127 = vpack.c.b16 %v7644, %v7641
        %v8128 = vpack.c.b16 %v7648, %v7645
        %v8129 = vpack.c.b16 %v7649, %v7646
        %v8130 = vpack.c.b16 %v7650, %v7647
        %v8131 = vpack.c.b16 %v7654, %v7651
        %v8132 = vpack.c.b16 %v7655, %v7652
        %v8133 = vpack.c.b16 %v7656, %v7653
        %v8134 = vpack.c.b16 %v7660, %v7657
        %v8135 = vpack.c.b16 %v7661, %v7658
        %v8136 = vpack.c.b16 %v7662, %v7659
        %v8137 = vpack.c.b16 %v7666, %v7663
        %v8138 = vpack.c.b16 %v7667, %v7664
        %v8139 = vpack.c.b16 %v7668, %v7665
        %v8140 = vpack.c.b16 %v7672, %v7669
        %v8141 = vpack.c.b16 %v7673, %v7670
        %v8142 = vpack.c.b16 %v7674, %v7671
        %v8143 = vpack.c.b16 %v7678, %v7675
        %v8144 = vpack.c.b16 %v7679, %v7676
        %v8145 = vpack.c.b16 %v7680, %v7677
        %v8146 = vpack.c.b16 %v7684, %v7681
        %v8147 = vpack.c.b16 %v7685, %v7682
        %v8148 = vpack.c.b16 %v7686, %v7683
        %v8149 = vpack.c.b16 %v7690, %v7687
        %v8150 = vpack.c.b16 %v7691, %v7688
        %v8151 = vpack.c.b16 %v7692, %v7689
        %v8152 = vpack.c.b16 %v7696, %v7693
        %v8153 = vpack.c.b16 %v7697, %v7694
        %v8154 = vpack.c.b16 %v7698, %v7695
        %v8155 = vpack.c.b16 %v7702, %v7699
        %v8156 = vpack.c.b16 %v7703, %v7700
        %v8157 = vpack.c.b16 %v7704, %v7701
        %v8158 = vpack.c.b16 %v7708, %v7705
        %v8159 = vpack.c.b16 %v7709, %v7706
        %v8160 = vpack.c.b16 %v7710, %v7707
        %v8161 = vpack.c.b16 %v7714, %v7711
        %v8162 = vpack.c.b16 %v7715, %v7712
        %v8163 = vpack.c.b16 %v7716, %v7713
        %v8164 = vpack.c.b16 %v7720, %v7717
        %v8165 = vpack.c.b16 %v7721, %v7718
        %v8166 = vpack.c.b16 %v7722, %v7719
        %v8167 = vpack.c.b16 %v7726, %v7723
        %v8168 = vpack.c.b16 %v7727, %v7724
        %v8169 = vpack.c.b16 %v7728, %v7725
        %v8170 = vpack.c.b16 %v7732, %v7729
        %v8171 = vpack.c.b16 %v7733, %v7730
        %v8172 = vpack.c.b16 %v7734, %v7731
        %v8173 = vpack.c.b16 %v7738, %v7735
        %v8174 = vpack.c.b16 %v7739, %v7736
        %v8175 = vpack.c.b16 %v7740, %v7737
        %v8176 = vpack.c.b16 %v7744, %v7741
        %v8177 = vpack.c.b16 %v7745, %v7742
        %v8178 = vpack.c.b16 %v7746, %v7743
        %v8179 = vpack.c.b16 %v7750, %v7747
        %v8180 = vpack.c.b16 %v7751, %v7748
        %v8181 = vpack.c.b16 %v7752, %v7749
        %v8182 = vpack.c.b16 %v7756, %v7753
        %v8183 = vpack.c.b16 %v7757, %v7754
        %v8184 = vpack.c.b16 %v7758, %v7755
        %v8185 = vpack.c.b16 %v7762, %v7759
        %v8186 = vpack.c.b16 %v7763, %v7760
        %v8187 = vpack.c.b16 %v7764, %v7761
        %v8188 = vpack.c.b16 %v7768, %v7765
        %v8189 = vpack.c.b16 %v7769, %v7766
        %v8190 = vpack.c.b16 %v7770, %v7767
        %v8191 = vpack.c.b16 %v7774, %v7771
        %v8192 = vpack.c.b16 %v7775, %v7772
        %v8193 = vpack.c.b16 %v7776, %v7773
        %v8194 = vpack.c.b16 %v7780, %v7777
        %v8195 = vpack.c.b16 %v7781, %v7778
        %v8196 = vpack.c.b16 %v7782, %v7779
        %v8197 = vpack.c.b16 %v7786, %v7783
        %v8198 = vpack.c.b16 %v7787, %v7784
        %v8199 = vpack.c.b16 %v7788, %v7785
        %v8200 = vpack.c.b16 %v7792, %v7789
        %v8201 = vpack.c.b16 %v7793, %v7790
        %v8202 = vpack.c.b16 %v7794, %v7791
        %v8203 = vpack.c.b16 %v7798, %v7795
        %v8204 = vpack.c.b16 %v7799, %v7796
        %v8205 = vpack.c.b16 %v7800, %v7797
        %v8206 = vpack.c.b16 %v7804, %v7801
        %v8207 = vpack.c.b16 %v7805, %v7802
        %v8208 = vpack.c.b16 %v7806, %v7803
        %v8209 = vpack.c.b16 %v7810, %v7807
        %v8210 = vpack.c.b16 %v7811, %v7808
        %v8211 = vpack.c.b16 %v7812, %v7809
        %v8212 = vpack.c.b16 %v7816, %v7813
        %v8213 = vpack.c.b16 %v7817, %v7814
        %v8214 = vpack.c.b16 %v7818, %v7815
        %v8215 = vpack.c.b16 %v7822, %v7819
        %v8216 = vpack.c.b16 %v7823, %v7820
        %v8217 = vpack.c.b16 %v7824, %v7821
        %v8218 = vpack.c.b16 %v7828, %v7825
        %v8219 = vpack.c.b16 %v7829, %v7826
        %v8220 = vpack.c.b16 %v7830, %v7827
        %v8221 = vpack.c.b16 %v7834, %v7831
        %v8222 = vpack.c.b16 %v7835, %v7832
        %v8223 = vpack.c.b16 %v7836, %v7833
        %v8224 = vpack.c.b16 %v7840, %v7837
        %v8225 = vpack.c.b16 %v7841, %v7838
        %v8226 = vpack.c.b16 %v7842, %v7839
        %v8227 = vpack.c.b16 %v7846, %v7843
        %v8228 = vpack.c.b16 %v7847, %v7844
        %v8229 = vpack.c.b16 %v7848, %v7845
        %v8230 = vpack.c.b16 %v7852, %v7849
        %v8231 = vpack.c.b16 %v7853, %v7850
        %v8232 = vpack.c.b16 %v7854, %v7851
        %v8233 = vpack.c.b16 %v7858, %v7855
        %v8234 = vpack.c.b16 %v7859, %v7856
        %v8235 = vpack.c.b16 %v7860, %v7857
        %v8236 = vpack.c.b16 %v7864, %v7861
        %v8237 = vpack.c.b16 %v7865, %v7862
        %v8238 = vpack.c.b16 %v7866, %v7863
        %v8239 = vpack.c.b16 %v7870, %v7867
        %v8240 = vpack.c.b16 %v7871, %v7868
        %v8241 = vpack.c.b16 %v7872, %v7869
        %v8242 = vpack.c.b16 %v7876, %v7873
        %v8243 = vpack.c.b16 %v7877, %v7874
        %v8244 = vpack.c.b16 %v7878, %v7875
        %v8245 = vpack.c.b16 %v7882, %v7879
        %v8246 = vpack.c.b16 %v7883, %v7880
        %v8247 = vpack.c.b16 %v7884, %v7881
        %v8248 = vpack.c.b16 %v7888, %v7885
        %v8249 = vpack.c.b16 %v7889, %v7886
        %v8250 = vpack.c.b16 %v7890, %v7887
        %v8251 = vpack.c.b16 %v7894, %v7891
        %v8252 = vpack.c.b16 %v7895, %v7892
        %v8253 = vpack.c.b16 %v7896, %v7893
        %v8254 = vpack.c.b16 %v7900, %v7897
        %v8255 = vpack.c.b16 %v7901, %v7898
        %v8256 = vpack.c.b16 %v7902, %v7899
        %v8257 = vpack.c.b16 %v7906, %v7903
        %v8258 = vpack.c.b16 %v7907, %v7904
        %v8259 = vpack.c.b16 %v7908, %v7905
        %v8260 = vpack.c.b16 %v7912, %v7909
        %v8261 = vpack.c.b16 %v7913, %v7910
        %v8262 = vpack.c.b16 %v7914, %v7911
        %v8263 = vpack.c.b16 %v7918, %v7915
        %v8264 = vpack.c.b16 %v7919, %v7916
        %v8265 = vpack.c.b16 %v7920, %v7917
        %v8266 = vpack.c.b16 %v7924, %v7921
        %v8267 = vpack.c.b16 %v7925, %v7922
        %v8268 = vpack.c.b16 %v7926, %v7923
        %v8269 = vpack.c.b16 %v7930, %v7927
        %v8270 = vpack.c.b16 %v7931, %v7928
        %v8271 = vpack.c.b16 %v7932, %v7929
        %v8272 = vpack.c.b16 %v7936, %v7933
        %v8273 = vpack.c.b16 %v7937, %v7934
        %v8274 = vpack.c.b16 %v7938, %v7935
        %v8275 = vpack.c.b16 %v7942, %v7939
        %v8276 = vpack.c.b16 %v7943, %v7940
        %v8277 = vpack.c.b16 %v7944, %v7941
        %v8278 = vpack.c.b16 %v7948, %v7945
        %v8279 = vpack.c.b16 %v7949, %v7946
        %v8280 = vpack.c.b16 %v7950, %v7947
        %v8281 = vpack.c.b16 %v7954, %v7951
        %v8282 = vpack.c.b16 %v7955, %v7952
        %v8283 = vpack.c.b16 %v7956, %v7953
        %v8284 = vpack.c.b16 %v7960, %v7957
        %v8285 = vpack.c.b16 %v7961, %v7958
        %v8286 = vpack.c.b16 %v7962, %v7959
        %v8287 = vpack.c.b16 %v7966, %v7963
        %v8288 = vpack.c.b16 %v7967, %v7964
        %v8289 = vpack.c.b16 %v7968, %v7965
        %v8290 = vpack.c.b16 %v7972, %v7969
        %v8291 = vpack.c.b16 %v7973, %v7970
        %v8292 = vpack.c.b16 %v7974, %v7971
        %v8293 = vpack.c.b16 %v7978, %v7975
        %v8294 = vpack.c.b16 %v7979, %v7976
        %v8295 = vpack.c.b16 %v7980, %v7977
        %v8296 = vpack.c.b16 %v7984, %v7981
        %v8297 = vpack.c.b16 %v7985, %v7982
        %v8298 = vpack.c.b16 %v7986, %v7983
        %v8299 = vpack.c.b16 %v7990, %v7987
        %v8300 = vpack.c.b16 %v7991, %v7988
        %v8301 = vpack.c.b16 %v7992, %v7989
        %v8302 = vpack.c.b16 %v7996, %v7993
        %v8303 = vpack.c.b16 %v7997, %v7994
        %v8304 = vpack.c.b16 %v7998, %v7995
        %v8305 = vpack.c.b16 %v8002, %v7999
        %v8306 = vpack.c.b16 %v8003, %v8000
        %v8307 = vpack.c.b16 %v8004, %v8001
        %v8308 = vpack.c.b16 %v8008, %v8005
        %v8309 = vpack.c.b16 %v8009, %v8006
        %v8310 = vpack.c.b16 %v8010, %v8007
        %v8311 = vpack.c.b16 %v8014, %v8011
        %v8312 = vpack.c.b16 %v8015, %v8012
        %v8313 = vpack.c.b16 %v8016, %v8013
        %v8314 = vpack.c.b16 %v8020, %v8017
        %v8315 = vpack.c.b16 %v8021, %v8018
        %v8316 = vpack.c.b16 %v8022, %v8019
        %v8317 = vpack.c.b16 %v8026, %v8023
        %v8318 = vpack.c.b16 %v8027, %v8024
        %v8319 = vpack.c.b16 %v8028, %v8025
        %v8320 = vpack.c.b16 %v8032, %v8029
        %v8321 = vpack.c.b16 %v8033, %v8030
        %v8322 = vpack.c.b16 %v8034, %v8031
        %8611 = vmatprep.subr.bf16.mxu0 %v8036
        %8612 = vmatpush1.bf16.msra.mxu0 %v8035
        %8613 = vmatprep.subr.bf16.mxu0 %v8039
        %8614 = vmatpush1.bf16.msra.mxu0 %v8038
        %8615 = vmatprep.subr.bf16.mxu0 %v8042
        %8616 = vmatpush1.bf16.msra.mxu0 %v8041
        %8617 = vmatprep.subr.bf16.mxu0 %v8045
        %8618 = vmatpush1.bf16.msra.mxu0 %v8044
        %8619 = vmatprep.subr.bf16.mxu0 %v8048
        %8620 = vmatpush1.bf16.msra.mxu0 %v8047
        %8621 = vmatprep.subr.bf16.mxu0 %v8051
        %8622 = vmatpush1.bf16.msra.mxu0 %v8050
        %8623 = vmatprep.subr.bf16.mxu0 %v8054
        %8624 = vmatpush1.bf16.msra.mxu0 %v8053
        %8625 = vmatprep.subr.bf16.mxu0 %v8057
        %8626 = vmatpush1.bf16.msra.mxu0 %v8056
        %8627 = vmatprep.subr.bf16.mxu0 %v8060
        %8628 = vmatpush1.bf16.msra.mxu0 %v8059
        %8629 = vmatprep.subr.bf16.mxu0 %v8063
        %8630 = vmatpush1.bf16.msra.mxu0 %v8062
        %8631 = vmatprep.subr.bf16.mxu0 %v8066
        %8632 = vmatpush1.bf16.msra.mxu0 %v8065
        %8633 = vmatprep.subr.bf16.mxu0 %v8069
        %8634 = vmatpush1.bf16.msra.mxu0 %v8068
        %8635 = vmatprep.subr.bf16.mxu0 %v8072
        %8636 = vmatpush1.bf16.msra.mxu0 %v8071
        %8637 = vmatprep.subr.bf16.mxu0 %v8075
        %8638 = vmatpush1.bf16.msra.mxu0 %v8074
        %8639 = vmatprep.subr.bf16.mxu0 %v8078
        %8640 = vmatpush1.bf16.msra.mxu0 %v8077
        %8641 = vmatprep.subr.bf16.mxu0 %v8081
        %8642 = vmatpush1.bf16.msra.mxu0 %v8080
        %8643 = vmatprep.mubr.bf16.mxu0 %v6680
        %8644 = vmatmul.mubr.bf16.gmra.mrb[0].mxu0 %v6679
        %v8645 = vpop.f32.mrb[0].mxu0
        %v8646 = vadd.f32 0.0, %v8645
        %v8647 = vpop.f32.mrb[0].mxu0
        %v8648 = vadd.f32 0.0, %v8647
        %v8649 = vpop.f32.mrb[0].mxu0
        %v8650 = vpop.f32.mrb[0].mxu0
        %8651 = vdwg.mxu0
        %8652 = vmatprep.subr.bf16.mxu0 %v8084
        %8653 = vmatpush1.bf16.msra.mxu0 %v8083
        %8654 = vmatprep.subr.bf16.mxu0 %v8087
        %8655 = vmatpush1.bf16.msra.mxu0 %v8086
        %8656 = vmatprep.subr.bf16.mxu0 %v8090
        %8657 = vmatpush1.bf16.msra.mxu0 %v8089
        %8658 = vmatprep.subr.bf16.mxu0 %v8093
        %8659 = vmatpush1.bf16.msra.mxu0 %v8092
        %8660 = vmatprep.subr.bf16.mxu0 %v8096
        %8661 = vmatpush1.bf16.msra.mxu0 %v8095
        %8662 = vmatprep.subr.bf16.mxu0 %v8099
        %8663 = vmatpush1.bf16.msra.mxu0 %v8098
        %8664 = vmatprep.subr.bf16.mxu0 %v8102
        %8665 = vmatpush1.bf16.msra.mxu0 %v8101
        %8666 = vmatprep.subr.bf16.mxu0 %v8105
        %8667 = vmatpush1.bf16.msra.mxu0 %v8104
        %8668 = vmatprep.subr.bf16.mxu0 %v8108
        %8669 = vmatpush1.bf16.msra.mxu0 %v8107
        %8670 = vmatprep.subr.bf16.mxu0 %v8111
        %8671 = vmatpush1.bf16.msra.mxu0 %v8110
        %8672 = vmatprep.subr.bf16.mxu0 %v8114
        %8673 = vmatpush1.bf16.msra.mxu0 %v8113
        %8674 = vmatprep.subr.bf16.mxu0 %v8117
        %8675 = vmatpush1.bf16.msra.mxu0 %v8116
        %8676 = vmatprep.subr.bf16.mxu0 %v8120
        %8677 = vmatpush1.bf16.msra.mxu0 %v8119
        %8678 = vmatprep.subr.bf16.mxu0 %v8123
        %8679 = vmatpush1.bf16.msra.mxu0 %v8122
        %8680 = vmatprep.subr.bf16.mxu0 %v8126
        %8681 = vmatpush1.bf16.msra.mxu0 %v8125
        %8682 = vmatprep.subr.bf16.mxu0 %v8129
        %8683 = vmatpush1.bf16.msra.mxu0 %v8128
        %8684 = vmatprep.mubr.bf16.mxu0 %v6682
        %8685 = vmatmul.mubr.bf16.gmra.mrb[0].mxu0 %v6681
        %v8686 = vpop.f32.mrb[0].mxu0
        %v8687 = vadd.f32 %v8646, %v8686
        %v8688 = vpop.f32.mrb[0].mxu0
        %v8689 = vadd.f32 %v8648, %v8688
        %v8690 = vpop.f32.mrb[0].mxu0
        %v8691 = vpop.f32.mrb[0].mxu0
        %8692 = vdwg.mxu0
        %8693 = vmatprep.subr.bf16.mxu0 %v8132
        %8694 = vmatpush1.bf16.msra.mxu0 %v8131
        %8695 = vmatprep.subr.bf16.mxu0 %v8135
        %8696 = vmatpush1.bf16.msra.mxu0 %v8134
        %8697 = vmatprep.subr.bf16.mxu0 %v8138
        %8698 = vmatpush1.bf16.msra.mxu0 %v8137
        %8699 = vmatprep.subr.bf16.mxu0 %v8141
        %8700 = vmatpush1.bf16.msra.mxu0 %v8140
        %8701 = vmatprep.subr.bf16.mxu0 %v8144
        %8702 = vmatpush1.bf16.msra.mxu0 %v8143
        %8703 = vmatprep.subr.bf16.mxu0 %v8147
        %8704 = vmatpush1.bf16.msra.mxu0 %v8146
        %8705 = vmatprep.subr.bf16.mxu0 %v8150
        %8706 = vmatpush1.bf16.msra.mxu0 %v8149
        %8707 = vmatprep.subr.bf16.mxu0 %v8153
        %8708 = vmatpush1.bf16.msra.mxu0 %v8152
        %8709 = vmatprep.subr.bf16.mxu0 %v8156
        %8710 = vmatpush1.bf16.msra.mxu0 %v8155
        %8711 = vmatprep.subr.bf16.mxu0 %v8159
        %8712 = vmatpush1.bf16.msra.mxu0 %v8158
        %8713 = vmatprep.subr.bf16.mxu0 %v8162
        %8714 = vmatpush1.bf16.msra.mxu0 %v8161
        %8715 = vmatprep.subr.bf16.mxu0 %v8165
        %8716 = vmatpush1.bf16.msra.mxu0 %v8164
        %8717 = vmatprep.subr.bf16.mxu0 %v8168
        %8718 = vmatpush1.bf16.msra.mxu0 %v8167
        %8719 = vmatprep.subr.bf16.mxu0 %v8171
        %8720 = vmatpush1.bf16.msra.mxu0 %v8170
        %8721 = vmatprep.subr.bf16.mxu0 %v8174
        %8722 = vmatpush1.bf16.msra.mxu0 %v8173
        %8723 = vmatprep.subr.bf16.mxu0 %v8177
        %8724 = vmatpush1.bf16.msra.mxu0 %v8176
        %8725 = vmatprep.mubr.bf16.mxu0 %v6684
        %8726 = vmatmul.mubr.bf16.gmra.mrb[0].mxu0 %v6683
        %v8727 = vpop.f32.mrb[0].mxu0
        %v8728 = vadd.f32 %v8687, %v8727
        %v8729 = vpop.f32.mrb[0].mxu0
        %v8730 = vadd.f32 %v8689, %v8729
        %v8731 = vpop.f32.mrb[0].mxu0
        %v8732 = vpop.f32.mrb[0].mxu0
        %8733 = vdwg.mxu0
        %8734 = vmatprep.subr.bf16.mxu0 %v8180
        %8735 = vmatpush1.bf16.msra.mxu0 %v8179
        %8736 = vmatprep.subr.bf16.mxu0 %v8183
        %8737 = vmatpush1.bf16.msra.mxu0 %v8182
        %8738 = vmatprep.subr.bf16.mxu0 %v8186
        %8739 = vmatpush1.bf16.msra.mxu0 %v8185
        %8740 = vmatprep.subr.bf16.mxu0 %v8189
        %8741 = vmatpush1.bf16.msra.mxu0 %v8188
        %8742 = vmatprep.subr.bf16.mxu0 %v8192
        %8743 = vmatpush1.bf16.msra.mxu0 %v8191
        %8744 = vmatprep.subr.bf16.mxu0 %v8195
        %8745 = vmatpush1.bf16.msra.mxu0 %v8194
        %8746 = vmatprep.subr.bf16.mxu0 %v8198
        %8747 = vmatpush1.bf16.msra.mxu0 %v8197
        %8748 = vmatprep.subr.bf16.mxu0 %v8201
        %8749 = vmatpush1.bf16.msra.mxu0 %v8200
        %8750 = vmatprep.subr.bf16.mxu0 %v8204
        %8751 = vmatpush1.bf16.msra.mxu0 %v8203
        %8752 = vmatprep.subr.bf16.mxu0 %v8207
        %8753 = vmatpush1.bf16.msra.mxu0 %v8206
        %8754 = vmatprep.subr.bf16.mxu0 %v8210
        %8755 = vmatpush1.bf16.msra.mxu0 %v8209
        %8756 = vmatprep.subr.bf16.mxu0 %v8213
        %8757 = vmatpush1.bf16.msra.mxu0 %v8212
        %8758 = vmatprep.subr.bf16.mxu0 %v8216
        %8759 = vmatpush1.bf16.msra.mxu0 %v8215
        %8760 = vmatprep.subr.bf16.mxu0 %v8219
        %8761 = vmatpush1.bf16.msra.mxu0 %v8218
        %8762 = vmatprep.subr.bf16.mxu0 %v8222
        %8763 = vmatpush1.bf16.msra.mxu0 %v8221
        %8764 = vmatprep.subr.bf16.mxu0 %v8225
        %8765 = vmatpush1.bf16.msra.mxu0 %v8224
        %8766 = vmatprep.mubr.bf16.mxu0 %v6686
        %8767 = vmatmul.mubr.bf16.gmra.mrb[0].mxu0 %v6685
        %v8768 = vpop.f32.mrb[0].mxu0
        %v8769 = vadd.f32 %v8728, %v8768
        %v8770 = vpop.f32.mrb[0].mxu0
        %v8771 = vadd.f32 %v8730, %v8770
        %v8772 = vpop.f32.mrb[0].mxu0
        %v8773 = vpop.f32.mrb[0].mxu0
        %8774 = vdwg.mxu0
        %8775 = vmatprep.subr.bf16.mxu0 %v8228
        %8776 = vmatpush1.bf16.msra.mxu0 %v8227
        %8777 = vmatprep.subr.bf16.mxu0 %v8231
        %8778 = vmatpush1.bf16.msra.mxu0 %v8230
        %8779 = vmatprep.subr.bf16.mxu0 %v8234
        %8780 = vmatpush1.bf16.msra.mxu0 %v8233
        %8781 = vmatprep.subr.bf16.mxu0 %v8237
        %8782 = vmatpush1.bf16.msra.mxu0 %v8236
        %8783 = vmatprep.subr.bf16.mxu0 %v8240
        %8784 = vmatpush1.bf16.msra.mxu0 %v8239
        %8785 = vmatprep.subr.bf16.mxu0 %v8243
        %8786 = vmatpush1.bf16.msra.mxu0 %v8242
        %8787 = vmatprep.subr.bf16.mxu0 %v8246
        %8788 = vmatpush1.bf16.msra.mxu0 %v8245
        %8789 = vmatprep.subr.bf16.mxu0 %v8249
        %8790 = vmatpush1.bf16.msra.mxu0 %v8248
        %8791 = vmatprep.subr.bf16.mxu0 %v8252
        %8792 = vmatpush1.bf16.msra.mxu0 %v8251
        %8793 = vmatprep.subr.bf16.mxu0 %v8255
        %8794 = vmatpush1.bf16.msra.mxu0 %v8254
        %8795 = vmatprep.subr.bf16.mxu0 %v8258
        %8796 = vmatpush1.bf16.msra.mxu0 %v8257
        %8797 = vmatprep.subr.bf16.mxu0 %v8261
        %8798 = vmatpush1.bf16.msra.mxu0 %v8260
        %8799 = vmatprep.subr.bf16.mxu0 %v8264
        %8800 = vmatpush1.bf16.msra.mxu0 %v8263
        %8801 = vmatprep.subr.bf16.mxu0 %v8267
        %8802 = vmatpush1.bf16.msra.mxu0 %v8266
        %8803 = vmatprep.subr.bf16.mxu0 %v8270
        %8804 = vmatpush1.bf16.msra.mxu0 %v8269
        %8805 = vmatprep.subr.bf16.mxu0 %v8273
        %8806 = vmatpush1.bf16.msra.mxu0 %v8272
        %8807 = vmatprep.mubr.bf16.mxu0 %v6688
        %8808 = vmatmul.mubr.bf16.gmra.mrb[0].mxu0 %v6687
        %v8809 = vpop.f32.mrb[0].mxu0
        %v8810 = vadd.f32 %v8769, %v8809
        %v8811 = vpop.f32.mrb[0].mxu0
        %v8812 = vadd.f32 %v8771, %v8811
        %v8813 = vpop.f32.mrb[0].mxu0
        %v8814 = vpop.f32.mrb[0].mxu0
        %8815 = vdwg.mxu0
        %8816 = vmatprep.subr.bf16.mxu0 %v8276
        %8817 = vmatpush1.bf16.msra.mxu0 %v8275
        %8818 = vmatprep.subr.bf16.mxu0 %v8279
        %8819 = vmatpush1.bf16.msra.mxu0 %v8278
        %8820 = vmatprep.subr.bf16.mxu0 %v8282
        %8821 = vmatpush1.bf16.msra.mxu0 %v8281
        %8822 = vmatprep.subr.bf16.mxu0 %v8285
        %8823 = vmatpush1.bf16.msra.mxu0 %v8284
        %8824 = vmatprep.subr.bf16.mxu0 %v8288
        %8825 = vmatpush1.bf16.msra.mxu0 %v8287
        %8826 = vmatprep.subr.bf16.mxu0 %v8291
        %8827 = vmatpush1.bf16.msra.mxu0 %v8290
        %8828 = vmatprep.subr.bf16.mxu0 %v8294
        %8829 = vmatpush1.bf16.msra.mxu0 %v8293
        %8830 = vmatprep.subr.bf16.mxu0 %v8297
        %8831 = vmatpush1.bf16.msra.mxu0 %v8296
        %8832 = vmatprep.subr.bf16.mxu0 %v8300
        %8833 = vmatpush1.bf16.msra.mxu0 %v8299
        %8834 = vmatprep.subr.bf16.mxu0 %v8303
        %8835 = vmatpush1.bf16.msra.mxu0 %v8302
        %8836 = vmatprep.subr.bf16.mxu0 %v8306
        %8837 = vmatpush1.bf16.msra.mxu0 %v8305
        %8838 = vmatprep.subr.bf16.mxu0 %v8309
        %8839 = vmatpush1.bf16.msra.mxu0 %v8308
        %8840 = vmatprep.subr.bf16.mxu0 %v8312
        %8841 = vmatpush1.bf16.msra.mxu0 %v8311
        %8842 = vmatprep.subr.bf16.mxu0 %v8315
        %8843 = vmatpush1.bf16.msra.mxu0 %v8314
        %8844 = vmatprep.subr.bf16.mxu0 %v8318
        %8845 = vmatpush1.bf16.msra.mxu0 %v8317
        %8846 = vmatprep.subr.bf16.mxu0 %v8321
        %8847 = vmatpush1.bf16.msra.mxu0 %v8320
        %8848 = vmatprep.mubr.bf16.mxu0 %v6690
        %8849 = vmatmul.mubr.bf16.gmra.mrb[0].mxu0 %v6689
        %v8850 = vpop.f32.mrb[0].mxu0
        %v8851 = vadd.f32 %v8810, %v8850
        %v8852 = vpop.f32.mrb[0].mxu0
        %v8853 = vadd.f32 %v8812, %v8852
        %v8854 = vpop.f32.mrb[0].mxu0
        %v8855 = vpop.f32.mrb[0].mxu0
        %8856 = vdwg.mxu0
        %8857 = vmatprep.subr.bf16.mxu0 0
        %8858 = vmatpush1.bf16.msra.mxu0 %v8037
        %8859 = vmatprep.subr.bf16.mxu0 0
        %8860 = vmatpush1.bf16.msra.mxu0 %v8040
        %8861 = vmatprep.subr.bf16.mxu0 0
        %8862 = vmatpush1.bf16.msra.mxu0 %v8043
        %8863 = vmatprep.subr.bf16.mxu0 0
        %8864 = vmatpush1.bf16.msra.mxu0 %v8046
        %8865 = vmatprep.subr.bf16.mxu0 0
        %8866 = vmatpush1.bf16.msra.mxu0 %v8049
        %8867 = vmatprep.subr.bf16.mxu0 0
        %8868 = vmatpush1.bf16.msra.mxu0 %v8052
        %8869 = vmatprep.subr.bf16.mxu0 0
        %8870 = vmatpush1.bf16.msra.mxu0 %v8055
        %8871 = vmatprep.subr.bf16.mxu0 0
        %8872 = vmatpush1.bf16.msra.mxu0 %v8058
        %8873 = vmatprep.subr.bf16.mxu0 0
        %8874 = vmatpush1.bf16.msra.mxu0 %v8061
        %8875 = vmatprep.subr.bf16.mxu0 0
        %8876 = vmatpush1.bf16.msra.mxu0 %v8064
        %8877 = vmatprep.subr.bf16.mxu0 0
        %8878 = vmatpush1.bf16.msra.mxu0 %v8067
        %8879 = vmatprep.subr.bf16.mxu0 0
        %8880 = vmatpush1.bf16.msra.mxu0 %v8070
        %8881 = vmatprep.subr.bf16.mxu0 0
        %8882 = vmatpush1.bf16.msra.mxu0 %v8073
        %8883 = vmatprep.subr.bf16.mxu0 0
        %8884 = vmatpush1.bf16.msra.mxu0 %v8076
        %8885 = vmatprep.subr.bf16.mxu0 0
        %8886 = vmatpush1.bf16.msra.mxu0 %v8079
        %8887 = vmatprep.subr.bf16.mxu0 0
        %8888 = vmatpush1.bf16.msra.mxu0 %v8082
        %8889 = vmatprep.mubr.bf16.mxu0 %v6680
        %8890 = vmatmul.mubr.bf16.gmra.mrb[0].mxu0 %v6679
        %v8891 = vpop.f32.mrb[0].mxu0
        %v8892 = vadd.f32 0.0, %v8891
        %v8893 = vpop.f32.mrb[0].mxu0
        %v8894 = vpop.f32.mrb[0].mxu0
        %v8895 = vpop.f32.mrb[0].mxu0
        %8896 = vdwg.mxu0
        %8897 = vmatprep.subr.bf16.mxu0 0
        %8898 = vmatpush1.bf16.msra.mxu0 %v8085
        %8899 = vmatprep.subr.bf16.mxu0 0
        %8900 = vmatpush1.bf16.msra.mxu0 %v8088
        %8901 = vmatprep.subr.bf16.mxu0 0
        %8902 = vmatpush1.bf16.msra.mxu0 %v8091
        %8903 = vmatprep.subr.bf16.mxu0 0
        %8904 = vmatpush1.bf16.msra.mxu0 %v8094
        %8905 = vmatprep.subr.bf16.mxu0 0
        %8906 = vmatpush1.bf16.msra.mxu0 %v8097
        %8907 = vmatprep.subr.bf16.mxu0 0
        %8908 = vmatpush1.bf16.msra.mxu0 %v8100
        %8909 = vmatprep.subr.bf16.mxu0 0
        %8910 = vmatpush1.bf16.msra.mxu0 %v8103
        %8911 = vmatprep.subr.bf16.mxu0 0
        %8912 = vmatpush1.bf16.msra.mxu0 %v8106
        %8913 = vmatprep.subr.bf16.mxu0 0
        %8914 = vmatpush1.bf16.msra.mxu0 %v8109
        %8915 = vmatprep.subr.bf16.mxu0 0
        %8916 = vmatpush1.bf16.msra.mxu0 %v8112
        %8917 = vmatprep.subr.bf16.mxu0 0
        %8918 = vmatpush1.bf16.msra.mxu0 %v8115
        %8919 = vmatprep.subr.bf16.mxu0 0
        %8920 = vmatpush1.bf16.msra.mxu0 %v8118
        %8921 = vmatprep.subr.bf16.mxu0 0
        %8922 = vmatpush1.bf16.msra.mxu0 %v8121
        %8923 = vmatprep.subr.bf16.mxu0 0
        %8924 = vmatpush1.bf16.msra.mxu0 %v8124
        %8925 = vmatprep.subr.bf16.mxu0 0
        %8926 = vmatpush1.bf16.msra.mxu0 %v8127
        %8927 = vmatprep.subr.bf16.mxu0 0
        %8928 = vmatpush1.bf16.msra.mxu0 %v8130
        %8929 = vmatprep.mubr.bf16.mxu0 %v6682
        %8930 = vmatmul.mubr.bf16.gmra.mrb[0].mxu0 %v6681
        %v8931 = vpop.f32.mrb[0].mxu0
        %v8932 = vadd.f32 %v8892, %v8931
        %v8933 = vpop.f32.mrb[0].mxu0
        %v8934 = vpop.f32.mrb[0].mxu0
        %v8935 = vpop.f32.mrb[0].mxu0
        %8936 = vdwg.mxu0
        %8937 = vmatprep.subr.bf16.mxu0 0
        %8938 = vmatpush1.bf16.msra.mxu0 %v8133
        %8939 = vmatprep.subr.bf16.mxu0 0
        %8940 = vmatpush1.bf16.msra.mxu0 %v8136
        %8941 = vmatprep.subr.bf16.mxu0 0
        %8942 = vmatpush1.bf16.msra.mxu0 %v8139
        %8943 = vmatprep.subr.bf16.mxu0 0
        %8944 = vmatpush1.bf16.msra.mxu0 %v8142
        %8945 = vmatprep.subr.bf16.mxu0 0
        %8946 = vmatpush1.bf16.msra.mxu0 %v8145
        %8947 = vmatprep.subr.bf16.mxu0 0
        %8948 = vmatpush1.bf16.msra.mxu0 %v8148
        %8949 = vmatprep.subr.bf16.mxu0 0
        %8950 = vmatpush1.bf16.msra.mxu0 %v8151
        %8951 = vmatprep.subr.bf16.mxu0 0
        %8952 = vmatpush1.bf16.msra.mxu0 %v8154
        %8953 = vmatprep.subr.bf16.mxu0 0
        %8954 = vmatpush1.bf16.msra.mxu0 %v8157
        %8955 = vmatprep.subr.bf16.mxu0 0
        %8956 = vmatpush1.bf16.msra.mxu0 %v8160
        %8957 = vmatprep.subr.bf16.mxu0 0
        %8958 = vmatpush1.bf16.msra.mxu0 %v8163
        %8959 = vmatprep.subr.bf16.mxu0 0
        %8960 = vmatpush1.bf16.msra.mxu0 %v8166
        %8961 = vmatprep.subr.bf16.mxu0 0
        %8962 = vmatpush1.bf16.msra.mxu0 %v8169
        %8963 = vmatprep.subr.bf16.mxu0 0
        %8964 = vmatpush1.bf16.msra.mxu0 %v8172
        %8965 = vmatprep.subr.bf16.mxu0 0
        %8966 = vmatpush1.bf16.msra.mxu0 %v8175
        %8967 = vmatprep.subr.bf16.mxu0 0
        %8968 = vmatpush1.bf16.msra.mxu0 %v8178
        %8969 = vmatprep.mubr.bf16.mxu0 %v6684
        %8970 = vmatmul.mubr.bf16.gmra.mrb[0].mxu0 %v6683
        %v8971 = vpop.f32.mrb[0].mxu0
        %v8972 = vadd.f32 %v8932, %v8971
        %v8973 = vpop.f32.mrb[0].mxu0
        %v8974 = vpop.f32.mrb[0].mxu0
        %v8975 = vpop.f32.mrb[0].mxu0
        %8976 = vdwg.mxu0
        %8977 = vmatprep.subr.bf16.mxu0 0
        %8978 = vmatpush1.bf16.msra.mxu0 %v8181
        %8979 = vmatprep.subr.bf16.mxu0 0
        %8980 = vmatpush1.bf16.msra.mxu0 %v8184
        %8981 = vmatprep.subr.bf16.mxu0 0
        %8982 = vmatpush1.bf16.msra.mxu0 %v8187
        %8983 = vmatprep.subr.bf16.mxu0 0
        %8984 = vmatpush1.bf16.msra.mxu0 %v8190
        %8985 = vmatprep.subr.bf16.mxu0 0
        %8986 = vmatpush1.bf16.msra.mxu0 %v8193
        %8987 = vmatprep.subr.bf16.mxu0 0
        %8988 = vmatpush1.bf16.msra.mxu0 %v8196
        %8989 = vmatprep.subr.bf16.mxu0 0
        %8990 = vmatpush1.bf16.msra.mxu0 %v8199
        %8991 = vmatprep.subr.bf16.mxu0 0
        %8992 = vmatpush1.bf16.msra.mxu0 %v8202
        %8993 = vmatprep.subr.bf16.mxu0 0
        %8994 = vmatpush1.bf16.msra.mxu0 %v8205
        %8995 = vmatprep.subr.bf16.mxu0 0
        %8996 = vmatpush1.bf16.msra.mxu0 %v8208
        %8997 = vmatprep.subr.bf16.mxu0 0
        %8998 = vmatpush1.bf16.msra.mxu0 %v8211
        %8999 = vmatprep.subr.bf16.mxu0 0
        %9000 = vmatpush1.bf16.msra.mxu0 %v8214
        %9001 = vmatprep.subr.bf16.mxu0 0
        %9002 = vmatpush1.bf16.msra.mxu0 %v8217
        %9003 = vmatprep.subr.bf16.mxu0 0
        %9004 = vmatpush1.bf16.msra.mxu0 %v8220
        %9005 = vmatprep.subr.bf16.mxu0 0
        %9006 = vmatpush1.bf16.msra.mxu0 %v8223
        %9007 = vmatprep.subr.bf16.mxu0 0
        %9008 = vmatpush1.bf16.msra.mxu0 %v8226
        %9009 = vmatprep.mubr.bf16.mxu0 %v6686
        %9010 = vmatmul.mubr.bf16.gmra.mrb[0].mxu0 %v6685
        %v9011 = vpop.f32.mrb[0].mxu0
        %v9012 = vadd.f32 %v8972, %v9011
        %v9013 = vpop.f32.mrb[0].mxu0
        %v9014 = vpop.f32.mrb[0].mxu0
        %v9015 = vpop.f32.mrb[0].mxu0
        %9016 = vdwg.mxu0
        %9017 = vmatprep.subr.bf16.mxu0 0
        %9018 = vmatpush1.bf16.msra.mxu0 %v8229
        %9019 = vmatprep.subr.bf16.mxu0 0
        %9020 = vmatpush1.bf16.msra.mxu0 %v8232
        %9021 = vmatprep.subr.bf16.mxu0 0
        %9022 = vmatpush1.bf16.msra.mxu0 %v8235
        %9023 = vmatprep.subr.bf16.mxu0 0
        %9024 = vmatpush1.bf16.msra.mxu0 %v8238
        %9025 = vmatprep.subr.bf16.mxu0 0
        %9026 = vmatpush1.bf16.msra.mxu0 %v8241
        %9027 = vmatprep.subr.bf16.mxu0 0
        %9028 = vmatpush1.bf16.msra.mxu0 %v8244
        %9029 = vmatprep.subr.bf16.mxu0 0
        %9030 = vmatpush1.bf16.msra.mxu0 %v8247
        %9031 = vmatprep.subr.bf16.mxu0 0
        %9032 = vmatpush1.bf16.msra.mxu0 %v8250
        %9033 = vmatprep.subr.bf16.mxu0 0
        %9034 = vmatpush1.bf16.msra.mxu0 %v8253
        %9035 = vmatprep.subr.bf16.mxu0 0
        %9036 = vmatpush1.bf16.msra.mxu0 %v8256
        %9037 = vmatprep.subr.bf16.mxu0 0
        %9038 = vmatpush1.bf16.msra.mxu0 %v8259
        %9039 = vmatprep.subr.bf16.mxu0 0
        %9040 = vmatpush1.bf16.msra.mxu0 %v8262
        %9041 = vmatprep.subr.bf16.mxu0 0
        %9042 = vmatpush1.bf16.msra.mxu0 %v8265
        %9043 = vmatprep.subr.bf16.mxu0 0
        %9044 = vmatpush1.bf16.msra.mxu0 %v8268
        %9045 = vmatprep.subr.bf16.mxu0 0
        %9046 = vmatpush1.bf16.msra.mxu0 %v8271
        %9047 = vmatprep.subr.bf16.mxu0 0
        %9048 = vmatpush1.bf16.msra.mxu0 %v8274
        %9049 = vmatprep.mubr.bf16.mxu0 %v6688
        %9050 = vmatmul.mubr.bf16.gmra.mrb[0].mxu0 %v6687
        %v9051 = vpop.f32.mrb[0].mxu0
        %v9052 = vadd.f32 %v9012, %v9051
        %v9053 = vpop.f32.mrb[0].mxu0
        %v9054 = vpop.f32.mrb[0].mxu0
        %v9055 = vpop.f32.mrb[0].mxu0
        %9056 = vdwg.mxu0
        %9057 = vmatprep.subr.bf16.mxu0 0
        %9058 = vmatpush1.bf16.msra.mxu0 %v8277
        %9059 = vmatprep.subr.bf16.mxu0 0
        %9060 = vmatpush1.bf16.msra.mxu0 %v8280
        %9061 = vmatprep.subr.bf16.mxu0 0
        %9062 = vmatpush1.bf16.msra.mxu0 %v8283
        %9063 = vmatprep.subr.bf16.mxu0 0
        %9064 = vmatpush1.bf16.msra.mxu0 %v8286
        %9065 = vmatprep.subr.bf16.mxu0 0
        %9066 = vmatpush1.bf16.msra.mxu0 %v8289
        %9067 = vmatprep.subr.bf16.mxu0 0
        %9068 = vmatpush1.bf16.msra.mxu0 %v8292
        %9069 = vmatprep.subr.bf16.mxu0 0
        %9070 = vmatpush1.bf16.msra.mxu0 %v8295
        %9071 = vmatprep.subr.bf16.mxu0 0
        %9072 = vmatpush1.bf16.msra.mxu0 %v8298
        %9073 = vmatprep.subr.bf16.mxu0 0
        %9074 = vmatpush1.bf16.msra.mxu0 %v8301
        %9075 = vmatprep.subr.bf16.mxu0 0
        %9076 = vmatpush1.bf16.msra.mxu0 %v8304
        %9077 = vmatprep.subr.bf16.mxu0 0
        %9078 = vmatpush1.bf16.msra.mxu0 %v8307
        %9079 = vmatprep.subr.bf16.mxu0 0
        %9080 = vmatpush1.bf16.msra.mxu0 %v8310
        %9081 = vmatprep.subr.bf16.mxu0 0
        %9082 = vmatpush1.bf16.msra.mxu0 %v8313
        %9083 = vmatprep.subr.bf16.mxu0 0
        %9084 = vmatpush1.bf16.msra.mxu0 %v8316
        %9085 = vmatprep.subr.bf16.mxu0 0
        %9086 = vmatpush1.bf16.msra.mxu0 %v8319
        %9087 = vmatprep.subr.bf16.mxu0 0
        %9088 = vmatpush1.bf16.msra.mxu0 %v8322
        %9089 = vmatprep.mubr.bf16.mxu0 %v6690
        %9090 = vmatmul.mubr.bf16.gmra.mrb[0].mxu0 %v6689
        %v9091 = vpop.f32.mrb[0].mxu0
        %v9092 = vadd.f32 %v9052, %v9091
        %v9093 = vpop.f32.mrb[0].mxu0
        %v9094 = vpop.f32.mrb[0].mxu0
        %v9095 = vpop.f32.mrb[0].mxu0
        %9096 = vdwg.mxu0
        %v9097 = vadd.f32 %v4220, %v8851
        %v9098 = vadd.f32 %v4221, %v8853
        %v9099 = vadd.f32 %v4222, %v9092
        %v9100 = vld [vmem:[%s893] sm:$0x7]
        %v9102 = vlaneseq
        %v9103 = vshrl.u32 %v9102, 7
        %v9104 = vsub.s32 0, %v9103
        %v9105 = vrot.slane %v9100, %v9104
        %v9106 = vlaneseq
        %v9107 = vshrl.u32 %v9106, 7
        %v9108 = vsub.s32 1, %v9107
        %v9109 = vrot.slane %v9100, %v9108
        %v9110 = vlaneseq
        %v9111 = vshrl.u32 %v9110, 7
        %v9112 = vsub.s32 2, %v9111
        %v9113 = vrot.slane %v9100, %v9112
        %v9117 = vadd.f32 %v9097, %v9105
        %v9118 = vadd.f32 %v9098, %v9109
        %v9119 = vadd.f32 %v9099, %v9113
        %9120 = vst [vmem:[#allocation2] sm:$0xff] %v9117
        %9121 = vst [vmem:[#allocation2 + $0x8] sm:$0xff] %v9118
        %9122 = vst [vmem:[#allocation2 + $0x10] sm:$0xff] %v9119
        %p9123 = scmp.eq.s32.totalorder %s58, 5
        // Predicated region
        $region153: #{tpu_custom_call.1} parent=83 // pred_check
          %p9124 = pneg %p9123
        $region154: #{tpu_custom_call.1} parent=83 // pred_check_branch
          %9126 = sbr.rel (%p9124) target = $region156
        $region155: #{tpu_custom_call.1} parent=83 // pred_region
          %v9127 = vld [vmem:[#allocation24] sm:$0x7]
          %v9128 = vld [vmem:[#allocation25] sm:$0x7]
          %v9129 = vadd.f32 %v9117, %v9118
          %v9130 = vadd.f32 %v9129, %v9119
          %9131 = vadd.xlane.f32.xlu0 %v9130
          %v9132 = vpop.xlane.xlu0 %9131
          %v9133 = vmul.f32 %v9132, %v1039
          %v9134 = vsub.f32 %v9117, %v9133
          %v9135 = vsub.f32 %v9118, %v9133
          %v9136 = vsub.f32 %v9119, %v9133
          %v9137 = vmul.f32 %v9134, %v9134
          %v9138 = vmul.f32 %v9135, %v9135
          %v9139 = vmul.f32 %v9136, %v9136
          %v9140 = vadd.f32 %v9137, %v9138
          %v9141 = vadd.f32 %v9140, %v9139
          %9142 = vadd.xlane.f32.xlu0 %v9141
          %v9143 = vpop.xlane.xlu0 %9142
          %v9144 = vmul.f32 %v9143, %v1039
          %v9145 = vadd.f32 %v9144, 1e-05
          %v9146 = vrsqrt.pop %v9145
          %v9147 = vmul.f32 %v9134, %v9146
          %v9148 = vmul.f32 %v9135, %v9146
          %v9149 = vmul.f32 %v9136, %v9146
          %v9151 = vlaneseq
          %v9152 = vshrl.u32 %v9151, 7
          %v9153 = vsub.s32 0, %v9152
          %v9154 = vrot.slane %v9127, %v9153
          %v9155 = vlaneseq
          %v9156 = vshrl.u32 %v9155, 7
          %v9157 = vsub.s32 1, %v9156
          %v9158 = vrot.slane %v9127, %v9157
          %v9159 = vlaneseq
          %v9160 = vshrl.u32 %v9159, 7
          %v9161 = vsub.s32 2, %v9160
          %v9162 = vrot.slane %v9127, %v9161
          %v9166 = vmul.f32 %v9147, %v9154
          %v9167 = vmul.f32 %v9148, %v9158
          %v9168 = vmul.f32 %v9149, %v9162
          %v9170 = vlaneseq
          %v9171 = vshrl.u32 %v9170, 7
          %v9172 = vsub.s32 0, %v9171
          %v9173 = vrot.slane %v9128, %v9172
          %v9174 = vlaneseq
          %v9175 = vshrl.u32 %v9174, 7
          %v9176 = vsub.s32 1, %v9175
          %v9177 = vrot.slane %v9128, %v9176
          %v9178 = vlaneseq
          %v9179 = vshrl.u32 %v9178, 7
          %v9180 = vsub.s32 2, %v9179
          %v9181 = vrot.slane %v9128, %v9180
          %v9185 = vadd.f32 %v9166, %v9173
          %v9186 = vadd.f32 %v9167, %v9177
          %v9187 = vadd.f32 %v9168, %v9181
          %v9188 = vpack.c.bf16 %v9185, %v9185
          %v9189 = vpack.c.bf16 %v9186, %v9186
          %v9190 = vpack.c.bf16 %v9187, %v9187
          %v9191 = vld [vmem:[#allocation27] sm:$0xf]
          %v9192 = vld [vmem:[#allocation27 + $0x4] sm:$0xf]
          %v9193 = vld [vmem:[#allocation27 + $0x8] sm:$0xf]
          %v9194 = vld [vmem:[#allocation27 + $0xc] sm:$0xf]
          %v9195 = vld [vmem:[#allocation27 + $0x10] sm:$0xf]
          %v9196 = vld [vmem:[#allocation27 + $0x14] sm:$0xf]
          %v9197 = vld [vmem:[#allocation27 + $0x18] sm:$0xf]
          %v9198 = vld [vmem:[#allocation27 + $0x1c] sm:$0xf]
          %v9199 = vld [vmem:[#allocation27 + $0x20] sm:$0xf]
          %v9200 = vld [vmem:[#allocation27 + $0x24] sm:$0xf]
          %v9201 = vld [vmem:[#allocation27 + $0x28] sm:$0xf]
          %v9202 = vld [vmem:[#allocation27 + $0x2c] sm:$0xf]
          %v9203 = vld [vmem:[#allocation27 + $0x30] sm:$0xf]
          %v9204 = vld [vmem:[#allocation27 + $0x34] sm:$0xf]
          %v9205 = vld [vmem:[#allocation27 + $0x38] sm:$0xf]
          %v9206 = vld [vmem:[#allocation27 + $0x3c] sm:$0xf]
          %v9207 = vld [vmem:[#allocation27 + $0x40] sm:$0xf]
          %v9208 = vld [vmem:[#allocation27 + $0x44] sm:$0xf]
          %v9209 = vld [vmem:[#allocation27 + $0x48] sm:$0xf]
          %v9210 = vld [vmem:[#allocation27 + $0x4c] sm:$0xf]
          %v9211 = vld [vmem:[#allocation27 + $0x50] sm:$0xf]
          %v9212 = vld [vmem:[#allocation27 + $0x54] sm:$0xf]
          %v9213 = vld [vmem:[#allocation27 + $0x58] sm:$0xf]
          %v9214 = vld [vmem:[#allocation27 + $0x5c] sm:$0xf]
          %v9215 = vld [vmem:[#allocation27 + $0x60] sm:$0xf]
          %v9216 = vld [vmem:[#allocation27 + $0x64] sm:$0xf]
          %v9217 = vld [vmem:[#allocation27 + $0x68] sm:$0xf]
          %v9218 = vld [vmem:[#allocation27 + $0x6c] sm:$0xf]
          %v9219 = vld [vmem:[#allocation27 + $0x70] sm:$0xf]
          %v9220 = vld [vmem:[#allocation27 + $0x74] sm:$0xf]
          %v9221 = vld [vmem:[#allocation27 + $0x78] sm:$0xf]
          %v9222 = vld [vmem:[#allocation27 + $0x7c] sm:$0xf]
          %v9223 = vld [vmem:[#allocation27 + $0x80] sm:$0xf]
          %v9224 = vld [vmem:[#allocation27 + $0x84] sm:$0xf]
          %v9225 = vld [vmem:[#allocation27 + $0x88] sm:$0xf]
          %v9226 = vld [vmem:[#allocation27 + $0x8c] sm:$0xf]
          %v9227 = vld [vmem:[#allocation27 + $0x90] sm:$0xf]
          %v9228 = vld [vmem:[#allocation27 + $0x94] sm:$0xf]
          %v9229 = vld [vmem:[#allocation27 + $0x98] sm:$0xf]
          %v9230 = vld [vmem:[#allocation27 + $0x9c] sm:$0xf]
          %v9231 = vld [vmem:[#allocation27 + $0xa0] sm:$0xf]
          %v9232 = vld [vmem:[#allocation27 + $0xa4] sm:$0xf]
          %v9233 = vld [vmem:[#allocation27 + $0xa8] sm:$0xf]
          %v9234 = vld [vmem:[#allocation27 + $0xac] sm:$0xf]
          %v9235 = vld [vmem:[#allocation27 + $0xb0] sm:$0xf]
          %v9236 = vld [vmem:[#allocation27 + $0xb4] sm:$0xf]
          %v9237 = vld [vmem:[#allocation27 + $0xb8] sm:$0xf]
          %v9238 = vld [vmem:[#allocation27 + $0xbc] sm:$0xf]
          %v9239 = vld [vmem:[#allocation28] sm:$0x1]
          %v9241 = vlaneseq
          %v9242 = vshrl.u32 %v9241, 7
          %v9243 = vsub.s32 0, %v9242
          %v9244 = vrot.slane %v9239, %v9243
          %v9294 = vunpack.c.l.b16 %v9191
          %v9295 = vunpack.c.l.b16 %v9192
          %v9296 = vunpack.c.l.b16 %v9193
          %v9297 = vunpack.c.l.b16 %v9194
          %v9298 = vunpack.c.l.b16 %v9195
          %v9299 = vunpack.c.l.b16 %v9196
          %v9300 = vunpack.c.l.b16 %v9197
          %v9301 = vunpack.c.l.b16 %v9198
          %v9302 = vunpack.c.l.b16 %v9199
          %v9303 = vunpack.c.l.b16 %v9200
          %v9304 = vunpack.c.l.b16 %v9201
          %v9305 = vunpack.c.l.b16 %v9202
          %v9306 = vunpack.c.l.b16 %v9203
          %v9307 = vunpack.c.l.b16 %v9204
          %v9308 = vunpack.c.l.b16 %v9205
          %v9309 = vunpack.c.l.b16 %v9206
          %v9310 = vunpack.c.l.b16 %v9207
          %v9311 = vunpack.c.l.b16 %v9208
          %v9312 = vunpack.c.l.b16 %v9209
          %v9313 = vunpack.c.l.b16 %v9210
          %v9314 = vunpack.c.l.b16 %v9211
          %v9315 = vunpack.c.l.b16 %v9212
          %v9316 = vunpack.c.l.b16 %v9213
          %v9317 = vunpack.c.l.b16 %v9214
          %v9318 = vunpack.c.l.b16 %v9215
          %v9319 = vunpack.c.l.b16 %v9216
          %v9320 = vunpack.c.l.b16 %v9217
          %v9321 = vunpack.c.l.b16 %v9218
          %v9322 = vunpack.c.l.b16 %v9219
          %v9323 = vunpack.c.l.b16 %v9220
          %v9324 = vunpack.c.l.b16 %v9221
          %v9325 = vunpack.c.l.b16 %v9222
          %v9326 = vunpack.c.l.b16 %v9223
          %v9327 = vunpack.c.l.b16 %v9224
          %v9328 = vunpack.c.l.b16 %v9225
          %v9329 = vunpack.c.l.b16 %v9226
          %v9330 = vunpack.c.l.b16 %v9227
          %v9331 = vunpack.c.l.b16 %v9228
          %v9332 = vunpack.c.l.b16 %v9229
          %v9333 = vunpack.c.l.b16 %v9230
          %v9334 = vunpack.c.l.b16 %v9231
          %v9335 = vunpack.c.l.b16 %v9232
          %v9336 = vunpack.c.l.b16 %v9233
          %v9337 = vunpack.c.l.b16 %v9234
          %v9338 = vunpack.c.l.b16 %v9235
          %v9339 = vunpack.c.l.b16 %v9236
          %v9340 = vunpack.c.l.b16 %v9237
          %v9341 = vunpack.c.l.b16 %v9238
          %v9342 = vpack.c.b16 %v9295, %v9294
          %v9343 = vpack.c.b16 %v9297, %v9296
          %v9344 = vpack.c.b16 %v9299, %v9298
          %v9345 = vpack.c.b16 %v9301, %v9300
          %v9346 = vpack.c.b16 %v9303, %v9302
          %v9347 = vpack.c.b16 %v9305, %v9304
          %v9348 = vpack.c.b16 %v9307, %v9306
          %v9349 = vpack.c.b16 %v9309, %v9308
          %v9350 = vpack.c.b16 %v9311, %v9310
          %v9351 = vpack.c.b16 %v9313, %v9312
          %v9352 = vpack.c.b16 %v9315, %v9314
          %v9353 = vpack.c.b16 %v9317, %v9316
          %v9354 = vpack.c.b16 %v9319, %v9318
          %v9355 = vpack.c.b16 %v9321, %v9320
          %v9356 = vpack.c.b16 %v9323, %v9322
          %v9357 = vpack.c.b16 %v9325, %v9324
          %v9358 = vpack.c.b16 %v9327, %v9326
          %v9359 = vpack.c.b16 %v9329, %v9328
          %v9360 = vpack.c.b16 %v9331, %v9330
          %v9361 = vpack.c.b16 %v9333, %v9332
          %v9362 = vpack.c.b16 %v9335, %v9334
          %v9363 = vpack.c.b16 %v9337, %v9336
          %v9364 = vpack.c.b16 %v9339, %v9338
          %v9365 = vpack.c.b16 %v9341, %v9340
          %9390 = vmatprep.subr.bf16.mxu0 0
          %9391 = vmatpush1.bf16.msra.mxu0 %v9342
          %9392 = vmatprep.subr.bf16.mxu0 0
          %9393 = vmatpush1.bf16.msra.mxu0 %v9343
          %9394 = vmatprep.subr.bf16.mxu0 0
          %9395 = vmatpush1.bf16.msra.mxu0 %v9344
          %9396 = vmatprep.subr.bf16.mxu0 0
          %9397 = vmatpush1.bf16.msra.mxu0 %v9345
          %9398 = vmatprep.subr.bf16.mxu0 0
          %9399 = vmatpush1.bf16.msra.mxu0 %v9346
          %9400 = vmatprep.subr.bf16.mxu0 0
          %9401 = vmatpush1.bf16.msra.mxu0 %v9347
          %9402 = vmatprep.subr.bf16.mxu0 0
          %9403 = vmatpush1.bf16.msra.mxu0 %v9348
          %9404 = vmatprep.subr.bf16.mxu0 0
          %9405 = vmatpush1.bf16.msra.mxu0 %v9349
          %9406 = vmatprep.subr.bf16.mxu0 0
          %9407 = vmatpush1.bf16.msra.mxu0 %v9350
          %9408 = vmatprep.subr.bf16.mxu0 0
          %9409 = vmatpush1.bf16.msra.mxu0 %v9351
          %9410 = vmatprep.subr.bf16.mxu0 0
          %9411 = vmatpush1.bf16.msra.mxu0 %v9352
          %9412 = vmatprep.subr.bf16.mxu0 0
          %9413 = vmatpush1.bf16.msra.mxu0 %v9353
          %9414 = vmatprep.subr.bf16.mxu0 0
          %9415 = vmatpush1.bf16.msra.mxu0 %v9354
          %9416 = vmatprep.subr.bf16.mxu0 0
          %9417 = vmatpush1.bf16.msra.mxu0 %v9355
          %9418 = vmatprep.subr.bf16.mxu0 0
          %9419 = vmatpush1.bf16.msra.mxu0 %v9356
          %9420 = vmatprep.subr.bf16.mxu0 0
          %9421 = vmatpush1.bf16.msra.mxu0 %v9357
          %9422 = vmatprep.mubr.bf16.mxu0 %v9189
          %9423 = vmatmul.mubr.bf16.gmra.mrb[0].mxu0 %v9188
          %v9424 = vpop.f32.mrb[0].mxu0
          %v9425 = vadd.f32 %v9244, %v9424
          %v9426 = vpop.f32.mrb[0].mxu0
          %v9427 = vpop.f32.mrb[0].mxu0
          %v9428 = vpop.f32.mrb[0].mxu0
          %9429 = vdwg.mxu0
          %9430 = vmatprep.subr.bf16.mxu0 0
          %9431 = vmatpush1.bf16.msra.mxu0 %v9358
          %9432 = vmatprep.subr.bf16.mxu0 0
          %9433 = vmatpush1.bf16.msra.mxu0 %v9359
          %9434 = vmatprep.subr.bf16.mxu0 0
          %9435 = vmatpush1.bf16.msra.mxu0 %v9360
          %9436 = vmatprep.subr.bf16.mxu0 0
          %9437 = vmatpush1.bf16.msra.mxu0 %v9361
          %9438 = vmatprep.subr.bf16.mxu0 0
          %9439 = vmatpush1.bf16.msra.mxu0 %v9362
          %9440 = vmatprep.subr.bf16.mxu0 0
          %9441 = vmatpush1.bf16.msra.mxu0 %v9363
          %9442 = vmatprep.subr.bf16.mxu0 0
          %9443 = vmatpush1.bf16.msra.mxu0 %v9364
          %9444 = vmatprep.subr.bf16.mxu0 0
          %9445 = vmatpush1.bf16.msra.mxu0 %v9365
          %9446 = vmatprep.subr.bf16.mxu0 0
          %9447 = vmatpush1.bf16.msra.mxu0 0
          %9448 = vmatprep.subr.bf16.mxu0 0
          %9449 = vmatpush1.bf16.msra.mxu0 0
          %9450 = vmatprep.subr.bf16.mxu0 0
          %9451 = vmatpush1.bf16.msra.mxu0 0
          %9452 = vmatprep.subr.bf16.mxu0 0
          %9453 = vmatpush1.bf16.msra.mxu0 0
          %9454 = vmatprep.subr.bf16.mxu0 0
          %9455 = vmatpush1.bf16.msra.mxu0 0
          %9456 = vmatprep.subr.bf16.mxu0 0
          %9457 = vmatpush1.bf16.msra.mxu0 0
          %9458 = vmatprep.subr.bf16.mxu0 0
          %9459 = vmatpush1.bf16.msra.mxu0 0
          %9460 = vmatprep.subr.bf16.mxu0 0
          %9461 = vmatpush1.bf16.msra.mxu0 0
          %9462 = vmatprep.mubr.bf16.mxu0 0
          %9463 = vmatmul.mubr.bf16.gmra.mrb[0].mxu0 %v9190
          %v9464 = vpop.f32.mrb[0].mxu0
          %v9465 = vadd.f32 %v9425, %v9464
          %v9466 = vpop.f32.mrb[0].mxu0
          %v9467 = vpop.f32.mrb[0].mxu0
          %v9468 = vpop.f32.mrb[0].mxu0
          %9469 = vdwg.mxu0
          %9470 = vst [vmem:[%s1012] sm:$0xff] %v9465
        $region156: #{tpu_custom_call.1} parent=83 // pred_fallthru
          _
        %s9471 = sand.u32 %s469, 1
        %s9472 = scalar_lea.sflag [#allocation6], %s9471
        %s9473 = sand.u32 %s469, 1
        %s9474 = smul.addr %s9473, 8
        %s9475 = scalar_lea.vmem [#allocation30], %s9474
        // Predicated region
        $region157: #{tpu_custom_call.1} parent=83 // pred_check
          %p9476 = pneg %p479
        $region158: #{tpu_custom_call.1} parent=83 // pred_check_branch
          %9478 = sbr.rel (%p9476) target = $region160
        $region159: #{tpu_custom_call.1} parent=83 // pred_region
          %s9480 = ssub.s32 128, 128
          %9481 = vsyncadd %s9472, %s9480
          %s9482 = smul.addr %s57, 128
          %s9483 = scalar_lea.hbm %s16, %s9482
          %s9485 = sshll.u32 %s9475, 4
          %s9486 = int_to_ptr.vmem [resolvable:$true] %s9485
          %9488 = dma.vmem_to_hbm [thread:$0]  %s9486, 128, %s9483, %s9472
        $region160: #{tpu_custom_call.1} parent=83 // pred_fallthru
          _
      $region84: #{tpu_custom_call.1} parent=5 // pred_fallthru
        _
      %p9489 = scmp.le.s32.totalorder 2, %s48
      // Predicated region
      $region161: #{tpu_custom_call.1} parent=5 // pred_check
        %p9490 = pneg %p9489
      $region162: #{tpu_custom_call.1} parent=5 // pred_check_branch
        %9492 = sbr.rel (%p9490) target = $region164
      $region163: #{tpu_custom_call.1} parent=5 // pred_region
        %s9493 = ssub.s32 %s48, 2
        // Predicated region
        $region165: #{tpu_custom_call.1} parent=163 // pred_check
          %p9494 = pneg %p485
        $region166: #{tpu_custom_call.1} parent=163 // pred_check_branch
          %9496 = sbr.rel (%p9494) target = $region168
        $region167: #{tpu_custom_call.1} parent=163 // pred_region
          %s9497 = sand.u32 %s470, 1
          %s9498 = scalar_lea.sflag [#allocation6], %s9497
          %s9499 = sand.u32 %s470, 1
          %s9500 = smul.addr %s9499, 8
          %s9501 = scalar_lea.vmem [#allocation30], %s9500
          %9502 = dma.done %s9498, 128
        $region168: #{tpu_custom_call.1} parent=163 // pred_fallthru
          _
      $region164: #{tpu_custom_call.1} parent=5 // pred_fallthru
        _
    $region6: #{tpu_custom_call.1} parent=1 // loop_footer
      %s52 = sadd.s32 1, %s48
    $region7: #{tpu_custom_call.1} parent=1 // loop_footer_branch
      %47 = sbr.rel target = $region3
    $region8: #{tpu_custom_call.1} parent=1 // loop_exit
      _
    %9503 = vsyncpa [#allocation5], 1
    %s9504 = scalar_lea.sflag [#allocation5], 1
    %9505 = vsyncpa %s9504, 1
    %9506 = vsyncpa [#allocation8], 1
    %s9507 = scalar_lea.sflag [#allocation8], 1
    %9508 = vsyncpa %s9507, 1
    %9509 = vsyncpa [#allocation11], 1
    %s9510 = scalar_lea.sflag [#allocation11], 1
    %9511 = vsyncpa %s9510, 1
    %9512 = vsyncpa [#allocation14], 1
    %s9513 = scalar_lea.sflag [#allocation14], 1
    %9514 = vsyncpa %s9513, 1
    %9515 = vsyncpa [#allocation17], 1
    %s9516 = scalar_lea.sflag [#allocation17], 1
    %9517 = vsyncpa %s9516, 1
    %9518 = vsyncpa [#allocation20], 1
    %s9519 = scalar_lea.sflag [#allocation20], 1
    %9520 = vsyncpa %s9519, 1
    %9521 = vsyncpa [#allocation23], 1
    %s9522 = scalar_lea.sflag [#allocation23], 1
    %9523 = vsyncpa %s9522, 1
    %9524 = vsyncpa [#allocation26], 1
    %9525 = vsyncpa [#allocation29], 1
    %9526 = vsyncpa [#allocation6], 1
    %s9527 = scalar_lea.sflag [#allocation6], 1
    %9528 = vsyncpa %s9527, 1

</llo_original>
